<compile_context>
chip_gen: v7x
topology: tpu7x:2x2x1
jax: 0.10.0
libtpu: 0.0.40
codegen_flags: <defaults>
</compile_context>

<pallas_src>
import functools
import math

import jax
import jax.numpy as jnp
from jax.experimental import pallas as pl
from jax.experimental.pallas import tpu as pltpu

# Keep f32 matmuls at full precision on both the Pallas and the pure-JAX
# reference sides so the correctness checks below are meaningful.
jax.config.update("jax_default_matmul_precision", "highest")


# ---------------------------------------------------------------------------
# Fused DeepONet forward kernel (single invocation, everything VMEM-resident)
# ---------------------------------------------------------------------------
def _deeponet_fused_kernel(
    xb_ref, xt_ref,
    c1w_ref, c1b_ref, raw_ref, rab_ref, rbw_ref, rbb_ref,
    bfcw_ref, bfcb_ref, wv_ref, bv_ref,
    t1w_ref, t1b_ref, t2w_ref, t2b_ref, t3w_ref, t3b_ref,
    m1w_ref, m1b_ref, m2w_ref, m2b_ref, m3w_ref, m3b_ref,
    o_ref,
    pad1_ref, im1_ref, padr_ref, imr_ref, pooled_ref):
  f32 = jnp.float32
  B, L, Cin = xb_ref.shape
  K1 = pad1_ref.shape[0] - L + 1          # 7
  Kr = padr_ref.shape[0] - L + 1          # 3
  H = c1w_ref.shape[1]
  R = raw_ref.shape[0]
  P1 = (K1 - 1) // 2
  PR = (Kr - 1) // 2

  def relu(v):
    return jnp.maximum(v, 0.0)

  # Zero the conv padding halos once per call (single grid step, so this is
  # not repeated); the interior rows are overwritten below for every use.
  pad1_ref[...] = jnp.zeros_like(pad1_ref)
  padr_ref[...] = jnp.zeros_like(padr_ref)

  # ---- BranchNet conv1 (k=7, pad=3, folded BN, ReLU) ----------------------
  # im2col with the batch stacked into the M dimension: one (B*L, K1*Cin)
  # @ (K1*Cin, H) MXU matmul for the whole batch.
  for b in range(B):
    pad1_ref[P1:P1 + L, :] = xb_ref[b]                       # (L, Cin)
    for k in range(K1):
      im1_ref[b * L:(b + 1) * L, k * Cin:(k + 1) * Cin] = pad1_ref[k:k + L, :]
  h = relu(jnp.dot(im1_ref[...], c1w_ref[...], preferred_element_type=f32)
           + c1b_ref[...])                                   # (B*L, H)

  # ---- three residual blocks: each conv is ONE (B*L, Kr*H) @ (Kr*H, H) ----
  def conv3(h_in, w, bias):
    for b in range(B):
      padr_ref[PR:PR + L, :] = h_in[b * L:(b + 1) * L, :]
      for k in range(Kr):
        imr_ref[b * L:(b + 1) * L, k * H:(k + 1) * H] = padr_ref[k:k + L, :]
    return jnp.dot(imr_ref[...], w, preferred_element_type=f32) + bias

  for r in range(R):
    y = relu(conv3(h, raw_ref[r], rab_ref[r]))               # convA + BN + ReLU
    h = relu(conv3(y, rbw_ref[r], rbb_ref[r]) + h)           # convB + BN + skip

  # ---- AdaptiveAvgPool1d(1): per-batch mean over the spatial axis ---------
  for b in range(B):
    pooled_ref[b:b + 1, :] = jnp.mean(h[b * L:(b + 1) * L, :], axis=0,
                                      keepdims=True)

  def dense(v, w_ref, b_ref, act=False):
    y = jnp.dot(v, w_ref[...], preferred_element_type=f32) + b_ref[...]
    return relu(y) if act else y

  # ---- branch fc (dropout = identity in eval mode) ------------------------
  branch_out = dense(pooled_ref[...], bfcw_ref, bfcb_ref)    # (B, H)

  # ---- TrunkNet: S==1 self-attention == V projection (softmax(1) == 1) ----
  att = dense(xt_ref[...], wv_ref, bv_ref)                   # (B, H)
  t = dense(att, t1w_ref, t1b_ref, act=True)                 # fc1 + folded BN
  t = dense(t, t2w_ref, t2b_ref, act=True)                   # fc2 + folded BN
  trunk_out = dense(t, t3w_ref, t3b_ref)                     # fc3

  # ---- DeepONet combine + final 3-layer MLP -------------------------------
  m = dense(branch_out * trunk_out, m1w_ref, m1b_ref, act=True)
  m = dense(m, m2w_ref, m2b_ref, act=True)
  o_ref[...] = dense(m, m3w_ref, m3b_ref).astype(o_ref.dtype)


@jax.jit
def deeponet_forward(fp, branch_x, trunk_x):
  B, Cin, L = branch_x.shape
  H = fp["c1_w"].shape[1]
  K1 = fp["c1_w"].shape[0] // Cin
  Kr = fp["ra_w"].shape[1] // H
  out_cols = fp["m3_w"].shape[1]

  # Layout plumbing: channel-last branch input so the conv im2col reads are
  # contiguous (L, Cin) tiles.  TODO(synk): fold this tiny host transpose into
  # the kernel's im2col build if it ever shows up in profiles.
  xb = jnp.transpose(branch_x, (0, 2, 1))                    # (B, L, Cin)

  out = pl.pallas_call(
      _deeponet_fused_kernel,
      out_shape=jax.ShapeDtypeStruct((B, out_cols), branch_x.dtype),
      scratch_shapes=[
          pltpu.VMEM((L + K1 - 1, Cin), jnp.float32),        # conv1 padded input
          pltpu.VMEM((B * L, K1 * Cin), jnp.float32),        # conv1 im2col
          pltpu.VMEM((L + Kr - 1, H), jnp.float32),          # residual padded input
          pltpu.VMEM((B * L, Kr * H), jnp.float32),          # residual im2col
          pltpu.VMEM((B, H), jnp.float32),                   # pooled branch features
      ],
  )(xb, trunk_x,
    fp["c1_w"], fp["c1_b"], fp["ra_w"], fp["ra_b"], fp["rb_w"], fp["rb_b"],
    fp["bfc_w"], fp["bfc_b"], fp["wv"], fp["bv"],
    fp["t1_w"], fp["t1_b"], fp["t2_w"], fp["t2_b"], fp["t3_w"], fp["t3_b"],
    fp["m1_w"], fp["m1_b"], fp["m2_w"], fp["m2_b"], fp["m3_w"], fp["m3_b"])
  return out.reshape(B, 2, -1)


# ---------------------------------------------------------------------------
# Standalone SelfAttention kernel (general S; the DeepONet forward uses the
# S==1 specialization inside the fused kernel above)
# ---------------------------------------------------------------------------
def _linear_kernel(x_ref, w_ref, b_ref, o_ref):
  o_ref[...] = (jnp.dot(x_ref[...], w_ref[...],
                        preferred_element_type=jnp.float32)
                + b_ref[...]).astype(o_ref.dtype)


def _self_attention_kernel(approx_recip, x_ref, wqkv_ref, bqkv_ref, o_ref):
  f32 = jnp.float32
  B, S, D = x_ref.shape
  H = wqkv_ref.shape[1] // 3

  x = x_ref[...].reshape(B * S, D)
  # Fused QKV: one MXU pass with N = 3H and a single broadcast bias add.
  qkv = jnp.dot(x, wqkv_ref[...], preferred_element_type=f32) + bqkv_ref[...]

  q = qkv[:, :H] * (1.0 / math.sqrt(float(H)))   # scale Q, not the S*S scores
  k = qkv[:, H:2 * H]
  v = qkv[:, 2 * H:]

  q3 = q.reshape(B, S, H)
  k3 = k.reshape(B, S, H)
  v3 = v.reshape(B, S, H)
  # contract last dims directly: no explicit k.T (XLU transpose)
  s = jnp.einsum("bqd,bkd->bqk", q3, k3, preferred_element_type=f32)
  s = s - jnp.max(s, axis=-1, keepdims=True)
  p = jnp.exp(s)
  denom = jnp.sum(p, axis=-1, keepdims=True)
  if approx_recip:
    p = p * pl.reciprocal(denom, approx=True)     # EUP (otherwise idle) unit
  else:
    p = p / denom
  out = jnp.einsum("bqk,bkd->bqd", p, v3, preferred_element_type=f32)
  o_ref[...] = out.reshape(B * S, H).astype(o_ref.dtype)


def self_attention(x, wqkv, bqkv, *, approx_recip=True):
  """x: (B, S, D); wqkv: (D, 3H) fused; bqkv: (3H,) -> (B, S, H)."""
  B, S, D = x.shape
  H3 = wqkv.shape[1]
  H = H3 // 3
  if S == 1:
    # softmax over a single key is exactly 1 -> attention output == V, so only
    # the V projection is live (wrapper-level specialization).
    out = pl.pallas_call(
        _linear_kernel,
        out_shape=jax.ShapeDtypeStruct((B, H), x.dtype),
    )(x.reshape(B, D), wqkv[:, 2 * H:], bqkv[2 * H:].reshape(1, H))
    return out.reshape(B, 1, H)

  kernel = functools.partial(_self_attention_kernel, approx_recip)
  out2d = pl.pallas_call(
      kernel,
      out_shape=jax.ShapeDtypeStruct((B * S, H), x.dtype),
  )(x, wqkv, bqkv.reshape(1, H3))
  return out2d.reshape(B, S, H)


# ---------------------------------------------------------------------------
# Parameter construction + eval-mode BN folding / im2col weight packing
# ---------------------------------------------------------------------------
def init_params(key, hidden, trunk_in, out_size):
  keys = iter(jax.random.split(key, 80))

  def lin(i, o):
    b = 1.0 / math.sqrt(i)
    return (jax.random.uniform(next(keys), (i, o), jnp.float32, -b, b),
            jax.random.uniform(next(keys), (o,), jnp.float32, -b, b))

  def conv(ci, co, k):
    b = 1.0 / math.sqrt(ci * k)
    return (jax.random.uniform(next(keys), (co, ci, k), jnp.float32, -b, b),
            jax.random.uniform(next(keys), (co,), jnp.float32, -b, b))

  def bn(c):
    return (1.0 + 0.1 * jax.random.normal(next(keys), (c,)),              # gamma
            0.1 * jax.random.normal(next(keys), (c,)),                    # beta
            0.1 * jax.random.normal(next(keys), (c,)),                    # running mean
            jax.random.uniform(next(keys), (c,), jnp.float32, 0.5, 1.5))  # running var

  p = {}
  p["c1_w"], p["c1_b"] = conv(2, hidden, 7)
  p["bn1"] = bn(hidden)
  for r in range(3):
    p[f"r{r}a_w"], p[f"r{r}a_b"] = conv(hidden, hidden, 3)
    p[f"r{r}bna"] = bn(hidden)
    p[f"r{r}b_w"], p[f"r{r}b_b"] = conv(hidden, hidden, 3)
    p[f"r{r}bnb"] = bn(hidden)
  p["bfc_w"], p["bfc_b"] = lin(hidden, hidden)
  p["wq"], p["bq"] = lin(trunk_in, hidden)
  p["wk"], p["bk"] = lin(trunk_in, hidden)
  p["wv"], p["bv"] = lin(trunk_in, hidden)
  p["t1_w"], p["t1_b"] = lin(hidden, hidden)
  p["tbn1"] = bn(hidden)
  p["t2_w"], p["t2_b"] = lin(hidden, hidden)
  p["tbn2"] = bn(hidden)
  p["t3_w"], p["t3_b"] = lin(hidden, hidden)
  p["m1_w"], p["m1_b"] = lin(hidden, 2 * hidden)
  p["m2_w"], p["m2_b"] = lin(2 * hidden, 2 * hidden)
  p["m3_w"], p["m3_b"] = lin(2 * hidden, 2 * out_size)
  return p


def fold_params(p, eps=1e-5):
  """Fold eval-mode BatchNorm into the preceding conv/linear weights, pack the
  conv weights in im2col layout (K*C_in, C_out), and fuse the QKV projections
  (the fused forward only needs Wv/bv thanks to the S==1 specialization)."""
  def bn_scale_shift(bn):
    g, beta, mean, var = bn
    s = g / jnp.sqrt(var + eps)
    return s, beta - mean * s

  def fold_conv(w, b, bn):
    s, t = bn_scale_shift(bn)
    taps = jnp.transpose(w * s[:, None, None], (2, 1, 0))   # (K, C_in, C_out)
    packed = taps.reshape(-1, w.shape[0])                   # (K*C_in, C_out)
    return packed, (b * s + t).reshape(1, -1)

  def fold_lin(w, b, bn):
    s, t = bn_scale_shift(bn)
    return w * s[None, :], (b * s + t).reshape(1, -1)

  fp = {}
  fp["c1_w"], fp["c1_b"] = fold_conv(p["c1_w"], p["c1_b"], p["bn1"])
  ra, rab, rb, rbb = [], [], [], []
  for r in range(3):
    t_, b_ = fold_conv(p[f"r{r}a_w"], p[f"r{r}a_b"], p[f"r{r}bna"])
    ra.append(t_)
    rab.append(b_)
    t_, b_ = fold_conv(p[f"r{r}b_w"], p[f"r{r}b_b"], p[f"r{r}bnb"])
    rb.append(t_)
    rbb.append(b_)
  fp["ra_w"], fp["ra_b"] = jnp.stack(ra), jnp.stack(rab)
  fp["rb_w"], fp["rb_b"] = jnp.stack(rb), jnp.stack(rbb)
  fp["bfc_w"], fp["bfc_b"] = p["bfc_w"], p["bfc_b"].reshape(1, -1)
  # fused QKV weight/bias for the general-S standalone attention kernel
  fp["wqkv"] = jnp.concatenate([p["wq"], p["wk"], p["wv"]], axis=1)
  fp["bqkv"] = jnp.concatenate([p["bq"], p["bk"], p["bv"]])
  # S==1 specialization only needs the V projection
  fp["wv"], fp["bv"] = p["wv"], p["bv"].reshape(1, -1)
  fp["t1_w"], fp["t1_b"] = fold_lin(p["t1_w"], p["t1_b"], p["tbn1"])
  fp["t2_w"], fp["t2_b"] = fold_lin(p["t2_w"], p["t2_b"], p["tbn2"])
  fp["t3_w"], fp["t3_b"] = p["t3_w"], p["t3_b"].reshape(1, -1)
  fp["m1_w"], fp["m1_b"] = p["m1_w"], p["m1_b"].reshape(1, -1)
  fp["m2_w"], fp["m2_b"] = p["m2_w"], p["m2_b"].reshape(1, -1)
  fp["m3_w"], fp["m3_b"] = p["m3_w"], p["m3_b"].reshape(1, -1)
  return fp


# ---------------------------------------------------------------------------
# Pure-JAX references (mirror the PyTorch eval-mode forward)
# ---------------------------------------------------------------------------
def self_attention_ref(x, wq, wk, wv, bq, bk, bv):
  H = wq.shape[1]
  q = x @ wq + bq
  k = x @ wk + bk
  v = x @ wv + bv
  att = (q @ jnp.swapaxes(k, -2, -1)) / jnp.sqrt(jnp.float32(H))
  att = jax.nn.softmax(att, axis=-1)
  return att @ v


def _conv1d_ref(x, w, b, pad):
  out = jax.lax.conv_general_dilated(
      x, w, window_strides=(1,), padding=[(pad, pad)],
      dimension_numbers=("NCH", "OIH", "NCH"))
  return out + b[None, :, None]


def _bn_eval_ref(x, bn, axis, eps=1e-5):
  g, beta, mean, var = bn
  shape = [1] * x.ndim
  shape[axis] = -1
  return ((x - mean.reshape(shape)) / jnp.sqrt(var.reshape(shape) + eps)
          * g.reshape(shape) + beta.reshape(shape))


def deeponet_ref(p, branch_x, trunk_x):
  relu = jax.nn.relu
  # BranchNet
  h = relu(_bn_eval_ref(_conv1d_ref(branch_x, p["c1_w"], p["c1_b"], 3), p["bn1"], 1))
  for r in range(3):
    idn = h
    y = relu(_bn_eval_ref(_conv1d_ref(h, p[f"r{r}a_w"], p[f"r{r}a_b"], 1),
                          p[f"r{r}bna"], 1))
    y = _bn_eval_ref(_conv1d_ref(y, p[f"r{r}b_w"], p[f"r{r}b_b"], 1),
                     p[f"r{r}bnb"], 1)
    h = relu(y + idn)
  branch_out = jnp.mean(h, axis=2) @ p["bfc_w"] + p["bfc_b"]
  # TrunkNet
  att = self_attention_ref(trunk_x[:, None, :], p["wq"], p["wk"], p["wv"],
                           p["bq"], p["bk"], p["bv"])[:, 0, :]
  t = relu(_bn_eval_ref(att @ p["t1_w"] + p["t1_b"], p["tbn1"], 1))
  t = relu(_bn_eval_ref(t @ p["t2_w"] + p["t2_b"], p["tbn2"], 1))
  trunk_out = t @ p["t3_w"] + p["t3_b"]
  # combine + MLP
  m = branch_out * trunk_out
  m = relu(m @ p["m1_w"] + p["m1_b"])
  m = relu(m @ p["m2_w"] + p["m2_b"])
  out = m @ p["m3_w"] + p["m3_b"]
  return out.reshape(branch_x.shape[0], 2, -1)


if __name__ == "__main__":
  B, L, HID, D_TRUNK, OUT = 2, 16, 32, 32, 16

  kparam, kb, kt, kx = jax.random.split(jax.random.PRNGKey(0), 4)
  params = init_params(kparam, HID, D_TRUNK, OUT)
  fp = fold_params(params)

  branch_x = jax.random.normal(kb, (B, 2, L), jnp.float32)
  trunk_x = jax.random.normal(kt, (B, D_TRUNK), jnp.float32)

  # Full DeepONet forward through the single fused Pallas kernel.  The fused
  # forward has no approximate ops (S==1 attention is exact), so the check
  # against the unfused/unfolded reference is tight.
  out = jax.block_until_ready(deeponet_forward(fp, branch_x, trunk_x))
  ref = deeponet_ref(params, branch_x, trunk_x)
  assert out.shape == (B, 2, OUT)
  assert jnp.allclose(out, ref, atol=1e-3, rtol=1e-3), "DeepONet mismatch vs reference"

  # Standalone SelfAttention kernel at general S (exact reciprocal -> tight
  # tolerance; approx EUP reciprocal -> relaxed tolerance).
  S = 8
  xa = jax.random.normal(kx, (B, S, D_TRUNK), jnp.float32)
  att_ref = self_attention_ref(xa, params["wq"], params["wk"], params["wv"],
                               params["bq"], params["bk"], params["bv"])

  att_exact = jax.block_until_ready(
      self_attention(xa, fp["wqkv"], fp["bqkv"], approx_recip=False))
  assert jnp.allclose(att_exact, att_ref, atol=1e-4, rtol=1e-4), \
      "attention (exact) mismatch"

  att_approx = jax.block_until_ready(
      self_attention(xa, fp["wqkv"], fp["bqkv"], approx_recip=True))
  assert jnp.allclose(att_approx, att_ref, atol=1e-2, rtol=1e-2), \
      "attention (approx recip) mismatch"

  # S == 1 wrapper-level specialization (softmax over one key == 1): exact.
  x1 = trunk_x[:, None, :]
  att1 = jax.block_until_ready(self_attention(x1, fp["wqkv"], fp["bqkv"]))
  att1_ref = self_attention_ref(x1, params["wq"], params["wk"], params["wv"],
                                params["bq"], params["bk"], params["bv"])
  assert jnp.allclose(att1, att1_ref, atol=1e-4, rtol=1e-4), \
      "attention (S==1) mismatch"

  print("KERNEL_OK")
</pallas_src>

<mosaic_0001>
module attributes {stable_mosaic.version = 11 : i64} {
  func.func @_deeponet_fused_kernel(%arg0: memref<2x16x2xf32, #tpu.memory_space<vmem>>, %arg1: memref<2x32xf32, #tpu.memory_space<vmem>>, %arg2: memref<14x32xf32, #tpu.memory_space<vmem>>, %arg3: memref<1x32xf32, #tpu.memory_space<vmem>>, %arg4: memref<3x96x32xf32, #tpu.memory_space<vmem>>, %arg5: memref<3x1x32xf32, #tpu.memory_space<vmem>>, %arg6: memref<3x96x32xf32, #tpu.memory_space<vmem>>, %arg7: memref<3x1x32xf32, #tpu.memory_space<vmem>>, %arg8: memref<32x32xf32, #tpu.memory_space<vmem>>, %arg9: memref<1x32xf32, #tpu.memory_space<vmem>>, %arg10: memref<32x32xf32, #tpu.memory_space<vmem>>, %arg11: memref<1x32xf32, #tpu.memory_space<vmem>>, %arg12: memref<32x32xf32, #tpu.memory_space<vmem>>, %arg13: memref<1x32xf32, #tpu.memory_space<vmem>>, %arg14: memref<32x32xf32, #tpu.memory_space<vmem>>, %arg15: memref<1x32xf32, #tpu.memory_space<vmem>>, %arg16: memref<32x32xf32, #tpu.memory_space<vmem>>, %arg17: memref<1x32xf32, #tpu.memory_space<vmem>>, %arg18: memref<32x64xf32, #tpu.memory_space<vmem>>, %arg19: memref<1x64xf32, #tpu.memory_space<vmem>>, %arg20: memref<64x64xf32, #tpu.memory_space<vmem>>, %arg21: memref<1x64xf32, #tpu.memory_space<vmem>>, %arg22: memref<64x32xf32, #tpu.memory_space<vmem>>, %arg23: memref<1x32xf32, #tpu.memory_space<vmem>>, %arg24: memref<2x32xf32, #tpu.memory_space<vmem>>, %arg25: memref<22x2xf32, #tpu.memory_space<vmem>>, %arg26: memref<32x14xf32, #tpu.memory_space<vmem>>, %arg27: memref<18x32xf32, #tpu.memory_space<vmem>>, %arg28: memref<32x96xf32, #tpu.memory_space<vmem>>, %arg29: memref<2x32xf32, #tpu.memory_space<vmem>>) attributes {dimension_semantics = [], scalar_prefetch = 0 : i64, scratch_operands = 5 : i64, tpu.core_type = #tpu.core_type<tc>} {
    %cst = arith.constant 0.000000e+00 : f32
    %0 = vector.broadcast %cst : f32 to vector<22x2xf32>
    %c0 = arith.constant 0 : index
    %c0_0 = arith.constant 0 : index
    %1 = vector.load %arg25[%c0, %c0_0] : memref<22x2xf32, #tpu.memory_space<vmem>>, vector<22x2xf32>
    tpu.vector_store %arg25[%c0, %c0_0], %0 {strides = array<i32>} : memref<22x2xf32, #tpu.memory_space<vmem>>, vector<22x2xf32>,
    %cst_1 = arith.constant 0.000000e+00 : f32
    %2 = vector.broadcast %cst_1 : f32 to vector<18x32xf32>
    %c0_2 = arith.constant 0 : index
    %c0_3 = arith.constant 0 : index
    %3 = vector.load %arg27[%c0_2, %c0_3] : memref<18x32xf32, #tpu.memory_space<vmem>>, vector<18x32xf32>
    tpu.vector_store %arg27[%c0_2, %c0_3], %2 {strides = array<i32>} : memref<18x32xf32, #tpu.memory_space<vmem>>, vector<18x32xf32>,
    %c0_4 = arith.constant 0 : index
    %c0_5 = arith.constant 0 : index
    %c0_6 = arith.constant 0 : index
    %4 = vector.load %arg0[%c0_4, %c0_5, %c0_6] : memref<2x16x2xf32, #tpu.memory_space<vmem>>, vector<1x16x2xf32>
    %5 = vector.shape_cast %4 : vector<1x16x2xf32> to vector<16x2xf32>
    %c3 = arith.constant 3 : index
    %c0_7 = arith.constant 0 : index
    %6 = vector.load %arg25[%c3, %c0_7] : memref<22x2xf32, #tpu.memory_space<vmem>>, vector<16x2xf32>
    tpu.vector_store %arg25[%c3, %c0_7], %5 {strides = array<i32>} : memref<22x2xf32, #tpu.memory_space<vmem>>, vector<16x2xf32>,
    %c0_8 = arith.constant 0 : index
    %c0_9 = arith.constant 0 : index
    %7 = vector.load %arg25[%c0_8, %c0_9] : memref<22x2xf32, #tpu.memory_space<vmem>>, vector<16x2xf32>
    %c0_10 = arith.constant 0 : index
    %c0_11 = arith.constant 0 : index
    %8 = vector.load %arg26[%c0_10, %c0_11] : memref<32x14xf32, #tpu.memory_space<vmem>>, vector<16x2xf32>
    tpu.vector_store %arg26[%c0_10, %c0_11], %7 {strides = array<i32>} : memref<32x14xf32, #tpu.memory_space<vmem>>, vector<16x2xf32>,
    %c1 = arith.constant 1 : index
    %c0_12 = arith.constant 0 : index
    %9 = vector.load %arg25[%c1, %c0_12] : memref<22x2xf32, #tpu.memory_space<vmem>>, vector<16x2xf32>
    %c0_13 = arith.constant 0 : index
    %c2 = arith.constant 2 : index
    %10 = vector.load %arg26[%c0_13, %c2] : memref<32x14xf32, #tpu.memory_space<vmem>>, vector<16x2xf32>
    tpu.vector_store %arg26[%c0_13, %c2], %9 {strides = array<i32>} : memref<32x14xf32, #tpu.memory_space<vmem>>, vector<16x2xf32>,
    %c2_14 = arith.constant 2 : index
    %c0_15 = arith.constant 0 : index
    %11 = vector.load %arg25[%c2_14, %c0_15] : memref<22x2xf32, #tpu.memory_space<vmem>>, vector<16x2xf32>
    %c0_16 = arith.constant 0 : index
    %c4 = arith.constant 4 : index
    %12 = vector.load %arg26[%c0_16, %c4] : memref<32x14xf32, #tpu.memory_space<vmem>>, vector<16x2xf32>
    tpu.vector_store %arg26[%c0_16, %c4], %11 {strides = array<i32>} : memref<32x14xf32, #tpu.memory_space<vmem>>, vector<16x2xf32>,
    %c3_17 = arith.constant 3 : index
    %c0_18 = arith.constant 0 : index
    %13 = vector.load %arg25[%c3_17, %c0_18] : memref<22x2xf32, #tpu.memory_space<vmem>>, vector<16x2xf32>
    %c0_19 = arith.constant 0 : index
    %c6 = arith.constant 6 : index
    %14 = vector.load %arg26[%c0_19, %c6] : memref<32x14xf32, #tpu.memory_space<vmem>>, vector<16x2xf32>
    tpu.vector_store %arg26[%c0_19, %c6], %13 {strides = array<i32>} : memref<32x14xf32, #tpu.memory_space<vmem>>, vector<16x2xf32>,
    %c4_20 = arith.constant 4 : index
    %c0_21 = arith.constant 0 : index
    %15 = vector.load %arg25[%c4_20, %c0_21] : memref<22x2xf32, #tpu.memory_space<vmem>>, vector<16x2xf32>
    %c0_22 = arith.constant 0 : index
    %c8 = arith.constant 8 : index
    %16 = vector.load %arg26[%c0_22, %c8] : memref<32x14xf32, #tpu.memory_space<vmem>>, vector<16x2xf32>
    tpu.vector_store %arg26[%c0_22, %c8], %15 {strides = array<i32>} : memref<32x14xf32, #tpu.memory_space<vmem>>, vector<16x2xf32>,
    %c5 = arith.constant 5 : index
    %c0_23 = arith.constant 0 : index
    %17 = vector.load %arg25[%c5, %c0_23] : memref<22x2xf32, #tpu.memory_space<vmem>>, vector<16x2xf32>
    %c0_24 = arith.constant 0 : index
    %c10 = arith.constant 10 : index
    %18 = vector.load %arg26[%c0_24, %c10] : memref<32x14xf32, #tpu.memory_space<vmem>>, vector<16x2xf32>
    tpu.vector_store %arg26[%c0_24, %c10], %17 {strides = array<i32>} : memref<32x14xf32, #tpu.memory_space<vmem>>, vector<16x2xf32>,
    %c6_25 = arith.constant 6 : index
    %c0_26 = arith.constant 0 : index
    %19 = vector.load %arg25[%c6_25, %c0_26] : memref<22x2xf32, #tpu.memory_space<vmem>>, vector<16x2xf32>
    %c0_27 = arith.constant 0 : index
    %c12 = arith.constant 12 : index
    %20 = vector.load %arg26[%c0_27, %c12] : memref<32x14xf32, #tpu.memory_space<vmem>>, vector<16x2xf32>
    tpu.vector_store %arg26[%c0_27, %c12], %19 {strides = array<i32>} : memref<32x14xf32, #tpu.memory_space<vmem>>, vector<16x2xf32>,
    %c1_28 = arith.constant 1 : index
    %c0_29 = arith.constant 0 : index
    %c0_30 = arith.constant 0 : index
    %21 = vector.load %arg0[%c1_28, %c0_29, %c0_30] : memref<2x16x2xf32, #tpu.memory_space<vmem>>, vector<1x16x2xf32>
    %22 = vector.shape_cast %21 : vector<1x16x2xf32> to vector<16x2xf32>
    %c3_31 = arith.constant 3 : index
    %c0_32 = arith.constant 0 : index
    %23 = vector.load %arg25[%c3_31, %c0_32] : memref<22x2xf32, #tpu.memory_space<vmem>>, vector<16x2xf32>
    tpu.vector_store %arg25[%c3_31, %c0_32], %22 {strides = array<i32>} : memref<22x2xf32, #tpu.memory_space<vmem>>, vector<16x2xf32>,
    %c0_33 = arith.constant 0 : index
    %c0_34 = arith.constant 0 : index
    %24 = vector.load %arg25[%c0_33, %c0_34] : memref<22x2xf32, #tpu.memory_space<vmem>>, vector<16x2xf32>
    %c16 = arith.constant 16 : index
    %c0_35 = arith.constant 0 : index
    %25 = vector.load %arg26[%c16, %c0_35] : memref<32x14xf32, #tpu.memory_space<vmem>>, vector<16x2xf32>
    tpu.vector_store %arg26[%c16, %c0_35], %24 {strides = array<i32>} : memref<32x14xf32, #tpu.memory_space<vmem>>, vector<16x2xf32>,
    %c1_36 = arith.constant 1 : index
    %c0_37 = arith.constant 0 : index
    %26 = vector.load %arg25[%c1_36, %c0_37] : memref<22x2xf32, #tpu.memory_space<vmem>>, vector<16x2xf32>
    %c16_38 = arith.constant 16 : index
    %c2_39 = arith.constant 2 : index
    %27 = vector.load %arg26[%c16_38, %c2_39] : memref<32x14xf32, #tpu.memory_space<vmem>>, vector<16x2xf32>
    tpu.vector_store %arg26[%c16_38, %c2_39], %26 {strides = array<i32>} : memref<32x14xf32, #tpu.memory_space<vmem>>, vector<16x2xf32>,
    %c2_40 = arith.constant 2 : index
    %c0_41 = arith.constant 0 : index
    %28 = vector.load %arg25[%c2_40, %c0_41] : memref<22x2xf32, #tpu.memory_space<vmem>>, vector<16x2xf32>
    %c16_42 = arith.constant 16 : index
    %c4_43 = arith.constant 4 : index
    %29 = vector.load %arg26[%c16_42, %c4_43] : memref<32x14xf32, #tpu.memory_space<vmem>>, vector<16x2xf32>
    tpu.vector_store %arg26[%c16_42, %c4_43], %28 {strides = array<i32>} : memref<32x14xf32, #tpu.memory_space<vmem>>, vector<16x2xf32>,
    %c3_44 = arith.constant 3 : index
    %c0_45 = arith.constant 0 : index
    %30 = vector.load %arg25[%c3_44, %c0_45] : memref<22x2xf32, #tpu.memory_space<vmem>>, vector<16x2xf32>
    %c16_46 = arith.constant 16 : index
    %c6_47 = arith.constant 6 : index
    %31 = vector.load %arg26[%c16_46, %c6_47] : memref<32x14xf32, #tpu.memory_space<vmem>>, vector<16x2xf32>
    tpu.vector_store %arg26[%c16_46, %c6_47], %30 {strides = array<i32>} : memref<32x14xf32, #tpu.memory_space<vmem>>, vector<16x2xf32>,
    %c4_48 = arith.constant 4 : index
    %c0_49 = arith.constant 0 : index
    %32 = vector.load %arg25[%c4_48, %c0_49] : memref<22x2xf32, #tpu.memory_space<vmem>>, vector<16x2xf32>
    %c16_50 = arith.constant 16 : index
    %c8_51 = arith.constant 8 : index
    %33 = vector.load %arg26[%c16_50, %c8_51] : memref<32x14xf32, #tpu.memory_space<vmem>>, vector<16x2xf32>
    tpu.vector_store %arg26[%c16_50, %c8_51], %32 {strides = array<i32>} : memref<32x14xf32, #tpu.memory_space<vmem>>, vector<16x2xf32>,
    %c5_52 = arith.constant 5 : index
    %c0_53 = arith.constant 0 : index
    %34 = vector.load %arg25[%c5_52, %c0_53] : memref<22x2xf32, #tpu.memory_space<vmem>>, vector<16x2xf32>
    %c16_54 = arith.constant 16 : index
    %c10_55 = arith.constant 10 : index
    %35 = vector.load %arg26[%c16_54, %c10_55] : memref<32x14xf32, #tpu.memory_space<vmem>>, vector<16x2xf32>
    tpu.vector_store %arg26[%c16_54, %c10_55], %34 {strides = array<i32>} : memref<32x14xf32, #tpu.memory_space<vmem>>, vector<16x2xf32>,
    %c6_56 = arith.constant 6 : index
    %c0_57 = arith.constant 0 : index
    %36 = vector.load %arg25[%c6_56, %c0_57] : memref<22x2xf32, #tpu.memory_space<vmem>>, vector<16x2xf32>
    %c16_58 = arith.constant 16 : index
    %c12_59 = arith.constant 12 : index
    %37 = vector.load %arg26[%c16_58, %c12_59] : memref<32x14xf32, #tpu.memory_space<vmem>>, vector<16x2xf32>
    tpu.vector_store %arg26[%c16_58, %c12_59], %36 {strides = array<i32>} : memref<32x14xf32, #tpu.memory_space<vmem>>, vector<16x2xf32>,
    %c0_60 = arith.constant 0 : index
    %c0_61 = arith.constant 0 : index
    %38 = vector.load %arg26[%c0_60, %c0_61] : memref<32x14xf32, #tpu.memory_space<vmem>>, vector<32x14xf32>
    %c0_62 = arith.constant 0 : index
    %c0_63 = arith.constant 0 : index
    %39 = vector.load %arg2[%c0_62, %c0_63] : memref<14x32xf32, #tpu.memory_space<vmem>>, vector<14x32xf32>
    %cst_64 = arith.constant dense<0.000000e+00> : vector<32x32xf32>
    %40 = tpu.matmul %38, %39, %cst_64 {dimension_numbers = #tpu.dot_dimension_numbers<[1], [0], [0], [1], [0, 0, 1, 1], [], []>, precision = #tpu.contract_precision<fp32>} : vector<32x14xf32>, vector<14x32xf32>, vector<32x32xf32> -> vector<32x32xf32>
    %c0_65 = arith.constant 0 : index
    %c0_66 = arith.constant 0 : index
    %41 = vector.load %arg3[%c0_65, %c0_66] : memref<1x32xf32, #tpu.memory_space<vmem>>, vector<1x32xf32>
    %42 = vector.broadcast %41 : vector<1x32xf32> to vector<32x32xf32>
    %43 = arith.addf %40, %42 : vector<32x32xf32>
    %cst_67 = arith.constant 0.000000e+00 : f32
    %44 = vector.broadcast %cst_67 : f32 to vector<32x32xf32>
    %45 = arith.maximumf %43, %44 : vector<32x32xf32>
    %c0_68 = arith.constant 0 : index
    %c0_69 = arith.constant 0 : index
    %c0_70 = arith.constant 0 : index
    %46 = vector.load %arg4[%c0_68, %c0_69, %c0_70] : memref<3x96x32xf32, #tpu.memory_space<vmem>>, vector<1x96x32xf32>
    %47 = vector.shape_cast %46 : vector<1x96x32xf32> to vector<96x32xf32>
    %c0_71 = arith.constant 0 : index
    %c0_72 = arith.constant 0 : index
    %c0_73 = arith.constant 0 : index
    %48 = vector.load %arg5[%c0_71, %c0_72, %c0_73] : memref<3x1x32xf32, #tpu.memory_space<vmem>>, vector<1x1x32xf32>
    %49 = vector.shape_cast %48 : vector<1x1x32xf32> to vector<1x32xf32>
    %50 = vector.extract_strided_slice %45 {offsets = [0, 0], sizes = [16, 32], strides = [1, 1]} : vector<32x32xf32> to vector<16x32xf32>
    %c1_74 = arith.constant 1 : index
    %c0_75 = arith.constant 0 : index
    %51 = vector.load %arg27[%c1_74, %c0_75] : memref<18x32xf32, #tpu.memory_space<vmem>>, vector<16x32xf32>
    tpu.vector_store %arg27[%c1_74, %c0_75], %50 {strides = array<i32>} : memref<18x32xf32, #tpu.memory_space<vmem>>, vector<16x32xf32>,
    %c0_76 = arith.constant 0 : index
    %c0_77 = arith.constant 0 : index
    %52 = vector.load %arg27[%c0_76, %c0_77] : memref<18x32xf32, #tpu.memory_space<vmem>>, vector<16x32xf32>
    %c0_78 = arith.constant 0 : index
    %c0_79 = arith.constant 0 : index
    %53 = vector.load %arg28[%c0_78, %c0_79] : memref<32x96xf32, #tpu.memory_space<vmem>>, vector<16x32xf32>
    tpu.vector_store %arg28[%c0_78, %c0_79], %52 {strides = array<i32>} : memref<32x96xf32, #tpu.memory_space<vmem>>, vector<16x32xf32>,
    %c1_80 = arith.constant 1 : index
    %c0_81 = arith.constant 0 : index
    %54 = vector.load %arg27[%c1_80, %c0_81] : memref<18x32xf32, #tpu.memory_space<vmem>>, vector<16x32xf32>
    %c0_82 = arith.constant 0 : index
    %c32 = arith.constant 32 : index
    %55 = vector.load %arg28[%c0_82, %c32] : memref<32x96xf32, #tpu.memory_space<vmem>>, vector<16x32xf32>
    tpu.vector_store %arg28[%c0_82, %c32], %54 {strides = array<i32>} : memref<32x96xf32, #tpu.memory_space<vmem>>, vector<16x32xf32>,
    %c2_83 = arith.constant 2 : index
    %c0_84 = arith.constant 0 : index
    %56 = vector.load %arg27[%c2_83, %c0_84] : memref<18x32xf32, #tpu.memory_space<vmem>>, vector<16x32xf32>
    %c0_85 = arith.constant 0 : index
    %c64 = arith.constant 64 : index
    %57 = vector.load %arg28[%c0_85, %c64] : memref<32x96xf32, #tpu.memory_space<vmem>>, vector<16x32xf32>
    tpu.vector_store %arg28[%c0_85, %c64], %56 {strides = array<i32>} : memref<32x96xf32, #tpu.memory_space<vmem>>, vector<16x32xf32>,
    %58 = vector.extract_strided_slice %45 {offsets = [16, 0], sizes = [16, 32], strides = [1, 1]} : vector<32x32xf32> to vector<16x32xf32>
    %c1_86 = arith.constant 1 : index
    %c0_87 = arith.constant 0 : index
    %59 = vector.load %arg27[%c1_86, %c0_87] : memref<18x32xf32, #tpu.memory_space<vmem>>, vector<16x32xf32>
    tpu.vector_store %arg27[%c1_86, %c0_87], %58 {strides = array<i32>} : memref<18x32xf32, #tpu.memory_space<vmem>>, vector<16x32xf32>,
    %c0_88 = arith.constant 0 : index
    %c0_89 = arith.constant 0 : index
    %60 = vector.load %arg27[%c0_88, %c0_89] : memref<18x32xf32, #tpu.memory_space<vmem>>, vector<16x32xf32>
    %c16_90 = arith.constant 16 : index
    %c0_91 = arith.constant 0 : index
    %61 = vector.load %arg28[%c16_90, %c0_91] : memref<32x96xf32, #tpu.memory_space<vmem>>, vector<16x32xf32>
    tpu.vector_store %arg28[%c16_90, %c0_91], %60 {strides = array<i32>} : memref<32x96xf32, #tpu.memory_space<vmem>>, vector<16x32xf32>,
    %c1_92 = arith.constant 1 : index
    %c0_93 = arith.constant 0 : index
    %62 = vector.load %arg27[%c1_92, %c0_93] : memref<18x32xf32, #tpu.memory_space<vmem>>, vector<16x32xf32>
    %c16_94 = arith.constant 16 : index
    %c32_95 = arith.constant 32 : index
    %63 = vector.load %arg28[%c16_94, %c32_95] : memref<32x96xf32, #tpu.memory_space<vmem>>, vector<16x32xf32>
    tpu.vector_store %arg28[%c16_94, %c32_95], %62 {strides = array<i32>} : memref<32x96xf32, #tpu.memory_space<vmem>>, vector<16x32xf32>,
    %c2_96 = arith.constant 2 : index
    %c0_97 = arith.constant 0 : index
    %64 = vector.load %arg27[%c2_96, %c0_97] : memref<18x32xf32, #tpu.memory_space<vmem>>, vector<16x32xf32>
    %c16_98 = arith.constant 16 : index
    %c64_99 = arith.constant 64 : index
    %65 = vector.load %arg28[%c16_98, %c64_99] : memref<32x96xf32, #tpu.memory_space<vmem>>, vector<16x32xf32>
    tpu.vector_store %arg28[%c16_98, %c64_99], %64 {strides = array<i32>} : memref<32x96xf32, #tpu.memory_space<vmem>>, vector<16x32xf32>,
    %c0_100 = arith.constant 0 : index
    %c0_101 = arith.constant 0 : index
    %66 = vector.load %arg28[%c0_100, %c0_101] : memref<32x96xf32, #tpu.memory_space<vmem>>, vector<32x96xf32>
    %cst_102 = arith.constant dense<0.000000e+00> : vector<32x32xf32>
    %67 = tpu.matmul %66, %47, %cst_102 {dimension_numbers = #tpu.dot_dimension_numbers<[1], [0], [0], [1], [0, 0, 1, 1], [], []>, precision = #tpu.contract_precision<fp32>} : vector<32x96xf32>, vector<96x32xf32>, vector<32x32xf32> -> vector<32x32xf32>
    %68 = vector.broadcast %49 : vector<1x32xf32> to vector<32x32xf32>
    %69 = arith.addf %67, %68 : vector<32x32xf32>
    %cst_103 = arith.constant 0.000000e+00 : f32
    %70 = vector.broadcast %cst_103 : f32 to vector<32x32xf32>
    %71 = arith.maximumf %69, %70 : vector<32x32xf32>
    %c0_104 = arith.constant 0 : index
    %c0_105 = arith.constant 0 : index
    %c0_106 = arith.constant 0 : index
    %72 = vector.load %arg6[%c0_104, %c0_105, %c0_106] : memref<3x96x32xf32, #tpu.memory_space<vmem>>, vector<1x96x32xf32>
    %73 = vector.shape_cast %72 : vector<1x96x32xf32> to vector<96x32xf32>
    %c0_107 = arith.constant 0 : index
    %c0_108 = arith.constant 0 : index
    %c0_109 = arith.constant 0 : index
    %74 = vector.load %arg7[%c0_107, %c0_108, %c0_109] : memref<3x1x32xf32, #tpu.memory_space<vmem>>, vector<1x1x32xf32>
    %75 = vector.shape_cast %74 : vector<1x1x32xf32> to vector<1x32xf32>
    %76 = vector.extract_strided_slice %71 {offsets = [0, 0], sizes = [16, 32], strides = [1, 1]} : vector<32x32xf32> to vector<16x32xf32>
    %c1_110 = arith.constant 1 : index
    %c0_111 = arith.constant 0 : index
    %77 = vector.load %arg27[%c1_110, %c0_111] : memref<18x32xf32, #tpu.memory_space<vmem>>, vector<16x32xf32>
    tpu.vector_store %arg27[%c1_110, %c0_111], %76 {strides = array<i32>} : memref<18x32xf32, #tpu.memory_space<vmem>>, vector<16x32xf32>,
    %c0_112 = arith.constant 0 : index
    %c0_113 = arith.constant 0 : index
    %78 = vector.load %arg27[%c0_112, %c0_113] : memref<18x32xf32, #tpu.memory_space<vmem>>, vector<16x32xf32>
    %c0_114 = arith.constant 0 : index
    %c0_115 = arith.constant 0 : index
    %79 = vector.load %arg28[%c0_114, %c0_115] : memref<32x96xf32, #tpu.memory_space<vmem>>, vector<16x32xf32>
    tpu.vector_store %arg28[%c0_114, %c0_115], %78 {strides = array<i32>} : memref<32x96xf32, #tpu.memory_space<vmem>>, vector<16x32xf32>,
    %c1_116 = arith.constant 1 : index
    %c0_117 = arith.constant 0 : index
    %80 = vector.load %arg27[%c1_116, %c0_117] : memref<18x32xf32, #tpu.memory_space<vmem>>, vector<16x32xf32>
    %c0_118 = arith.constant 0 : index
    %c32_119 = arith.constant 32 : index
    %81 = vector.load %arg28[%c0_118, %c32_119] : memref<32x96xf32, #tpu.memory_space<vmem>>, vector<16x32xf32>
    tpu.vector_store %arg28[%c0_118, %c32_119], %80 {strides = array<i32>} : memref<32x96xf32, #tpu.memory_space<vmem>>, vector<16x32xf32>,
    %c2_120 = arith.constant 2 : index
    %c0_121 = arith.constant 0 : index
    %82 = vector.load %arg27[%c2_120, %c0_121] : memref<18x32xf32, #tpu.memory_space<vmem>>, vector<16x32xf32>
    %c0_122 = arith.constant 0 : index
    %c64_123 = arith.constant 64 : index
    %83 = vector.load %arg28[%c0_122, %c64_123] : memref<32x96xf32, #tpu.memory_space<vmem>>, vector<16x32xf32>
    tpu.vector_store %arg28[%c0_122, %c64_123], %82 {strides = array<i32>} : memref<32x96xf32, #tpu.memory_space<vmem>>, vector<16x32xf32>,
    %84 = vector.extract_strided_slice %71 {offsets = [16, 0], sizes = [16, 32], strides = [1, 1]} : vector<32x32xf32> to vector<16x32xf32>
    %c1_124 = arith.constant 1 : index
    %c0_125 = arith.constant 0 : index
    %85 = vector.load %arg27[%c1_124, %c0_125] : memref<18x32xf32, #tpu.memory_space<vmem>>, vector<16x32xf32>
    tpu.vector_store %arg27[%c1_124, %c0_125], %84 {strides = array<i32>} : memref<18x32xf32, #tpu.memory_space<vmem>>, vector<16x32xf32>,
    %c0_126 = arith.constant 0 : index
    %c0_127 = arith.constant 0 : index
    %86 = vector.load %arg27[%c0_126, %c0_127] : memref<18x32xf32, #tpu.memory_space<vmem>>, vector<16x32xf32>
    %c16_128 = arith.constant 16 : index
    %c0_129 = arith.constant 0 : index
    %87 = vector.load %arg28[%c16_128, %c0_129] : memref<32x96xf32, #tpu.memory_space<vmem>>, vector<16x32xf32>
    tpu.vector_store %arg28[%c16_128, %c0_129], %86 {strides = array<i32>} : memref<32x96xf32, #tpu.memory_space<vmem>>, vector<16x32xf32>,
    %c1_130 = arith.constant 1 : index
    %c0_131 = arith.constant 0 : index
    %88 = vector.load %arg27[%c1_130, %c0_131] : memref<18x32xf32, #tpu.memory_space<vmem>>, vector<16x32xf32>
    %c16_132 = arith.constant 16 : index
    %c32_133 = arith.constant 32 : index
    %89 = vector.load %arg28[%c16_132, %c32_133] : memref<32x96xf32, #tpu.memory_space<vmem>>, vector<16x32xf32>
    tpu.vector_store %arg28[%c16_132, %c32_133], %88 {strides = array<i32>} : memref<32x96xf32, #tpu.memory_space<vmem>>, vector<16x32xf32>,
    %c2_134 = arith.constant 2 : index
    %c0_135 = arith.constant 0 : index
    %90 = vector.load %arg27[%c2_134, %c0_135] : memref<18x32xf32, #tpu.memory_space<vmem>>, vector<16x32xf32>
    %c16_136 = arith.constant 16 : index
    %c64_137 = arith.constant 64 : index
    %91 = vector.load %arg28[%c16_136, %c64_137] : memref<32x96xf32, #tpu.memory_space<vmem>>, vector<16x32xf32>
    tpu.vector_store %arg28[%c16_136, %c64_137], %90 {strides = array<i32>} : memref<32x96xf32, #tpu.memory_space<vmem>>, vector<16x32xf32>,
    %c0_138 = arith.constant 0 : index
    %c0_139 = arith.constant 0 : index
    %92 = vector.load %arg28[%c0_138, %c0_139] : memref<32x96xf32, #tpu.memory_space<vmem>>, vector<32x96xf32>
    %cst_140 = arith.constant dense<0.000000e+00> : vector<32x32xf32>
    %93 = tpu.matmul %92, %73, %cst_140 {dimension_numbers = #tpu.dot_dimension_numbers<[1], [0], [0], [1], [0, 0, 1, 1], [], []>, precision = #tpu.contract_precision<fp32>} : vector<32x96xf32>, vector<96x32xf32>, vector<32x32xf32> -> vector<32x32xf32>
    %94 = vector.broadcast %75 : vector<1x32xf32> to vector<32x32xf32>
    %95 = arith.addf %93, %94 : vector<32x32xf32>
    %96 = arith.addf %95, %45 : vector<32x32xf32>
    %cst_141 = arith.constant 0.000000e+00 : f32
    %97 = vector.broadcast %cst_141 : f32 to vector<32x32xf32>
    %98 = arith.maximumf %96, %97 : vector<32x32xf32>
    %c1_142 = arith.constant 1 : index
    %c0_143 = arith.constant 0 : index
    %c0_144 = arith.constant 0 : index
    %99 = vector.load %arg4[%c1_142, %c0_143, %c0_144] : memref<3x96x32xf32, #tpu.memory_space<vmem>>, vector<1x96x32xf32>
    %100 = vector.shape_cast %99 : vector<1x96x32xf32> to vector<96x32xf32>
    %c1_145 = arith.constant 1 : index
    %c0_146 = arith.constant 0 : index
    %c0_147 = arith.constant 0 : index
    %101 = vector.load %arg5[%c1_145, %c0_146, %c0_147] : memref<3x1x32xf32, #tpu.memory_space<vmem>>, vector<1x1x32xf32>
    %102 = vector.shape_cast %101 : vector<1x1x32xf32> to vector<1x32xf32>
    %103 = vector.extract_strided_slice %98 {offsets = [0, 0], sizes = [16, 32], strides = [1, 1]} : vector<32x32xf32> to vector<16x32xf32>
    %c1_148 = arith.constant 1 : index
    %c0_149 = arith.constant 0 : index
    %104 = vector.load %arg27[%c1_148, %c0_149] : memref<18x32xf32, #tpu.memory_space<vmem>>, vector<16x32xf32>
    tpu.vector_store %arg27[%c1_148, %c0_149], %103 {strides = array<i32>} : memref<18x32xf32, #tpu.memory_space<vmem>>, vector<16x32xf32>,
    %c0_150 = arith.constant 0 : index
    %c0_151 = arith.constant 0 : index
    %105 = vector.load %arg27[%c0_150, %c0_151] : memref<18x32xf32, #tpu.memory_space<vmem>>, vector<16x32xf32>
    %c0_152 = arith.constant 0 : index
    %c0_153 = arith.constant 0 : index
    %106 = vector.load %arg28[%c0_152, %c0_153] : memref<32x96xf32, #tpu.memory_space<vmem>>, vector<16x32xf32>
    tpu.vector_store %arg28[%c0_152, %c0_153], %105 {strides = array<i32>} : memref<32x96xf32, #tpu.memory_space<vmem>>, vector<16x32xf32>,
    %c1_154 = arith.constant 1 : index
    %c0_155 = arith.constant 0 : index
    %107 = vector.load %arg27[%c1_154, %c0_155] : memref<18x32xf32, #tpu.memory_space<vmem>>, vector<16x32xf32>
    %c0_156 = arith.constant 0 : index
    %c32_157 = arith.constant 32 : index
    %108 = vector.load %arg28[%c0_156, %c32_157] : memref<32x96xf32, #tpu.memory_space<vmem>>, vector<16x32xf32>
    tpu.vector_store %arg28[%c0_156, %c32_157], %107 {strides = array<i32>} : memref<32x96xf32, #tpu.memory_space<vmem>>, vector<16x32xf32>,
    %c2_158 = arith.constant 2 : index
    %c0_159 = arith.constant 0 : index
    %109 = vector.load %arg27[%c2_158, %c0_159] : memref<18x32xf32, #tpu.memory_space<vmem>>, vector<16x32xf32>
    %c0_160 = arith.constant 0 : index
    %c64_161 = arith.constant 64 : index
    %110 = vector.load %arg28[%c0_160, %c64_161] : memref<32x96xf32, #tpu.memory_space<vmem>>, vector<16x32xf32>
    tpu.vector_store %arg28[%c0_160, %c64_161], %109 {strides = array<i32>} : memref<32x96xf32, #tpu.memory_space<vmem>>, vector<16x32xf32>,
    %111 = vector.extract_strided_slice %98 {offsets = [16, 0], sizes = [16, 32], strides = [1, 1]} : vector<32x32xf32> to vector<16x32xf32>
    %c1_162 = arith.constant 1 : index
    %c0_163 = arith.constant 0 : index
    %112 = vector.load %arg27[%c1_162, %c0_163] : memref<18x32xf32, #tpu.memory_space<vmem>>, vector<16x32xf32>
    tpu.vector_store %arg27[%c1_162, %c0_163], %111 {strides = array<i32>} : memref<18x32xf32, #tpu.memory_space<vmem>>, vector<16x32xf32>,
    %c0_164 = arith.constant 0 : index
    %c0_165 = arith.constant 0 : index
    %113 = vector.load %arg27[%c0_164, %c0_165] : memref<18x32xf32, #tpu.memory_space<vmem>>, vector<16x32xf32>
    %c16_166 = arith.constant 16 : index
    %c0_167 = arith.constant 0 : index
    %114 = vector.load %arg28[%c16_166, %c0_167] : memref<32x96xf32, #tpu.memory_space<vmem>>, vector<16x32xf32>
    tpu.vector_store %arg28[%c16_166, %c0_167], %113 {strides = array<i32>} : memref<32x96xf32, #tpu.memory_space<vmem>>, vector<16x32xf32>,
    %c1_168 = arith.constant 1 : index
    %c0_169 = arith.constant 0 : index
    %115 = vector.load %arg27[%c1_168, %c0_169] : memref<18x32xf32, #tpu.memory_space<vmem>>, vector<16x32xf32>
    %c16_170 = arith.constant 16 : index
    %c32_171 = arith.constant 32 : index
    %116 = vector.load %arg28[%c16_170, %c32_171] : memref<32x96xf32, #tpu.memory_space<vmem>>, vector<16x32xf32>
    tpu.vector_store %arg28[%c16_170, %c32_171], %115 {strides = array<i32>} : memref<32x96xf32, #tpu.memory_space<vmem>>, vector<16x32xf32>,
    %c2_172 = arith.constant 2 : index
    %c0_173 = arith.constant 0 : index
    %117 = vector.load %arg27[%c2_172, %c0_173] : memref<18x32xf32, #tpu.memory_space<vmem>>, vector<16x32xf32>
    %c16_174 = arith.constant 16 : index
    %c64_175 = arith.constant 64 : index
    %118 = vector.load %arg28[%c16_174, %c64_175] : memref<32x96xf32, #tpu.memory_space<vmem>>, vector<16x32xf32>
    tpu.vector_store %arg28[%c16_174, %c64_175], %117 {strides = array<i32>} : memref<32x96xf32, #tpu.memory_space<vmem>>, vector<16x32xf32>,
    %c0_176 = arith.constant 0 : index
    %c0_177 = arith.constant 0 : index
    %119 = vector.load %arg28[%c0_176, %c0_177] : memref<32x96xf32, #tpu.memory_space<vmem>>, vector<32x96xf32>
    %cst_178 = arith.constant dense<0.000000e+00> : vector<32x32xf32>
    %120 = tpu.matmul %119, %100, %cst_178 {dimension_numbers = #tpu.dot_dimension_numbers<[1], [0], [0], [1], [0, 0, 1, 1], [], []>, precision = #tpu.contract_precision<fp32>} : vector<32x96xf32>, vector<96x32xf32>, vector<32x32xf32> -> vector<32x32xf32>
    %121 = vector.broadcast %102 : vector<1x32xf32> to vector<32x32xf32>
    %122 = arith.addf %120, %121 : vector<32x32xf32>
    %cst_179 = arith.constant 0.000000e+00 : f32
    %123 = vector.broadcast %cst_179 : f32 to vector<32x32xf32>
    %124 = arith.maximumf %122, %123 : vector<32x32xf32>
    %c1_180 = arith.constant 1 : index
    %c0_181 = arith.constant 0 : index
    %c0_182 = arith.constant 0 : index
    %125 = vector.load %arg6[%c1_180, %c0_181, %c0_182] : memref<3x96x32xf32, #tpu.memory_space<vmem>>, vector<1x96x32xf32>
    %126 = vector.shape_cast %125 : vector<1x96x32xf32> to vector<96x32xf32>
    %c1_183 = arith.constant 1 : index
    %c0_184 = arith.constant 0 : index
    %c0_185 = arith.constant 0 : index
    %127 = vector.load %arg7[%c1_183, %c0_184, %c0_185] : memref<3x1x32xf32, #tpu.memory_space<vmem>>, vector<1x1x32xf32>
    %128 = vector.shape_cast %127 : vector<1x1x32xf32> to vector<1x32xf32>
    %129 = vector.extract_strided_slice %124 {offsets = [0, 0], sizes = [16, 32], strides = [1, 1]} : vector<32x32xf32> to vector<16x32xf32>
    %c1_186 = arith.constant 1 : index
    %c0_187 = arith.constant 0 : index
    %130 = vector.load %arg27[%c1_186, %c0_187] : memref<18x32xf32, #tpu.memory_space<vmem>>, vector<16x32xf32>
    tpu.vector_store %arg27[%c1_186, %c0_187], %129 {strides = array<i32>} : memref<18x32xf32, #tpu.memory_space<vmem>>, vector<16x32xf32>,
    %c0_188 = arith.constant 0 : index
    %c0_189 = arith.constant 0 : index
    %131 = vector.load %arg27[%c0_188, %c0_189] : memref<18x32xf32, #tpu.memory_space<vmem>>, vector<16x32xf32>
    %c0_190 = arith.constant 0 : index
    %c0_191 = arith.constant 0 : index
    %132 = vector.load %arg28[%c0_190, %c0_191] : memref<32x96xf32, #tpu.memory_space<vmem>>, vector<16x32xf32>
    tpu.vector_store %arg28[%c0_190, %c0_191], %131 {strides = array<i32>} : memref<32x96xf32, #tpu.memory_space<vmem>>, vector<16x32xf32>,
    %c1_192 = arith.constant 1 : index
    %c0_193 = arith.constant 0 : index
    %133 = vector.load %arg27[%c1_192, %c0_193] : memref<18x32xf32, #tpu.memory_space<vmem>>, vector<16x32xf32>
    %c0_194 = arith.constant 0 : index
    %c32_195 = arith.constant 32 : index
    %134 = vector.load %arg28[%c0_194, %c32_195] : memref<32x96xf32, #tpu.memory_space<vmem>>, vector<16x32xf32>
    tpu.vector_store %arg28[%c0_194, %c32_195], %133 {strides = array<i32>} : memref<32x96xf32, #tpu.memory_space<vmem>>, vector<16x32xf32>,
    %c2_196 = arith.constant 2 : index
    %c0_197 = arith.constant 0 : index
    %135 = vector.load %arg27[%c2_196, %c0_197] : memref<18x32xf32, #tpu.memory_space<vmem>>, vector<16x32xf32>
    %c0_198 = arith.constant 0 : index
    %c64_199 = arith.constant 64 : index
    %136 = vector.load %arg28[%c0_198, %c64_199] : memref<32x96xf32, #tpu.memory_space<vmem>>, vector<16x32xf32>
    tpu.vector_store %arg28[%c0_198, %c64_199], %135 {strides = array<i32>} : memref<32x96xf32, #tpu.memory_space<vmem>>, vector<16x32xf32>,
    %137 = vector.extract_strided_slice %124 {offsets = [16, 0], sizes = [16, 32], strides = [1, 1]} : vector<32x32xf32> to vector<16x32xf32>
    %c1_200 = arith.constant 1 : index
    %c0_201 = arith.constant 0 : index
    %138 = vector.load %arg27[%c1_200, %c0_201] : memref<18x32xf32, #tpu.memory_space<vmem>>, vector<16x32xf32>
    tpu.vector_store %arg27[%c1_200, %c0_201], %137 {strides = array<i32>} : memref<18x32xf32, #tpu.memory_space<vmem>>, vector<16x32xf32>,
    %c0_202 = arith.constant 0 : index
    %c0_203 = arith.constant 0 : index
    %139 = vector.load %arg27[%c0_202, %c0_203] : memref<18x32xf32, #tpu.memory_space<vmem>>, vector<16x32xf32>
    %c16_204 = arith.constant 16 : index
    %c0_205 = arith.constant 0 : index
    %140 = vector.load %arg28[%c16_204, %c0_205] : memref<32x96xf32, #tpu.memory_space<vmem>>, vector<16x32xf32>
    tpu.vector_store %arg28[%c16_204, %c0_205], %139 {strides = array<i32>} : memref<32x96xf32, #tpu.memory_space<vmem>>, vector<16x32xf32>,
    %c1_206 = arith.constant 1 : index
    %c0_207 = arith.constant 0 : index
    %141 = vector.load %arg27[%c1_206, %c0_207] : memref<18x32xf32, #tpu.memory_space<vmem>>, vector<16x32xf32>
    %c16_208 = arith.constant 16 : index
    %c32_209 = arith.constant 32 : index
    %142 = vector.load %arg28[%c16_208, %c32_209] : memref<32x96xf32, #tpu.memory_space<vmem>>, vector<16x32xf32>
    tpu.vector_store %arg28[%c16_208, %c32_209], %141 {strides = array<i32>} : memref<32x96xf32, #tpu.memory_space<vmem>>, vector<16x32xf32>,
    %c2_210 = arith.constant 2 : index
    %c0_211 = arith.constant 0 : index
    %143 = vector.load %arg27[%c2_210, %c0_211] : memref<18x32xf32, #tpu.memory_space<vmem>>, vector<16x32xf32>
    %c16_212 = arith.constant 16 : index
    %c64_213 = arith.constant 64 : index
    %144 = vector.load %arg28[%c16_212, %c64_213] : memref<32x96xf32, #tpu.memory_space<vmem>>, vector<16x32xf32>
    tpu.vector_store %arg28[%c16_212, %c64_213], %143 {strides = array<i32>} : memref<32x96xf32, #tpu.memory_space<vmem>>, vector<16x32xf32>,
    %c0_214 = arith.constant 0 : index
    %c0_215 = arith.constant 0 : index
    %145 = vector.load %arg28[%c0_214, %c0_215] : memref<32x96xf32, #tpu.memory_space<vmem>>, vector<32x96xf32>
    %cst_216 = arith.constant dense<0.000000e+00> : vector<32x32xf32>
    %146 = tpu.matmul %145, %126, %cst_216 {dimension_numbers = #tpu.dot_dimension_numbers<[1], [0], [0], [1], [0, 0, 1, 1], [], []>, precision = #tpu.contract_precision<fp32>} : vector<32x96xf32>, vector<96x32xf32>, vector<32x32xf32> -> vector<32x32xf32>
    %147 = vector.broadcast %128 : vector<1x32xf32> to vector<32x32xf32>
    %148 = arith.addf %146, %147 : vector<32x32xf32>
    %149 = arith.addf %148, %98 : vector<32x32xf32>
    %cst_217 = arith.constant 0.000000e+00 : f32
    %150 = vector.broadcast %cst_217 : f32 to vector<32x32xf32>
    %151 = arith.maximumf %149, %150 : vector<32x32xf32>
    %c2_218 = arith.constant 2 : index
    %c0_219 = arith.constant 0 : index
    %c0_220 = arith.constant 0 : index
    %152 = vector.load %arg4[%c2_218, %c0_219, %c0_220] : memref<3x96x32xf32, #tpu.memory_space<vmem>>, vector<1x96x32xf32>
    %153 = vector.shape_cast %152 : vector<1x96x32xf32> to vector<96x32xf32>
    %c2_221 = arith.constant 2 : index
    %c0_222 = arith.constant 0 : index
    %c0_223 = arith.constant 0 : index
    %154 = vector.load %arg5[%c2_221, %c0_222, %c0_223] : memref<3x1x32xf32, #tpu.memory_space<vmem>>, vector<1x1x32xf32>
    %155 = vector.shape_cast %154 : vector<1x1x32xf32> to vector<1x32xf32>
    %156 = vector.extract_strided_slice %151 {offsets = [0, 0], sizes = [16, 32], strides = [1, 1]} : vector<32x32xf32> to vector<16x32xf32>
    %c1_224 = arith.constant 1 : index
    %c0_225 = arith.constant 0 : index
    %157 = vector.load %arg27[%c1_224, %c0_225] : memref<18x32xf32, #tpu.memory_space<vmem>>, vector<16x32xf32>
    tpu.vector_store %arg27[%c1_224, %c0_225], %156 {strides = array<i32>} : memref<18x32xf32, #tpu.memory_space<vmem>>, vector<16x32xf32>,
    %c0_226 = arith.constant 0 : index
    %c0_227 = arith.constant 0 : index
    %158 = vector.load %arg27[%c0_226, %c0_227] : memref<18x32xf32, #tpu.memory_space<vmem>>, vector<16x32xf32>
    %c0_228 = arith.constant 0 : index
    %c0_229 = arith.constant 0 : index
    %159 = vector.load %arg28[%c0_228, %c0_229] : memref<32x96xf32, #tpu.memory_space<vmem>>, vector<16x32xf32>
    tpu.vector_store %arg28[%c0_228, %c0_229], %158 {strides = array<i32>} : memref<32x96xf32, #tpu.memory_space<vmem>>, vector<16x32xf32>,
    %c1_230 = arith.constant 1 : index
    %c0_231 = arith.constant 0 : index
    %160 = vector.load %arg27[%c1_230, %c0_231] : memref<18x32xf32, #tpu.memory_space<vmem>>, vector<16x32xf32>
    %c0_232 = arith.constant 0 : index
    %c32_233 = arith.constant 32 : index
    %161 = vector.load %arg28[%c0_232, %c32_233] : memref<32x96xf32, #tpu.memory_space<vmem>>, vector<16x32xf32>
    tpu.vector_store %arg28[%c0_232, %c32_233], %160 {strides = array<i32>} : memref<32x96xf32, #tpu.memory_space<vmem>>, vector<16x32xf32>,
    %c2_234 = arith.constant 2 : index
    %c0_235 = arith.constant 0 : index
    %162 = vector.load %arg27[%c2_234, %c0_235] : memref<18x32xf32, #tpu.memory_space<vmem>>, vector<16x32xf32>
    %c0_236 = arith.constant 0 : index
    %c64_237 = arith.constant 64 : index
    %163 = vector.load %arg28[%c0_236, %c64_237] : memref<32x96xf32, #tpu.memory_space<vmem>>, vector<16x32xf32>
    tpu.vector_store %arg28[%c0_236, %c64_237], %162 {strides = array<i32>} : memref<32x96xf32, #tpu.memory_space<vmem>>, vector<16x32xf32>,
    %164 = vector.extract_strided_slice %151 {offsets = [16, 0], sizes = [16, 32], strides = [1, 1]} : vector<32x32xf32> to vector<16x32xf32>
    %c1_238 = arith.constant 1 : index
    %c0_239 = arith.constant 0 : index
    %165 = vector.load %arg27[%c1_238, %c0_239] : memref<18x32xf32, #tpu.memory_space<vmem>>, vector<16x32xf32>
    tpu.vector_store %arg27[%c1_238, %c0_239], %164 {strides = array<i32>} : memref<18x32xf32, #tpu.memory_space<vmem>>, vector<16x32xf32>,
    %c0_240 = arith.constant 0 : index
    %c0_241 = arith.constant 0 : index
    %166 = vector.load %arg27[%c0_240, %c0_241] : memref<18x32xf32, #tpu.memory_space<vmem>>, vector<16x32xf32>
    %c16_242 = arith.constant 16 : index
    %c0_243 = arith.constant 0 : index
    %167 = vector.load %arg28[%c16_242, %c0_243] : memref<32x96xf32, #tpu.memory_space<vmem>>, vector<16x32xf32>
    tpu.vector_store %arg28[%c16_242, %c0_243], %166 {strides = array<i32>} : memref<32x96xf32, #tpu.memory_space<vmem>>, vector<16x32xf32>,
    %c1_244 = arith.constant 1 : index
    %c0_245 = arith.constant 0 : index
    %168 = vector.load %arg27[%c1_244, %c0_245] : memref<18x32xf32, #tpu.memory_space<vmem>>, vector<16x32xf32>
    %c16_246 = arith.constant 16 : index
    %c32_247 = arith.constant 32 : index
    %169 = vector.load %arg28[%c16_246, %c32_247] : memref<32x96xf32, #tpu.memory_space<vmem>>, vector<16x32xf32>
    tpu.vector_store %arg28[%c16_246, %c32_247], %168 {strides = array<i32>} : memref<32x96xf32, #tpu.memory_space<vmem>>, vector<16x32xf32>,
    %c2_248 = arith.constant 2 : index
    %c0_249 = arith.constant 0 : index
    %170 = vector.load %arg27[%c2_248, %c0_249] : memref<18x32xf32, #tpu.memory_space<vmem>>, vector<16x32xf32>
    %c16_250 = arith.constant 16 : index
    %c64_251 = arith.constant 64 : index
    %171 = vector.load %arg28[%c16_250, %c64_251] : memref<32x96xf32, #tpu.memory_space<vmem>>, vector<16x32xf32>
    tpu.vector_store %arg28[%c16_250, %c64_251], %170 {strides = array<i32>} : memref<32x96xf32, #tpu.memory_space<vmem>>, vector<16x32xf32>,
    %c0_252 = arith.constant 0 : index
    %c0_253 = arith.constant 0 : index
    %172 = vector.load %arg28[%c0_252, %c0_253] : memref<32x96xf32, #tpu.memory_space<vmem>>, vector<32x96xf32>
    %cst_254 = arith.constant dense<0.000000e+00> : vector<32x32xf32>
    %173 = tpu.matmul %172, %153, %cst_254 {dimension_numbers = #tpu.dot_dimension_numbers<[1], [0], [0], [1], [0, 0, 1, 1], [], []>, precision = #tpu.contract_precision<fp32>} : vector<32x96xf32>, vector<96x32xf32>, vector<32x32xf32> -> vector<32x32xf32>
    %174 = vector.broadcast %155 : vector<1x32xf32> to vector<32x32xf32>
    %175 = arith.addf %173, %174 : vector<32x32xf32>
    %cst_255 = arith.constant 0.000000e+00 : f32
    %176 = vector.broadcast %cst_255 : f32 to vector<32x32xf32>
    %177 = arith.maximumf %175, %176 : vector<32x32xf32>
    %c2_256 = arith.constant 2 : index
    %c0_257 = arith.constant 0 : index
    %c0_258 = arith.constant 0 : index
    %178 = vector.load %arg6[%c2_256, %c0_257, %c0_258] : memref<3x96x32xf32, #tpu.memory_space<vmem>>, vector<1x96x32xf32>
    %179 = vector.shape_cast %178 : vector<1x96x32xf32> to vector<96x32xf32>
    %c2_259 = arith.constant 2 : index
    %c0_260 = arith.constant 0 : index
    %c0_261 = arith.constant 0 : index
    %180 = vector.load %arg7[%c2_259, %c0_260, %c0_261] : memref<3x1x32xf32, #tpu.memory_space<vmem>>, vector<1x1x32xf32>
    %181 = vector.shape_cast %180 : vector<1x1x32xf32> to vector<1x32xf32>
    %182 = vector.extract_strided_slice %177 {offsets = [0, 0], sizes = [16, 32], strides = [1, 1]} : vector<32x32xf32> to vector<16x32xf32>
    %c1_262 = arith.constant 1 : index
    %c0_263 = arith.constant 0 : index
    %183 = vector.load %arg27[%c1_262, %c0_263] : memref<18x32xf32, #tpu.memory_space<vmem>>, vector<16x32xf32>
    tpu.vector_store %arg27[%c1_262, %c0_263], %182 {strides = array<i32>} : memref<18x32xf32, #tpu.memory_space<vmem>>, vector<16x32xf32>,
    %c0_264 = arith.constant 0 : index
    %c0_265 = arith.constant 0 : index
    %184 = vector.load %arg27[%c0_264, %c0_265] : memref<18x32xf32, #tpu.memory_space<vmem>>, vector<16x32xf32>
    %c0_266 = arith.constant 0 : index
    %c0_267 = arith.constant 0 : index
    %185 = vector.load %arg28[%c0_266, %c0_267] : memref<32x96xf32, #tpu.memory_space<vmem>>, vector<16x32xf32>
    tpu.vector_store %arg28[%c0_266, %c0_267], %184 {strides = array<i32>} : memref<32x96xf32, #tpu.memory_space<vmem>>, vector<16x32xf32>,
    %c1_268 = arith.constant 1 : index
    %c0_269 = arith.constant 0 : index
    %186 = vector.load %arg27[%c1_268, %c0_269] : memref<18x32xf32, #tpu.memory_space<vmem>>, vector<16x32xf32>
    %c0_270 = arith.constant 0 : index
    %c32_271 = arith.constant 32 : index
    %187 = vector.load %arg28[%c0_270, %c32_271] : memref<32x96xf32, #tpu.memory_space<vmem>>, vector<16x32xf32>
    tpu.vector_store %arg28[%c0_270, %c32_271], %186 {strides = array<i32>} : memref<32x96xf32, #tpu.memory_space<vmem>>, vector<16x32xf32>,
    %c2_272 = arith.constant 2 : index
    %c0_273 = arith.constant 0 : index
    %188 = vector.load %arg27[%c2_272, %c0_273] : memref<18x32xf32, #tpu.memory_space<vmem>>, vector<16x32xf32>
    %c0_274 = arith.constant 0 : index
    %c64_275 = arith.constant 64 : index
    %189 = vector.load %arg28[%c0_274, %c64_275] : memref<32x96xf32, #tpu.memory_space<vmem>>, vector<16x32xf32>
    tpu.vector_store %arg28[%c0_274, %c64_275], %188 {strides = array<i32>} : memref<32x96xf32, #tpu.memory_space<vmem>>, vector<16x32xf32>,
    %190 = vector.extract_strided_slice %177 {offsets = [16, 0], sizes = [16, 32], strides = [1, 1]} : vector<32x32xf32> to vector<16x32xf32>
    %c1_276 = arith.constant 1 : index
    %c0_277 = arith.constant 0 : index
    %191 = vector.load %arg27[%c1_276, %c0_277] : memref<18x32xf32, #tpu.memory_space<vmem>>, vector<16x32xf32>
    tpu.vector_store %arg27[%c1_276, %c0_277], %190 {strides = array<i32>} : memref<18x32xf32, #tpu.memory_space<vmem>>, vector<16x32xf32>,
    %c0_278 = arith.constant 0 : index
    %c0_279 = arith.constant 0 : index
    %192 = vector.load %arg27[%c0_278, %c0_279] : memref<18x32xf32, #tpu.memory_space<vmem>>, vector<16x32xf32>
    %c16_280 = arith.constant 16 : index
    %c0_281 = arith.constant 0 : index
    %193 = vector.load %arg28[%c16_280, %c0_281] : memref<32x96xf32, #tpu.memory_space<vmem>>, vector<16x32xf32>
    tpu.vector_store %arg28[%c16_280, %c0_281], %192 {strides = array<i32>} : memref<32x96xf32, #tpu.memory_space<vmem>>, vector<16x32xf32>,
    %c1_282 = arith.constant 1 : index
    %c0_283 = arith.constant 0 : index
    %194 = vector.load %arg27[%c1_282, %c0_283] : memref<18x32xf32, #tpu.memory_space<vmem>>, vector<16x32xf32>
    %c16_284 = arith.constant 16 : index
    %c32_285 = arith.constant 32 : index
    %195 = vector.load %arg28[%c16_284, %c32_285] : memref<32x96xf32, #tpu.memory_space<vmem>>, vector<16x32xf32>
    tpu.vector_store %arg28[%c16_284, %c32_285], %194 {strides = array<i32>} : memref<32x96xf32, #tpu.memory_space<vmem>>, vector<16x32xf32>,
    %c2_286 = arith.constant 2 : index
    %c0_287 = arith.constant 0 : index
    %196 = vector.load %arg27[%c2_286, %c0_287] : memref<18x32xf32, #tpu.memory_space<vmem>>, vector<16x32xf32>
    %c16_288 = arith.constant 16 : index
    %c64_289 = arith.constant 64 : index
    %197 = vector.load %arg28[%c16_288, %c64_289] : memref<32x96xf32, #tpu.memory_space<vmem>>, vector<16x32xf32>
    tpu.vector_store %arg28[%c16_288, %c64_289], %196 {strides = array<i32>} : memref<32x96xf32, #tpu.memory_space<vmem>>, vector<16x32xf32>,
    %c0_290 = arith.constant 0 : index
    %c0_291 = arith.constant 0 : index
    %198 = vector.load %arg28[%c0_290, %c0_291] : memref<32x96xf32, #tpu.memory_space<vmem>>, vector<32x96xf32>
    %cst_292 = arith.constant dense<0.000000e+00> : vector<32x32xf32>
    %199 = tpu.matmul %198, %179, %cst_292 {dimension_numbers = #tpu.dot_dimension_numbers<[1], [0], [0], [1], [0, 0, 1, 1], [], []>, precision = #tpu.contract_precision<fp32>} : vector<32x96xf32>, vector<96x32xf32>, vector<32x32xf32> -> vector<32x32xf32>
    %200 = vector.broadcast %181 : vector<1x32xf32> to vector<32x32xf32>
    %201 = arith.addf %199, %200 : vector<32x32xf32>
    %202 = arith.addf %201, %151 : vector<32x32xf32>
    %cst_293 = arith.constant 0.000000e+00 : f32
    %203 = vector.broadcast %cst_293 : f32 to vector<32x32xf32>
    %204 = arith.maximumf %202, %203 : vector<32x32xf32>
    %205 = vector.extract_strided_slice %204 {offsets = [0, 0], sizes = [16, 32], strides = [1, 1]} : vector<32x32xf32> to vector<16x32xf32>
    %cst_294 = arith.constant dense<0.000000e+00> : vector<32xf32>
    %206 = vector.multi_reduction <add>, %205, %cst_294 [0] : vector<16x32xf32> to vector<32xf32>
    %207 = vector.shape_cast %206 : vector<32xf32> to vector<1x32xf32>
    %cst_295 = arith.constant 1.600000e+01 : f32
    %208 = vector.broadcast %cst_295 : f32 to vector<1x32xf32>
    %209 = arith.divf %207, %208 : vector<1x32xf32>
    %c0_296 = arith.constant 0 : index
    %c0_297 = arith.constant 0 : index
    %210 = vector.load %arg29[%c0_296, %c0_297] : memref<2x32xf32, #tpu.memory_space<vmem>>, vector<1x32xf32>
    tpu.vector_store %arg29[%c0_296, %c0_297], %209 {strides = array<i32>} : memref<2x32xf32, #tpu.memory_space<vmem>>, vector<1x32xf32>,
    %211 = vector.extract_strided_slice %204 {offsets = [16, 0], sizes = [16, 32], strides = [1, 1]} : vector<32x32xf32> to vector<16x32xf32>
    %cst_298 = arith.constant dense<0.000000e+00> : vector<32xf32>
    %212 = vector.multi_reduction <add>, %211, %cst_298 [0] : vector<16x32xf32> to vector<32xf32>
    %213 = vector.shape_cast %212 : vector<32xf32> to vector<1x32xf32>
    %cst_299 = arith.constant 1.600000e+01 : f32
    %214 = vector.broadcast %cst_299 : f32 to vector<1x32xf32>
    %215 = arith.divf %213, %214 : vector<1x32xf32>
    %c1_300 = arith.constant 1 : index
    %c0_301 = arith.constant 0 : index
    %216 = vector.load %arg29[%c1_300, %c0_301] : memref<2x32xf32, #tpu.memory_space<vmem>>, vector<1x32xf32>
    tpu.vector_store %arg29[%c1_300, %c0_301], %215 {strides = array<i32>} : memref<2x32xf32, #tpu.memory_space<vmem>>, vector<1x32xf32>,
    %c0_302 = arith.constant 0 : index
    %c0_303 = arith.constant 0 : index
    %217 = vector.load %arg29[%c0_302, %c0_303] : memref<2x32xf32, #tpu.memory_space<vmem>>, vector<2x32xf32>
    %c0_304 = arith.constant 0 : index
    %c0_305 = arith.constant 0 : index
    %218 = vector.load %arg8[%c0_304, %c0_305] : memref<32x32xf32, #tpu.memory_space<vmem>>, vector<32x32xf32>
    %cst_306 = arith.constant dense<0.000000e+00> : vector<2x32xf32>
    %219 = tpu.matmul %217, %218, %cst_306 {dimension_numbers = #tpu.dot_dimension_numbers<[1], [0], [0], [1], [0, 0, 1, 1], [], []>, precision = #tpu.contract_precision<fp32>} : vector<2x32xf32>, vector<32x32xf32>, vector<2x32xf32> -> vector<2x32xf32>
    %c0_307 = arith.constant 0 : index
    %c0_308 = arith.constant 0 : index
    %220 = vector.load %arg9[%c0_307, %c0_308] : memref<1x32xf32, #tpu.memory_space<vmem>>, vector<1x32xf32>
    %221 = vector.broadcast %220 : vector<1x32xf32> to vector<2x32xf32>
    %222 = arith.addf %219, %221 : vector<2x32xf32>
    %c0_309 = arith.constant 0 : index
    %c0_310 = arith.constant 0 : index
    %223 = vector.load %arg1[%c0_309, %c0_310] : memref<2x32xf32, #tpu.memory_space<vmem>>, vector<2x32xf32>
    %c0_311 = arith.constant 0 : index
    %c0_312 = arith.constant 0 : index
    %224 = vector.load %arg10[%c0_311, %c0_312] : memref<32x32xf32, #tpu.memory_space<vmem>>, vector<32x32xf32>
    %cst_313 = arith.constant dense<0.000000e+00> : vector<2x32xf32>
    %225 = tpu.matmul %223, %224, %cst_313 {dimension_numbers = #tpu.dot_dimension_numbers<[1], [0], [0], [1], [0, 0, 1, 1], [], []>, precision = #tpu.contract_precision<fp32>} : vector<2x32xf32>, vector<32x32xf32>, vector<2x32xf32> -> vector<2x32xf32>
    %c0_314 = arith.constant 0 : index
    %c0_315 = arith.constant 0 : index
    %226 = vector.load %arg11[%c0_314, %c0_315] : memref<1x32xf32, #tpu.memory_space<vmem>>, vector<1x32xf32>
    %227 = vector.broadcast %226 : vector<1x32xf32> to vector<2x32xf32>
    %228 = arith.addf %225, %227 : vector<2x32xf32>
    %c0_316 = arith.constant 0 : index
    %c0_317 = arith.constant 0 : index
    %229 = vector.load %arg12[%c0_316, %c0_317] : memref<32x32xf32, #tpu.memory_space<vmem>>, vector<32x32xf32>
    %cst_318 = arith.constant dense<0.000000e+00> : vector<2x32xf32>
    %230 = tpu.matmul %228, %229, %cst_318 {dimension_numbers = #tpu.dot_dimension_numbers<[1], [0], [0], [1], [0, 0, 1, 1], [], []>, precision = #tpu.contract_precision<fp32>} : vector<2x32xf32>, vector<32x32xf32>, vector<2x32xf32> -> vector<2x32xf32>
    %c0_319 = arith.constant 0 : index
    %c0_320 = arith.constant 0 : index
    %231 = vector.load %arg13[%c0_319, %c0_320] : memref<1x32xf32, #tpu.memory_space<vmem>>, vector<1x32xf32>
    %232 = vector.broadcast %231 : vector<1x32xf32> to vector<2x32xf32>
    %233 = arith.addf %230, %232 : vector<2x32xf32>
    %cst_321 = arith.constant 0.000000e+00 : f32
    %234 = vector.broadcast %cst_321 : f32 to vector<2x32xf32>
    %235 = arith.maximumf %233, %234 : vector<2x32xf32>
    %c0_322 = arith.constant 0 : index
    %c0_323 = arith.constant 0 : index
    %236 = vector.load %arg14[%c0_322, %c0_323] : memref<32x32xf32, #tpu.memory_space<vmem>>, vector<32x32xf32>
    %cst_324 = arith.constant dense<0.000000e+00> : vector<2x32xf32>
    %237 = tpu.matmul %235, %236, %cst_324 {dimension_numbers = #tpu.dot_dimension_numbers<[1], [0], [0], [1], [0, 0, 1, 1], [], []>, precision = #tpu.contract_precision<fp32>} : vector<2x32xf32>, vector<32x32xf32>, vector<2x32xf32> -> vector<2x32xf32>
    %c0_325 = arith.constant 0 : index
    %c0_326 = arith.constant 0 : index
    %238 = vector.load %arg15[%c0_325, %c0_326] : memref<1x32xf32, #tpu.memory_space<vmem>>, vector<1x32xf32>
    %239 = vector.broadcast %238 : vector<1x32xf32> to vector<2x32xf32>
    %240 = arith.addf %237, %239 : vector<2x32xf32>
    %cst_327 = arith.constant 0.000000e+00 : f32
    %241 = vector.broadcast %cst_327 : f32 to vector<2x32xf32>
    %242 = arith.maximumf %240, %241 : vector<2x32xf32>
    %c0_328 = arith.constant 0 : index
    %c0_329 = arith.constant 0 : index
    %243 = vector.load %arg16[%c0_328, %c0_329] : memref<32x32xf32, #tpu.memory_space<vmem>>, vector<32x32xf32>
    %cst_330 = arith.constant dense<0.000000e+00> : vector<2x32xf32>
    %244 = tpu.matmul %242, %243, %cst_330 {dimension_numbers = #tpu.dot_dimension_numbers<[1], [0], [0], [1], [0, 0, 1, 1], [], []>, precision = #tpu.contract_precision<fp32>} : vector<2x32xf32>, vector<32x32xf32>, vector<2x32xf32> -> vector<2x32xf32>
    %c0_331 = arith.constant 0 : index
    %c0_332 = arith.constant 0 : index
    %245 = vector.load %arg17[%c0_331, %c0_332] : memref<1x32xf32, #tpu.memory_space<vmem>>, vector<1x32xf32>
    %246 = vector.broadcast %245 : vector<1x32xf32> to vector<2x32xf32>
    %247 = arith.addf %244, %246 : vector<2x32xf32>
    %248 = arith.mulf %222, %247 : vector<2x32xf32>
    %c0_333 = arith.constant 0 : index
    %c0_334 = arith.constant 0 : index
    %249 = vector.load %arg18[%c0_333, %c0_334] : memref<32x64xf32, #tpu.memory_space<vmem>>, vector<32x64xf32>
    %cst_335 = arith.constant dense<0.000000e+00> : vector<2x64xf32>
    %250 = tpu.matmul %248, %249, %cst_335 {dimension_numbers = #tpu.dot_dimension_numbers<[1], [0], [0], [1], [0, 0, 1, 1], [], []>, precision = #tpu.contract_precision<fp32>} : vector<2x32xf32>, vector<32x64xf32>, vector<2x64xf32> -> vector<2x64xf32>
    %c0_336 = arith.constant 0 : index
    %c0_337 = arith.constant 0 : index
    %251 = vector.load %arg19[%c0_336, %c0_337] : memref<1x64xf32, #tpu.memory_space<vmem>>, vector<1x64xf32>
    %252 = vector.broadcast %251 : vector<1x64xf32> to vector<2x64xf32>
    %253 = arith.addf %250, %252 : vector<2x64xf32>
    %cst_338 = arith.constant 0.000000e+00 : f32
    %254 = vector.broadcast %cst_338 : f32 to vector<2x64xf32>
    %255 = arith.maximumf %253, %254 : vector<2x64xf32>
    %c0_339 = arith.constant 0 : index
    %c0_340 = arith.constant 0 : index
    %256 = vector.load %arg20[%c0_339, %c0_340] : memref<64x64xf32, #tpu.memory_space<vmem>>, vector<64x64xf32>
    %cst_341 = arith.constant dense<0.000000e+00> : vector<2x64xf32>
    %257 = tpu.matmul %255, %256, %cst_341 {dimension_numbers = #tpu.dot_dimension_numbers<[1], [0], [0], [1], [0, 0, 1, 1], [], []>, precision = #tpu.contract_precision<fp32>} : vector<2x64xf32>, vector<64x64xf32>, vector<2x64xf32> -> vector<2x64xf32>
    %c0_342 = arith.constant 0 : index
    %c0_343 = arith.constant 0 : index
    %258 = vector.load %arg21[%c0_342, %c0_343] : memref<1x64xf32, #tpu.memory_space<vmem>>, vector<1x64xf32>
    %259 = vector.broadcast %258 : vector<1x64xf32> to vector<2x64xf32>
    %260 = arith.addf %257, %259 : vector<2x64xf32>
    %cst_344 = arith.constant 0.000000e+00 : f32
    %261 = vector.broadcast %cst_344 : f32 to vector<2x64xf32>
    %262 = arith.maximumf %260, %261 : vector<2x64xf32>
    %c0_345 = arith.constant 0 : index
    %c0_346 = arith.constant 0 : index
    %263 = vector.load %arg22[%c0_345, %c0_346] : memref<64x32xf32, #tpu.memory_space<vmem>>, vector<64x32xf32>
    %cst_347 = arith.constant dense<0.000000e+00> : vector<2x32xf32>
    %264 = tpu.matmul %262, %263, %cst_347 {dimension_numbers = #tpu.dot_dimension_numbers<[1], [0], [0], [1], [0, 0, 1, 1], [], []>, precision = #tpu.contract_precision<fp32>} : vector<2x64xf32>, vector<64x32xf32>, vector<2x32xf32> -> vector<2x32xf32>
    %c0_348 = arith.constant 0 : index
    %c0_349 = arith.constant 0 : index
    %265 = vector.load %arg23[%c0_348, %c0_349] : memref<1x32xf32, #tpu.memory_space<vmem>>, vector<1x32xf32>
    %266 = vector.broadcast %265 : vector<1x32xf32> to vector<2x32xf32>
    %267 = arith.addf %264, %266 : vector<2x32xf32>
    %c0_350 = arith.constant 0 : index
    %c0_351 = arith.constant 0 : index
    %268 = vector.load %arg24[%c0_350, %c0_351] : memref<2x32xf32, #tpu.memory_space<vmem>>, vector<2x32xf32>
    tpu.vector_store %arg24[%c0_350, %c0_351], %267 {strides = array<i32>} : memref<2x32xf32, #tpu.memory_space<vmem>>, vector<2x32xf32>,
    return
  }
}

</mosaic_0001>

<llo_original>
// kernel: deeponet_forward.1
$region0: #{deeponet_forward.1}
  #allocation0 [shape = 'u32[]', space=smem, size = 0x4, offset = 0x4, fixed_abs, tag = 'smem constant byte address 0x4 - core index']
  #allocation1 [shape = 'u32[144,128]{1,0:T(1,128)}', space=vmem, size = 0x12000, scoped, tag = 'internal scratch']
  #allocation2 [shape = 'f32[22,2]{1,0:T(8,128)}', space=vmem, size = 0x3000, scoped, tag = 'scratch operand']
  #allocation3 [shape = 'f32[32,14]{1,0:T(8,128)}', space=vmem, size = 0x4000, scoped, tag = 'scratch operand']
  #allocation4 [shape = 'f32[18,32]{1,0:T(8,128)}', space=vmem, size = 0x3000, scoped, tag = 'scratch operand']
  #allocation5 [shape = 'f32[32,96]{1,0:T(8,128)}', space=vmem, size = 0x4000, scoped, tag = 'scratch operand']
  #allocation6 [shape = 'f32[2,32]{1,0:T(2,128)}', space=vmem, size = 0x400, scoped, tag = 'scratch operand']
  %s0 = inlined_call_operand.vmem [shape: f32[2,16,2], index: 0, kind: input, shape index: {}]
  %s1 = inlined_call_operand.vmem [shape: f32[2,32], index: 1, kind: input, shape index: {}]
  %s2 = inlined_call_operand.vmem [shape: f32[14,32], index: 2, kind: input, shape index: {}]
  %s3 = inlined_call_operand.vmem [shape: f32[1,32], index: 3, kind: input, shape index: {}]
  %s4 = inlined_call_operand.vmem [shape: f32[3,96,32], index: 4, kind: input, shape index: {}]
  %s5 = inlined_call_operand.vmem [shape: f32[3,1,32], index: 5, kind: input, shape index: {}]
  %s6 = inlined_call_operand.vmem [shape: f32[3,96,32], index: 6, kind: input, shape index: {}]
  %s7 = inlined_call_operand.vmem [shape: f32[3,1,32], index: 7, kind: input, shape index: {}]
  %s8 = inlined_call_operand.vmem [shape: f32[32,32], index: 8, kind: input, shape index: {}]
  %s9 = inlined_call_operand.vmem [shape: f32[1,32], index: 9, kind: input, shape index: {}]
  %s10 = inlined_call_operand.vmem [shape: f32[32,32], index: 10, kind: input, shape index: {}]
  %s11 = inlined_call_operand.vmem [shape: f32[1,32], index: 11, kind: input, shape index: {}]
  %s12 = inlined_call_operand.vmem [shape: f32[32,32], index: 12, kind: input, shape index: {}]
  %s13 = inlined_call_operand.vmem [shape: f32[1,32], index: 13, kind: input, shape index: {}]
  %s14 = inlined_call_operand.vmem [shape: f32[32,32], index: 14, kind: input, shape index: {}]
  %s15 = inlined_call_operand.vmem [shape: f32[1,32], index: 15, kind: input, shape index: {}]
  %s16 = inlined_call_operand.vmem [shape: f32[32,32], index: 16, kind: input, shape index: {}]
  %s17 = inlined_call_operand.vmem [shape: f32[1,32], index: 17, kind: input, shape index: {}]
  %s18 = inlined_call_operand.vmem [shape: f32[32,64], index: 18, kind: input, shape index: {}]
  %s19 = inlined_call_operand.vmem [shape: f32[1,64], index: 19, kind: input, shape index: {}]
  %s20 = inlined_call_operand.vmem [shape: f32[64,64], index: 20, kind: input, shape index: {}]
  %s21 = inlined_call_operand.vmem [shape: f32[1,64], index: 21, kind: input, shape index: {}]
  %s22 = inlined_call_operand.vmem [shape: f32[64,32], index: 22, kind: input, shape index: {}]
  %s23 = inlined_call_operand.vmem [shape: f32[1,32], index: 23, kind: input, shape index: {}]
  %s24 = inlined_call_operand.vmem [shape: f32[2,32], index: 24, kind: output, shape index: {}]
  %s25 = sld [smem:[#allocation0]]
  $region106: #{deeponet_forward.1} parent=0
    _
  %s27 = ssub.s32 1, %s25
  %s28 = scalar_select 0, %s27, %s25
  // Predicated region
  $region2: #{deeponet_forward.1} parent=0 // pred_check
    _
  $region3: #{deeponet_forward.1} parent=0 // pred_check_branch
    %30 = sbr.rel (0) target = $region5
  $region4: #{deeponet_forward.1} parent=0 // pred_region
    _
  $region5: #{deeponet_forward.1} parent=0 // pred_fallthru
    _
  // Predicated region
  $region6: #{deeponet_forward.1} parent=0 // pred_check
    _
  $region7: #{deeponet_forward.1} parent=0 // pred_check_branch
    %32 = sbr.rel (0) target = $region9
  $region8: #{deeponet_forward.1} parent=0 // pred_region
    _
  $region9: #{deeponet_forward.1} parent=0 // pred_fallthru
    _
  // Predicated region
  $region10: #{deeponet_forward.1} parent=0 // pred_check
    _
  $region11: #{deeponet_forward.1} parent=0 // pred_check_branch
    %34 = sbr.rel (0) target = $region13
  $region12: #{deeponet_forward.1} parent=0 // pred_region
    _
  $region13: #{deeponet_forward.1} parent=0 // pred_fallthru
    _
  // Predicated region
  $region14: #{deeponet_forward.1} parent=0 // pred_check
    _
  $region15: #{deeponet_forward.1} parent=0 // pred_check_branch
    %36 = sbr.rel (0) target = $region17
  $region16: #{deeponet_forward.1} parent=0 // pred_region
    _
  $region17: #{deeponet_forward.1} parent=0 // pred_fallthru
    _
  // Predicated region
  $region18: #{deeponet_forward.1} parent=0 // pred_check
    _
  $region19: #{deeponet_forward.1} parent=0 // pred_check_branch
    %38 = sbr.rel (0) target = $region21
  $region20: #{deeponet_forward.1} parent=0 // pred_region
    _
  $region21: #{deeponet_forward.1} parent=0 // pred_fallthru
    _
  // Predicated region
  $region22: #{deeponet_forward.1} parent=0 // pred_check
    _
  $region23: #{deeponet_forward.1} parent=0 // pred_check_branch
    %40 = sbr.rel (0) target = $region25
  $region24: #{deeponet_forward.1} parent=0 // pred_region
    _
  $region25: #{deeponet_forward.1} parent=0 // pred_fallthru
    _
  // Predicated region
  $region26: #{deeponet_forward.1} parent=0 // pred_check
    _
  $region27: #{deeponet_forward.1} parent=0 // pred_check_branch
    %42 = sbr.rel (0) target = $region29
  $region28: #{deeponet_forward.1} parent=0 // pred_region
    _
  $region29: #{deeponet_forward.1} parent=0 // pred_fallthru
    _
  // Predicated region
  $region30: #{deeponet_forward.1} parent=0 // pred_check
    _
  $region31: #{deeponet_forward.1} parent=0 // pred_check_branch
    %44 = sbr.rel (0) target = $region33
  $region32: #{deeponet_forward.1} parent=0 // pred_region
    _
  $region33: #{deeponet_forward.1} parent=0 // pred_fallthru
    _
  // Predicated region
  $region34: #{deeponet_forward.1} parent=0 // pred_check
    _
  $region35: #{deeponet_forward.1} parent=0 // pred_check_branch
    %46 = sbr.rel (0) target = $region37
  $region36: #{deeponet_forward.1} parent=0 // pred_region
    _
  $region37: #{deeponet_forward.1} parent=0 // pred_fallthru
    _
  // Predicated region
  $region38: #{deeponet_forward.1} parent=0 // pred_check
    _
  $region39: #{deeponet_forward.1} parent=0 // pred_check_branch
    %48 = sbr.rel (0) target = $region41
  $region40: #{deeponet_forward.1} parent=0 // pred_region
    _
  $region41: #{deeponet_forward.1} parent=0 // pred_fallthru
    _
  // Predicated region
  $region42: #{deeponet_forward.1} parent=0 // pred_check
    _
  $region43: #{deeponet_forward.1} parent=0 // pred_check_branch
    %50 = sbr.rel (0) target = $region45
  $region44: #{deeponet_forward.1} parent=0 // pred_region
    _
  $region45: #{deeponet_forward.1} parent=0 // pred_fallthru
    _
  // Predicated region
  $region46: #{deeponet_forward.1} parent=0 // pred_check
    _
  $region47: #{deeponet_forward.1} parent=0 // pred_check_branch
    %52 = sbr.rel (0) target = $region49
  $region48: #{deeponet_forward.1} parent=0 // pred_region
    _
  $region49: #{deeponet_forward.1} parent=0 // pred_fallthru
    _
  // Predicated region
  $region50: #{deeponet_forward.1} parent=0 // pred_check
    _
  $region51: #{deeponet_forward.1} parent=0 // pred_check_branch
    %54 = sbr.rel (0) target = $region53
  $region52: #{deeponet_forward.1} parent=0 // pred_region
    _
  $region53: #{deeponet_forward.1} parent=0 // pred_fallthru
    _
  // Predicated region
  $region54: #{deeponet_forward.1} parent=0 // pred_check
    _
  $region55: #{deeponet_forward.1} parent=0 // pred_check_branch
    %56 = sbr.rel (0) target = $region57
  $region56: #{deeponet_forward.1} parent=0 // pred_region
    _
  $region57: #{deeponet_forward.1} parent=0 // pred_fallthru
    _
  // Predicated region
  $region58: #{deeponet_forward.1} parent=0 // pred_check
    _
  $region59: #{deeponet_forward.1} parent=0 // pred_check_branch
    %58 = sbr.rel (0) target = $region61
  $region60: #{deeponet_forward.1} parent=0 // pred_region
    _
  $region61: #{deeponet_forward.1} parent=0 // pred_fallthru
    _
  // Predicated region
  $region62: #{deeponet_forward.1} parent=0 // pred_check
    _
  $region63: #{deeponet_forward.1} parent=0 // pred_check_branch
    %60 = sbr.rel (0) target = $region65
  $region64: #{deeponet_forward.1} parent=0 // pred_region
    _
  $region65: #{deeponet_forward.1} parent=0 // pred_fallthru
    _
  // Predicated region
  $region66: #{deeponet_forward.1} parent=0 // pred_check
    _
  $region67: #{deeponet_forward.1} parent=0 // pred_check_branch
    %62 = sbr.rel (0) target = $region69
  $region68: #{deeponet_forward.1} parent=0 // pred_region
    _
  $region69: #{deeponet_forward.1} parent=0 // pred_fallthru
    _
  // Predicated region
  $region70: #{deeponet_forward.1} parent=0 // pred_check
    _
  $region71: #{deeponet_forward.1} parent=0 // pred_check_branch
    %64 = sbr.rel (0) target = $region73
  $region72: #{deeponet_forward.1} parent=0 // pred_region
    _
  $region73: #{deeponet_forward.1} parent=0 // pred_fallthru
    _
  // Predicated region
  $region74: #{deeponet_forward.1} parent=0 // pred_check
    _
  $region75: #{deeponet_forward.1} parent=0 // pred_check_branch
    %66 = sbr.rel (0) target = $region77
  $region76: #{deeponet_forward.1} parent=0 // pred_region
    _
  $region77: #{deeponet_forward.1} parent=0 // pred_fallthru
    _
  // Predicated region
  $region78: #{deeponet_forward.1} parent=0 // pred_check
    _
  $region79: #{deeponet_forward.1} parent=0 // pred_check_branch
    %68 = sbr.rel (0) target = $region81
  $region80: #{deeponet_forward.1} parent=0 // pred_region
    _
  $region81: #{deeponet_forward.1} parent=0 // pred_fallthru
    _
  // Predicated region
  $region82: #{deeponet_forward.1} parent=0 // pred_check
    _
  $region83: #{deeponet_forward.1} parent=0 // pred_check_branch
    %70 = sbr.rel (0) target = $region85
  $region84: #{deeponet_forward.1} parent=0 // pred_region
    _
  $region85: #{deeponet_forward.1} parent=0 // pred_fallthru
    _
  // Predicated region
  $region86: #{deeponet_forward.1} parent=0 // pred_check
    _
  $region87: #{deeponet_forward.1} parent=0 // pred_check_branch
    %72 = sbr.rel (0) target = $region89
  $region88: #{deeponet_forward.1} parent=0 // pred_region
    _
  $region89: #{deeponet_forward.1} parent=0 // pred_fallthru
    _
  // Predicated region
  $region90: #{deeponet_forward.1} parent=0 // pred_check
    _
  $region91: #{deeponet_forward.1} parent=0 // pred_check_branch
    %74 = sbr.rel (0) target = $region93
  $region92: #{deeponet_forward.1} parent=0 // pred_region
    _
  $region93: #{deeponet_forward.1} parent=0 // pred_fallthru
    _
  // Predicated region
  $region94: #{deeponet_forward.1} parent=0 // pred_check
    _
  $region95: #{deeponet_forward.1} parent=0 // pred_check_branch
    %76 = sbr.rel (0) target = $region97
  $region96: #{deeponet_forward.1} parent=0 // pred_region
    _
  $region97: #{deeponet_forward.1} parent=0 // pred_fallthru
    _
  %vm77 = vcmask 15360
  %78 = vst.msk [vmem:[#allocation2] sm:$0xff] %vm77, 0.0
  %79 = vst.msk [vmem:[#allocation2 + $0x8] sm:$0xff] %vm77, 0.0
  %vm80 = vcmask 13312
  %81 = vst.msk [vmem:[#allocation2 + $0x10] sm:$0x3f] %vm80, 0.0
  %vm82 = vcmask 261120
  %83 = vst.msk [vmem:[#allocation4] sm:$0xff] %vm82, 0.0
  %84 = vst.msk [vmem:[#allocation4 + $0x8] sm:$0xff] %vm82, 0.0
  %vm85 = vcmask 254976
  %86 = vst.msk [vmem:[#allocation4 + $0x10] sm:$0x3] %vm85, 0.0
  %v87 = vld [vmem:[%s0] sm:$0xff]
  %v88 = vld [vmem:[%s0 + $0x8] sm:$0xff]
  %89 = vst.msk [vmem:[#allocation2 + $0x3] sm:$0xff] %vm77, %v87
  %90 = vst.msk [vmem:[#allocation2 + $0xb] sm:$0xff] %vm77, %v88
  %v91 = vld [vmem:[#allocation2] sm:$0xff]
  %v92 = vld [vmem:[#allocation2 + $0x8] sm:$0xff]
  %93 = vst.msk [vmem:[#allocation3] sm:$0xff] %vm77, %v91
  %94 = vst.msk [vmem:[#allocation3 + $0x8] sm:$0xff] %vm77, %v92
  %v95 = vld [vmem:[#allocation2 + $0x1] sm:$0xff]
  %v96 = vld [vmem:[#allocation2 + $0x9] sm:$0xff]
  %99 = vrot.lane.b32.xlu0 %v95, 2
  %v100 = vpop.permute.xlu0 %99
  %101 = vrot.lane.b32.xlu0 %v96, 2
  %v102 = vpop.permute.xlu0 %101
  %vm105 = vcmask 31760
  %106 = vst.msk [vmem:[#allocation3] sm:$0xff] %vm105, %v100
  %107 = vst.msk [vmem:[#allocation3 + $0x8] sm:$0xff] %vm105, %v102
  %v108 = vld [vmem:[#allocation2 + $0x2] sm:$0xff]
  %v109 = vld [vmem:[#allocation2 + $0xa] sm:$0xff]
  %112 = vrot.lane.b32.xlu0 %v108, 4
  %v113 = vpop.permute.xlu0 %112
  %114 = vrot.lane.b32.xlu0 %v109, 4
  %v115 = vpop.permute.xlu0 %114
  %vm118 = vcmask 48160
  %119 = vst.msk [vmem:[#allocation3] sm:$0xff] %vm118, %v113
  %120 = vst.msk [vmem:[#allocation3 + $0x8] sm:$0xff] %vm118, %v115
  %v121 = vld [vmem:[#allocation2 + $0x3] sm:$0xff]
  %v122 = vld [vmem:[#allocation2 + $0xb] sm:$0xff]
  %125 = vrot.lane.b32.xlu0 %v121, 6
  %v126 = vpop.permute.xlu0 %125
  %127 = vrot.lane.b32.xlu0 %v122, 6
  %v128 = vpop.permute.xlu0 %127
  %vm131 = vcmask 64560
  %132 = vst.msk [vmem:[#allocation3] sm:$0xff] %vm131, %v126
  %133 = vst.msk [vmem:[#allocation3 + $0x8] sm:$0xff] %vm131, %v128
  %v134 = vld [vmem:[#allocation2 + $0x4] sm:$0xff]
  %v135 = vld [vmem:[#allocation2 + $0xc] sm:$0xff]
  %138 = vrot.lane.b32.xlu0 %v134, 8
  %v139 = vpop.permute.xlu0 %138
  %140 = vrot.lane.b32.xlu0 %v135, 8
  %v141 = vpop.permute.xlu0 %140
  %vm144 = vcmask 80960
  %145 = vst.msk [vmem:[#allocation3] sm:$0xff] %vm144, %v139
  %146 = vst.msk [vmem:[#allocation3 + $0x8] sm:$0xff] %vm144, %v141
  %v147 = vld [vmem:[#allocation2 + $0x5] sm:$0xff]
  %v148 = vld [vmem:[#allocation2 + $0xd] sm:$0xff]
  %151 = vrot.lane.b32.xlu0 %v147, 10
  %v152 = vpop.permute.xlu0 %151
  %153 = vrot.lane.b32.xlu0 %v148, 10
  %v154 = vpop.permute.xlu0 %153
  %vm157 = vcmask 97360
  %158 = vst.msk [vmem:[#allocation3] sm:$0xff] %vm157, %v152
  %159 = vst.msk [vmem:[#allocation3 + $0x8] sm:$0xff] %vm157, %v154
  %v160 = vld [vmem:[#allocation2 + $0x6] sm:$0xff]
  %v161 = vld [vmem:[#allocation2 + $0xe] sm:$0xff]
  %164 = vrot.lane.b32.xlu0 %v160, 12
  %v165 = vpop.permute.xlu0 %164
  %166 = vrot.lane.b32.xlu0 %v161, 12
  %v167 = vpop.permute.xlu0 %166
  %vm170 = vcmask 113760
  %171 = vst.msk [vmem:[#allocation3] sm:$0xff] %vm170, %v165
  %172 = vst.msk [vmem:[#allocation3 + $0x8] sm:$0xff] %vm170, %v167
  %s173 = scalar_lea.vmem %s0, 16
  %v174 = vld [vmem:[%s173] sm:$0xff]
  %v175 = vld [vmem:[%s173 + $0x8] sm:$0xff]
  %176 = vst.msk [vmem:[#allocation2 + $0x3] sm:$0xff] %vm77, %v174
  %177 = vst.msk [vmem:[#allocation2 + $0xb] sm:$0xff] %vm77, %v175
  %v178 = vld [vmem:[#allocation2] sm:$0xff]
  %v179 = vld [vmem:[#allocation2 + $0x8] sm:$0xff]
  %180 = vst.msk [vmem:[#allocation3 + $0x10] sm:$0xff] %vm77, %v178
  %181 = vst.msk [vmem:[#allocation3 + $0x18] sm:$0xff] %vm77, %v179
  %v182 = vld [vmem:[#allocation2 + $0x1] sm:$0xff]
  %v183 = vld [vmem:[#allocation2 + $0x9] sm:$0xff]
  %186 = vrot.lane.b32.xlu0 %v182, 2
  %v187 = vpop.permute.xlu0 %186
  %188 = vrot.lane.b32.xlu0 %v183, 2
  %v189 = vpop.permute.xlu0 %188
  %192 = vst.msk [vmem:[#allocation3 + $0x10] sm:$0xff] %vm105, %v187
  %193 = vst.msk [vmem:[#allocation3 + $0x18] sm:$0xff] %vm105, %v189
  %v194 = vld [vmem:[#allocation2 + $0x2] sm:$0xff]
  %v195 = vld [vmem:[#allocation2 + $0xa] sm:$0xff]
  %198 = vrot.lane.b32.xlu0 %v194, 4
  %v199 = vpop.permute.xlu0 %198
  %200 = vrot.lane.b32.xlu0 %v195, 4
  %v201 = vpop.permute.xlu0 %200
  %204 = vst.msk [vmem:[#allocation3 + $0x10] sm:$0xff] %vm118, %v199
  %205 = vst.msk [vmem:[#allocation3 + $0x18] sm:$0xff] %vm118, %v201
  %v206 = vld [vmem:[#allocation2 + $0x3] sm:$0xff]
  %v207 = vld [vmem:[#allocation2 + $0xb] sm:$0xff]
  %210 = vrot.lane.b32.xlu0 %v206, 6
  %v211 = vpop.permute.xlu0 %210
  %212 = vrot.lane.b32.xlu0 %v207, 6
  %v213 = vpop.permute.xlu0 %212
  %216 = vst.msk [vmem:[#allocation3 + $0x10] sm:$0xff] %vm131, %v211
  %217 = vst.msk [vmem:[#allocation3 + $0x18] sm:$0xff] %vm131, %v213
  %v218 = vld [vmem:[#allocation2 + $0x4] sm:$0xff]
  %v219 = vld [vmem:[#allocation2 + $0xc] sm:$0xff]
  %222 = vrot.lane.b32.xlu0 %v218, 8
  %v223 = vpop.permute.xlu0 %222
  %224 = vrot.lane.b32.xlu0 %v219, 8
  %v225 = vpop.permute.xlu0 %224
  %228 = vst.msk [vmem:[#allocation3 + $0x10] sm:$0xff] %vm144, %v223
  %229 = vst.msk [vmem:[#allocation3 + $0x18] sm:$0xff] %vm144, %v225
  %v230 = vld [vmem:[#allocation2 + $0x5] sm:$0xff]
  %v231 = vld [vmem:[#allocation2 + $0xd] sm:$0xff]
  %234 = vrot.lane.b32.xlu0 %v230, 10
  %v235 = vpop.permute.xlu0 %234
  %236 = vrot.lane.b32.xlu0 %v231, 10
  %v237 = vpop.permute.xlu0 %236
  %240 = vst.msk [vmem:[#allocation3 + $0x10] sm:$0xff] %vm157, %v235
  %241 = vst.msk [vmem:[#allocation3 + $0x18] sm:$0xff] %vm157, %v237
  %v242 = vld [vmem:[#allocation2 + $0x6] sm:$0xff]
  %v243 = vld [vmem:[#allocation2 + $0xe] sm:$0xff]
  %246 = vrot.lane.b32.xlu0 %v242, 12
  %v247 = vpop.permute.xlu0 %246
  %248 = vrot.lane.b32.xlu0 %v243, 12
  %v249 = vpop.permute.xlu0 %248
  %252 = vst.msk [vmem:[#allocation3 + $0x10] sm:$0xff] %vm170, %v247
  %253 = vst.msk [vmem:[#allocation3 + $0x18] sm:$0xff] %vm170, %v249
  %v254 = vld [vmem:[#allocation3] sm:$0xff]
  %v255 = vld [vmem:[#allocation3 + $0x8] sm:$0xff]
  %v256 = vld [vmem:[#allocation3 + $0x10] sm:$0xff]
  %v257 = vld [vmem:[#allocation3 + $0x18] sm:$0xff]
  %v258 = vld [vmem:[%s2] sm:$0xff]
  %v259 = vld [vmem:[%s2 + $0x8] sm:$0x3f]
  %v260 = vld [vmem:[%s3] sm:$0x1]
  %v262 = vlaneseq
  %v263 = vshrl.u32 %v262, 7
  %v264 = vsub.s32 0, %v263
  %v265 = vrot.slane %v260, %v264
  %vm267 = vcmask 113664
  %v269 = vsel %vm267, %v254, 0
  %v272 = vsel %vm267, %v255, 0
  %v275 = vsel %vm267, %v256, 0
  %v278 = vsel %vm267, %v257, 0
  %vm280 = vcmask 1045504
  %v282 = vsel %vm280, %v259, 0
  %284 = vmatprep.subr.mxu0 0.0
  %v285 = vand.u32 %v258, 4294901760
  %286 = vmatpush1.msra.mxu0 %v285
  %287 = vmatprep.subr.mxu0 0.0
  %v288 = vand.u32 %v282, 4294901760
  %289 = vmatpush1.msra.mxu0 %v288
  %290 = vmatprep.subr.mxu0 0.0
  %291 = vmatpush1.msra.mxu0 0.0
  %292 = vmatprep.subr.mxu0 0.0
  %293 = vmatpush1.msra.mxu0 0.0
  %294 = vmatprep.subr.mxu0 0.0
  %295 = vmatpush1.msra.mxu0 0.0
  %296 = vmatprep.subr.mxu0 0.0
  %297 = vmatpush1.msra.mxu0 0.0
  %298 = vmatprep.subr.mxu0 0.0
  %299 = vmatpush1.msra.mxu0 0.0
  %300 = vmatprep.subr.mxu0 0.0
  %301 = vmatpush1.msra.mxu0 0.0
  %302 = vmatprep.subr.mxu0 0.0
  %303 = vmatpush1.msra.mxu0 0.0
  %304 = vmatprep.subr.mxu0 0.0
  %305 = vmatpush1.msra.mxu0 0.0
  %306 = vmatprep.subr.mxu0 0.0
  %307 = vmatpush1.msra.mxu0 0.0
  %308 = vmatprep.subr.mxu0 0.0
  %309 = vmatpush1.msra.mxu0 0.0
  %310 = vmatprep.subr.mxu0 0.0
  %311 = vmatpush1.msra.mxu0 0.0
  %312 = vmatprep.subr.mxu0 0.0
  %313 = vmatpush1.msra.mxu0 0.0
  %314 = vmatprep.subr.mxu0 0.0
  %315 = vmatpush1.msra.mxu0 0.0
  %316 = vmatprep.subr.mxu0 0.0
  %317 = vmatpush1.msra.mxu0 0.0
  %318 = vmatprep.subr.mxu0 0.0
  %319 = vmatpush1.msra.mxu0 0.0
  %320 = vmatprep.subr.mxu0 0.0
  %321 = vmatpush1.msra.mxu0 0.0
  %322 = vmatprep.subr.mxu0 0.0
  %323 = vmatpush1.msra.mxu0 0.0
  %324 = vmatprep.subr.mxu0 0.0
  %325 = vmatpush1.msra.mxu0 0.0
  %326 = vmatprep.subr.mxu0 0.0
  %327 = vmatpush1.msra.mxu0 0.0
  %328 = vmatprep.subr.mxu0 0.0
  %329 = vmatpush1.msra.mxu0 0.0
  %330 = vmatprep.subr.mxu0 0.0
  %331 = vmatpush1.msra.mxu0 0.0
  %332 = vmatprep.subr.mxu0 0.0
  %333 = vmatpush1.msra.mxu0 0.0
  %334 = vmatprep.subr.mxu0 0.0
  %335 = vmatpush1.msra.mxu0 0.0
  %336 = vmatprep.subr.mxu0 0.0
  %337 = vmatpush1.msra.mxu0 0.0
  %338 = vmatprep.subr.mxu0 0.0
  %339 = vmatpush1.msra.mxu0 0.0
  %340 = vmatprep.subr.mxu0 0.0
  %341 = vmatpush1.msra.mxu0 0.0
  %342 = vmatprep.subr.mxu0 0.0
  %343 = vmatpush1.msra.mxu0 0.0
  %344 = vmatprep.subr.mxu0 0.0
  %345 = vmatpush1.msra.mxu0 0.0
  %346 = vmatprep.subr.mxu0 0.0
  %347 = vmatpush1.msra.mxu0 0.0
  %348 = vmatprep.subr.mxu0 0.0
  %349 = vmatpush1.msra.mxu0 0.0
  %350 = vmatprep.mubr.f32.mxu0 0.0
  %v351 = vand.u32 %v269, 4294901760
  %v352 = vsub.f32 %v269, %v351
  %v353 = vand.u32 %v352, 4294901760
  %v354 = vsub.f32 %v352, %v353
  %v355 = vand.u32 %v354, 4294901760
  %356 = vmatmul.mubr.f32.gmra.mrb[0].mxu0 %v355
  %v357 = vpop.f32.mrb[0].mxu0
  %v358 = vadd.f32 %v265, %v357
  %v359 = vpop.f32.mrb[0].mxu0
  %360 = vmatprep.mubr.f32.mxu0 0.0
  %v361 = vand.u32 %v272, 4294901760
  %v362 = vsub.f32 %v272, %v361
  %v363 = vand.u32 %v362, 4294901760
  %v364 = vsub.f32 %v362, %v363
  %v365 = vand.u32 %v364, 4294901760
  %366 = vmatmul.mubr.f32.gmra.mrb[0].mxu0 %v365
  %v367 = vpop.f32.mrb[0].mxu0
  %v368 = vadd.f32 %v265, %v367
  %v369 = vpop.f32.mrb[0].mxu0
  %370 = vmatprep.mubr.f32.mxu0 0.0
  %v371 = vand.u32 %v275, 4294901760
  %v372 = vsub.f32 %v275, %v371
  %v373 = vand.u32 %v372, 4294901760
  %v374 = vsub.f32 %v372, %v373
  %v375 = vand.u32 %v374, 4294901760
  %376 = vmatmul.mubr.f32.gmra.mrb[0].mxu0 %v375
  %v377 = vpop.f32.mrb[0].mxu0
  %v378 = vadd.f32 %v265, %v377
  %v379 = vpop.f32.mrb[0].mxu0
  %380 = vmatprep.mubr.f32.mxu0 0.0
  %v381 = vand.u32 %v278, 4294901760
  %v382 = vsub.f32 %v278, %v381
  %v383 = vand.u32 %v382, 4294901760
  %v384 = vsub.f32 %v382, %v383
  %v385 = vand.u32 %v384, 4294901760
  %386 = vmatmul.mubr.f32.gmra.mrb[0].mxu0 %v385
  %v387 = vpop.f32.mrb[0].mxu0
  %v388 = vadd.f32 %v265, %v387
  %v389 = vpop.f32.mrb[0].mxu0
  %390 = vdwg.mxu0
  %391 = vmatprep.subr.mxu0 0.0
  %v392 = vand.u32 %v258, 4294901760
  %v393 = vsub.f32 %v258, %v392
  %v394 = vand.u32 %v393, 4294901760
  %v395 = vsub.f32 %v393, %v394
  %v396 = vand.u32 %v395, 4294901760
  %397 = vmatpush1.msra.mxu0 %v396
  %398 = vmatprep.subr.mxu0 0.0
  %v399 = vand.u32 %v282, 4294901760
  %v400 = vsub.f32 %v282, %v399
  %v401 = vand.u32 %v400, 4294901760
  %v402 = vsub.f32 %v400, %v401
  %v403 = vand.u32 %v402, 4294901760
  %404 = vmatpush1.msra.mxu0 %v403
  %405 = vmatprep.subr.mxu0 0.0
  %406 = vmatpush1.msra.mxu0 0.0
  %407 = vmatprep.subr.mxu0 0.0
  %408 = vmatpush1.msra.mxu0 0.0
  %409 = vmatprep.subr.mxu0 0.0
  %410 = vmatpush1.msra.mxu0 0.0
  %411 = vmatprep.subr.mxu0 0.0
  %412 = vmatpush1.msra.mxu0 0.0
  %413 = vmatprep.subr.mxu0 0.0
  %414 = vmatpush1.msra.mxu0 0.0
  %415 = vmatprep.subr.mxu0 0.0
  %416 = vmatpush1.msra.mxu0 0.0
  %417 = vmatprep.subr.mxu0 0.0
  %418 = vmatpush1.msra.mxu0 0.0
  %419 = vmatprep.subr.mxu0 0.0
  %420 = vmatpush1.msra.mxu0 0.0
  %421 = vmatprep.subr.mxu0 0.0
  %422 = vmatpush1.msra.mxu0 0.0
  %423 = vmatprep.subr.mxu0 0.0
  %424 = vmatpush1.msra.mxu0 0.0
  %425 = vmatprep.subr.mxu0 0.0
  %426 = vmatpush1.msra.mxu0 0.0
  %427 = vmatprep.subr.mxu0 0.0
  %428 = vmatpush1.msra.mxu0 0.0
  %429 = vmatprep.subr.mxu0 0.0
  %430 = vmatpush1.msra.mxu0 0.0
  %431 = vmatprep.subr.mxu0 0.0
  %432 = vmatpush1.msra.mxu0 0.0
  %433 = vmatprep.subr.mxu0 0.0
  %434 = vmatpush1.msra.mxu0 0.0
  %435 = vmatprep.subr.mxu0 0.0
  %436 = vmatpush1.msra.mxu0 0.0
  %437 = vmatprep.subr.mxu0 0.0
  %438 = vmatpush1.msra.mxu0 0.0
  %439 = vmatprep.subr.mxu0 0.0
  %440 = vmatpush1.msra.mxu0 0.0
  %441 = vmatprep.subr.mxu0 0.0
  %442 = vmatpush1.msra.mxu0 0.0
  %443 = vmatprep.subr.mxu0 0.0
  %444 = vmatpush1.msra.mxu0 0.0
  %445 = vmatprep.subr.mxu0 0.0
  %446 = vmatpush1.msra.mxu0 0.0
  %447 = vmatprep.subr.mxu0 0.0
  %448 = vmatpush1.msra.mxu0 0.0
  %449 = vmatprep.subr.mxu0 0.0
  %450 = vmatpush1.msra.mxu0 0.0
  %451 = vmatprep.subr.mxu0 0.0
  %452 = vmatpush1.msra.mxu0 0.0
  %453 = vmatprep.subr.mxu0 0.0
  %454 = vmatpush1.msra.mxu0 0.0
  %455 = vmatprep.subr.mxu0 0.0
  %456 = vmatpush1.msra.mxu0 0.0
  %457 = vmatprep.subr.mxu0 0.0
  %458 = vmatpush1.msra.mxu0 0.0
  %459 = vmatprep.subr.mxu0 0.0
  %460 = vmatpush1.msra.mxu0 0.0
  %461 = vmatprep.subr.mxu0 0.0
  %462 = vmatpush1.msra.mxu0 0.0
  %463 = vmatprep.subr.mxu0 0.0
  %464 = vmatpush1.msra.mxu0 0.0
  %465 = vmatprep.mubr.f32.mxu0 0.0
  %v466 = vand.u32 %v269, 4294901760
  %467 = vmatmul.mubr.f32.gmra.mrb[0].mxu0 %v466
  %v468 = vpop.f32.mrb[0].mxu0
  %v469 = vadd.f32 %v358, %v468
  %v470 = vpop.f32.mrb[0].mxu0
  %471 = vmatprep.mubr.f32.mxu0 0.0
  %v472 = vand.u32 %v272, 4294901760
  %473 = vmatmul.mubr.f32.gmra.mrb[0].mxu0 %v472
  %v474 = vpop.f32.mrb[0].mxu0
  %v475 = vadd.f32 %v368, %v474
  %v476 = vpop.f32.mrb[0].mxu0
  %477 = vmatprep.mubr.f32.mxu0 0.0
  %v478 = vand.u32 %v275, 4294901760
  %479 = vmatmul.mubr.f32.gmra.mrb[0].mxu0 %v478
  %v480 = vpop.f32.mrb[0].mxu0
  %v481 = vadd.f32 %v378, %v480
  %v482 = vpop.f32.mrb[0].mxu0
  %483 = vmatprep.mubr.f32.mxu0 0.0
  %v484 = vand.u32 %v278, 4294901760
  %485 = vmatmul.mubr.f32.gmra.mrb[0].mxu0 %v484
  %v486 = vpop.f32.mrb[0].mxu0
  %v487 = vadd.f32 %v388, %v486
  %v488 = vpop.f32.mrb[0].mxu0
  %489 = vdwg.mxu0
  %490 = vmatprep.subr.mxu0 0.0
  %v491 = vand.u32 %v258, 4294901760
  %v492 = vsub.f32 %v258, %v491
  %493 = vmatpush1.msra.mxu0 %v492
  %494 = vmatprep.subr.mxu0 0.0
  %v495 = vand.u32 %v282, 4294901760
  %v496 = vsub.f32 %v282, %v495
  %497 = vmatpush1.msra.mxu0 %v496
  %498 = vmatprep.subr.mxu0 0.0
  %499 = vmatpush1.msra.mxu0 0.0
  %500 = vmatprep.subr.mxu0 0.0
  %501 = vmatpush1.msra.mxu0 0.0
  %502 = vmatprep.subr.mxu0 0.0
  %503 = vmatpush1.msra.mxu0 0.0
  %504 = vmatprep.subr.mxu0 0.0
  %505 = vmatpush1.msra.mxu0 0.0
  %506 = vmatprep.subr.mxu0 0.0
  %507 = vmatpush1.msra.mxu0 0.0
  %508 = vmatprep.subr.mxu0 0.0
  %509 = vmatpush1.msra.mxu0 0.0
  %510 = vmatprep.subr.mxu0 0.0
  %511 = vmatpush1.msra.mxu0 0.0
  %512 = vmatprep.subr.mxu0 0.0
  %513 = vmatpush1.msra.mxu0 0.0
  %514 = vmatprep.subr.mxu0 0.0
  %515 = vmatpush1.msra.mxu0 0.0
  %516 = vmatprep.subr.mxu0 0.0
  %517 = vmatpush1.msra.mxu0 0.0
  %518 = vmatprep.subr.mxu0 0.0
  %519 = vmatpush1.msra.mxu0 0.0
  %520 = vmatprep.subr.mxu0 0.0
  %521 = vmatpush1.msra.mxu0 0.0
  %522 = vmatprep.subr.mxu0 0.0
  %523 = vmatpush1.msra.mxu0 0.0
  %524 = vmatprep.subr.mxu0 0.0
  %525 = vmatpush1.msra.mxu0 0.0
  %526 = vmatprep.subr.mxu0 0.0
  %527 = vmatpush1.msra.mxu0 0.0
  %528 = vmatprep.subr.mxu0 0.0
  %529 = vmatpush1.msra.mxu0 0.0
  %530 = vmatprep.subr.mxu0 0.0
  %531 = vmatpush1.msra.mxu0 0.0
  %532 = vmatprep.subr.mxu0 0.0
  %533 = vmatpush1.msra.mxu0 0.0
  %534 = vmatprep.subr.mxu0 0.0
  %535 = vmatpush1.msra.mxu0 0.0
  %536 = vmatprep.subr.mxu0 0.0
  %537 = vmatpush1.msra.mxu0 0.0
  %538 = vmatprep.subr.mxu0 0.0
  %539 = vmatpush1.msra.mxu0 0.0
  %540 = vmatprep.subr.mxu0 0.0
  %541 = vmatpush1.msra.mxu0 0.0
  %542 = vmatprep.subr.mxu0 0.0
  %543 = vmatpush1.msra.mxu0 0.0
  %544 = vmatprep.subr.mxu0 0.0
  %545 = vmatpush1.msra.mxu0 0.0
  %546 = vmatprep.subr.mxu0 0.0
  %547 = vmatpush1.msra.mxu0 0.0
  %548 = vmatprep.subr.mxu0 0.0
  %549 = vmatpush1.msra.mxu0 0.0
  %550 = vmatprep.subr.mxu0 0.0
  %551 = vmatpush1.msra.mxu0 0.0
  %552 = vmatprep.subr.mxu0 0.0
  %553 = vmatpush1.msra.mxu0 0.0
  %554 = vmatprep.subr.mxu0 0.0
  %555 = vmatpush1.msra.mxu0 0.0
  %556 = vmatprep.subr.mxu0 0.0
  %557 = vmatpush1.msra.mxu0 0.0
  %558 = vmatprep.mubr.f32.mxu0 0.0
  %v559 = vand.u32 %v269, 4294901760
  %v560 = vsub.f32 %v269, %v559
  %561 = vmatmul.mubr.f32.gmra.mrb[0].mxu0 %v560
  %v562 = vpop.f32.mrb[0].mxu0
  %v563 = vadd.f32 %v469, %v562
  %v564 = vpop.f32.mrb[0].mxu0
  %565 = vmatprep.mubr.f32.mxu0 0.0
  %v566 = vand.u32 %v272, 4294901760
  %v567 = vsub.f32 %v272, %v566
  %568 = vmatmul.mubr.f32.gmra.mrb[0].mxu0 %v567
  %v569 = vpop.f32.mrb[0].mxu0
  %v570 = vadd.f32 %v475, %v569
  %v571 = vpop.f32.mrb[0].mxu0
  %572 = vmatprep.mubr.f32.mxu0 0.0
  %v573 = vand.u32 %v275, 4294901760
  %v574 = vsub.f32 %v275, %v573
  %575 = vmatmul.mubr.f32.gmra.mrb[0].mxu0 %v574
  %v576 = vpop.f32.mrb[0].mxu0
  %v577 = vadd.f32 %v481, %v576
  %v578 = vpop.f32.mrb[0].mxu0
  %579 = vmatprep.mubr.f32.mxu0 0.0
  %v580 = vand.u32 %v278, 4294901760
  %v581 = vsub.f32 %v278, %v580
  %582 = vmatmul.mubr.f32.gmra.mrb[0].mxu0 %v581
  %v583 = vpop.f32.mrb[0].mxu0
  %v584 = vadd.f32 %v487, %v583
  %v585 = vpop.f32.mrb[0].mxu0
  %586 = vdwg.mxu0
  %587 = vmatprep.subr.mxu0 0.0
  %v588 = vand.u32 %v258, 4294901760
  %589 = vmatpush1.msra.mxu0 %v588
  %590 = vmatprep.subr.mxu0 0.0
  %v591 = vand.u32 %v282, 4294901760
  %592 = vmatpush1.msra.mxu0 %v591
  %593 = vmatprep.subr.mxu0 0.0
  %594 = vmatpush1.msra.mxu0 0.0
  %595 = vmatprep.subr.mxu0 0.0
  %596 = vmatpush1.msra.mxu0 0.0
  %597 = vmatprep.subr.mxu0 0.0
  %598 = vmatpush1.msra.mxu0 0.0
  %599 = vmatprep.subr.mxu0 0.0
  %600 = vmatpush1.msra.mxu0 0.0
  %601 = vmatprep.subr.mxu0 0.0
  %602 = vmatpush1.msra.mxu0 0.0
  %603 = vmatprep.subr.mxu0 0.0
  %604 = vmatpush1.msra.mxu0 0.0
  %605 = vmatprep.subr.mxu0 0.0
  %606 = vmatpush1.msra.mxu0 0.0
  %607 = vmatprep.subr.mxu0 0.0
  %608 = vmatpush1.msra.mxu0 0.0
  %609 = vmatprep.subr.mxu0 0.0
  %610 = vmatpush1.msra.mxu0 0.0
  %611 = vmatprep.subr.mxu0 0.0
  %612 = vmatpush1.msra.mxu0 0.0
  %613 = vmatprep.subr.mxu0 0.0
  %614 = vmatpush1.msra.mxu0 0.0
  %615 = vmatprep.subr.mxu0 0.0
  %616 = vmatpush1.msra.mxu0 0.0
  %617 = vmatprep.subr.mxu0 0.0
  %618 = vmatpush1.msra.mxu0 0.0
  %619 = vmatprep.subr.mxu0 0.0
  %620 = vmatpush1.msra.mxu0 0.0
  %621 = vmatprep.subr.mxu0 0.0
  %622 = vmatpush1.msra.mxu0 0.0
  %623 = vmatprep.subr.mxu0 0.0
  %624 = vmatpush1.msra.mxu0 0.0
  %625 = vmatprep.subr.mxu0 0.0
  %626 = vmatpush1.msra.mxu0 0.0
  %627 = vmatprep.subr.mxu0 0.0
  %628 = vmatpush1.msra.mxu0 0.0
  %629 = vmatprep.subr.mxu0 0.0
  %630 = vmatpush1.msra.mxu0 0.0
  %631 = vmatprep.subr.mxu0 0.0
  %632 = vmatpush1.msra.mxu0 0.0
  %633 = vmatprep.subr.mxu0 0.0
  %634 = vmatpush1.msra.mxu0 0.0
  %635 = vmatprep.subr.mxu0 0.0
  %636 = vmatpush1.msra.mxu0 0.0
  %637 = vmatprep.subr.mxu0 0.0
  %638 = vmatpush1.msra.mxu0 0.0
  %639 = vmatprep.subr.mxu0 0.0
  %640 = vmatpush1.msra.mxu0 0.0
  %641 = vmatprep.subr.mxu0 0.0
  %642 = vmatpush1.msra.mxu0 0.0
  %643 = vmatprep.subr.mxu0 0.0
  %644 = vmatpush1.msra.mxu0 0.0
  %645 = vmatprep.subr.mxu0 0.0
  %646 = vmatpush1.msra.mxu0 0.0
  %647 = vmatprep.subr.mxu0 0.0
  %648 = vmatpush1.msra.mxu0 0.0
  %649 = vmatprep.subr.mxu0 0.0
  %650 = vmatpush1.msra.mxu0 0.0
  %651 = vmatprep.subr.mxu0 0.0
  %652 = vmatpush1.msra.mxu0 0.0
  %653 = vmatprep.mubr.f32.mxu0 0.0
  %v654 = vand.u32 %v269, 4294901760
  %v655 = vsub.f32 %v269, %v654
  %v656 = vand.u32 %v655, 4294901760
  %657 = vmatmul.mubr.f32.gmra.mrb[0].mxu0 %v656
  %v658 = vpop.f32.mrb[0].mxu0
  %v659 = vadd.f32 %v563, %v658
  %v660 = vpop.f32.mrb[0].mxu0
  %661 = vmatprep.mubr.f32.mxu0 0.0
  %v662 = vand.u32 %v272, 4294901760
  %v663 = vsub.f32 %v272, %v662
  %v664 = vand.u32 %v663, 4294901760
  %665 = vmatmul.mubr.f32.gmra.mrb[0].mxu0 %v664
  %v666 = vpop.f32.mrb[0].mxu0
  %v667 = vadd.f32 %v570, %v666
  %v668 = vpop.f32.mrb[0].mxu0
  %669 = vmatprep.mubr.f32.mxu0 0.0
  %v670 = vand.u32 %v275, 4294901760
  %v671 = vsub.f32 %v275, %v670
  %v672 = vand.u32 %v671, 4294901760
  %673 = vmatmul.mubr.f32.gmra.mrb[0].mxu0 %v672
  %v674 = vpop.f32.mrb[0].mxu0
  %v675 = vadd.f32 %v577, %v674
  %v676 = vpop.f32.mrb[0].mxu0
  %677 = vmatprep.mubr.f32.mxu0 0.0
  %v678 = vand.u32 %v278, 4294901760
  %v679 = vsub.f32 %v278, %v678
  %v680 = vand.u32 %v679, 4294901760
  %681 = vmatmul.mubr.f32.gmra.mrb[0].mxu0 %v680
  %v682 = vpop.f32.mrb[0].mxu0
  %v683 = vadd.f32 %v584, %v682
  %v684 = vpop.f32.mrb[0].mxu0
  %685 = vdwg.mxu0
  %686 = vmatprep.subr.mxu0 0.0
  %v687 = vand.u32 %v258, 4294901760
  %v688 = vsub.f32 %v258, %v687
  %v689 = vand.u32 %v688, 4294901760
  %690 = vmatpush1.msra.mxu0 %v689
  %691 = vmatprep.subr.mxu0 0.0
  %v692 = vand.u32 %v282, 4294901760
  %v693 = vsub.f32 %v282, %v692
  %v694 = vand.u32 %v693, 4294901760
  %695 = vmatpush1.msra.mxu0 %v694
  %696 = vmatprep.subr.mxu0 0.0
  %697 = vmatpush1.msra.mxu0 0.0
  %698 = vmatprep.subr.mxu0 0.0
  %699 = vmatpush1.msra.mxu0 0.0
  %700 = vmatprep.subr.mxu0 0.0
  %701 = vmatpush1.msra.mxu0 0.0
  %702 = vmatprep.subr.mxu0 0.0
  %703 = vmatpush1.msra.mxu0 0.0
  %704 = vmatprep.subr.mxu0 0.0
  %705 = vmatpush1.msra.mxu0 0.0
  %706 = vmatprep.subr.mxu0 0.0
  %707 = vmatpush1.msra.mxu0 0.0
  %708 = vmatprep.subr.mxu0 0.0
  %709 = vmatpush1.msra.mxu0 0.0
  %710 = vmatprep.subr.mxu0 0.0
  %711 = vmatpush1.msra.mxu0 0.0
  %712 = vmatprep.subr.mxu0 0.0
  %713 = vmatpush1.msra.mxu0 0.0
  %714 = vmatprep.subr.mxu0 0.0
  %715 = vmatpush1.msra.mxu0 0.0
  %716 = vmatprep.subr.mxu0 0.0
  %717 = vmatpush1.msra.mxu0 0.0
  %718 = vmatprep.subr.mxu0 0.0
  %719 = vmatpush1.msra.mxu0 0.0
  %720 = vmatprep.subr.mxu0 0.0
  %721 = vmatpush1.msra.mxu0 0.0
  %722 = vmatprep.subr.mxu0 0.0
  %723 = vmatpush1.msra.mxu0 0.0
  %724 = vmatprep.subr.mxu0 0.0
  %725 = vmatpush1.msra.mxu0 0.0
  %726 = vmatprep.subr.mxu0 0.0
  %727 = vmatpush1.msra.mxu0 0.0
  %728 = vmatprep.subr.mxu0 0.0
  %729 = vmatpush1.msra.mxu0 0.0
  %730 = vmatprep.subr.mxu0 0.0
  %731 = vmatpush1.msra.mxu0 0.0
  %732 = vmatprep.subr.mxu0 0.0
  %733 = vmatpush1.msra.mxu0 0.0
  %734 = vmatprep.subr.mxu0 0.0
  %735 = vmatpush1.msra.mxu0 0.0
  %736 = vmatprep.subr.mxu0 0.0
  %737 = vmatpush1.msra.mxu0 0.0
  %738 = vmatprep.subr.mxu0 0.0
  %739 = vmatpush1.msra.mxu0 0.0
  %740 = vmatprep.subr.mxu0 0.0
  %741 = vmatpush1.msra.mxu0 0.0
  %742 = vmatprep.subr.mxu0 0.0
  %743 = vmatpush1.msra.mxu0 0.0
  %744 = vmatprep.subr.mxu0 0.0
  %745 = vmatpush1.msra.mxu0 0.0
  %746 = vmatprep.subr.mxu0 0.0
  %747 = vmatpush1.msra.mxu0 0.0
  %748 = vmatprep.subr.mxu0 0.0
  %749 = vmatpush1.msra.mxu0 0.0
  %750 = vmatprep.subr.mxu0 0.0
  %751 = vmatpush1.msra.mxu0 0.0
  %752 = vmatprep.subr.mxu0 0.0
  %753 = vmatpush1.msra.mxu0 0.0
  %754 = vmatprep.subr.mxu0 0.0
  %755 = vmatpush1.msra.mxu0 0.0
  %756 = vmatprep.mubr.f32.mxu0 0.0
  %v757 = vand.u32 %v269, 4294901760
  %758 = vmatmul.mubr.f32.gmra.mrb[0].mxu0 %v757
  %v759 = vpop.f32.mrb[0].mxu0
  %v760 = vadd.f32 %v659, %v759
  %v761 = vpop.f32.mrb[0].mxu0
  %762 = vmatprep.mubr.f32.mxu0 0.0
  %v763 = vand.u32 %v272, 4294901760
  %764 = vmatmul.mubr.f32.gmra.mrb[0].mxu0 %v763
  %v765 = vpop.f32.mrb[0].mxu0
  %v766 = vadd.f32 %v667, %v765
  %v767 = vpop.f32.mrb[0].mxu0
  %768 = vmatprep.mubr.f32.mxu0 0.0
  %v769 = vand.u32 %v275, 4294901760
  %770 = vmatmul.mubr.f32.gmra.mrb[0].mxu0 %v769
  %v771 = vpop.f32.mrb[0].mxu0
  %v772 = vadd.f32 %v675, %v771
  %v773 = vpop.f32.mrb[0].mxu0
  %774 = vmatprep.mubr.f32.mxu0 0.0
  %v775 = vand.u32 %v278, 4294901760
  %776 = vmatmul.mubr.f32.gmra.mrb[0].mxu0 %v775
  %v777 = vpop.f32.mrb[0].mxu0
  %v778 = vadd.f32 %v683, %v777
  %v779 = vpop.f32.mrb[0].mxu0
  %780 = vdwg.mxu0
  %781 = vmatprep.subr.mxu0 0.0
  %v782 = vand.u32 %v258, 4294901760
  %783 = vmatpush1.msra.mxu0 %v782
  %784 = vmatprep.subr.mxu0 0.0
  %v785 = vand.u32 %v282, 4294901760
  %786 = vmatpush1.msra.mxu0 %v785
  %787 = vmatprep.subr.mxu0 0.0
  %788 = vmatpush1.msra.mxu0 0.0
  %789 = vmatprep.subr.mxu0 0.0
  %790 = vmatpush1.msra.mxu0 0.0
  %791 = vmatprep.subr.mxu0 0.0
  %792 = vmatpush1.msra.mxu0 0.0
  %793 = vmatprep.subr.mxu0 0.0
  %794 = vmatpush1.msra.mxu0 0.0
  %795 = vmatprep.subr.mxu0 0.0
  %796 = vmatpush1.msra.mxu0 0.0
  %797 = vmatprep.subr.mxu0 0.0
  %798 = vmatpush1.msra.mxu0 0.0
  %799 = vmatprep.subr.mxu0 0.0
  %800 = vmatpush1.msra.mxu0 0.0
  %801 = vmatprep.subr.mxu0 0.0
  %802 = vmatpush1.msra.mxu0 0.0
  %803 = vmatprep.subr.mxu0 0.0
  %804 = vmatpush1.msra.mxu0 0.0
  %805 = vmatprep.subr.mxu0 0.0
  %806 = vmatpush1.msra.mxu0 0.0
  %807 = vmatprep.subr.mxu0 0.0
  %808 = vmatpush1.msra.mxu0 0.0
  %809 = vmatprep.subr.mxu0 0.0
  %810 = vmatpush1.msra.mxu0 0.0
  %811 = vmatprep.subr.mxu0 0.0
  %812 = vmatpush1.msra.mxu0 0.0
  %813 = vmatprep.subr.mxu0 0.0
  %814 = vmatpush1.msra.mxu0 0.0
  %815 = vmatprep.subr.mxu0 0.0
  %816 = vmatpush1.msra.mxu0 0.0
  %817 = vmatprep.subr.mxu0 0.0
  %818 = vmatpush1.msra.mxu0 0.0
  %819 = vmatprep.subr.mxu0 0.0
  %820 = vmatpush1.msra.mxu0 0.0
  %821 = vmatprep.subr.mxu0 0.0
  %822 = vmatpush1.msra.mxu0 0.0
  %823 = vmatprep.subr.mxu0 0.0
  %824 = vmatpush1.msra.mxu0 0.0
  %825 = vmatprep.subr.mxu0 0.0
  %826 = vmatpush1.msra.mxu0 0.0
  %827 = vmatprep.subr.mxu0 0.0
  %828 = vmatpush1.msra.mxu0 0.0
  %829 = vmatprep.subr.mxu0 0.0
  %830 = vmatpush1.msra.mxu0 0.0
  %831 = vmatprep.subr.mxu0 0.0
  %832 = vmatpush1.msra.mxu0 0.0
  %833 = vmatprep.subr.mxu0 0.0
  %834 = vmatpush1.msra.mxu0 0.0
  %835 = vmatprep.subr.mxu0 0.0
  %836 = vmatpush1.msra.mxu0 0.0
  %837 = vmatprep.subr.mxu0 0.0
  %838 = vmatpush1.msra.mxu0 0.0
  %839 = vmatprep.subr.mxu0 0.0
  %840 = vmatpush1.msra.mxu0 0.0
  %841 = vmatprep.subr.mxu0 0.0
  %842 = vmatpush1.msra.mxu0 0.0
  %843 = vmatprep.subr.mxu0 0.0
  %844 = vmatpush1.msra.mxu0 0.0
  %845 = vmatprep.subr.mxu0 0.0
  %846 = vmatpush1.msra.mxu0 0.0
  %847 = vmatprep.mubr.f32.mxu0 0.0
  %v848 = vand.u32 %v269, 4294901760
  %849 = vmatmul.mubr.f32.gmra.mrb[0].mxu0 %v848
  %v850 = vpop.f32.mrb[0].mxu0
  %v851 = vadd.f32 %v760, %v850
  %v852 = vpop.f32.mrb[0].mxu0
  %853 = vmatprep.mubr.f32.mxu0 0.0
  %v854 = vand.u32 %v272, 4294901760
  %855 = vmatmul.mubr.f32.gmra.mrb[0].mxu0 %v854
  %v856 = vpop.f32.mrb[0].mxu0
  %v857 = vadd.f32 %v766, %v856
  %v858 = vpop.f32.mrb[0].mxu0
  %859 = vmatprep.mubr.f32.mxu0 0.0
  %v860 = vand.u32 %v275, 4294901760
  %861 = vmatmul.mubr.f32.gmra.mrb[0].mxu0 %v860
  %v862 = vpop.f32.mrb[0].mxu0
  %v863 = vadd.f32 %v772, %v862
  %v864 = vpop.f32.mrb[0].mxu0
  %865 = vmatprep.mubr.f32.mxu0 0.0
  %v866 = vand.u32 %v278, 4294901760
  %867 = vmatmul.mubr.f32.gmra.mrb[0].mxu0 %v866
  %v868 = vpop.f32.mrb[0].mxu0
  %v869 = vadd.f32 %v778, %v868
  %v870 = vpop.f32.mrb[0].mxu0
  %871 = vdwg.mxu0
  %v872 = vmax.f32 %v851, 0.0
  %v873 = vmax.f32 %v857, 0.0
  %v874 = vmax.f32 %v863, 0.0
  %v875 = vmax.f32 %v869, 0.0
  %v876 = vld [vmem:[%s4] sm:$0xff]
  %v877 = vld [vmem:[%s4 + $0x8] sm:$0xff]
  %v878 = vld [vmem:[%s4 + $0x10] sm:$0xff]
  %v879 = vld [vmem:[%s4 + $0x18] sm:$0xff]
  %v880 = vld [vmem:[%s4 + $0x20] sm:$0xff]
  %v881 = vld [vmem:[%s4 + $0x28] sm:$0xff]
  %v882 = vld [vmem:[%s4 + $0x30] sm:$0xff]
  %v883 = vld [vmem:[%s4 + $0x38] sm:$0xff]
  %v884 = vld [vmem:[%s4 + $0x40] sm:$0xff]
  %v885 = vld [vmem:[%s4 + $0x48] sm:$0xff]
  %v886 = vld [vmem:[%s4 + $0x50] sm:$0xff]
  %v887 = vld [vmem:[%s4 + $0x58] sm:$0xff]
  %v888 = vld [vmem:[%s5] sm:$0x1]
  %889 = vst.msk [vmem:[#allocation4 + $0x1] sm:$0xff] %vm82, %v872
  %890 = vst.msk [vmem:[#allocation4 + $0x9] sm:$0xff] %vm82, %v873
  %v891 = vld [vmem:[#allocation4] sm:$0xff]
  %v892 = vld [vmem:[#allocation4 + $0x8] sm:$0xff]
  %893 = vst.msk [vmem:[#allocation5] sm:$0xff] %vm82, %v891
  %894 = vst.msk [vmem:[#allocation5 + $0x8] sm:$0xff] %vm82, %v892
  %v895 = vld [vmem:[#allocation4 + $0x1] sm:$0xff]
  %v896 = vld [vmem:[#allocation4 + $0x9] sm:$0xff]
  %899 = vrot.lane.b32.xlu0 %v895, 32
  %v900 = vpop.permute.xlu0 %899
  %901 = vrot.lane.b32.xlu0 %v896, 32
  %v902 = vpop.permute.xlu0 %901
  %vm905 = vcmask 523520
  %906 = vst.msk [vmem:[#allocation5] sm:$0xff] %vm905, %v900
  %907 = vst.msk [vmem:[#allocation5 + $0x8] sm:$0xff] %vm905, %v902
  %v908 = vld [vmem:[#allocation4 + $0x2] sm:$0xff]
  %v909 = vld [vmem:[#allocation4 + $0xa] sm:$0xff]
  %912 = vrot.lane.b32.xlu0 %v908, 64
  %v913 = vpop.permute.xlu0 %912
  %914 = vrot.lane.b32.xlu0 %v909, 64
  %v915 = vpop.permute.xlu0 %914
  %vm918 = vcmask 785920
  %919 = vst.msk [vmem:[#allocation5] sm:$0xff] %vm918, %v913
  %920 = vst.msk [vmem:[#allocation5 + $0x8] sm:$0xff] %vm918, %v915
  %921 = vst.msk [vmem:[#allocation4 + $0x1] sm:$0xff] %vm82, %v874
  %922 = vst.msk [vmem:[#allocation4 + $0x9] sm:$0xff] %vm82, %v875
  %v923 = vld [vmem:[#allocation4] sm:$0xff]
  %v924 = vld [vmem:[#allocation4 + $0x8] sm:$0xff]
  %925 = vst.msk [vmem:[#allocation5 + $0x10] sm:$0xff] %vm82, %v923
  %926 = vst.msk [vmem:[#allocation5 + $0x18] sm:$0xff] %vm82, %v924
  %v927 = vld [vmem:[#allocation4 + $0x1] sm:$0xff]
  %v928 = vld [vmem:[#allocation4 + $0x9] sm:$0xff]
  %931 = vrot.lane.b32.xlu0 %v927, 32
  %v932 = vpop.permute.xlu0 %931
  %933 = vrot.lane.b32.xlu0 %v928, 32
  %v934 = vpop.permute.xlu0 %933
  %937 = vst.msk [vmem:[#allocation5 + $0x10] sm:$0xff] %vm905, %v932
  %938 = vst.msk [vmem:[#allocation5 + $0x18] sm:$0xff] %vm905, %v934
  %v939 = vld [vmem:[#allocation4 + $0x2] sm:$0xff]
  %v940 = vld [vmem:[#allocation4 + $0xa] sm:$0xff]
  %943 = vrot.lane.b32.xlu0 %v939, 64
  %v944 = vpop.permute.xlu0 %943
  %945 = vrot.lane.b32.xlu0 %v940, 64
  %v946 = vpop.permute.xlu0 %945
  %949 = vst.msk [vmem:[#allocation5 + $0x10] sm:$0xff] %vm918, %v944
  %950 = vst.msk [vmem:[#allocation5 + $0x18] sm:$0xff] %vm918, %v946
  %v951 = vld [vmem:[#allocation5] sm:$0xff]
  %v952 = vld [vmem:[#allocation5 + $0x8] sm:$0xff]
  %v953 = vld [vmem:[#allocation5 + $0x10] sm:$0xff]
  %v954 = vld [vmem:[#allocation5 + $0x18] sm:$0xff]
  %v956 = vlaneseq
  %v957 = vshrl.u32 %v956, 7
  %v958 = vsub.s32 0, %v957
  %v959 = vrot.slane %v888, %v958
  %vm961 = vcmask 785408
  %v963 = vsel %vm961, %v951, 0
  %v966 = vsel %vm961, %v952, 0
  %v969 = vsel %vm961, %v953, 0
  %v972 = vsel %vm961, %v954, 0
  %974 = vmatprep.subr.mxu0 0.0
  %v975 = vand.u32 %v876, 4294901760
  %976 = vmatpush1.msra.mxu0 %v975
  %977 = vmatprep.subr.mxu0 0.0
  %v978 = vand.u32 %v877, 4294901760
  %979 = vmatpush1.msra.mxu0 %v978
  %980 = vmatprep.subr.mxu0 0.0
  %v981 = vand.u32 %v878, 4294901760
  %982 = vmatpush1.msra.mxu0 %v981
  %983 = vmatprep.subr.mxu0 0.0
  %v984 = vand.u32 %v879, 4294901760
  %985 = vmatpush1.msra.mxu0 %v984
  %986 = vmatprep.subr.mxu0 0.0
  %v987 = vand.u32 %v880, 4294901760
  %988 = vmatpush1.msra.mxu0 %v987
  %989 = vmatprep.subr.mxu0 0.0
  %v990 = vand.u32 %v881, 4294901760
  %991 = vmatpush1.msra.mxu0 %v990
  %992 = vmatprep.subr.mxu0 0.0
  %v993 = vand.u32 %v882, 4294901760
  %994 = vmatpush1.msra.mxu0 %v993
  %995 = vmatprep.subr.mxu0 0.0
  %v996 = vand.u32 %v883, 4294901760
  %997 = vmatpush1.msra.mxu0 %v996
  %998 = vmatprep.subr.mxu0 0.0
  %v999 = vand.u32 %v884, 4294901760
  %1000 = vmatpush1.msra.mxu0 %v999
  %1001 = vmatprep.subr.mxu0 0.0
  %v1002 = vand.u32 %v885, 4294901760
  %1003 = vmatpush1.msra.mxu0 %v1002
  %1004 = vmatprep.subr.mxu0 0.0
  %v1005 = vand.u32 %v886, 4294901760
  %1006 = vmatpush1.msra.mxu0 %v1005
  %1007 = vmatprep.subr.mxu0 0.0
  %v1008 = vand.u32 %v887, 4294901760
  %1009 = vmatpush1.msra.mxu0 %v1008
  %1010 = vmatprep.subr.mxu0 0.0
  %1011 = vmatpush1.msra.mxu0 0.0
  %1012 = vmatprep.subr.mxu0 0.0
  %1013 = vmatpush1.msra.mxu0 0.0
  %1014 = vmatprep.subr.mxu0 0.0
  %1015 = vmatpush1.msra.mxu0 0.0
  %1016 = vmatprep.subr.mxu0 0.0
  %1017 = vmatpush1.msra.mxu0 0.0
  %1018 = vmatprep.subr.mxu0 0.0
  %1019 = vmatpush1.msra.mxu0 0.0
  %1020 = vmatprep.subr.mxu0 0.0
  %1021 = vmatpush1.msra.mxu0 0.0
  %1022 = vmatprep.subr.mxu0 0.0
  %1023 = vmatpush1.msra.mxu0 0.0
  %1024 = vmatprep.subr.mxu0 0.0
  %1025 = vmatpush1.msra.mxu0 0.0
  %1026 = vmatprep.subr.mxu0 0.0
  %1027 = vmatpush1.msra.mxu0 0.0
  %1028 = vmatprep.subr.mxu0 0.0
  %1029 = vmatpush1.msra.mxu0 0.0
  %1030 = vmatprep.subr.mxu0 0.0
  %1031 = vmatpush1.msra.mxu0 0.0
  %1032 = vmatprep.subr.mxu0 0.0
  %1033 = vmatpush1.msra.mxu0 0.0
  %1034 = vmatprep.subr.mxu0 0.0
  %1035 = vmatpush1.msra.mxu0 0.0
  %1036 = vmatprep.subr.mxu0 0.0
  %1037 = vmatpush1.msra.mxu0 0.0
  %1038 = vmatprep.subr.mxu0 0.0
  %1039 = vmatpush1.msra.mxu0 0.0
  %1040 = vmatprep.subr.mxu0 0.0
  %1041 = vmatpush1.msra.mxu0 0.0
  %1042 = vmatprep.subr.mxu0 0.0
  %1043 = vmatpush1.msra.mxu0 0.0
  %1044 = vmatprep.subr.mxu0 0.0
  %1045 = vmatpush1.msra.mxu0 0.0
  %1046 = vmatprep.subr.mxu0 0.0
  %1047 = vmatpush1.msra.mxu0 0.0
  %1048 = vmatprep.subr.mxu0 0.0
  %1049 = vmatpush1.msra.mxu0 0.0
  %1050 = vmatprep.mubr.f32.mxu0 0.0
  %v1051 = vand.u32 %v963, 4294901760
  %v1052 = vsub.f32 %v963, %v1051
  %v1053 = vand.u32 %v1052, 4294901760
  %v1054 = vsub.f32 %v1052, %v1053
  %v1055 = vand.u32 %v1054, 4294901760
  %1056 = vmatmul.mubr.f32.gmra.mrb[0].mxu0 %v1055
  %v1057 = vpop.f32.mrb[0].mxu0
  %v1058 = vadd.f32 %v959, %v1057
  %v1059 = vpop.f32.mrb[0].mxu0
  %1060 = vmatprep.mubr.f32.mxu0 0.0
  %v1061 = vand.u32 %v966, 4294901760
  %v1062 = vsub.f32 %v966, %v1061
  %v1063 = vand.u32 %v1062, 4294901760
  %v1064 = vsub.f32 %v1062, %v1063
  %v1065 = vand.u32 %v1064, 4294901760
  %1066 = vmatmul.mubr.f32.gmra.mrb[0].mxu0 %v1065
  %v1067 = vpop.f32.mrb[0].mxu0
  %v1068 = vadd.f32 %v959, %v1067
  %v1069 = vpop.f32.mrb[0].mxu0
  %1070 = vmatprep.mubr.f32.mxu0 0.0
  %v1071 = vand.u32 %v969, 4294901760
  %v1072 = vsub.f32 %v969, %v1071
  %v1073 = vand.u32 %v1072, 4294901760
  %v1074 = vsub.f32 %v1072, %v1073
  %v1075 = vand.u32 %v1074, 4294901760
  %1076 = vmatmul.mubr.f32.gmra.mrb[0].mxu0 %v1075
  %v1077 = vpop.f32.mrb[0].mxu0
  %v1078 = vadd.f32 %v959, %v1077
  %v1079 = vpop.f32.mrb[0].mxu0
  %1080 = vmatprep.mubr.f32.mxu0 0.0
  %v1081 = vand.u32 %v972, 4294901760
  %v1082 = vsub.f32 %v972, %v1081
  %v1083 = vand.u32 %v1082, 4294901760
  %v1084 = vsub.f32 %v1082, %v1083
  %v1085 = vand.u32 %v1084, 4294901760
  %1086 = vmatmul.mubr.f32.gmra.mrb[0].mxu0 %v1085
  %v1087 = vpop.f32.mrb[0].mxu0
  %v1088 = vadd.f32 %v959, %v1087
  %v1089 = vpop.f32.mrb[0].mxu0
  %1090 = vdwg.mxu0
  %1091 = vmatprep.subr.mxu0 0.0
  %v1092 = vand.u32 %v876, 4294901760
  %v1093 = vsub.f32 %v876, %v1092
  %v1094 = vand.u32 %v1093, 4294901760
  %v1095 = vsub.f32 %v1093, %v1094
  %v1096 = vand.u32 %v1095, 4294901760
  %1097 = vmatpush1.msra.mxu0 %v1096
  %1098 = vmatprep.subr.mxu0 0.0
  %v1099 = vand.u32 %v877, 4294901760
  %v1100 = vsub.f32 %v877, %v1099
  %v1101 = vand.u32 %v1100, 4294901760
  %v1102 = vsub.f32 %v1100, %v1101
  %v1103 = vand.u32 %v1102, 4294901760
  %1104 = vmatpush1.msra.mxu0 %v1103
  %1105 = vmatprep.subr.mxu0 0.0
  %v1106 = vand.u32 %v878, 4294901760
  %v1107 = vsub.f32 %v878, %v1106
  %v1108 = vand.u32 %v1107, 4294901760
  %v1109 = vsub.f32 %v1107, %v1108
  %v1110 = vand.u32 %v1109, 4294901760
  %1111 = vmatpush1.msra.mxu0 %v1110
  %1112 = vmatprep.subr.mxu0 0.0
  %v1113 = vand.u32 %v879, 4294901760
  %v1114 = vsub.f32 %v879, %v1113
  %v1115 = vand.u32 %v1114, 4294901760
  %v1116 = vsub.f32 %v1114, %v1115
  %v1117 = vand.u32 %v1116, 4294901760
  %1118 = vmatpush1.msra.mxu0 %v1117
  %1119 = vmatprep.subr.mxu0 0.0
  %v1120 = vand.u32 %v880, 4294901760
  %v1121 = vsub.f32 %v880, %v1120
  %v1122 = vand.u32 %v1121, 4294901760
  %v1123 = vsub.f32 %v1121, %v1122
  %v1124 = vand.u32 %v1123, 4294901760
  %1125 = vmatpush1.msra.mxu0 %v1124
  %1126 = vmatprep.subr.mxu0 0.0
  %v1127 = vand.u32 %v881, 4294901760
  %v1128 = vsub.f32 %v881, %v1127
  %v1129 = vand.u32 %v1128, 4294901760
  %v1130 = vsub.f32 %v1128, %v1129
  %v1131 = vand.u32 %v1130, 4294901760
  %1132 = vmatpush1.msra.mxu0 %v1131
  %1133 = vmatprep.subr.mxu0 0.0
  %v1134 = vand.u32 %v882, 4294901760
  %v1135 = vsub.f32 %v882, %v1134
  %v1136 = vand.u32 %v1135, 4294901760
  %v1137 = vsub.f32 %v1135, %v1136
  %v1138 = vand.u32 %v1137, 4294901760
  %1139 = vmatpush1.msra.mxu0 %v1138
  %1140 = vmatprep.subr.mxu0 0.0
  %v1141 = vand.u32 %v883, 4294901760
  %v1142 = vsub.f32 %v883, %v1141
  %v1143 = vand.u32 %v1142, 4294901760
  %v1144 = vsub.f32 %v1142, %v1143
  %v1145 = vand.u32 %v1144, 4294901760
  %1146 = vmatpush1.msra.mxu0 %v1145
  %1147 = vmatprep.subr.mxu0 0.0
  %v1148 = vand.u32 %v884, 4294901760
  %v1149 = vsub.f32 %v884, %v1148
  %v1150 = vand.u32 %v1149, 4294901760
  %v1151 = vsub.f32 %v1149, %v1150
  %v1152 = vand.u32 %v1151, 4294901760
  %1153 = vmatpush1.msra.mxu0 %v1152
  %1154 = vmatprep.subr.mxu0 0.0
  %v1155 = vand.u32 %v885, 4294901760
  %v1156 = vsub.f32 %v885, %v1155
  %v1157 = vand.u32 %v1156, 4294901760
  %v1158 = vsub.f32 %v1156, %v1157
  %v1159 = vand.u32 %v1158, 4294901760
  %1160 = vmatpush1.msra.mxu0 %v1159
  %1161 = vmatprep.subr.mxu0 0.0
  %v1162 = vand.u32 %v886, 4294901760
  %v1163 = vsub.f32 %v886, %v1162
  %v1164 = vand.u32 %v1163, 4294901760
  %v1165 = vsub.f32 %v1163, %v1164
  %v1166 = vand.u32 %v1165, 4294901760
  %1167 = vmatpush1.msra.mxu0 %v1166
  %1168 = vmatprep.subr.mxu0 0.0
  %v1169 = vand.u32 %v887, 4294901760
  %v1170 = vsub.f32 %v887, %v1169
  %v1171 = vand.u32 %v1170, 4294901760
  %v1172 = vsub.f32 %v1170, %v1171
  %v1173 = vand.u32 %v1172, 4294901760
  %1174 = vmatpush1.msra.mxu0 %v1173
  %1175 = vmatprep.subr.mxu0 0.0
  %1176 = vmatpush1.msra.mxu0 0.0
  %1177 = vmatprep.subr.mxu0 0.0
  %1178 = vmatpush1.msra.mxu0 0.0
  %1179 = vmatprep.subr.mxu0 0.0
  %1180 = vmatpush1.msra.mxu0 0.0
  %1181 = vmatprep.subr.mxu0 0.0
  %1182 = vmatpush1.msra.mxu0 0.0
  %1183 = vmatprep.subr.mxu0 0.0
  %1184 = vmatpush1.msra.mxu0 0.0
  %1185 = vmatprep.subr.mxu0 0.0
  %1186 = vmatpush1.msra.mxu0 0.0
  %1187 = vmatprep.subr.mxu0 0.0
  %1188 = vmatpush1.msra.mxu0 0.0
  %1189 = vmatprep.subr.mxu0 0.0
  %1190 = vmatpush1.msra.mxu0 0.0
  %1191 = vmatprep.subr.mxu0 0.0
  %1192 = vmatpush1.msra.mxu0 0.0
  %1193 = vmatprep.subr.mxu0 0.0
  %1194 = vmatpush1.msra.mxu0 0.0
  %1195 = vmatprep.subr.mxu0 0.0
  %1196 = vmatpush1.msra.mxu0 0.0
  %1197 = vmatprep.subr.mxu0 0.0
  %1198 = vmatpush1.msra.mxu0 0.0
  %1199 = vmatprep.subr.mxu0 0.0
  %1200 = vmatpush1.msra.mxu0 0.0
  %1201 = vmatprep.subr.mxu0 0.0
  %1202 = vmatpush1.msra.mxu0 0.0
  %1203 = vmatprep.subr.mxu0 0.0
  %1204 = vmatpush1.msra.mxu0 0.0
  %1205 = vmatprep.subr.mxu0 0.0
  %1206 = vmatpush1.msra.mxu0 0.0
  %1207 = vmatprep.subr.mxu0 0.0
  %1208 = vmatpush1.msra.mxu0 0.0
  %1209 = vmatprep.subr.mxu0 0.0
  %1210 = vmatpush1.msra.mxu0 0.0
  %1211 = vmatprep.subr.mxu0 0.0
  %1212 = vmatpush1.msra.mxu0 0.0
  %1213 = vmatprep.subr.mxu0 0.0
  %1214 = vmatpush1.msra.mxu0 0.0
  %1215 = vmatprep.mubr.f32.mxu0 0.0
  %v1216 = vand.u32 %v963, 4294901760
  %1217 = vmatmul.mubr.f32.gmra.mrb[0].mxu0 %v1216
  %v1218 = vpop.f32.mrb[0].mxu0
  %v1219 = vadd.f32 %v1058, %v1218
  %v1220 = vpop.f32.mrb[0].mxu0
  %1221 = vmatprep.mubr.f32.mxu0 0.0
  %v1222 = vand.u32 %v966, 4294901760
  %1223 = vmatmul.mubr.f32.gmra.mrb[0].mxu0 %v1222
  %v1224 = vpop.f32.mrb[0].mxu0
  %v1225 = vadd.f32 %v1068, %v1224
  %v1226 = vpop.f32.mrb[0].mxu0
  %1227 = vmatprep.mubr.f32.mxu0 0.0
  %v1228 = vand.u32 %v969, 4294901760
  %1229 = vmatmul.mubr.f32.gmra.mrb[0].mxu0 %v1228
  %v1230 = vpop.f32.mrb[0].mxu0
  %v1231 = vadd.f32 %v1078, %v1230
  %v1232 = vpop.f32.mrb[0].mxu0
  %1233 = vmatprep.mubr.f32.mxu0 0.0
  %v1234 = vand.u32 %v972, 4294901760
  %1235 = vmatmul.mubr.f32.gmra.mrb[0].mxu0 %v1234
  %v1236 = vpop.f32.mrb[0].mxu0
  %v1237 = vadd.f32 %v1088, %v1236
  %v1238 = vpop.f32.mrb[0].mxu0
  %1239 = vdwg.mxu0
  %1240 = vmatprep.subr.mxu0 0.0
  %v1241 = vand.u32 %v876, 4294901760
  %v1242 = vsub.f32 %v876, %v1241
  %1243 = vmatpush1.msra.mxu0 %v1242
  %1244 = vmatprep.subr.mxu0 0.0
  %v1245 = vand.u32 %v877, 4294901760
  %v1246 = vsub.f32 %v877, %v1245
  %1247 = vmatpush1.msra.mxu0 %v1246
  %1248 = vmatprep.subr.mxu0 0.0
  %v1249 = vand.u32 %v878, 4294901760
  %v1250 = vsub.f32 %v878, %v1249
  %1251 = vmatpush1.msra.mxu0 %v1250
  %1252 = vmatprep.subr.mxu0 0.0
  %v1253 = vand.u32 %v879, 4294901760
  %v1254 = vsub.f32 %v879, %v1253
  %1255 = vmatpush1.msra.mxu0 %v1254
  %1256 = vmatprep.subr.mxu0 0.0
  %v1257 = vand.u32 %v880, 4294901760
  %v1258 = vsub.f32 %v880, %v1257
  %1259 = vmatpush1.msra.mxu0 %v1258
  %1260 = vmatprep.subr.mxu0 0.0
  %v1261 = vand.u32 %v881, 4294901760
  %v1262 = vsub.f32 %v881, %v1261
  %1263 = vmatpush1.msra.mxu0 %v1262
  %1264 = vmatprep.subr.mxu0 0.0
  %v1265 = vand.u32 %v882, 4294901760
  %v1266 = vsub.f32 %v882, %v1265
  %1267 = vmatpush1.msra.mxu0 %v1266
  %1268 = vmatprep.subr.mxu0 0.0
  %v1269 = vand.u32 %v883, 4294901760
  %v1270 = vsub.f32 %v883, %v1269
  %1271 = vmatpush1.msra.mxu0 %v1270
  %1272 = vmatprep.subr.mxu0 0.0
  %v1273 = vand.u32 %v884, 4294901760
  %v1274 = vsub.f32 %v884, %v1273
  %1275 = vmatpush1.msra.mxu0 %v1274
  %1276 = vmatprep.subr.mxu0 0.0
  %v1277 = vand.u32 %v885, 4294901760
  %v1278 = vsub.f32 %v885, %v1277
  %1279 = vmatpush1.msra.mxu0 %v1278
  %1280 = vmatprep.subr.mxu0 0.0
  %v1281 = vand.u32 %v886, 4294901760
  %v1282 = vsub.f32 %v886, %v1281
  %1283 = vmatpush1.msra.mxu0 %v1282
  %1284 = vmatprep.subr.mxu0 0.0
  %v1285 = vand.u32 %v887, 4294901760
  %v1286 = vsub.f32 %v887, %v1285
  %1287 = vmatpush1.msra.mxu0 %v1286
  %1288 = vmatprep.subr.mxu0 0.0
  %1289 = vmatpush1.msra.mxu0 0.0
  %1290 = vmatprep.subr.mxu0 0.0
  %1291 = vmatpush1.msra.mxu0 0.0
  %1292 = vmatprep.subr.mxu0 0.0
  %1293 = vmatpush1.msra.mxu0 0.0
  %1294 = vmatprep.subr.mxu0 0.0
  %1295 = vmatpush1.msra.mxu0 0.0
  %1296 = vmatprep.subr.mxu0 0.0
  %1297 = vmatpush1.msra.mxu0 0.0
  %1298 = vmatprep.subr.mxu0 0.0
  %1299 = vmatpush1.msra.mxu0 0.0
  %1300 = vmatprep.subr.mxu0 0.0
  %1301 = vmatpush1.msra.mxu0 0.0
  %1302 = vmatprep.subr.mxu0 0.0
  %1303 = vmatpush1.msra.mxu0 0.0
  %1304 = vmatprep.subr.mxu0 0.0
  %1305 = vmatpush1.msra.mxu0 0.0
  %1306 = vmatprep.subr.mxu0 0.0
  %1307 = vmatpush1.msra.mxu0 0.0
  %1308 = vmatprep.subr.mxu0 0.0
  %1309 = vmatpush1.msra.mxu0 0.0
  %1310 = vmatprep.subr.mxu0 0.0
  %1311 = vmatpush1.msra.mxu0 0.0
  %1312 = vmatprep.subr.mxu0 0.0
  %1313 = vmatpush1.msra.mxu0 0.0
  %1314 = vmatprep.subr.mxu0 0.0
  %1315 = vmatpush1.msra.mxu0 0.0
  %1316 = vmatprep.subr.mxu0 0.0
  %1317 = vmatpush1.msra.mxu0 0.0
  %1318 = vmatprep.subr.mxu0 0.0
  %1319 = vmatpush1.msra.mxu0 0.0
  %1320 = vmatprep.subr.mxu0 0.0
  %1321 = vmatpush1.msra.mxu0 0.0
  %1322 = vmatprep.subr.mxu0 0.0
  %1323 = vmatpush1.msra.mxu0 0.0
  %1324 = vmatprep.subr.mxu0 0.0
  %1325 = vmatpush1.msra.mxu0 0.0
  %1326 = vmatprep.subr.mxu0 0.0
  %1327 = vmatpush1.msra.mxu0 0.0
  %1328 = vmatprep.mubr.f32.mxu0 0.0
  %v1329 = vand.u32 %v963, 4294901760
  %v1330 = vsub.f32 %v963, %v1329
  %1331 = vmatmul.mubr.f32.gmra.mrb[0].mxu0 %v1330
  %v1332 = vpop.f32.mrb[0].mxu0
  %v1333 = vadd.f32 %v1219, %v1332
  %v1334 = vpop.f32.mrb[0].mxu0
  %1335 = vmatprep.mubr.f32.mxu0 0.0
  %v1336 = vand.u32 %v966, 4294901760
  %v1337 = vsub.f32 %v966, %v1336
  %1338 = vmatmul.mubr.f32.gmra.mrb[0].mxu0 %v1337
  %v1339 = vpop.f32.mrb[0].mxu0
  %v1340 = vadd.f32 %v1225, %v1339
  %v1341 = vpop.f32.mrb[0].mxu0
  %1342 = vmatprep.mubr.f32.mxu0 0.0
  %v1343 = vand.u32 %v969, 4294901760
  %v1344 = vsub.f32 %v969, %v1343
  %1345 = vmatmul.mubr.f32.gmra.mrb[0].mxu0 %v1344
  %v1346 = vpop.f32.mrb[0].mxu0
  %v1347 = vadd.f32 %v1231, %v1346
  %v1348 = vpop.f32.mrb[0].mxu0
  %1349 = vmatprep.mubr.f32.mxu0 0.0
  %v1350 = vand.u32 %v972, 4294901760
  %v1351 = vsub.f32 %v972, %v1350
  %1352 = vmatmul.mubr.f32.gmra.mrb[0].mxu0 %v1351
  %v1353 = vpop.f32.mrb[0].mxu0
  %v1354 = vadd.f32 %v1237, %v1353
  %v1355 = vpop.f32.mrb[0].mxu0
  %1356 = vdwg.mxu0
  %1357 = vmatprep.subr.mxu0 0.0
  %v1358 = vand.u32 %v876, 4294901760
  %1359 = vmatpush1.msra.mxu0 %v1358
  %1360 = vmatprep.subr.mxu0 0.0
  %v1361 = vand.u32 %v877, 4294901760
  %1362 = vmatpush1.msra.mxu0 %v1361
  %1363 = vmatprep.subr.mxu0 0.0
  %v1364 = vand.u32 %v878, 4294901760
  %1365 = vmatpush1.msra.mxu0 %v1364
  %1366 = vmatprep.subr.mxu0 0.0
  %v1367 = vand.u32 %v879, 4294901760
  %1368 = vmatpush1.msra.mxu0 %v1367
  %1369 = vmatprep.subr.mxu0 0.0
  %v1370 = vand.u32 %v880, 4294901760
  %1371 = vmatpush1.msra.mxu0 %v1370
  %1372 = vmatprep.subr.mxu0 0.0
  %v1373 = vand.u32 %v881, 4294901760
  %1374 = vmatpush1.msra.mxu0 %v1373
  %1375 = vmatprep.subr.mxu0 0.0
  %v1376 = vand.u32 %v882, 4294901760
  %1377 = vmatpush1.msra.mxu0 %v1376
  %1378 = vmatprep.subr.mxu0 0.0
  %v1379 = vand.u32 %v883, 4294901760
  %1380 = vmatpush1.msra.mxu0 %v1379
  %1381 = vmatprep.subr.mxu0 0.0
  %v1382 = vand.u32 %v884, 4294901760
  %1383 = vmatpush1.msra.mxu0 %v1382
  %1384 = vmatprep.subr.mxu0 0.0
  %v1385 = vand.u32 %v885, 4294901760
  %1386 = vmatpush1.msra.mxu0 %v1385
  %1387 = vmatprep.subr.mxu0 0.0
  %v1388 = vand.u32 %v886, 4294901760
  %1389 = vmatpush1.msra.mxu0 %v1388
  %1390 = vmatprep.subr.mxu0 0.0
  %v1391 = vand.u32 %v887, 4294901760
  %1392 = vmatpush1.msra.mxu0 %v1391
  %1393 = vmatprep.subr.mxu0 0.0
  %1394 = vmatpush1.msra.mxu0 0.0
  %1395 = vmatprep.subr.mxu0 0.0
  %1396 = vmatpush1.msra.mxu0 0.0
  %1397 = vmatprep.subr.mxu0 0.0
  %1398 = vmatpush1.msra.mxu0 0.0
  %1399 = vmatprep.subr.mxu0 0.0
  %1400 = vmatpush1.msra.mxu0 0.0
  %1401 = vmatprep.subr.mxu0 0.0
  %1402 = vmatpush1.msra.mxu0 0.0
  %1403 = vmatprep.subr.mxu0 0.0
  %1404 = vmatpush1.msra.mxu0 0.0
  %1405 = vmatprep.subr.mxu0 0.0
  %1406 = vmatpush1.msra.mxu0 0.0
  %1407 = vmatprep.subr.mxu0 0.0
  %1408 = vmatpush1.msra.mxu0 0.0
  %1409 = vmatprep.subr.mxu0 0.0
  %1410 = vmatpush1.msra.mxu0 0.0
  %1411 = vmatprep.subr.mxu0 0.0
  %1412 = vmatpush1.msra.mxu0 0.0
  %1413 = vmatprep.subr.mxu0 0.0
  %1414 = vmatpush1.msra.mxu0 0.0
  %1415 = vmatprep.subr.mxu0 0.0
  %1416 = vmatpush1.msra.mxu0 0.0
  %1417 = vmatprep.subr.mxu0 0.0
  %1418 = vmatpush1.msra.mxu0 0.0
  %1419 = vmatprep.subr.mxu0 0.0
  %1420 = vmatpush1.msra.mxu0 0.0
  %1421 = vmatprep.subr.mxu0 0.0
  %1422 = vmatpush1.msra.mxu0 0.0
  %1423 = vmatprep.subr.mxu0 0.0
  %1424 = vmatpush1.msra.mxu0 0.0
  %1425 = vmatprep.subr.mxu0 0.0
  %1426 = vmatpush1.msra.mxu0 0.0
  %1427 = vmatprep.subr.mxu0 0.0
  %1428 = vmatpush1.msra.mxu0 0.0
  %1429 = vmatprep.subr.mxu0 0.0
  %1430 = vmatpush1.msra.mxu0 0.0
  %1431 = vmatprep.subr.mxu0 0.0
  %1432 = vmatpush1.msra.mxu0 0.0
  %1433 = vmatprep.mubr.f32.mxu0 0.0
  %v1434 = vand.u32 %v963, 4294901760
  %v1435 = vsub.f32 %v963, %v1434
  %v1436 = vand.u32 %v1435, 4294901760
  %1437 = vmatmul.mubr.f32.gmra.mrb[0].mxu0 %v1436
  %v1438 = vpop.f32.mrb[0].mxu0
  %v1439 = vadd.f32 %v1333, %v1438
  %v1440 = vpop.f32.mrb[0].mxu0
  %1441 = vmatprep.mubr.f32.mxu0 0.0
  %v1442 = vand.u32 %v966, 4294901760
  %v1443 = vsub.f32 %v966, %v1442
  %v1444 = vand.u32 %v1443, 4294901760
  %1445 = vmatmul.mubr.f32.gmra.mrb[0].mxu0 %v1444
  %v1446 = vpop.f32.mrb[0].mxu0
  %v1447 = vadd.f32 %v1340, %v1446
  %v1448 = vpop.f32.mrb[0].mxu0
  %1449 = vmatprep.mubr.f32.mxu0 0.0
  %v1450 = vand.u32 %v969, 4294901760
  %v1451 = vsub.f32 %v969, %v1450
  %v1452 = vand.u32 %v1451, 4294901760
  %1453 = vmatmul.mubr.f32.gmra.mrb[0].mxu0 %v1452
  %v1454 = vpop.f32.mrb[0].mxu0
  %v1455 = vadd.f32 %v1347, %v1454
  %v1456 = vpop.f32.mrb[0].mxu0
  %1457 = vmatprep.mubr.f32.mxu0 0.0
  %v1458 = vand.u32 %v972, 4294901760
  %v1459 = vsub.f32 %v972, %v1458
  %v1460 = vand.u32 %v1459, 4294901760
  %1461 = vmatmul.mubr.f32.gmra.mrb[0].mxu0 %v1460
  %v1462 = vpop.f32.mrb[0].mxu0
  %v1463 = vadd.f32 %v1354, %v1462
  %v1464 = vpop.f32.mrb[0].mxu0
  %1465 = vdwg.mxu0
  %1466 = vmatprep.subr.mxu0 0.0
  %v1467 = vand.u32 %v876, 4294901760
  %v1468 = vsub.f32 %v876, %v1467
  %v1469 = vand.u32 %v1468, 4294901760
  %1470 = vmatpush1.msra.mxu0 %v1469
  %1471 = vmatprep.subr.mxu0 0.0
  %v1472 = vand.u32 %v877, 4294901760
  %v1473 = vsub.f32 %v877, %v1472
  %v1474 = vand.u32 %v1473, 4294901760
  %1475 = vmatpush1.msra.mxu0 %v1474
  %1476 = vmatprep.subr.mxu0 0.0
  %v1477 = vand.u32 %v878, 4294901760
  %v1478 = vsub.f32 %v878, %v1477
  %v1479 = vand.u32 %v1478, 4294901760
  %1480 = vmatpush1.msra.mxu0 %v1479
  %1481 = vmatprep.subr.mxu0 0.0
  %v1482 = vand.u32 %v879, 4294901760
  %v1483 = vsub.f32 %v879, %v1482
  %v1484 = vand.u32 %v1483, 4294901760
  %1485 = vmatpush1.msra.mxu0 %v1484
  %1486 = vmatprep.subr.mxu0 0.0
  %v1487 = vand.u32 %v880, 4294901760
  %v1488 = vsub.f32 %v880, %v1487
  %v1489 = vand.u32 %v1488, 4294901760
  %1490 = vmatpush1.msra.mxu0 %v1489
  %1491 = vmatprep.subr.mxu0 0.0
  %v1492 = vand.u32 %v881, 4294901760
  %v1493 = vsub.f32 %v881, %v1492
  %v1494 = vand.u32 %v1493, 4294901760
  %1495 = vmatpush1.msra.mxu0 %v1494
  %1496 = vmatprep.subr.mxu0 0.0
  %v1497 = vand.u32 %v882, 4294901760
  %v1498 = vsub.f32 %v882, %v1497
  %v1499 = vand.u32 %v1498, 4294901760
  %1500 = vmatpush1.msra.mxu0 %v1499
  %1501 = vmatprep.subr.mxu0 0.0
  %v1502 = vand.u32 %v883, 4294901760
  %v1503 = vsub.f32 %v883, %v1502
  %v1504 = vand.u32 %v1503, 4294901760
  %1505 = vmatpush1.msra.mxu0 %v1504
  %1506 = vmatprep.subr.mxu0 0.0
  %v1507 = vand.u32 %v884, 4294901760
  %v1508 = vsub.f32 %v884, %v1507
  %v1509 = vand.u32 %v1508, 4294901760
  %1510 = vmatpush1.msra.mxu0 %v1509
  %1511 = vmatprep.subr.mxu0 0.0
  %v1512 = vand.u32 %v885, 4294901760
  %v1513 = vsub.f32 %v885, %v1512
  %v1514 = vand.u32 %v1513, 4294901760
  %1515 = vmatpush1.msra.mxu0 %v1514
  %1516 = vmatprep.subr.mxu0 0.0
  %v1517 = vand.u32 %v886, 4294901760
  %v1518 = vsub.f32 %v886, %v1517
  %v1519 = vand.u32 %v1518, 4294901760
  %1520 = vmatpush1.msra.mxu0 %v1519
  %1521 = vmatprep.subr.mxu0 0.0
  %v1522 = vand.u32 %v887, 4294901760
  %v1523 = vsub.f32 %v887, %v1522
  %v1524 = vand.u32 %v1523, 4294901760
  %1525 = vmatpush1.msra.mxu0 %v1524
  %1526 = vmatprep.subr.mxu0 0.0
  %1527 = vmatpush1.msra.mxu0 0.0
  %1528 = vmatprep.subr.mxu0 0.0
  %1529 = vmatpush1.msra.mxu0 0.0
  %1530 = vmatprep.subr.mxu0 0.0
  %1531 = vmatpush1.msra.mxu0 0.0
  %1532 = vmatprep.subr.mxu0 0.0
  %1533 = vmatpush1.msra.mxu0 0.0
  %1534 = vmatprep.subr.mxu0 0.0
  %1535 = vmatpush1.msra.mxu0 0.0
  %1536 = vmatprep.subr.mxu0 0.0
  %1537 = vmatpush1.msra.mxu0 0.0
  %1538 = vmatprep.subr.mxu0 0.0
  %1539 = vmatpush1.msra.mxu0 0.0
  %1540 = vmatprep.subr.mxu0 0.0
  %1541 = vmatpush1.msra.mxu0 0.0
  %1542 = vmatprep.subr.mxu0 0.0
  %1543 = vmatpush1.msra.mxu0 0.0
  %1544 = vmatprep.subr.mxu0 0.0
  %1545 = vmatpush1.msra.mxu0 0.0
  %1546 = vmatprep.subr.mxu0 0.0
  %1547 = vmatpush1.msra.mxu0 0.0
  %1548 = vmatprep.subr.mxu0 0.0
  %1549 = vmatpush1.msra.mxu0 0.0
  %1550 = vmatprep.subr.mxu0 0.0
  %1551 = vmatpush1.msra.mxu0 0.0
  %1552 = vmatprep.subr.mxu0 0.0
  %1553 = vmatpush1.msra.mxu0 0.0
  %1554 = vmatprep.subr.mxu0 0.0
  %1555 = vmatpush1.msra.mxu0 0.0
  %1556 = vmatprep.subr.mxu0 0.0
  %1557 = vmatpush1.msra.mxu0 0.0
  %1558 = vmatprep.subr.mxu0 0.0
  %1559 = vmatpush1.msra.mxu0 0.0
  %1560 = vmatprep.subr.mxu0 0.0
  %1561 = vmatpush1.msra.mxu0 0.0
  %1562 = vmatprep.subr.mxu0 0.0
  %1563 = vmatpush1.msra.mxu0 0.0
  %1564 = vmatprep.subr.mxu0 0.0
  %1565 = vmatpush1.msra.mxu0 0.0
  %1566 = vmatprep.mubr.f32.mxu0 0.0
  %v1567 = vand.u32 %v963, 4294901760
  %1568 = vmatmul.mubr.f32.gmra.mrb[0].mxu0 %v1567
  %v1569 = vpop.f32.mrb[0].mxu0
  %v1570 = vadd.f32 %v1439, %v1569
  %v1571 = vpop.f32.mrb[0].mxu0
  %1572 = vmatprep.mubr.f32.mxu0 0.0
  %v1573 = vand.u32 %v966, 4294901760
  %1574 = vmatmul.mubr.f32.gmra.mrb[0].mxu0 %v1573
  %v1575 = vpop.f32.mrb[0].mxu0
  %v1576 = vadd.f32 %v1447, %v1575
  %v1577 = vpop.f32.mrb[0].mxu0
  %1578 = vmatprep.mubr.f32.mxu0 0.0
  %v1579 = vand.u32 %v969, 4294901760
  %1580 = vmatmul.mubr.f32.gmra.mrb[0].mxu0 %v1579
  %v1581 = vpop.f32.mrb[0].mxu0
  %v1582 = vadd.f32 %v1455, %v1581
  %v1583 = vpop.f32.mrb[0].mxu0
  %1584 = vmatprep.mubr.f32.mxu0 0.0
  %v1585 = vand.u32 %v972, 4294901760
  %1586 = vmatmul.mubr.f32.gmra.mrb[0].mxu0 %v1585
  %v1587 = vpop.f32.mrb[0].mxu0
  %v1588 = vadd.f32 %v1463, %v1587
  %v1589 = vpop.f32.mrb[0].mxu0
  %1590 = vdwg.mxu0
  %1591 = vmatprep.subr.mxu0 0.0
  %v1592 = vand.u32 %v876, 4294901760
  %1593 = vmatpush1.msra.mxu0 %v1592
  %1594 = vmatprep.subr.mxu0 0.0
  %v1595 = vand.u32 %v877, 4294901760
  %1596 = vmatpush1.msra.mxu0 %v1595
  %1597 = vmatprep.subr.mxu0 0.0
  %v1598 = vand.u32 %v878, 4294901760
  %1599 = vmatpush1.msra.mxu0 %v1598
  %1600 = vmatprep.subr.mxu0 0.0
  %v1601 = vand.u32 %v879, 4294901760
  %1602 = vmatpush1.msra.mxu0 %v1601
  %1603 = vmatprep.subr.mxu0 0.0
  %v1604 = vand.u32 %v880, 4294901760
  %1605 = vmatpush1.msra.mxu0 %v1604
  %1606 = vmatprep.subr.mxu0 0.0
  %v1607 = vand.u32 %v881, 4294901760
  %1608 = vmatpush1.msra.mxu0 %v1607
  %1609 = vmatprep.subr.mxu0 0.0
  %v1610 = vand.u32 %v882, 4294901760
  %1611 = vmatpush1.msra.mxu0 %v1610
  %1612 = vmatprep.subr.mxu0 0.0
  %v1613 = vand.u32 %v883, 4294901760
  %1614 = vmatpush1.msra.mxu0 %v1613
  %1615 = vmatprep.subr.mxu0 0.0
  %v1616 = vand.u32 %v884, 4294901760
  %1617 = vmatpush1.msra.mxu0 %v1616
  %1618 = vmatprep.subr.mxu0 0.0
  %v1619 = vand.u32 %v885, 4294901760
  %1620 = vmatpush1.msra.mxu0 %v1619
  %1621 = vmatprep.subr.mxu0 0.0
  %v1622 = vand.u32 %v886, 4294901760
  %1623 = vmatpush1.msra.mxu0 %v1622
  %1624 = vmatprep.subr.mxu0 0.0
  %v1625 = vand.u32 %v887, 4294901760
  %1626 = vmatpush1.msra.mxu0 %v1625
  %1627 = vmatprep.subr.mxu0 0.0
  %1628 = vmatpush1.msra.mxu0 0.0
  %1629 = vmatprep.subr.mxu0 0.0
  %1630 = vmatpush1.msra.mxu0 0.0
  %1631 = vmatprep.subr.mxu0 0.0
  %1632 = vmatpush1.msra.mxu0 0.0
  %1633 = vmatprep.subr.mxu0 0.0
  %1634 = vmatpush1.msra.mxu0 0.0
  %1635 = vmatprep.subr.mxu0 0.0
  %1636 = vmatpush1.msra.mxu0 0.0
  %1637 = vmatprep.subr.mxu0 0.0
  %1638 = vmatpush1.msra.mxu0 0.0
  %1639 = vmatprep.subr.mxu0 0.0
  %1640 = vmatpush1.msra.mxu0 0.0
  %1641 = vmatprep.subr.mxu0 0.0
  %1642 = vmatpush1.msra.mxu0 0.0
  %1643 = vmatprep.subr.mxu0 0.0
  %1644 = vmatpush1.msra.mxu0 0.0
  %1645 = vmatprep.subr.mxu0 0.0
  %1646 = vmatpush1.msra.mxu0 0.0
  %1647 = vmatprep.subr.mxu0 0.0
  %1648 = vmatpush1.msra.mxu0 0.0
  %1649 = vmatprep.subr.mxu0 0.0
  %1650 = vmatpush1.msra.mxu0 0.0
  %1651 = vmatprep.subr.mxu0 0.0
  %1652 = vmatpush1.msra.mxu0 0.0
  %1653 = vmatprep.subr.mxu0 0.0
  %1654 = vmatpush1.msra.mxu0 0.0
  %1655 = vmatprep.subr.mxu0 0.0
  %1656 = vmatpush1.msra.mxu0 0.0
  %1657 = vmatprep.subr.mxu0 0.0
  %1658 = vmatpush1.msra.mxu0 0.0
  %1659 = vmatprep.subr.mxu0 0.0
  %1660 = vmatpush1.msra.mxu0 0.0
  %1661 = vmatprep.subr.mxu0 0.0
  %1662 = vmatpush1.msra.mxu0 0.0
  %1663 = vmatprep.subr.mxu0 0.0
  %1664 = vmatpush1.msra.mxu0 0.0
  %1665 = vmatprep.subr.mxu0 0.0
  %1666 = vmatpush1.msra.mxu0 0.0
  %1667 = vmatprep.mubr.f32.mxu0 0.0
  %v1668 = vand.u32 %v963, 4294901760
  %1669 = vmatmul.mubr.f32.gmra.mrb[0].mxu0 %v1668
  %v1670 = vpop.f32.mrb[0].mxu0
  %v1671 = vadd.f32 %v1570, %v1670
  %v1672 = vpop.f32.mrb[0].mxu0
  %1673 = vmatprep.mubr.f32.mxu0 0.0
  %v1674 = vand.u32 %v966, 4294901760
  %1675 = vmatmul.mubr.f32.gmra.mrb[0].mxu0 %v1674
  %v1676 = vpop.f32.mrb[0].mxu0
  %v1677 = vadd.f32 %v1576, %v1676
  %v1678 = vpop.f32.mrb[0].mxu0
  %1679 = vmatprep.mubr.f32.mxu0 0.0
  %v1680 = vand.u32 %v969, 4294901760
  %1681 = vmatmul.mubr.f32.gmra.mrb[0].mxu0 %v1680
  %v1682 = vpop.f32.mrb[0].mxu0
  %v1683 = vadd.f32 %v1582, %v1682
  %v1684 = vpop.f32.mrb[0].mxu0
  %1685 = vmatprep.mubr.f32.mxu0 0.0
  %v1686 = vand.u32 %v972, 4294901760
  %1687 = vmatmul.mubr.f32.gmra.mrb[0].mxu0 %v1686
  %v1688 = vpop.f32.mrb[0].mxu0
  %v1689 = vadd.f32 %v1588, %v1688
  %v1690 = vpop.f32.mrb[0].mxu0
  %1691 = vdwg.mxu0
  %v1692 = vmax.f32 %v1671, 0.0
  %v1693 = vmax.f32 %v1677, 0.0
  %v1694 = vmax.f32 %v1683, 0.0
  %v1695 = vmax.f32 %v1689, 0.0
  %v1696 = vld [vmem:[%s6] sm:$0xff]
  %v1697 = vld [vmem:[%s6 + $0x8] sm:$0xff]
  %v1698 = vld [vmem:[%s6 + $0x10] sm:$0xff]
  %v1699 = vld [vmem:[%s6 + $0x18] sm:$0xff]
  %v1700 = vld [vmem:[%s6 + $0x20] sm:$0xff]
  %v1701 = vld [vmem:[%s6 + $0x28] sm:$0xff]
  %v1702 = vld [vmem:[%s6 + $0x30] sm:$0xff]
  %v1703 = vld [vmem:[%s6 + $0x38] sm:$0xff]
  %v1704 = vld [vmem:[%s6 + $0x40] sm:$0xff]
  %v1705 = vld [vmem:[%s6 + $0x48] sm:$0xff]
  %v1706 = vld [vmem:[%s6 + $0x50] sm:$0xff]
  %v1707 = vld [vmem:[%s6 + $0x58] sm:$0xff]
  %v1708 = vld [vmem:[%s7] sm:$0x1]
  %1709 = vst.msk [vmem:[#allocation4 + $0x1] sm:$0xff] %vm82, %v1692
  %1710 = vst.msk [vmem:[#allocation4 + $0x9] sm:$0xff] %vm82, %v1693
  %v1711 = vld [vmem:[#allocation4] sm:$0xff]
  %v1712 = vld [vmem:[#allocation4 + $0x8] sm:$0xff]
  %1713 = vst.msk [vmem:[#allocation5] sm:$0xff] %vm82, %v1711
  %1714 = vst.msk [vmem:[#allocation5 + $0x8] sm:$0xff] %vm82, %v1712
  %v1715 = vld [vmem:[#allocation4 + $0x1] sm:$0xff]
  %v1716 = vld [vmem:[#allocation4 + $0x9] sm:$0xff]
  %1719 = vrot.lane.b32.xlu0 %v1715, 32
  %v1720 = vpop.permute.xlu0 %1719
  %1721 = vrot.lane.b32.xlu0 %v1716, 32
  %v1722 = vpop.permute.xlu0 %1721
  %1725 = vst.msk [vmem:[#allocation5] sm:$0xff] %vm905, %v1720
  %1726 = vst.msk [vmem:[#allocation5 + $0x8] sm:$0xff] %vm905, %v1722
  %v1727 = vld [vmem:[#allocation4 + $0x2] sm:$0xff]
  %v1728 = vld [vmem:[#allocation4 + $0xa] sm:$0xff]
  %1731 = vrot.lane.b32.xlu0 %v1727, 64
  %v1732 = vpop.permute.xlu0 %1731
  %1733 = vrot.lane.b32.xlu0 %v1728, 64
  %v1734 = vpop.permute.xlu0 %1733
  %1737 = vst.msk [vmem:[#allocation5] sm:$0xff] %vm918, %v1732
  %1738 = vst.msk [vmem:[#allocation5 + $0x8] sm:$0xff] %vm918, %v1734
  %1739 = vst.msk [vmem:[#allocation4 + $0x1] sm:$0xff] %vm82, %v1694
  %1740 = vst.msk [vmem:[#allocation4 + $0x9] sm:$0xff] %vm82, %v1695
  %v1741 = vld [vmem:[#allocation4] sm:$0xff]
  %v1742 = vld [vmem:[#allocation4 + $0x8] sm:$0xff]
  %1743 = vst.msk [vmem:[#allocation5 + $0x10] sm:$0xff] %vm82, %v1741
  %1744 = vst.msk [vmem:[#allocation5 + $0x18] sm:$0xff] %vm82, %v1742
  %v1745 = vld [vmem:[#allocation4 + $0x1] sm:$0xff]
  %v1746 = vld [vmem:[#allocation4 + $0x9] sm:$0xff]
  %1749 = vrot.lane.b32.xlu0 %v1745, 32
  %v1750 = vpop.permute.xlu0 %1749
  %1751 = vrot.lane.b32.xlu0 %v1746, 32
  %v1752 = vpop.permute.xlu0 %1751
  %1755 = vst.msk [vmem:[#allocation5 + $0x10] sm:$0xff] %vm905, %v1750
  %1756 = vst.msk [vmem:[#allocation5 + $0x18] sm:$0xff] %vm905, %v1752
  %v1757 = vld [vmem:[#allocation4 + $0x2] sm:$0xff]
  %v1758 = vld [vmem:[#allocation4 + $0xa] sm:$0xff]
  %1761 = vrot.lane.b32.xlu0 %v1757, 64
  %v1762 = vpop.permute.xlu0 %1761
  %1763 = vrot.lane.b32.xlu0 %v1758, 64
  %v1764 = vpop.permute.xlu0 %1763
  %1767 = vst.msk [vmem:[#allocation5 + $0x10] sm:$0xff] %vm918, %v1762
  %1768 = vst.msk [vmem:[#allocation5 + $0x18] sm:$0xff] %vm918, %v1764
  %v1769 = vld [vmem:[#allocation5] sm:$0xff]
  %v1770 = vld [vmem:[#allocation5 + $0x8] sm:$0xff]
  %v1771 = vld [vmem:[#allocation5 + $0x10] sm:$0xff]
  %v1772 = vld [vmem:[#allocation5 + $0x18] sm:$0xff]
  %v1774 = vlaneseq
  %v1775 = vshrl.u32 %v1774, 7
  %v1776 = vsub.s32 0, %v1775
  %v1777 = vrot.slane %v1708, %v1776
  %v1780 = vsel %vm961, %v1769, 0
  %v1783 = vsel %vm961, %v1770, 0
  %v1786 = vsel %vm961, %v1771, 0
  %v1789 = vsel %vm961, %v1772, 0
  %1791 = vmatprep.subr.mxu0 0.0
  %v1792 = vand.u32 %v1696, 4294901760
  %1793 = vmatpush1.msra.mxu0 %v1792
  %1794 = vmatprep.subr.mxu0 0.0
  %v1795 = vand.u32 %v1697, 4294901760
  %1796 = vmatpush1.msra.mxu0 %v1795
  %1797 = vmatprep.subr.mxu0 0.0
  %v1798 = vand.u32 %v1698, 4294901760
  %1799 = vmatpush1.msra.mxu0 %v1798
  %1800 = vmatprep.subr.mxu0 0.0
  %v1801 = vand.u32 %v1699, 4294901760
  %1802 = vmatpush1.msra.mxu0 %v1801
  %1803 = vmatprep.subr.mxu0 0.0
  %v1804 = vand.u32 %v1700, 4294901760
  %1805 = vmatpush1.msra.mxu0 %v1804
  %1806 = vmatprep.subr.mxu0 0.0
  %v1807 = vand.u32 %v1701, 4294901760
  %1808 = vmatpush1.msra.mxu0 %v1807
  %1809 = vmatprep.subr.mxu0 0.0
  %v1810 = vand.u32 %v1702, 4294901760
  %1811 = vmatpush1.msra.mxu0 %v1810
  %1812 = vmatprep.subr.mxu0 0.0
  %v1813 = vand.u32 %v1703, 4294901760
  %1814 = vmatpush1.msra.mxu0 %v1813
  %1815 = vmatprep.subr.mxu0 0.0
  %v1816 = vand.u32 %v1704, 4294901760
  %1817 = vmatpush1.msra.mxu0 %v1816
  %1818 = vmatprep.subr.mxu0 0.0
  %v1819 = vand.u32 %v1705, 4294901760
  %1820 = vmatpush1.msra.mxu0 %v1819
  %1821 = vmatprep.subr.mxu0 0.0
  %v1822 = vand.u32 %v1706, 4294901760
  %1823 = vmatpush1.msra.mxu0 %v1822
  %1824 = vmatprep.subr.mxu0 0.0
  %v1825 = vand.u32 %v1707, 4294901760
  %1826 = vmatpush1.msra.mxu0 %v1825
  %1827 = vmatprep.subr.mxu0 0.0
  %1828 = vmatpush1.msra.mxu0 0.0
  %1829 = vmatprep.subr.mxu0 0.0
  %1830 = vmatpush1.msra.mxu0 0.0
  %1831 = vmatprep.subr.mxu0 0.0
  %1832 = vmatpush1.msra.mxu0 0.0
  %1833 = vmatprep.subr.mxu0 0.0
  %1834 = vmatpush1.msra.mxu0 0.0
  %1835 = vmatprep.subr.mxu0 0.0
  %1836 = vmatpush1.msra.mxu0 0.0
  %1837 = vmatprep.subr.mxu0 0.0
  %1838 = vmatpush1.msra.mxu0 0.0
  %1839 = vmatprep.subr.mxu0 0.0
  %1840 = vmatpush1.msra.mxu0 0.0
  %1841 = vmatprep.subr.mxu0 0.0
  %1842 = vmatpush1.msra.mxu0 0.0
  %1843 = vmatprep.subr.mxu0 0.0
  %1844 = vmatpush1.msra.mxu0 0.0
  %1845 = vmatprep.subr.mxu0 0.0
  %1846 = vmatpush1.msra.mxu0 0.0
  %1847 = vmatprep.subr.mxu0 0.0
  %1848 = vmatpush1.msra.mxu0 0.0
  %1849 = vmatprep.subr.mxu0 0.0
  %1850 = vmatpush1.msra.mxu0 0.0
  %1851 = vmatprep.subr.mxu0 0.0
  %1852 = vmatpush1.msra.mxu0 0.0
  %1853 = vmatprep.subr.mxu0 0.0
  %1854 = vmatpush1.msra.mxu0 0.0
  %1855 = vmatprep.subr.mxu0 0.0
  %1856 = vmatpush1.msra.mxu0 0.0
  %1857 = vmatprep.subr.mxu0 0.0
  %1858 = vmatpush1.msra.mxu0 0.0
  %1859 = vmatprep.subr.mxu0 0.0
  %1860 = vmatpush1.msra.mxu0 0.0
  %1861 = vmatprep.subr.mxu0 0.0
  %1862 = vmatpush1.msra.mxu0 0.0
  %1863 = vmatprep.subr.mxu0 0.0
  %1864 = vmatpush1.msra.mxu0 0.0
  %1865 = vmatprep.subr.mxu0 0.0
  %1866 = vmatpush1.msra.mxu0 0.0
  %1867 = vmatprep.mubr.f32.mxu0 0.0
  %v1868 = vand.u32 %v1780, 4294901760
  %v1869 = vsub.f32 %v1780, %v1868
  %v1870 = vand.u32 %v1869, 4294901760
  %v1871 = vsub.f32 %v1869, %v1870
  %v1872 = vand.u32 %v1871, 4294901760
  %1873 = vmatmul.mubr.f32.gmra.mrb[0].mxu0 %v1872
  %v1874 = vpop.f32.mrb[0].mxu0
  %v1875 = vadd.f32 %v1777, %v1874
  %v1876 = vpop.f32.mrb[0].mxu0
  %1877 = vmatprep.mubr.f32.mxu0 0.0
  %v1878 = vand.u32 %v1783, 4294901760
  %v1879 = vsub.f32 %v1783, %v1878
  %v1880 = vand.u32 %v1879, 4294901760
  %v1881 = vsub.f32 %v1879, %v1880
  %v1882 = vand.u32 %v1881, 4294901760
  %1883 = vmatmul.mubr.f32.gmra.mrb[0].mxu0 %v1882
  %v1884 = vpop.f32.mrb[0].mxu0
  %v1885 = vadd.f32 %v1777, %v1884
  %v1886 = vpop.f32.mrb[0].mxu0
  %1887 = vmatprep.mubr.f32.mxu0 0.0
  %v1888 = vand.u32 %v1786, 4294901760
  %v1889 = vsub.f32 %v1786, %v1888
  %v1890 = vand.u32 %v1889, 4294901760
  %v1891 = vsub.f32 %v1889, %v1890
  %v1892 = vand.u32 %v1891, 4294901760
  %1893 = vmatmul.mubr.f32.gmra.mrb[0].mxu0 %v1892
  %v1894 = vpop.f32.mrb[0].mxu0
  %v1895 = vadd.f32 %v1777, %v1894
  %v1896 = vpop.f32.mrb[0].mxu0
  %1897 = vmatprep.mubr.f32.mxu0 0.0
  %v1898 = vand.u32 %v1789, 4294901760
  %v1899 = vsub.f32 %v1789, %v1898
  %v1900 = vand.u32 %v1899, 4294901760
  %v1901 = vsub.f32 %v1899, %v1900
  %v1902 = vand.u32 %v1901, 4294901760
  %1903 = vmatmul.mubr.f32.gmra.mrb[0].mxu0 %v1902
  %v1904 = vpop.f32.mrb[0].mxu0
  %v1905 = vadd.f32 %v1777, %v1904
  %v1906 = vpop.f32.mrb[0].mxu0
  %1907 = vdwg.mxu0
  %1908 = vmatprep.subr.mxu0 0.0
  %v1909 = vand.u32 %v1696, 4294901760
  %v1910 = vsub.f32 %v1696, %v1909
  %v1911 = vand.u32 %v1910, 4294901760
  %v1912 = vsub.f32 %v1910, %v1911
  %v1913 = vand.u32 %v1912, 4294901760
  %1914 = vmatpush1.msra.mxu0 %v1913
  %1915 = vmatprep.subr.mxu0 0.0
  %v1916 = vand.u32 %v1697, 4294901760
  %v1917 = vsub.f32 %v1697, %v1916
  %v1918 = vand.u32 %v1917, 4294901760
  %v1919 = vsub.f32 %v1917, %v1918
  %v1920 = vand.u32 %v1919, 4294901760
  %1921 = vmatpush1.msra.mxu0 %v1920
  %1922 = vmatprep.subr.mxu0 0.0
  %v1923 = vand.u32 %v1698, 4294901760
  %v1924 = vsub.f32 %v1698, %v1923
  %v1925 = vand.u32 %v1924, 4294901760
  %v1926 = vsub.f32 %v1924, %v1925
  %v1927 = vand.u32 %v1926, 4294901760
  %1928 = vmatpush1.msra.mxu0 %v1927
  %1929 = vmatprep.subr.mxu0 0.0
  %v1930 = vand.u32 %v1699, 4294901760
  %v1931 = vsub.f32 %v1699, %v1930
  %v1932 = vand.u32 %v1931, 4294901760
  %v1933 = vsub.f32 %v1931, %v1932
  %v1934 = vand.u32 %v1933, 4294901760
  %1935 = vmatpush1.msra.mxu0 %v1934
  %1936 = vmatprep.subr.mxu0 0.0
  %v1937 = vand.u32 %v1700, 4294901760
  %v1938 = vsub.f32 %v1700, %v1937
  %v1939 = vand.u32 %v1938, 4294901760
  %v1940 = vsub.f32 %v1938, %v1939
  %v1941 = vand.u32 %v1940, 4294901760
  %1942 = vmatpush1.msra.mxu0 %v1941
  %1943 = vmatprep.subr.mxu0 0.0
  %v1944 = vand.u32 %v1701, 4294901760
  %v1945 = vsub.f32 %v1701, %v1944
  %v1946 = vand.u32 %v1945, 4294901760
  %v1947 = vsub.f32 %v1945, %v1946
  %v1948 = vand.u32 %v1947, 4294901760
  %1949 = vmatpush1.msra.mxu0 %v1948
  %1950 = vmatprep.subr.mxu0 0.0
  %v1951 = vand.u32 %v1702, 4294901760
  %v1952 = vsub.f32 %v1702, %v1951
  %v1953 = vand.u32 %v1952, 4294901760
  %v1954 = vsub.f32 %v1952, %v1953
  %v1955 = vand.u32 %v1954, 4294901760
  %1956 = vmatpush1.msra.mxu0 %v1955
  %1957 = vmatprep.subr.mxu0 0.0
  %v1958 = vand.u32 %v1703, 4294901760
  %v1959 = vsub.f32 %v1703, %v1958
  %v1960 = vand.u32 %v1959, 4294901760
  %v1961 = vsub.f32 %v1959, %v1960
  %v1962 = vand.u32 %v1961, 4294901760
  %1963 = vmatpush1.msra.mxu0 %v1962
  %1964 = vmatprep.subr.mxu0 0.0
  %v1965 = vand.u32 %v1704, 4294901760
  %v1966 = vsub.f32 %v1704, %v1965
  %v1967 = vand.u32 %v1966, 4294901760
  %v1968 = vsub.f32 %v1966, %v1967
  %v1969 = vand.u32 %v1968, 4294901760
  %1970 = vmatpush1.msra.mxu0 %v1969
  %1971 = vmatprep.subr.mxu0 0.0
  %v1972 = vand.u32 %v1705, 4294901760
  %v1973 = vsub.f32 %v1705, %v1972
  %v1974 = vand.u32 %v1973, 4294901760
  %v1975 = vsub.f32 %v1973, %v1974
  %v1976 = vand.u32 %v1975, 4294901760
  %1977 = vmatpush1.msra.mxu0 %v1976
  %1978 = vmatprep.subr.mxu0 0.0
  %v1979 = vand.u32 %v1706, 4294901760
  %v1980 = vsub.f32 %v1706, %v1979
  %v1981 = vand.u32 %v1980, 4294901760
  %v1982 = vsub.f32 %v1980, %v1981
  %v1983 = vand.u32 %v1982, 4294901760
  %1984 = vmatpush1.msra.mxu0 %v1983
  %1985 = vmatprep.subr.mxu0 0.0
  %v1986 = vand.u32 %v1707, 4294901760
  %v1987 = vsub.f32 %v1707, %v1986
  %v1988 = vand.u32 %v1987, 4294901760
  %v1989 = vsub.f32 %v1987, %v1988
  %v1990 = vand.u32 %v1989, 4294901760
  %1991 = vmatpush1.msra.mxu0 %v1990
  %1992 = vmatprep.subr.mxu0 0.0
  %1993 = vmatpush1.msra.mxu0 0.0
  %1994 = vmatprep.subr.mxu0 0.0
  %1995 = vmatpush1.msra.mxu0 0.0
  %1996 = vmatprep.subr.mxu0 0.0
  %1997 = vmatpush1.msra.mxu0 0.0
  %1998 = vmatprep.subr.mxu0 0.0
  %1999 = vmatpush1.msra.mxu0 0.0
  %2000 = vmatprep.subr.mxu0 0.0
  %2001 = vmatpush1.msra.mxu0 0.0
  %2002 = vmatprep.subr.mxu0 0.0
  %2003 = vmatpush1.msra.mxu0 0.0
  %2004 = vmatprep.subr.mxu0 0.0
  %2005 = vmatpush1.msra.mxu0 0.0
  %2006 = vmatprep.subr.mxu0 0.0
  %2007 = vmatpush1.msra.mxu0 0.0
  %2008 = vmatprep.subr.mxu0 0.0
  %2009 = vmatpush1.msra.mxu0 0.0
  %2010 = vmatprep.subr.mxu0 0.0
  %2011 = vmatpush1.msra.mxu0 0.0
  %2012 = vmatprep.subr.mxu0 0.0
  %2013 = vmatpush1.msra.mxu0 0.0
  %2014 = vmatprep.subr.mxu0 0.0
  %2015 = vmatpush1.msra.mxu0 0.0
  %2016 = vmatprep.subr.mxu0 0.0
  %2017 = vmatpush1.msra.mxu0 0.0
  %2018 = vmatprep.subr.mxu0 0.0
  %2019 = vmatpush1.msra.mxu0 0.0
  %2020 = vmatprep.subr.mxu0 0.0
  %2021 = vmatpush1.msra.mxu0 0.0
  %2022 = vmatprep.subr.mxu0 0.0
  %2023 = vmatpush1.msra.mxu0 0.0
  %2024 = vmatprep.subr.mxu0 0.0
  %2025 = vmatpush1.msra.mxu0 0.0
  %2026 = vmatprep.subr.mxu0 0.0
  %2027 = vmatpush1.msra.mxu0 0.0
  %2028 = vmatprep.subr.mxu0 0.0
  %2029 = vmatpush1.msra.mxu0 0.0
  %2030 = vmatprep.subr.mxu0 0.0
  %2031 = vmatpush1.msra.mxu0 0.0
  %2032 = vmatprep.mubr.f32.mxu0 0.0
  %v2033 = vand.u32 %v1780, 4294901760
  %2034 = vmatmul.mubr.f32.gmra.mrb[0].mxu0 %v2033
  %v2035 = vpop.f32.mrb[0].mxu0
  %v2036 = vadd.f32 %v1875, %v2035
  %v2037 = vpop.f32.mrb[0].mxu0
  %2038 = vmatprep.mubr.f32.mxu0 0.0
  %v2039 = vand.u32 %v1783, 4294901760
  %2040 = vmatmul.mubr.f32.gmra.mrb[0].mxu0 %v2039
  %v2041 = vpop.f32.mrb[0].mxu0
  %v2042 = vadd.f32 %v1885, %v2041
  %v2043 = vpop.f32.mrb[0].mxu0
  %2044 = vmatprep.mubr.f32.mxu0 0.0
  %v2045 = vand.u32 %v1786, 4294901760
  %2046 = vmatmul.mubr.f32.gmra.mrb[0].mxu0 %v2045
  %v2047 = vpop.f32.mrb[0].mxu0
  %v2048 = vadd.f32 %v1895, %v2047
  %v2049 = vpop.f32.mrb[0].mxu0
  %2050 = vmatprep.mubr.f32.mxu0 0.0
  %v2051 = vand.u32 %v1789, 4294901760
  %2052 = vmatmul.mubr.f32.gmra.mrb[0].mxu0 %v2051
  %v2053 = vpop.f32.mrb[0].mxu0
  %v2054 = vadd.f32 %v1905, %v2053
  %v2055 = vpop.f32.mrb[0].mxu0
  %2056 = vdwg.mxu0
  %2057 = vmatprep.subr.mxu0 0.0
  %v2058 = vand.u32 %v1696, 4294901760
  %v2059 = vsub.f32 %v1696, %v2058
  %2060 = vmatpush1.msra.mxu0 %v2059
  %2061 = vmatprep.subr.mxu0 0.0
  %v2062 = vand.u32 %v1697, 4294901760
  %v2063 = vsub.f32 %v1697, %v2062
  %2064 = vmatpush1.msra.mxu0 %v2063
  %2065 = vmatprep.subr.mxu0 0.0
  %v2066 = vand.u32 %v1698, 4294901760
  %v2067 = vsub.f32 %v1698, %v2066
  %2068 = vmatpush1.msra.mxu0 %v2067
  %2069 = vmatprep.subr.mxu0 0.0
  %v2070 = vand.u32 %v1699, 4294901760
  %v2071 = vsub.f32 %v1699, %v2070
  %2072 = vmatpush1.msra.mxu0 %v2071
  %2073 = vmatprep.subr.mxu0 0.0
  %v2074 = vand.u32 %v1700, 4294901760
  %v2075 = vsub.f32 %v1700, %v2074
  %2076 = vmatpush1.msra.mxu0 %v2075
  %2077 = vmatprep.subr.mxu0 0.0
  %v2078 = vand.u32 %v1701, 4294901760
  %v2079 = vsub.f32 %v1701, %v2078
  %2080 = vmatpush1.msra.mxu0 %v2079
  %2081 = vmatprep.subr.mxu0 0.0
  %v2082 = vand.u32 %v1702, 4294901760
  %v2083 = vsub.f32 %v1702, %v2082
  %2084 = vmatpush1.msra.mxu0 %v2083
  %2085 = vmatprep.subr.mxu0 0.0
  %v2086 = vand.u32 %v1703, 4294901760
  %v2087 = vsub.f32 %v1703, %v2086
  %2088 = vmatpush1.msra.mxu0 %v2087
  %2089 = vmatprep.subr.mxu0 0.0
  %v2090 = vand.u32 %v1704, 4294901760
  %v2091 = vsub.f32 %v1704, %v2090
  %2092 = vmatpush1.msra.mxu0 %v2091
  %2093 = vmatprep.subr.mxu0 0.0
  %v2094 = vand.u32 %v1705, 4294901760
  %v2095 = vsub.f32 %v1705, %v2094
  %2096 = vmatpush1.msra.mxu0 %v2095
  %2097 = vmatprep.subr.mxu0 0.0
  %v2098 = vand.u32 %v1706, 4294901760
  %v2099 = vsub.f32 %v1706, %v2098
  %2100 = vmatpush1.msra.mxu0 %v2099
  %2101 = vmatprep.subr.mxu0 0.0
  %v2102 = vand.u32 %v1707, 4294901760
  %v2103 = vsub.f32 %v1707, %v2102
  %2104 = vmatpush1.msra.mxu0 %v2103
  %2105 = vmatprep.subr.mxu0 0.0
  %2106 = vmatpush1.msra.mxu0 0.0
  %2107 = vmatprep.subr.mxu0 0.0
  %2108 = vmatpush1.msra.mxu0 0.0
  %2109 = vmatprep.subr.mxu0 0.0
  %2110 = vmatpush1.msra.mxu0 0.0
  %2111 = vmatprep.subr.mxu0 0.0
  %2112 = vmatpush1.msra.mxu0 0.0
  %2113 = vmatprep.subr.mxu0 0.0
  %2114 = vmatpush1.msra.mxu0 0.0
  %2115 = vmatprep.subr.mxu0 0.0
  %2116 = vmatpush1.msra.mxu0 0.0
  %2117 = vmatprep.subr.mxu0 0.0
  %2118 = vmatpush1.msra.mxu0 0.0
  %2119 = vmatprep.subr.mxu0 0.0
  %2120 = vmatpush1.msra.mxu0 0.0
  %2121 = vmatprep.subr.mxu0 0.0
  %2122 = vmatpush1.msra.mxu0 0.0
  %2123 = vmatprep.subr.mxu0 0.0
  %2124 = vmatpush1.msra.mxu0 0.0
  %2125 = vmatprep.subr.mxu0 0.0
  %2126 = vmatpush1.msra.mxu0 0.0
  %2127 = vmatprep.subr.mxu0 0.0
  %2128 = vmatpush1.msra.mxu0 0.0
  %2129 = vmatprep.subr.mxu0 0.0
  %2130 = vmatpush1.msra.mxu0 0.0
  %2131 = vmatprep.subr.mxu0 0.0
  %2132 = vmatpush1.msra.mxu0 0.0
  %2133 = vmatprep.subr.mxu0 0.0
  %2134 = vmatpush1.msra.mxu0 0.0
  %2135 = vmatprep.subr.mxu0 0.0
  %2136 = vmatpush1.msra.mxu0 0.0
  %2137 = vmatprep.subr.mxu0 0.0
  %2138 = vmatpush1.msra.mxu0 0.0
  %2139 = vmatprep.subr.mxu0 0.0
  %2140 = vmatpush1.msra.mxu0 0.0
  %2141 = vmatprep.subr.mxu0 0.0
  %2142 = vmatpush1.msra.mxu0 0.0
  %2143 = vmatprep.subr.mxu0 0.0
  %2144 = vmatpush1.msra.mxu0 0.0
  %2145 = vmatprep.mubr.f32.mxu0 0.0
  %v2146 = vand.u32 %v1780, 4294901760
  %v2147 = vsub.f32 %v1780, %v2146
  %2148 = vmatmul.mubr.f32.gmra.mrb[0].mxu0 %v2147
  %v2149 = vpop.f32.mrb[0].mxu0
  %v2150 = vadd.f32 %v2036, %v2149
  %v2151 = vpop.f32.mrb[0].mxu0
  %2152 = vmatprep.mubr.f32.mxu0 0.0
  %v2153 = vand.u32 %v1783, 4294901760
  %v2154 = vsub.f32 %v1783, %v2153
  %2155 = vmatmul.mubr.f32.gmra.mrb[0].mxu0 %v2154
  %v2156 = vpop.f32.mrb[0].mxu0
  %v2157 = vadd.f32 %v2042, %v2156
  %v2158 = vpop.f32.mrb[0].mxu0
  %2159 = vmatprep.mubr.f32.mxu0 0.0
  %v2160 = vand.u32 %v1786, 4294901760
  %v2161 = vsub.f32 %v1786, %v2160
  %2162 = vmatmul.mubr.f32.gmra.mrb[0].mxu0 %v2161
  %v2163 = vpop.f32.mrb[0].mxu0
  %v2164 = vadd.f32 %v2048, %v2163
  %v2165 = vpop.f32.mrb[0].mxu0
  %2166 = vmatprep.mubr.f32.mxu0 0.0
  %v2167 = vand.u32 %v1789, 4294901760
  %v2168 = vsub.f32 %v1789, %v2167
  %2169 = vmatmul.mubr.f32.gmra.mrb[0].mxu0 %v2168
  %v2170 = vpop.f32.mrb[0].mxu0
  %v2171 = vadd.f32 %v2054, %v2170
  %v2172 = vpop.f32.mrb[0].mxu0
  %2173 = vdwg.mxu0
  %2174 = vmatprep.subr.mxu0 0.0
  %v2175 = vand.u32 %v1696, 4294901760
  %2176 = vmatpush1.msra.mxu0 %v2175
  %2177 = vmatprep.subr.mxu0 0.0
  %v2178 = vand.u32 %v1697, 4294901760
  %2179 = vmatpush1.msra.mxu0 %v2178
  %2180 = vmatprep.subr.mxu0 0.0
  %v2181 = vand.u32 %v1698, 4294901760
  %2182 = vmatpush1.msra.mxu0 %v2181
  %2183 = vmatprep.subr.mxu0 0.0
  %v2184 = vand.u32 %v1699, 4294901760
  %2185 = vmatpush1.msra.mxu0 %v2184
  %2186 = vmatprep.subr.mxu0 0.0
  %v2187 = vand.u32 %v1700, 4294901760
  %2188 = vmatpush1.msra.mxu0 %v2187
  %2189 = vmatprep.subr.mxu0 0.0
  %v2190 = vand.u32 %v1701, 4294901760
  %2191 = vmatpush1.msra.mxu0 %v2190
  %2192 = vmatprep.subr.mxu0 0.0
  %v2193 = vand.u32 %v1702, 4294901760
  %2194 = vmatpush1.msra.mxu0 %v2193
  %2195 = vmatprep.subr.mxu0 0.0
  %v2196 = vand.u32 %v1703, 4294901760
  %2197 = vmatpush1.msra.mxu0 %v2196
  %2198 = vmatprep.subr.mxu0 0.0
  %v2199 = vand.u32 %v1704, 4294901760
  %2200 = vmatpush1.msra.mxu0 %v2199
  %2201 = vmatprep.subr.mxu0 0.0
  %v2202 = vand.u32 %v1705, 4294901760
  %2203 = vmatpush1.msra.mxu0 %v2202
  %2204 = vmatprep.subr.mxu0 0.0
  %v2205 = vand.u32 %v1706, 4294901760
  %2206 = vmatpush1.msra.mxu0 %v2205
  %2207 = vmatprep.subr.mxu0 0.0
  %v2208 = vand.u32 %v1707, 4294901760
  %2209 = vmatpush1.msra.mxu0 %v2208
  %2210 = vmatprep.subr.mxu0 0.0
  %2211 = vmatpush1.msra.mxu0 0.0
  %2212 = vmatprep.subr.mxu0 0.0
  %2213 = vmatpush1.msra.mxu0 0.0
  %2214 = vmatprep.subr.mxu0 0.0
  %2215 = vmatpush1.msra.mxu0 0.0
  %2216 = vmatprep.subr.mxu0 0.0
  %2217 = vmatpush1.msra.mxu0 0.0
  %2218 = vmatprep.subr.mxu0 0.0
  %2219 = vmatpush1.msra.mxu0 0.0
  %2220 = vmatprep.subr.mxu0 0.0
  %2221 = vmatpush1.msra.mxu0 0.0
  %2222 = vmatprep.subr.mxu0 0.0
  %2223 = vmatpush1.msra.mxu0 0.0
  %2224 = vmatprep.subr.mxu0 0.0
  %2225 = vmatpush1.msra.mxu0 0.0
  %2226 = vmatprep.subr.mxu0 0.0
  %2227 = vmatpush1.msra.mxu0 0.0
  %2228 = vmatprep.subr.mxu0 0.0
  %2229 = vmatpush1.msra.mxu0 0.0
  %2230 = vmatprep.subr.mxu0 0.0
  %2231 = vmatpush1.msra.mxu0 0.0
  %2232 = vmatprep.subr.mxu0 0.0
  %2233 = vmatpush1.msra.mxu0 0.0
  %2234 = vmatprep.subr.mxu0 0.0
  %2235 = vmatpush1.msra.mxu0 0.0
  %2236 = vmatprep.subr.mxu0 0.0
  %2237 = vmatpush1.msra.mxu0 0.0
  %2238 = vmatprep.subr.mxu0 0.0
  %2239 = vmatpush1.msra.mxu0 0.0
  %2240 = vmatprep.subr.mxu0 0.0
  %2241 = vmatpush1.msra.mxu0 0.0
  %2242 = vmatprep.subr.mxu0 0.0
  %2243 = vmatpush1.msra.mxu0 0.0
  %2244 = vmatprep.subr.mxu0 0.0
  %2245 = vmatpush1.msra.mxu0 0.0
  %2246 = vmatprep.subr.mxu0 0.0
  %2247 = vmatpush1.msra.mxu0 0.0
  %2248 = vmatprep.subr.mxu0 0.0
  %2249 = vmatpush1.msra.mxu0 0.0
  %2250 = vmatprep.mubr.f32.mxu0 0.0
  %v2251 = vand.u32 %v1780, 4294901760
  %v2252 = vsub.f32 %v1780, %v2251
  %v2253 = vand.u32 %v2252, 4294901760
  %2254 = vmatmul.mubr.f32.gmra.mrb[0].mxu0 %v2253
  %v2255 = vpop.f32.mrb[0].mxu0
  %v2256 = vadd.f32 %v2150, %v2255
  %v2257 = vpop.f32.mrb[0].mxu0
  %2258 = vmatprep.mubr.f32.mxu0 0.0
  %v2259 = vand.u32 %v1783, 4294901760
  %v2260 = vsub.f32 %v1783, %v2259
  %v2261 = vand.u32 %v2260, 4294901760
  %2262 = vmatmul.mubr.f32.gmra.mrb[0].mxu0 %v2261
  %v2263 = vpop.f32.mrb[0].mxu0
  %v2264 = vadd.f32 %v2157, %v2263
  %v2265 = vpop.f32.mrb[0].mxu0
  %2266 = vmatprep.mubr.f32.mxu0 0.0
  %v2267 = vand.u32 %v1786, 4294901760
  %v2268 = vsub.f32 %v1786, %v2267
  %v2269 = vand.u32 %v2268, 4294901760
  %2270 = vmatmul.mubr.f32.gmra.mrb[0].mxu0 %v2269
  %v2271 = vpop.f32.mrb[0].mxu0
  %v2272 = vadd.f32 %v2164, %v2271
  %v2273 = vpop.f32.mrb[0].mxu0
  %2274 = vmatprep.mubr.f32.mxu0 0.0
  %v2275 = vand.u32 %v1789, 4294901760
  %v2276 = vsub.f32 %v1789, %v2275
  %v2277 = vand.u32 %v2276, 4294901760
  %2278 = vmatmul.mubr.f32.gmra.mrb[0].mxu0 %v2277
  %v2279 = vpop.f32.mrb[0].mxu0
  %v2280 = vadd.f32 %v2171, %v2279
  %v2281 = vpop.f32.mrb[0].mxu0
  %2282 = vdwg.mxu0
  %2283 = vmatprep.subr.mxu0 0.0
  %v2284 = vand.u32 %v1696, 4294901760
  %v2285 = vsub.f32 %v1696, %v2284
  %v2286 = vand.u32 %v2285, 4294901760
  %2287 = vmatpush1.msra.mxu0 %v2286
  %2288 = vmatprep.subr.mxu0 0.0
  %v2289 = vand.u32 %v1697, 4294901760
  %v2290 = vsub.f32 %v1697, %v2289
  %v2291 = vand.u32 %v2290, 4294901760
  %2292 = vmatpush1.msra.mxu0 %v2291
  %2293 = vmatprep.subr.mxu0 0.0
  %v2294 = vand.u32 %v1698, 4294901760
  %v2295 = vsub.f32 %v1698, %v2294
  %v2296 = vand.u32 %v2295, 4294901760
  %2297 = vmatpush1.msra.mxu0 %v2296
  %2298 = vmatprep.subr.mxu0 0.0
  %v2299 = vand.u32 %v1699, 4294901760
  %v2300 = vsub.f32 %v1699, %v2299
  %v2301 = vand.u32 %v2300, 4294901760
  %2302 = vmatpush1.msra.mxu0 %v2301
  %2303 = vmatprep.subr.mxu0 0.0
  %v2304 = vand.u32 %v1700, 4294901760
  %v2305 = vsub.f32 %v1700, %v2304
  %v2306 = vand.u32 %v2305, 4294901760
  %2307 = vmatpush1.msra.mxu0 %v2306
  %2308 = vmatprep.subr.mxu0 0.0
  %v2309 = vand.u32 %v1701, 4294901760
  %v2310 = vsub.f32 %v1701, %v2309
  %v2311 = vand.u32 %v2310, 4294901760
  %2312 = vmatpush1.msra.mxu0 %v2311
  %2313 = vmatprep.subr.mxu0 0.0
  %v2314 = vand.u32 %v1702, 4294901760
  %v2315 = vsub.f32 %v1702, %v2314
  %v2316 = vand.u32 %v2315, 4294901760
  %2317 = vmatpush1.msra.mxu0 %v2316
  %2318 = vmatprep.subr.mxu0 0.0
  %v2319 = vand.u32 %v1703, 4294901760
  %v2320 = vsub.f32 %v1703, %v2319
  %v2321 = vand.u32 %v2320, 4294901760
  %2322 = vmatpush1.msra.mxu0 %v2321
  %2323 = vmatprep.subr.mxu0 0.0
  %v2324 = vand.u32 %v1704, 4294901760
  %v2325 = vsub.f32 %v1704, %v2324
  %v2326 = vand.u32 %v2325, 4294901760
  %2327 = vmatpush1.msra.mxu0 %v2326
  %2328 = vmatprep.subr.mxu0 0.0
  %v2329 = vand.u32 %v1705, 4294901760
  %v2330 = vsub.f32 %v1705, %v2329
  %v2331 = vand.u32 %v2330, 4294901760
  %2332 = vmatpush1.msra.mxu0 %v2331
  %2333 = vmatprep.subr.mxu0 0.0
  %v2334 = vand.u32 %v1706, 4294901760
  %v2335 = vsub.f32 %v1706, %v2334
  %v2336 = vand.u32 %v2335, 4294901760
  %2337 = vmatpush1.msra.mxu0 %v2336
  %2338 = vmatprep.subr.mxu0 0.0
  %v2339 = vand.u32 %v1707, 4294901760
  %v2340 = vsub.f32 %v1707, %v2339
  %v2341 = vand.u32 %v2340, 4294901760
  %2342 = vmatpush1.msra.mxu0 %v2341
  %2343 = vmatprep.subr.mxu0 0.0
  %2344 = vmatpush1.msra.mxu0 0.0
  %2345 = vmatprep.subr.mxu0 0.0
  %2346 = vmatpush1.msra.mxu0 0.0
  %2347 = vmatprep.subr.mxu0 0.0
  %2348 = vmatpush1.msra.mxu0 0.0
  %2349 = vmatprep.subr.mxu0 0.0
  %2350 = vmatpush1.msra.mxu0 0.0
  %2351 = vmatprep.subr.mxu0 0.0
  %2352 = vmatpush1.msra.mxu0 0.0
  %2353 = vmatprep.subr.mxu0 0.0
  %2354 = vmatpush1.msra.mxu0 0.0
  %2355 = vmatprep.subr.mxu0 0.0
  %2356 = vmatpush1.msra.mxu0 0.0
  %2357 = vmatprep.subr.mxu0 0.0
  %2358 = vmatpush1.msra.mxu0 0.0
  %2359 = vmatprep.subr.mxu0 0.0
  %2360 = vmatpush1.msra.mxu0 0.0
  %2361 = vmatprep.subr.mxu0 0.0
  %2362 = vmatpush1.msra.mxu0 0.0
  %2363 = vmatprep.subr.mxu0 0.0
  %2364 = vmatpush1.msra.mxu0 0.0
  %2365 = vmatprep.subr.mxu0 0.0
  %2366 = vmatpush1.msra.mxu0 0.0
  %2367 = vmatprep.subr.mxu0 0.0
  %2368 = vmatpush1.msra.mxu0 0.0
  %2369 = vmatprep.subr.mxu0 0.0
  %2370 = vmatpush1.msra.mxu0 0.0
  %2371 = vmatprep.subr.mxu0 0.0
  %2372 = vmatpush1.msra.mxu0 0.0
  %2373 = vmatprep.subr.mxu0 0.0
  %2374 = vmatpush1.msra.mxu0 0.0
  %2375 = vmatprep.subr.mxu0 0.0
  %2376 = vmatpush1.msra.mxu0 0.0
  %2377 = vmatprep.subr.mxu0 0.0
  %2378 = vmatpush1.msra.mxu0 0.0
  %2379 = vmatprep.subr.mxu0 0.0
  %2380 = vmatpush1.msra.mxu0 0.0
  %2381 = vmatprep.subr.mxu0 0.0
  %2382 = vmatpush1.msra.mxu0 0.0
  %2383 = vmatprep.mubr.f32.mxu0 0.0
  %v2384 = vand.u32 %v1780, 4294901760
  %2385 = vmatmul.mubr.f32.gmra.mrb[0].mxu0 %v2384
  %v2386 = vpop.f32.mrb[0].mxu0
  %v2387 = vadd.f32 %v2256, %v2386
  %v2388 = vpop.f32.mrb[0].mxu0
  %2389 = vmatprep.mubr.f32.mxu0 0.0
  %v2390 = vand.u32 %v1783, 4294901760
  %2391 = vmatmul.mubr.f32.gmra.mrb[0].mxu0 %v2390
  %v2392 = vpop.f32.mrb[0].mxu0
  %v2393 = vadd.f32 %v2264, %v2392
  %v2394 = vpop.f32.mrb[0].mxu0
  %2395 = vmatprep.mubr.f32.mxu0 0.0
  %v2396 = vand.u32 %v1786, 4294901760
  %2397 = vmatmul.mubr.f32.gmra.mrb[0].mxu0 %v2396
  %v2398 = vpop.f32.mrb[0].mxu0
  %v2399 = vadd.f32 %v2272, %v2398
  %v2400 = vpop.f32.mrb[0].mxu0
  %2401 = vmatprep.mubr.f32.mxu0 0.0
  %v2402 = vand.u32 %v1789, 4294901760
  %2403 = vmatmul.mubr.f32.gmra.mrb[0].mxu0 %v2402
  %v2404 = vpop.f32.mrb[0].mxu0
  %v2405 = vadd.f32 %v2280, %v2404
  %v2406 = vpop.f32.mrb[0].mxu0
  %2407 = vdwg.mxu0
  %2408 = vmatprep.subr.mxu0 0.0
  %v2409 = vand.u32 %v1696, 4294901760
  %2410 = vmatpush1.msra.mxu0 %v2409
  %2411 = vmatprep.subr.mxu0 0.0
  %v2412 = vand.u32 %v1697, 4294901760
  %2413 = vmatpush1.msra.mxu0 %v2412
  %2414 = vmatprep.subr.mxu0 0.0
  %v2415 = vand.u32 %v1698, 4294901760
  %2416 = vmatpush1.msra.mxu0 %v2415
  %2417 = vmatprep.subr.mxu0 0.0
  %v2418 = vand.u32 %v1699, 4294901760
  %2419 = vmatpush1.msra.mxu0 %v2418
  %2420 = vmatprep.subr.mxu0 0.0
  %v2421 = vand.u32 %v1700, 4294901760
  %2422 = vmatpush1.msra.mxu0 %v2421
  %2423 = vmatprep.subr.mxu0 0.0
  %v2424 = vand.u32 %v1701, 4294901760
  %2425 = vmatpush1.msra.mxu0 %v2424
  %2426 = vmatprep.subr.mxu0 0.0
  %v2427 = vand.u32 %v1702, 4294901760
  %2428 = vmatpush1.msra.mxu0 %v2427
  %2429 = vmatprep.subr.mxu0 0.0
  %v2430 = vand.u32 %v1703, 4294901760
  %2431 = vmatpush1.msra.mxu0 %v2430
  %2432 = vmatprep.subr.mxu0 0.0
  %v2433 = vand.u32 %v1704, 4294901760
  %2434 = vmatpush1.msra.mxu0 %v2433
  %2435 = vmatprep.subr.mxu0 0.0
  %v2436 = vand.u32 %v1705, 4294901760
  %2437 = vmatpush1.msra.mxu0 %v2436
  %2438 = vmatprep.subr.mxu0 0.0
  %v2439 = vand.u32 %v1706, 4294901760
  %2440 = vmatpush1.msra.mxu0 %v2439
  %2441 = vmatprep.subr.mxu0 0.0
  %v2442 = vand.u32 %v1707, 4294901760
  %2443 = vmatpush1.msra.mxu0 %v2442
  %2444 = vmatprep.subr.mxu0 0.0
  %2445 = vmatpush1.msra.mxu0 0.0
  %2446 = vmatprep.subr.mxu0 0.0
  %2447 = vmatpush1.msra.mxu0 0.0
  %2448 = vmatprep.subr.mxu0 0.0
  %2449 = vmatpush1.msra.mxu0 0.0
  %2450 = vmatprep.subr.mxu0 0.0
  %2451 = vmatpush1.msra.mxu0 0.0
  %2452 = vmatprep.subr.mxu0 0.0
  %2453 = vmatpush1.msra.mxu0 0.0
  %2454 = vmatprep.subr.mxu0 0.0
  %2455 = vmatpush1.msra.mxu0 0.0
  %2456 = vmatprep.subr.mxu0 0.0
  %2457 = vmatpush1.msra.mxu0 0.0
  %2458 = vmatprep.subr.mxu0 0.0
  %2459 = vmatpush1.msra.mxu0 0.0
  %2460 = vmatprep.subr.mxu0 0.0
  %2461 = vmatpush1.msra.mxu0 0.0
  %2462 = vmatprep.subr.mxu0 0.0
  %2463 = vmatpush1.msra.mxu0 0.0
  %2464 = vmatprep.subr.mxu0 0.0
  %2465 = vmatpush1.msra.mxu0 0.0
  %2466 = vmatprep.subr.mxu0 0.0
  %2467 = vmatpush1.msra.mxu0 0.0
  %2468 = vmatprep.subr.mxu0 0.0
  %2469 = vmatpush1.msra.mxu0 0.0
  %2470 = vmatprep.subr.mxu0 0.0
  %2471 = vmatpush1.msra.mxu0 0.0
  %2472 = vmatprep.subr.mxu0 0.0
  %2473 = vmatpush1.msra.mxu0 0.0
  %2474 = vmatprep.subr.mxu0 0.0
  %2475 = vmatpush1.msra.mxu0 0.0
  %2476 = vmatprep.subr.mxu0 0.0
  %2477 = vmatpush1.msra.mxu0 0.0
  %2478 = vmatprep.subr.mxu0 0.0
  %2479 = vmatpush1.msra.mxu0 0.0
  %2480 = vmatprep.subr.mxu0 0.0
  %2481 = vmatpush1.msra.mxu0 0.0
  %2482 = vmatprep.subr.mxu0 0.0
  %2483 = vmatpush1.msra.mxu0 0.0
  %2484 = vmatprep.mubr.f32.mxu0 0.0
  %v2485 = vand.u32 %v1780, 4294901760
  %2486 = vmatmul.mubr.f32.gmra.mrb[0].mxu0 %v2485
  %v2487 = vpop.f32.mrb[0].mxu0
  %v2488 = vadd.f32 %v2387, %v2487
  %v2489 = vpop.f32.mrb[0].mxu0
  %2490 = vmatprep.mubr.f32.mxu0 0.0
  %v2491 = vand.u32 %v1783, 4294901760
  %2492 = vmatmul.mubr.f32.gmra.mrb[0].mxu0 %v2491
  %v2493 = vpop.f32.mrb[0].mxu0
  %v2494 = vadd.f32 %v2393, %v2493
  %v2495 = vpop.f32.mrb[0].mxu0
  %2496 = vmatprep.mubr.f32.mxu0 0.0
  %v2497 = vand.u32 %v1786, 4294901760
  %2498 = vmatmul.mubr.f32.gmra.mrb[0].mxu0 %v2497
  %v2499 = vpop.f32.mrb[0].mxu0
  %v2500 = vadd.f32 %v2399, %v2499
  %v2501 = vpop.f32.mrb[0].mxu0
  %2502 = vmatprep.mubr.f32.mxu0 0.0
  %v2503 = vand.u32 %v1789, 4294901760
  %2504 = vmatmul.mubr.f32.gmra.mrb[0].mxu0 %v2503
  %v2505 = vpop.f32.mrb[0].mxu0
  %v2506 = vadd.f32 %v2405, %v2505
  %v2507 = vpop.f32.mrb[0].mxu0
  %2508 = vdwg.mxu0
  %v2509 = vadd.f32 %v2488, %v872
  %v2510 = vadd.f32 %v2494, %v873
  %v2511 = vadd.f32 %v2500, %v874
  %v2512 = vadd.f32 %v2506, %v875
  %v2513 = vmax.f32 %v2509, 0.0
  %v2514 = vmax.f32 %v2510, 0.0
  %v2515 = vmax.f32 %v2511, 0.0
  %v2516 = vmax.f32 %v2512, 0.0
  %s2517 = scalar_lea.vmem %s4, 96
  %v2518 = vld [vmem:[%s2517] sm:$0xff]
  %v2519 = vld [vmem:[%s2517 + $0x8] sm:$0xff]
  %v2520 = vld [vmem:[%s2517 + $0x10] sm:$0xff]
  %v2521 = vld [vmem:[%s2517 + $0x18] sm:$0xff]
  %v2522 = vld [vmem:[%s2517 + $0x20] sm:$0xff]
  %v2523 = vld [vmem:[%s2517 + $0x28] sm:$0xff]
  %v2524 = vld [vmem:[%s2517 + $0x30] sm:$0xff]
  %v2525 = vld [vmem:[%s2517 + $0x38] sm:$0xff]
  %v2526 = vld [vmem:[%s2517 + $0x40] sm:$0xff]
  %v2527 = vld [vmem:[%s2517 + $0x48] sm:$0xff]
  %v2528 = vld [vmem:[%s2517 + $0x50] sm:$0xff]
  %v2529 = vld [vmem:[%s2517 + $0x58] sm:$0xff]
  %s2530 = scalar_lea.vmem %s5, 1
  %v2531 = vld [vmem:[%s2530] sm:$0x1]
  %2532 = vst.msk [vmem:[#allocation4 + $0x1] sm:$0xff] %vm82, %v2513
  %2533 = vst.msk [vmem:[#allocation4 + $0x9] sm:$0xff] %vm82, %v2514
  %v2534 = vld [vmem:[#allocation4] sm:$0xff]
  %v2535 = vld [vmem:[#allocation4 + $0x8] sm:$0xff]
  %2536 = vst.msk [vmem:[#allocation5] sm:$0xff] %vm82, %v2534
  %2537 = vst.msk [vmem:[#allocation5 + $0x8] sm:$0xff] %vm82, %v2535
  %v2538 = vld [vmem:[#allocation4 + $0x1] sm:$0xff]
  %v2539 = vld [vmem:[#allocation4 + $0x9] sm:$0xff]
  %2542 = vrot.lane.b32.xlu0 %v2538, 32
  %v2543 = vpop.permute.xlu0 %2542
  %2544 = vrot.lane.b32.xlu0 %v2539, 32
  %v2545 = vpop.permute.xlu0 %2544
  %2548 = vst.msk [vmem:[#allocation5] sm:$0xff] %vm905, %v2543
  %2549 = vst.msk [vmem:[#allocation5 + $0x8] sm:$0xff] %vm905, %v2545
  %v2550 = vld [vmem:[#allocation4 + $0x2] sm:$0xff]
  %v2551 = vld [vmem:[#allocation4 + $0xa] sm:$0xff]
  %2554 = vrot.lane.b32.xlu0 %v2550, 64
  %v2555 = vpop.permute.xlu0 %2554
  %2556 = vrot.lane.b32.xlu0 %v2551, 64
  %v2557 = vpop.permute.xlu0 %2556
  %2560 = vst.msk [vmem:[#allocation5] sm:$0xff] %vm918, %v2555
  %2561 = vst.msk [vmem:[#allocation5 + $0x8] sm:$0xff] %vm918, %v2557
  %2562 = vst.msk [vmem:[#allocation4 + $0x1] sm:$0xff] %vm82, %v2515
  %2563 = vst.msk [vmem:[#allocation4 + $0x9] sm:$0xff] %vm82, %v2516
  %v2564 = vld [vmem:[#allocation4] sm:$0xff]
  %v2565 = vld [vmem:[#allocation4 + $0x8] sm:$0xff]
  %2566 = vst.msk [vmem:[#allocation5 + $0x10] sm:$0xff] %vm82, %v2564
  %2567 = vst.msk [vmem:[#allocation5 + $0x18] sm:$0xff] %vm82, %v2565
  %v2568 = vld [vmem:[#allocation4 + $0x1] sm:$0xff]
  %v2569 = vld [vmem:[#allocation4 + $0x9] sm:$0xff]
  %2572 = vrot.lane.b32.xlu0 %v2568, 32
  %v2573 = vpop.permute.xlu0 %2572
  %2574 = vrot.lane.b32.xlu0 %v2569, 32
  %v2575 = vpop.permute.xlu0 %2574
  %2578 = vst.msk [vmem:[#allocation5 + $0x10] sm:$0xff] %vm905, %v2573
  %2579 = vst.msk [vmem:[#allocation5 + $0x18] sm:$0xff] %vm905, %v2575
  %v2580 = vld [vmem:[#allocation4 + $0x2] sm:$0xff]
  %v2581 = vld [vmem:[#allocation4 + $0xa] sm:$0xff]
  %2584 = vrot.lane.b32.xlu0 %v2580, 64
  %v2585 = vpop.permute.xlu0 %2584
  %2586 = vrot.lane.b32.xlu0 %v2581, 64
  %v2587 = vpop.permute.xlu0 %2586
  %2590 = vst.msk [vmem:[#allocation5 + $0x10] sm:$0xff] %vm918, %v2585
  %2591 = vst.msk [vmem:[#allocation5 + $0x18] sm:$0xff] %vm918, %v2587
  %v2592 = vld [vmem:[#allocation5] sm:$0xff]
  %v2593 = vld [vmem:[#allocation5 + $0x8] sm:$0xff]
  %v2594 = vld [vmem:[#allocation5 + $0x10] sm:$0xff]
  %v2595 = vld [vmem:[#allocation5 + $0x18] sm:$0xff]
  %v2597 = vlaneseq
  %v2598 = vshrl.u32 %v2597, 7
  %v2599 = vsub.s32 0, %v2598
  %v2600 = vrot.slane %v2531, %v2599
  %v2603 = vsel %vm961, %v2592, 0
  %v2606 = vsel %vm961, %v2593, 0
  %v2609 = vsel %vm961, %v2594, 0
  %v2612 = vsel %vm961, %v2595, 0
  %2614 = vmatprep.subr.mxu0 0.0
  %v2615 = vand.u32 %v2518, 4294901760
  %2616 = vmatpush1.msra.mxu0 %v2615
  %2617 = vmatprep.subr.mxu0 0.0
  %v2618 = vand.u32 %v2519, 4294901760
  %2619 = vmatpush1.msra.mxu0 %v2618
  %2620 = vmatprep.subr.mxu0 0.0
  %v2621 = vand.u32 %v2520, 4294901760
  %2622 = vmatpush1.msra.mxu0 %v2621
  %2623 = vmatprep.subr.mxu0 0.0
  %v2624 = vand.u32 %v2521, 4294901760
  %2625 = vmatpush1.msra.mxu0 %v2624
  %2626 = vmatprep.subr.mxu0 0.0
  %v2627 = vand.u32 %v2522, 4294901760
  %2628 = vmatpush1.msra.mxu0 %v2627
  %2629 = vmatprep.subr.mxu0 0.0
  %v2630 = vand.u32 %v2523, 4294901760
  %2631 = vmatpush1.msra.mxu0 %v2630
  %2632 = vmatprep.subr.mxu0 0.0
  %v2633 = vand.u32 %v2524, 4294901760
  %2634 = vmatpush1.msra.mxu0 %v2633
  %2635 = vmatprep.subr.mxu0 0.0
  %v2636 = vand.u32 %v2525, 4294901760
  %2637 = vmatpush1.msra.mxu0 %v2636
  %2638 = vmatprep.subr.mxu0 0.0
  %v2639 = vand.u32 %v2526, 4294901760
  %2640 = vmatpush1.msra.mxu0 %v2639
  %2641 = vmatprep.subr.mxu0 0.0
  %v2642 = vand.u32 %v2527, 4294901760
  %2643 = vmatpush1.msra.mxu0 %v2642
  %2644 = vmatprep.subr.mxu0 0.0
  %v2645 = vand.u32 %v2528, 4294901760
  %2646 = vmatpush1.msra.mxu0 %v2645
  %2647 = vmatprep.subr.mxu0 0.0
  %v2648 = vand.u32 %v2529, 4294901760
  %2649 = vmatpush1.msra.mxu0 %v2648
  %2650 = vmatprep.subr.mxu0 0.0
  %2651 = vmatpush1.msra.mxu0 0.0
  %2652 = vmatprep.subr.mxu0 0.0
  %2653 = vmatpush1.msra.mxu0 0.0
  %2654 = vmatprep.subr.mxu0 0.0
  %2655 = vmatpush1.msra.mxu0 0.0
  %2656 = vmatprep.subr.mxu0 0.0
  %2657 = vmatpush1.msra.mxu0 0.0
  %2658 = vmatprep.subr.mxu0 0.0
  %2659 = vmatpush1.msra.mxu0 0.0
  %2660 = vmatprep.subr.mxu0 0.0
  %2661 = vmatpush1.msra.mxu0 0.0
  %2662 = vmatprep.subr.mxu0 0.0
  %2663 = vmatpush1.msra.mxu0 0.0
  %2664 = vmatprep.subr.mxu0 0.0
  %2665 = vmatpush1.msra.mxu0 0.0
  %2666 = vmatprep.subr.mxu0 0.0
  %2667 = vmatpush1.msra.mxu0 0.0
  %2668 = vmatprep.subr.mxu0 0.0
  %2669 = vmatpush1.msra.mxu0 0.0
  %2670 = vmatprep.subr.mxu0 0.0
  %2671 = vmatpush1.msra.mxu0 0.0
  %2672 = vmatprep.subr.mxu0 0.0
  %2673 = vmatpush1.msra.mxu0 0.0
  %2674 = vmatprep.subr.mxu0 0.0
  %2675 = vmatpush1.msra.mxu0 0.0
  %2676 = vmatprep.subr.mxu0 0.0
  %2677 = vmatpush1.msra.mxu0 0.0
  %2678 = vmatprep.subr.mxu0 0.0
  %2679 = vmatpush1.msra.mxu0 0.0
  %2680 = vmatprep.subr.mxu0 0.0
  %2681 = vmatpush1.msra.mxu0 0.0
  %2682 = vmatprep.subr.mxu0 0.0
  %2683 = vmatpush1.msra.mxu0 0.0
  %2684 = vmatprep.subr.mxu0 0.0
  %2685 = vmatpush1.msra.mxu0 0.0
  %2686 = vmatprep.subr.mxu0 0.0
  %2687 = vmatpush1.msra.mxu0 0.0
  %2688 = vmatprep.subr.mxu0 0.0
  %2689 = vmatpush1.msra.mxu0 0.0
  %2690 = vmatprep.mubr.f32.mxu0 0.0
  %v2691 = vand.u32 %v2603, 4294901760
  %v2692 = vsub.f32 %v2603, %v2691
  %v2693 = vand.u32 %v2692, 4294901760
  %v2694 = vsub.f32 %v2692, %v2693
  %v2695 = vand.u32 %v2694, 4294901760
  %2696 = vmatmul.mubr.f32.gmra.mrb[0].mxu0 %v2695
  %v2697 = vpop.f32.mrb[0].mxu0
  %v2698 = vadd.f32 %v2600, %v2697
  %v2699 = vpop.f32.mrb[0].mxu0
  %2700 = vmatprep.mubr.f32.mxu0 0.0
  %v2701 = vand.u32 %v2606, 4294901760
  %v2702 = vsub.f32 %v2606, %v2701
  %v2703 = vand.u32 %v2702, 4294901760
  %v2704 = vsub.f32 %v2702, %v2703
  %v2705 = vand.u32 %v2704, 4294901760
  %2706 = vmatmul.mubr.f32.gmra.mrb[0].mxu0 %v2705
  %v2707 = vpop.f32.mrb[0].mxu0
  %v2708 = vadd.f32 %v2600, %v2707
  %v2709 = vpop.f32.mrb[0].mxu0
  %2710 = vmatprep.mubr.f32.mxu0 0.0
  %v2711 = vand.u32 %v2609, 4294901760
  %v2712 = vsub.f32 %v2609, %v2711
  %v2713 = vand.u32 %v2712, 4294901760
  %v2714 = vsub.f32 %v2712, %v2713
  %v2715 = vand.u32 %v2714, 4294901760
  %2716 = vmatmul.mubr.f32.gmra.mrb[0].mxu0 %v2715
  %v2717 = vpop.f32.mrb[0].mxu0
  %v2718 = vadd.f32 %v2600, %v2717
  %v2719 = vpop.f32.mrb[0].mxu0
  %2720 = vmatprep.mubr.f32.mxu0 0.0
  %v2721 = vand.u32 %v2612, 4294901760
  %v2722 = vsub.f32 %v2612, %v2721
  %v2723 = vand.u32 %v2722, 4294901760
  %v2724 = vsub.f32 %v2722, %v2723
  %v2725 = vand.u32 %v2724, 4294901760
  %2726 = vmatmul.mubr.f32.gmra.mrb[0].mxu0 %v2725
  %v2727 = vpop.f32.mrb[0].mxu0
  %v2728 = vadd.f32 %v2600, %v2727
  %v2729 = vpop.f32.mrb[0].mxu0
  %2730 = vdwg.mxu0
  %2731 = vmatprep.subr.mxu0 0.0
  %v2732 = vand.u32 %v2518, 4294901760
  %v2733 = vsub.f32 %v2518, %v2732
  %v2734 = vand.u32 %v2733, 4294901760
  %v2735 = vsub.f32 %v2733, %v2734
  %v2736 = vand.u32 %v2735, 4294901760
  %2737 = vmatpush1.msra.mxu0 %v2736
  %2738 = vmatprep.subr.mxu0 0.0
  %v2739 = vand.u32 %v2519, 4294901760
  %v2740 = vsub.f32 %v2519, %v2739
  %v2741 = vand.u32 %v2740, 4294901760
  %v2742 = vsub.f32 %v2740, %v2741
  %v2743 = vand.u32 %v2742, 4294901760
  %2744 = vmatpush1.msra.mxu0 %v2743
  %2745 = vmatprep.subr.mxu0 0.0
  %v2746 = vand.u32 %v2520, 4294901760
  %v2747 = vsub.f32 %v2520, %v2746
  %v2748 = vand.u32 %v2747, 4294901760
  %v2749 = vsub.f32 %v2747, %v2748
  %v2750 = vand.u32 %v2749, 4294901760
  %2751 = vmatpush1.msra.mxu0 %v2750
  %2752 = vmatprep.subr.mxu0 0.0
  %v2753 = vand.u32 %v2521, 4294901760
  %v2754 = vsub.f32 %v2521, %v2753
  %v2755 = vand.u32 %v2754, 4294901760
  %v2756 = vsub.f32 %v2754, %v2755
  %v2757 = vand.u32 %v2756, 4294901760
  %2758 = vmatpush1.msra.mxu0 %v2757
  %2759 = vmatprep.subr.mxu0 0.0
  %v2760 = vand.u32 %v2522, 4294901760
  %v2761 = vsub.f32 %v2522, %v2760
  %v2762 = vand.u32 %v2761, 4294901760
  %v2763 = vsub.f32 %v2761, %v2762
  %v2764 = vand.u32 %v2763, 4294901760
  %2765 = vmatpush1.msra.mxu0 %v2764
  %2766 = vmatprep.subr.mxu0 0.0
  %v2767 = vand.u32 %v2523, 4294901760
  %v2768 = vsub.f32 %v2523, %v2767
  %v2769 = vand.u32 %v2768, 4294901760
  %v2770 = vsub.f32 %v2768, %v2769
  %v2771 = vand.u32 %v2770, 4294901760
  %2772 = vmatpush1.msra.mxu0 %v2771
  %2773 = vmatprep.subr.mxu0 0.0
  %v2774 = vand.u32 %v2524, 4294901760
  %v2775 = vsub.f32 %v2524, %v2774
  %v2776 = vand.u32 %v2775, 4294901760
  %v2777 = vsub.f32 %v2775, %v2776
  %v2778 = vand.u32 %v2777, 4294901760
  %2779 = vmatpush1.msra.mxu0 %v2778
  %2780 = vmatprep.subr.mxu0 0.0
  %v2781 = vand.u32 %v2525, 4294901760
  %v2782 = vsub.f32 %v2525, %v2781
  %v2783 = vand.u32 %v2782, 4294901760
  %v2784 = vsub.f32 %v2782, %v2783
  %v2785 = vand.u32 %v2784, 4294901760
  %2786 = vmatpush1.msra.mxu0 %v2785
  %2787 = vmatprep.subr.mxu0 0.0
  %v2788 = vand.u32 %v2526, 4294901760
  %v2789 = vsub.f32 %v2526, %v2788
  %v2790 = vand.u32 %v2789, 4294901760
  %v2791 = vsub.f32 %v2789, %v2790
  %v2792 = vand.u32 %v2791, 4294901760
  %2793 = vmatpush1.msra.mxu0 %v2792
  %2794 = vmatprep.subr.mxu0 0.0
  %v2795 = vand.u32 %v2527, 4294901760
  %v2796 = vsub.f32 %v2527, %v2795
  %v2797 = vand.u32 %v2796, 4294901760
  %v2798 = vsub.f32 %v2796, %v2797
  %v2799 = vand.u32 %v2798, 4294901760
  %2800 = vmatpush1.msra.mxu0 %v2799
  %2801 = vmatprep.subr.mxu0 0.0
  %v2802 = vand.u32 %v2528, 4294901760
  %v2803 = vsub.f32 %v2528, %v2802
  %v2804 = vand.u32 %v2803, 4294901760
  %v2805 = vsub.f32 %v2803, %v2804
  %v2806 = vand.u32 %v2805, 4294901760
  %2807 = vmatpush1.msra.mxu0 %v2806
  %2808 = vmatprep.subr.mxu0 0.0
  %v2809 = vand.u32 %v2529, 4294901760
  %v2810 = vsub.f32 %v2529, %v2809
  %v2811 = vand.u32 %v2810, 4294901760
  %v2812 = vsub.f32 %v2810, %v2811
  %v2813 = vand.u32 %v2812, 4294901760
  %2814 = vmatpush1.msra.mxu0 %v2813
  %2815 = vmatprep.subr.mxu0 0.0
  %2816 = vmatpush1.msra.mxu0 0.0
  %2817 = vmatprep.subr.mxu0 0.0
  %2818 = vmatpush1.msra.mxu0 0.0
  %2819 = vmatprep.subr.mxu0 0.0
  %2820 = vmatpush1.msra.mxu0 0.0
  %2821 = vmatprep.subr.mxu0 0.0
  %2822 = vmatpush1.msra.mxu0 0.0
  %2823 = vmatprep.subr.mxu0 0.0
  %2824 = vmatpush1.msra.mxu0 0.0
  %2825 = vmatprep.subr.mxu0 0.0
  %2826 = vmatpush1.msra.mxu0 0.0
  %2827 = vmatprep.subr.mxu0 0.0
  %2828 = vmatpush1.msra.mxu0 0.0
  %2829 = vmatprep.subr.mxu0 0.0
  %2830 = vmatpush1.msra.mxu0 0.0
  %2831 = vmatprep.subr.mxu0 0.0
  %2832 = vmatpush1.msra.mxu0 0.0
  %2833 = vmatprep.subr.mxu0 0.0
  %2834 = vmatpush1.msra.mxu0 0.0
  %2835 = vmatprep.subr.mxu0 0.0
  %2836 = vmatpush1.msra.mxu0 0.0
  %2837 = vmatprep.subr.mxu0 0.0
  %2838 = vmatpush1.msra.mxu0 0.0
  %2839 = vmatprep.subr.mxu0 0.0
  %2840 = vmatpush1.msra.mxu0 0.0
  %2841 = vmatprep.subr.mxu0 0.0
  %2842 = vmatpush1.msra.mxu0 0.0
  %2843 = vmatprep.subr.mxu0 0.0
  %2844 = vmatpush1.msra.mxu0 0.0
  %2845 = vmatprep.subr.mxu0 0.0
  %2846 = vmatpush1.msra.mxu0 0.0
  %2847 = vmatprep.subr.mxu0 0.0
  %2848 = vmatpush1.msra.mxu0 0.0
  %2849 = vmatprep.subr.mxu0 0.0
  %2850 = vmatpush1.msra.mxu0 0.0
  %2851 = vmatprep.subr.mxu0 0.0
  %2852 = vmatpush1.msra.mxu0 0.0
  %2853 = vmatprep.subr.mxu0 0.0
  %2854 = vmatpush1.msra.mxu0 0.0
  %2855 = vmatprep.mubr.f32.mxu0 0.0
  %v2856 = vand.u32 %v2603, 4294901760
  %2857 = vmatmul.mubr.f32.gmra.mrb[0].mxu0 %v2856
  %v2858 = vpop.f32.mrb[0].mxu0
  %v2859 = vadd.f32 %v2698, %v2858
  %v2860 = vpop.f32.mrb[0].mxu0
  %2861 = vmatprep.mubr.f32.mxu0 0.0
  %v2862 = vand.u32 %v2606, 4294901760
  %2863 = vmatmul.mubr.f32.gmra.mrb[0].mxu0 %v2862
  %v2864 = vpop.f32.mrb[0].mxu0
  %v2865 = vadd.f32 %v2708, %v2864
  %v2866 = vpop.f32.mrb[0].mxu0
  %2867 = vmatprep.mubr.f32.mxu0 0.0
  %v2868 = vand.u32 %v2609, 4294901760
  %2869 = vmatmul.mubr.f32.gmra.mrb[0].mxu0 %v2868
  %v2870 = vpop.f32.mrb[0].mxu0
  %v2871 = vadd.f32 %v2718, %v2870
  %v2872 = vpop.f32.mrb[0].mxu0
  %2873 = vmatprep.mubr.f32.mxu0 0.0
  %v2874 = vand.u32 %v2612, 4294901760
  %2875 = vmatmul.mubr.f32.gmra.mrb[0].mxu0 %v2874
  %v2876 = vpop.f32.mrb[0].mxu0
  %v2877 = vadd.f32 %v2728, %v2876
  %v2878 = vpop.f32.mrb[0].mxu0
  %2879 = vdwg.mxu0
  %2880 = vmatprep.subr.mxu0 0.0
  %v2881 = vand.u32 %v2518, 4294901760
  %v2882 = vsub.f32 %v2518, %v2881
  %2883 = vmatpush1.msra.mxu0 %v2882
  %2884 = vmatprep.subr.mxu0 0.0
  %v2885 = vand.u32 %v2519, 4294901760
  %v2886 = vsub.f32 %v2519, %v2885
  %2887 = vmatpush1.msra.mxu0 %v2886
  %2888 = vmatprep.subr.mxu0 0.0
  %v2889 = vand.u32 %v2520, 4294901760
  %v2890 = vsub.f32 %v2520, %v2889
  %2891 = vmatpush1.msra.mxu0 %v2890
  %2892 = vmatprep.subr.mxu0 0.0
  %v2893 = vand.u32 %v2521, 4294901760
  %v2894 = vsub.f32 %v2521, %v2893
  %2895 = vmatpush1.msra.mxu0 %v2894
  %2896 = vmatprep.subr.mxu0 0.0
  %v2897 = vand.u32 %v2522, 4294901760
  %v2898 = vsub.f32 %v2522, %v2897
  %2899 = vmatpush1.msra.mxu0 %v2898
  %2900 = vmatprep.subr.mxu0 0.0
  %v2901 = vand.u32 %v2523, 4294901760
  %v2902 = vsub.f32 %v2523, %v2901
  %2903 = vmatpush1.msra.mxu0 %v2902
  %2904 = vmatprep.subr.mxu0 0.0
  %v2905 = vand.u32 %v2524, 4294901760
  %v2906 = vsub.f32 %v2524, %v2905
  %2907 = vmatpush1.msra.mxu0 %v2906
  %2908 = vmatprep.subr.mxu0 0.0
  %v2909 = vand.u32 %v2525, 4294901760
  %v2910 = vsub.f32 %v2525, %v2909
  %2911 = vmatpush1.msra.mxu0 %v2910
  %2912 = vmatprep.subr.mxu0 0.0
  %v2913 = vand.u32 %v2526, 4294901760
  %v2914 = vsub.f32 %v2526, %v2913
  %2915 = vmatpush1.msra.mxu0 %v2914
  %2916 = vmatprep.subr.mxu0 0.0
  %v2917 = vand.u32 %v2527, 4294901760
  %v2918 = vsub.f32 %v2527, %v2917
  %2919 = vmatpush1.msra.mxu0 %v2918
  %2920 = vmatprep.subr.mxu0 0.0
  %v2921 = vand.u32 %v2528, 4294901760
  %v2922 = vsub.f32 %v2528, %v2921
  %2923 = vmatpush1.msra.mxu0 %v2922
  %2924 = vmatprep.subr.mxu0 0.0
  %v2925 = vand.u32 %v2529, 4294901760
  %v2926 = vsub.f32 %v2529, %v2925
  %2927 = vmatpush1.msra.mxu0 %v2926
  %2928 = vmatprep.subr.mxu0 0.0
  %2929 = vmatpush1.msra.mxu0 0.0
  %2930 = vmatprep.subr.mxu0 0.0
  %2931 = vmatpush1.msra.mxu0 0.0
  %2932 = vmatprep.subr.mxu0 0.0
  %2933 = vmatpush1.msra.mxu0 0.0
  %2934 = vmatprep.subr.mxu0 0.0
  %2935 = vmatpush1.msra.mxu0 0.0
  %2936 = vmatprep.subr.mxu0 0.0
  %2937 = vmatpush1.msra.mxu0 0.0
  %2938 = vmatprep.subr.mxu0 0.0
  %2939 = vmatpush1.msra.mxu0 0.0
  %2940 = vmatprep.subr.mxu0 0.0
  %2941 = vmatpush1.msra.mxu0 0.0
  %2942 = vmatprep.subr.mxu0 0.0
  %2943 = vmatpush1.msra.mxu0 0.0
  %2944 = vmatprep.subr.mxu0 0.0
  %2945 = vmatpush1.msra.mxu0 0.0
  %2946 = vmatprep.subr.mxu0 0.0
  %2947 = vmatpush1.msra.mxu0 0.0
  %2948 = vmatprep.subr.mxu0 0.0
  %2949 = vmatpush1.msra.mxu0 0.0
  %2950 = vmatprep.subr.mxu0 0.0
  %2951 = vmatpush1.msra.mxu0 0.0
  %2952 = vmatprep.subr.mxu0 0.0
  %2953 = vmatpush1.msra.mxu0 0.0
  %2954 = vmatprep.subr.mxu0 0.0
  %2955 = vmatpush1.msra.mxu0 0.0
  %2956 = vmatprep.subr.mxu0 0.0
  %2957 = vmatpush1.msra.mxu0 0.0
  %2958 = vmatprep.subr.mxu0 0.0
  %2959 = vmatpush1.msra.mxu0 0.0
  %2960 = vmatprep.subr.mxu0 0.0
  %2961 = vmatpush1.msra.mxu0 0.0
  %2962 = vmatprep.subr.mxu0 0.0
  %2963 = vmatpush1.msra.mxu0 0.0
  %2964 = vmatprep.subr.mxu0 0.0
  %2965 = vmatpush1.msra.mxu0 0.0
  %2966 = vmatprep.subr.mxu0 0.0
  %2967 = vmatpush1.msra.mxu0 0.0
  %2968 = vmatprep.mubr.f32.mxu0 0.0
  %v2969 = vand.u32 %v2603, 4294901760
  %v2970 = vsub.f32 %v2603, %v2969
  %2971 = vmatmul.mubr.f32.gmra.mrb[0].mxu0 %v2970
  %v2972 = vpop.f32.mrb[0].mxu0
  %v2973 = vadd.f32 %v2859, %v2972
  %v2974 = vpop.f32.mrb[0].mxu0
  %2975 = vmatprep.mubr.f32.mxu0 0.0
  %v2976 = vand.u32 %v2606, 4294901760
  %v2977 = vsub.f32 %v2606, %v2976
  %2978 = vmatmul.mubr.f32.gmra.mrb[0].mxu0 %v2977
  %v2979 = vpop.f32.mrb[0].mxu0
  %v2980 = vadd.f32 %v2865, %v2979
  %v2981 = vpop.f32.mrb[0].mxu0
  %2982 = vmatprep.mubr.f32.mxu0 0.0
  %v2983 = vand.u32 %v2609, 4294901760
  %v2984 = vsub.f32 %v2609, %v2983
  %2985 = vmatmul.mubr.f32.gmra.mrb[0].mxu0 %v2984
  %v2986 = vpop.f32.mrb[0].mxu0
  %v2987 = vadd.f32 %v2871, %v2986
  %v2988 = vpop.f32.mrb[0].mxu0
  %2989 = vmatprep.mubr.f32.mxu0 0.0
  %v2990 = vand.u32 %v2612, 4294901760
  %v2991 = vsub.f32 %v2612, %v2990
  %2992 = vmatmul.mubr.f32.gmra.mrb[0].mxu0 %v2991
  %v2993 = vpop.f32.mrb[0].mxu0
  %v2994 = vadd.f32 %v2877, %v2993
  %v2995 = vpop.f32.mrb[0].mxu0
  %2996 = vdwg.mxu0
  %2997 = vmatprep.subr.mxu0 0.0
  %v2998 = vand.u32 %v2518, 4294901760
  %2999 = vmatpush1.msra.mxu0 %v2998
  %3000 = vmatprep.subr.mxu0 0.0
  %v3001 = vand.u32 %v2519, 4294901760
  %3002 = vmatpush1.msra.mxu0 %v3001
  %3003 = vmatprep.subr.mxu0 0.0
  %v3004 = vand.u32 %v2520, 4294901760
  %3005 = vmatpush1.msra.mxu0 %v3004
  %3006 = vmatprep.subr.mxu0 0.0
  %v3007 = vand.u32 %v2521, 4294901760
  %3008 = vmatpush1.msra.mxu0 %v3007
  %3009 = vmatprep.subr.mxu0 0.0
  %v3010 = vand.u32 %v2522, 4294901760
  %3011 = vmatpush1.msra.mxu0 %v3010
  %3012 = vmatprep.subr.mxu0 0.0
  %v3013 = vand.u32 %v2523, 4294901760
  %3014 = vmatpush1.msra.mxu0 %v3013
  %3015 = vmatprep.subr.mxu0 0.0
  %v3016 = vand.u32 %v2524, 4294901760
  %3017 = vmatpush1.msra.mxu0 %v3016
  %3018 = vmatprep.subr.mxu0 0.0
  %v3019 = vand.u32 %v2525, 4294901760
  %3020 = vmatpush1.msra.mxu0 %v3019
  %3021 = vmatprep.subr.mxu0 0.0
  %v3022 = vand.u32 %v2526, 4294901760
  %3023 = vmatpush1.msra.mxu0 %v3022
  %3024 = vmatprep.subr.mxu0 0.0
  %v3025 = vand.u32 %v2527, 4294901760
  %3026 = vmatpush1.msra.mxu0 %v3025
  %3027 = vmatprep.subr.mxu0 0.0
  %v3028 = vand.u32 %v2528, 4294901760
  %3029 = vmatpush1.msra.mxu0 %v3028
  %3030 = vmatprep.subr.mxu0 0.0
  %v3031 = vand.u32 %v2529, 4294901760
  %3032 = vmatpush1.msra.mxu0 %v3031
  %3033 = vmatprep.subr.mxu0 0.0
  %3034 = vmatpush1.msra.mxu0 0.0
  %3035 = vmatprep.subr.mxu0 0.0
  %3036 = vmatpush1.msra.mxu0 0.0
  %3037 = vmatprep.subr.mxu0 0.0
  %3038 = vmatpush1.msra.mxu0 0.0
  %3039 = vmatprep.subr.mxu0 0.0
  %3040 = vmatpush1.msra.mxu0 0.0
  %3041 = vmatprep.subr.mxu0 0.0
  %3042 = vmatpush1.msra.mxu0 0.0
  %3043 = vmatprep.subr.mxu0 0.0
  %3044 = vmatpush1.msra.mxu0 0.0
  %3045 = vmatprep.subr.mxu0 0.0
  %3046 = vmatpush1.msra.mxu0 0.0
  %3047 = vmatprep.subr.mxu0 0.0
  %3048 = vmatpush1.msra.mxu0 0.0
  %3049 = vmatprep.subr.mxu0 0.0
  %3050 = vmatpush1.msra.mxu0 0.0
  %3051 = vmatprep.subr.mxu0 0.0
  %3052 = vmatpush1.msra.mxu0 0.0
  %3053 = vmatprep.subr.mxu0 0.0
  %3054 = vmatpush1.msra.mxu0 0.0
  %3055 = vmatprep.subr.mxu0 0.0
  %3056 = vmatpush1.msra.mxu0 0.0
  %3057 = vmatprep.subr.mxu0 0.0
  %3058 = vmatpush1.msra.mxu0 0.0
  %3059 = vmatprep.subr.mxu0 0.0
  %3060 = vmatpush1.msra.mxu0 0.0
  %3061 = vmatprep.subr.mxu0 0.0
  %3062 = vmatpush1.msra.mxu0 0.0
  %3063 = vmatprep.subr.mxu0 0.0
  %3064 = vmatpush1.msra.mxu0 0.0
  %3065 = vmatprep.subr.mxu0 0.0
  %3066 = vmatpush1.msra.mxu0 0.0
  %3067 = vmatprep.subr.mxu0 0.0
  %3068 = vmatpush1.msra.mxu0 0.0
  %3069 = vmatprep.subr.mxu0 0.0
  %3070 = vmatpush1.msra.mxu0 0.0
  %3071 = vmatprep.subr.mxu0 0.0
  %3072 = vmatpush1.msra.mxu0 0.0
  %3073 = vmatprep.mubr.f32.mxu0 0.0
  %v3074 = vand.u32 %v2603, 4294901760
  %v3075 = vsub.f32 %v2603, %v3074
  %v3076 = vand.u32 %v3075, 4294901760
  %3077 = vmatmul.mubr.f32.gmra.mrb[0].mxu0 %v3076
  %v3078 = vpop.f32.mrb[0].mxu0
  %v3079 = vadd.f32 %v2973, %v3078
  %v3080 = vpop.f32.mrb[0].mxu0
  %3081 = vmatprep.mubr.f32.mxu0 0.0
  %v3082 = vand.u32 %v2606, 4294901760
  %v3083 = vsub.f32 %v2606, %v3082
  %v3084 = vand.u32 %v3083, 4294901760
  %3085 = vmatmul.mubr.f32.gmra.mrb[0].mxu0 %v3084
  %v3086 = vpop.f32.mrb[0].mxu0
  %v3087 = vadd.f32 %v2980, %v3086
  %v3088 = vpop.f32.mrb[0].mxu0
  %3089 = vmatprep.mubr.f32.mxu0 0.0
  %v3090 = vand.u32 %v2609, 4294901760
  %v3091 = vsub.f32 %v2609, %v3090
  %v3092 = vand.u32 %v3091, 4294901760
  %3093 = vmatmul.mubr.f32.gmra.mrb[0].mxu0 %v3092
  %v3094 = vpop.f32.mrb[0].mxu0
  %v3095 = vadd.f32 %v2987, %v3094
  %v3096 = vpop.f32.mrb[0].mxu0
  %3097 = vmatprep.mubr.f32.mxu0 0.0
  %v3098 = vand.u32 %v2612, 4294901760
  %v3099 = vsub.f32 %v2612, %v3098
  %v3100 = vand.u32 %v3099, 4294901760
  %3101 = vmatmul.mubr.f32.gmra.mrb[0].mxu0 %v3100
  %v3102 = vpop.f32.mrb[0].mxu0
  %v3103 = vadd.f32 %v2994, %v3102
  %v3104 = vpop.f32.mrb[0].mxu0
  %3105 = vdwg.mxu0
  %3106 = vmatprep.subr.mxu0 0.0
  %v3107 = vand.u32 %v2518, 4294901760
  %v3108 = vsub.f32 %v2518, %v3107
  %v3109 = vand.u32 %v3108, 4294901760
  %3110 = vmatpush1.msra.mxu0 %v3109
  %3111 = vmatprep.subr.mxu0 0.0
  %v3112 = vand.u32 %v2519, 4294901760
  %v3113 = vsub.f32 %v2519, %v3112
  %v3114 = vand.u32 %v3113, 4294901760
  %3115 = vmatpush1.msra.mxu0 %v3114
  %3116 = vmatprep.subr.mxu0 0.0
  %v3117 = vand.u32 %v2520, 4294901760
  %v3118 = vsub.f32 %v2520, %v3117
  %v3119 = vand.u32 %v3118, 4294901760
  %3120 = vmatpush1.msra.mxu0 %v3119
  %3121 = vmatprep.subr.mxu0 0.0
  %v3122 = vand.u32 %v2521, 4294901760
  %v3123 = vsub.f32 %v2521, %v3122
  %v3124 = vand.u32 %v3123, 4294901760
  %3125 = vmatpush1.msra.mxu0 %v3124
  %3126 = vmatprep.subr.mxu0 0.0
  %v3127 = vand.u32 %v2522, 4294901760
  %v3128 = vsub.f32 %v2522, %v3127
  %v3129 = vand.u32 %v3128, 4294901760
  %3130 = vmatpush1.msra.mxu0 %v3129
  %3131 = vmatprep.subr.mxu0 0.0
  %v3132 = vand.u32 %v2523, 4294901760
  %v3133 = vsub.f32 %v2523, %v3132
  %v3134 = vand.u32 %v3133, 4294901760
  %3135 = vmatpush1.msra.mxu0 %v3134
  %3136 = vmatprep.subr.mxu0 0.0
  %v3137 = vand.u32 %v2524, 4294901760
  %v3138 = vsub.f32 %v2524, %v3137
  %v3139 = vand.u32 %v3138, 4294901760
  %3140 = vmatpush1.msra.mxu0 %v3139
  %3141 = vmatprep.subr.mxu0 0.0
  %v3142 = vand.u32 %v2525, 4294901760
  %v3143 = vsub.f32 %v2525, %v3142
  %v3144 = vand.u32 %v3143, 4294901760
  %3145 = vmatpush1.msra.mxu0 %v3144
  %3146 = vmatprep.subr.mxu0 0.0
  %v3147 = vand.u32 %v2526, 4294901760
  %v3148 = vsub.f32 %v2526, %v3147
  %v3149 = vand.u32 %v3148, 4294901760
  %3150 = vmatpush1.msra.mxu0 %v3149
  %3151 = vmatprep.subr.mxu0 0.0
  %v3152 = vand.u32 %v2527, 4294901760
  %v3153 = vsub.f32 %v2527, %v3152
  %v3154 = vand.u32 %v3153, 4294901760
  %3155 = vmatpush1.msra.mxu0 %v3154
  %3156 = vmatprep.subr.mxu0 0.0
  %v3157 = vand.u32 %v2528, 4294901760
  %v3158 = vsub.f32 %v2528, %v3157
  %v3159 = vand.u32 %v3158, 4294901760
  %3160 = vmatpush1.msra.mxu0 %v3159
  %3161 = vmatprep.subr.mxu0 0.0
  %v3162 = vand.u32 %v2529, 4294901760
  %v3163 = vsub.f32 %v2529, %v3162
  %v3164 = vand.u32 %v3163, 4294901760
  %3165 = vmatpush1.msra.mxu0 %v3164
  %3166 = vmatprep.subr.mxu0 0.0
  %3167 = vmatpush1.msra.mxu0 0.0
  %3168 = vmatprep.subr.mxu0 0.0
  %3169 = vmatpush1.msra.mxu0 0.0
  %3170 = vmatprep.subr.mxu0 0.0
  %3171 = vmatpush1.msra.mxu0 0.0
  %3172 = vmatprep.subr.mxu0 0.0
  %3173 = vmatpush1.msra.mxu0 0.0
  %3174 = vmatprep.subr.mxu0 0.0
  %3175 = vmatpush1.msra.mxu0 0.0
  %3176 = vmatprep.subr.mxu0 0.0
  %3177 = vmatpush1.msra.mxu0 0.0
  %3178 = vmatprep.subr.mxu0 0.0
  %3179 = vmatpush1.msra.mxu0 0.0
  %3180 = vmatprep.subr.mxu0 0.0
  %3181 = vmatpush1.msra.mxu0 0.0
  %3182 = vmatprep.subr.mxu0 0.0
  %3183 = vmatpush1.msra.mxu0 0.0
  %3184 = vmatprep.subr.mxu0 0.0
  %3185 = vmatpush1.msra.mxu0 0.0
  %3186 = vmatprep.subr.mxu0 0.0
  %3187 = vmatpush1.msra.mxu0 0.0
  %3188 = vmatprep.subr.mxu0 0.0
  %3189 = vmatpush1.msra.mxu0 0.0
  %3190 = vmatprep.subr.mxu0 0.0
  %3191 = vmatpush1.msra.mxu0 0.0
  %3192 = vmatprep.subr.mxu0 0.0
  %3193 = vmatpush1.msra.mxu0 0.0
  %3194 = vmatprep.subr.mxu0 0.0
  %3195 = vmatpush1.msra.mxu0 0.0
  %3196 = vmatprep.subr.mxu0 0.0
  %3197 = vmatpush1.msra.mxu0 0.0
  %3198 = vmatprep.subr.mxu0 0.0
  %3199 = vmatpush1.msra.mxu0 0.0
  %3200 = vmatprep.subr.mxu0 0.0
  %3201 = vmatpush1.msra.mxu0 0.0
  %3202 = vmatprep.subr.mxu0 0.0
  %3203 = vmatpush1.msra.mxu0 0.0
  %3204 = vmatprep.subr.mxu0 0.0
  %3205 = vmatpush1.msra.mxu0 0.0
  %3206 = vmatprep.mubr.f32.mxu0 0.0
  %v3207 = vand.u32 %v2603, 4294901760
  %3208 = vmatmul.mubr.f32.gmra.mrb[0].mxu0 %v3207
  %v3209 = vpop.f32.mrb[0].mxu0
  %v3210 = vadd.f32 %v3079, %v3209
  %v3211 = vpop.f32.mrb[0].mxu0
  %3212 = vmatprep.mubr.f32.mxu0 0.0
  %v3213 = vand.u32 %v2606, 4294901760
  %3214 = vmatmul.mubr.f32.gmra.mrb[0].mxu0 %v3213
  %v3215 = vpop.f32.mrb[0].mxu0
  %v3216 = vadd.f32 %v3087, %v3215
  %v3217 = vpop.f32.mrb[0].mxu0
  %3218 = vmatprep.mubr.f32.mxu0 0.0
  %v3219 = vand.u32 %v2609, 4294901760
  %3220 = vmatmul.mubr.f32.gmra.mrb[0].mxu0 %v3219
  %v3221 = vpop.f32.mrb[0].mxu0
  %v3222 = vadd.f32 %v3095, %v3221
  %v3223 = vpop.f32.mrb[0].mxu0
  %3224 = vmatprep.mubr.f32.mxu0 0.0
  %v3225 = vand.u32 %v2612, 4294901760
  %3226 = vmatmul.mubr.f32.gmra.mrb[0].mxu0 %v3225
  %v3227 = vpop.f32.mrb[0].mxu0
  %v3228 = vadd.f32 %v3103, %v3227
  %v3229 = vpop.f32.mrb[0].mxu0
  %3230 = vdwg.mxu0
  %3231 = vmatprep.subr.mxu0 0.0
  %v3232 = vand.u32 %v2518, 4294901760
  %3233 = vmatpush1.msra.mxu0 %v3232
  %3234 = vmatprep.subr.mxu0 0.0
  %v3235 = vand.u32 %v2519, 4294901760
  %3236 = vmatpush1.msra.mxu0 %v3235
  %3237 = vmatprep.subr.mxu0 0.0
  %v3238 = vand.u32 %v2520, 4294901760
  %3239 = vmatpush1.msra.mxu0 %v3238
  %3240 = vmatprep.subr.mxu0 0.0
  %v3241 = vand.u32 %v2521, 4294901760
  %3242 = vmatpush1.msra.mxu0 %v3241
  %3243 = vmatprep.subr.mxu0 0.0
  %v3244 = vand.u32 %v2522, 4294901760
  %3245 = vmatpush1.msra.mxu0 %v3244
  %3246 = vmatprep.subr.mxu0 0.0
  %v3247 = vand.u32 %v2523, 4294901760
  %3248 = vmatpush1.msra.mxu0 %v3247
  %3249 = vmatprep.subr.mxu0 0.0
  %v3250 = vand.u32 %v2524, 4294901760
  %3251 = vmatpush1.msra.mxu0 %v3250
  %3252 = vmatprep.subr.mxu0 0.0
  %v3253 = vand.u32 %v2525, 4294901760
  %3254 = vmatpush1.msra.mxu0 %v3253
  %3255 = vmatprep.subr.mxu0 0.0
  %v3256 = vand.u32 %v2526, 4294901760
  %3257 = vmatpush1.msra.mxu0 %v3256
  %3258 = vmatprep.subr.mxu0 0.0
  %v3259 = vand.u32 %v2527, 4294901760
  %3260 = vmatpush1.msra.mxu0 %v3259
  %3261 = vmatprep.subr.mxu0 0.0
  %v3262 = vand.u32 %v2528, 4294901760
  %3263 = vmatpush1.msra.mxu0 %v3262
  %3264 = vmatprep.subr.mxu0 0.0
  %v3265 = vand.u32 %v2529, 4294901760
  %3266 = vmatpush1.msra.mxu0 %v3265
  %3267 = vmatprep.subr.mxu0 0.0
  %3268 = vmatpush1.msra.mxu0 0.0
  %3269 = vmatprep.subr.mxu0 0.0
  %3270 = vmatpush1.msra.mxu0 0.0
  %3271 = vmatprep.subr.mxu0 0.0
  %3272 = vmatpush1.msra.mxu0 0.0
  %3273 = vmatprep.subr.mxu0 0.0
  %3274 = vmatpush1.msra.mxu0 0.0
  %3275 = vmatprep.subr.mxu0 0.0
  %3276 = vmatpush1.msra.mxu0 0.0
  %3277 = vmatprep.subr.mxu0 0.0
  %3278 = vmatpush1.msra.mxu0 0.0
  %3279 = vmatprep.subr.mxu0 0.0
  %3280 = vmatpush1.msra.mxu0 0.0
  %3281 = vmatprep.subr.mxu0 0.0
  %3282 = vmatpush1.msra.mxu0 0.0
  %3283 = vmatprep.subr.mxu0 0.0
  %3284 = vmatpush1.msra.mxu0 0.0
  %3285 = vmatprep.subr.mxu0 0.0
  %3286 = vmatpush1.msra.mxu0 0.0
  %3287 = vmatprep.subr.mxu0 0.0
  %3288 = vmatpush1.msra.mxu0 0.0
  %3289 = vmatprep.subr.mxu0 0.0
  %3290 = vmatpush1.msra.mxu0 0.0
  %3291 = vmatprep.subr.mxu0 0.0
  %3292 = vmatpush1.msra.mxu0 0.0
  %3293 = vmatprep.subr.mxu0 0.0
  %3294 = vmatpush1.msra.mxu0 0.0
  %3295 = vmatprep.subr.mxu0 0.0
  %3296 = vmatpush1.msra.mxu0 0.0
  %3297 = vmatprep.subr.mxu0 0.0
  %3298 = vmatpush1.msra.mxu0 0.0
  %3299 = vmatprep.subr.mxu0 0.0
  %3300 = vmatpush1.msra.mxu0 0.0
  %3301 = vmatprep.subr.mxu0 0.0
  %3302 = vmatpush1.msra.mxu0 0.0
  %3303 = vmatprep.subr.mxu0 0.0
  %3304 = vmatpush1.msra.mxu0 0.0
  %3305 = vmatprep.subr.mxu0 0.0
  %3306 = vmatpush1.msra.mxu0 0.0
  %3307 = vmatprep.mubr.f32.mxu0 0.0
  %v3308 = vand.u32 %v2603, 4294901760
  %3309 = vmatmul.mubr.f32.gmra.mrb[0].mxu0 %v3308
  %v3310 = vpop.f32.mrb[0].mxu0
  %v3311 = vadd.f32 %v3210, %v3310
  %v3312 = vpop.f32.mrb[0].mxu0
  %3313 = vmatprep.mubr.f32.mxu0 0.0
  %v3314 = vand.u32 %v2606, 4294901760
  %3315 = vmatmul.mubr.f32.gmra.mrb[0].mxu0 %v3314
  %v3316 = vpop.f32.mrb[0].mxu0
  %v3317 = vadd.f32 %v3216, %v3316
  %v3318 = vpop.f32.mrb[0].mxu0
  %3319 = vmatprep.mubr.f32.mxu0 0.0
  %v3320 = vand.u32 %v2609, 4294901760
  %3321 = vmatmul.mubr.f32.gmra.mrb[0].mxu0 %v3320
  %v3322 = vpop.f32.mrb[0].mxu0
  %v3323 = vadd.f32 %v3222, %v3322
  %v3324 = vpop.f32.mrb[0].mxu0
  %3325 = vmatprep.mubr.f32.mxu0 0.0
  %v3326 = vand.u32 %v2612, 4294901760
  %3327 = vmatmul.mubr.f32.gmra.mrb[0].mxu0 %v3326
  %v3328 = vpop.f32.mrb[0].mxu0
  %v3329 = vadd.f32 %v3228, %v3328
  %v3330 = vpop.f32.mrb[0].mxu0
  %3331 = vdwg.mxu0
  %v3332 = vmax.f32 %v3311, 0.0
  %v3333 = vmax.f32 %v3317, 0.0
  %v3334 = vmax.f32 %v3323, 0.0
  %v3335 = vmax.f32 %v3329, 0.0
  %s3336 = scalar_lea.vmem %s6, 96
  %v3337 = vld [vmem:[%s3336] sm:$0xff]
  %v3338 = vld [vmem:[%s3336 + $0x8] sm:$0xff]
  %v3339 = vld [vmem:[%s3336 + $0x10] sm:$0xff]
  %v3340 = vld [vmem:[%s3336 + $0x18] sm:$0xff]
  %v3341 = vld [vmem:[%s3336 + $0x20] sm:$0xff]
  %v3342 = vld [vmem:[%s3336 + $0x28] sm:$0xff]
  %v3343 = vld [vmem:[%s3336 + $0x30] sm:$0xff]
  %v3344 = vld [vmem:[%s3336 + $0x38] sm:$0xff]
  %v3345 = vld [vmem:[%s3336 + $0x40] sm:$0xff]
  %v3346 = vld [vmem:[%s3336 + $0x48] sm:$0xff]
  %v3347 = vld [vmem:[%s3336 + $0x50] sm:$0xff]
  %v3348 = vld [vmem:[%s3336 + $0x58] sm:$0xff]
  %s3349 = scalar_lea.vmem %s7, 1
  %v3350 = vld [vmem:[%s3349] sm:$0x1]
  %3351 = vst.msk [vmem:[#allocation4 + $0x1] sm:$0xff] %vm82, %v3332
  %3352 = vst.msk [vmem:[#allocation4 + $0x9] sm:$0xff] %vm82, %v3333
  %v3353 = vld [vmem:[#allocation4] sm:$0xff]
  %v3354 = vld [vmem:[#allocation4 + $0x8] sm:$0xff]
  %3355 = vst.msk [vmem:[#allocation5] sm:$0xff] %vm82, %v3353
  %3356 = vst.msk [vmem:[#allocation5 + $0x8] sm:$0xff] %vm82, %v3354
  %v3357 = vld [vmem:[#allocation4 + $0x1] sm:$0xff]
  %v3358 = vld [vmem:[#allocation4 + $0x9] sm:$0xff]
  %3361 = vrot.lane.b32.xlu0 %v3357, 32
  %v3362 = vpop.permute.xlu0 %3361
  %3363 = vrot.lane.b32.xlu0 %v3358, 32
  %v3364 = vpop.permute.xlu0 %3363
  %3367 = vst.msk [vmem:[#allocation5] sm:$0xff] %vm905, %v3362
  %3368 = vst.msk [vmem:[#allocation5 + $0x8] sm:$0xff] %vm905, %v3364
  %v3369 = vld [vmem:[#allocation4 + $0x2] sm:$0xff]
  %v3370 = vld [vmem:[#allocation4 + $0xa] sm:$0xff]
  %3373 = vrot.lane.b32.xlu0 %v3369, 64
  %v3374 = vpop.permute.xlu0 %3373
  %3375 = vrot.lane.b32.xlu0 %v3370, 64
  %v3376 = vpop.permute.xlu0 %3375
  %3379 = vst.msk [vmem:[#allocation5] sm:$0xff] %vm918, %v3374
  %3380 = vst.msk [vmem:[#allocation5 + $0x8] sm:$0xff] %vm918, %v3376
  %3381 = vst.msk [vmem:[#allocation4 + $0x1] sm:$0xff] %vm82, %v3334
  %3382 = vst.msk [vmem:[#allocation4 + $0x9] sm:$0xff] %vm82, %v3335
  %v3383 = vld [vmem:[#allocation4] sm:$0xff]
  %v3384 = vld [vmem:[#allocation4 + $0x8] sm:$0xff]
  %3385 = vst.msk [vmem:[#allocation5 + $0x10] sm:$0xff] %vm82, %v3383
  %3386 = vst.msk [vmem:[#allocation5 + $0x18] sm:$0xff] %vm82, %v3384
  %v3387 = vld [vmem:[#allocation4 + $0x1] sm:$0xff]
  %v3388 = vld [vmem:[#allocation4 + $0x9] sm:$0xff]
  %3391 = vrot.lane.b32.xlu0 %v3387, 32
  %v3392 = vpop.permute.xlu0 %3391
  %3393 = vrot.lane.b32.xlu0 %v3388, 32
  %v3394 = vpop.permute.xlu0 %3393
  %3397 = vst.msk [vmem:[#allocation5 + $0x10] sm:$0xff] %vm905, %v3392
  %3398 = vst.msk [vmem:[#allocation5 + $0x18] sm:$0xff] %vm905, %v3394
  %v3399 = vld [vmem:[#allocation4 + $0x2] sm:$0xff]
  %v3400 = vld [vmem:[#allocation4 + $0xa] sm:$0xff]
  %3403 = vrot.lane.b32.xlu0 %v3399, 64
  %v3404 = vpop.permute.xlu0 %3403
  %3405 = vrot.lane.b32.xlu0 %v3400, 64
  %v3406 = vpop.permute.xlu0 %3405
  %3409 = vst.msk [vmem:[#allocation5 + $0x10] sm:$0xff] %vm918, %v3404
  %3410 = vst.msk [vmem:[#allocation5 + $0x18] sm:$0xff] %vm918, %v3406
  %v3411 = vld [vmem:[#allocation5] sm:$0xff]
  %v3412 = vld [vmem:[#allocation5 + $0x8] sm:$0xff]
  %v3413 = vld [vmem:[#allocation5 + $0x10] sm:$0xff]
  %v3414 = vld [vmem:[#allocation5 + $0x18] sm:$0xff]
  %v3416 = vlaneseq
  %v3417 = vshrl.u32 %v3416, 7
  %v3418 = vsub.s32 0, %v3417
  %v3419 = vrot.slane %v3350, %v3418
  %v3422 = vsel %vm961, %v3411, 0
  %v3425 = vsel %vm961, %v3412, 0
  %v3428 = vsel %vm961, %v3413, 0
  %v3431 = vsel %vm961, %v3414, 0
  %3433 = vmatprep.subr.mxu0 0.0
  %v3434 = vand.u32 %v3337, 4294901760
  %3435 = vmatpush1.msra.mxu0 %v3434
  %3436 = vmatprep.subr.mxu0 0.0
  %v3437 = vand.u32 %v3338, 4294901760
  %3438 = vmatpush1.msra.mxu0 %v3437
  %3439 = vmatprep.subr.mxu0 0.0
  %v3440 = vand.u32 %v3339, 4294901760
  %3441 = vmatpush1.msra.mxu0 %v3440
  %3442 = vmatprep.subr.mxu0 0.0
  %v3443 = vand.u32 %v3340, 4294901760
  %3444 = vmatpush1.msra.mxu0 %v3443
  %3445 = vmatprep.subr.mxu0 0.0
  %v3446 = vand.u32 %v3341, 4294901760
  %3447 = vmatpush1.msra.mxu0 %v3446
  %3448 = vmatprep.subr.mxu0 0.0
  %v3449 = vand.u32 %v3342, 4294901760
  %3450 = vmatpush1.msra.mxu0 %v3449
  %3451 = vmatprep.subr.mxu0 0.0
  %v3452 = vand.u32 %v3343, 4294901760
  %3453 = vmatpush1.msra.mxu0 %v3452
  %3454 = vmatprep.subr.mxu0 0.0
  %v3455 = vand.u32 %v3344, 4294901760
  %3456 = vmatpush1.msra.mxu0 %v3455
  %3457 = vmatprep.subr.mxu0 0.0
  %v3458 = vand.u32 %v3345, 4294901760
  %3459 = vmatpush1.msra.mxu0 %v3458
  %3460 = vmatprep.subr.mxu0 0.0
  %v3461 = vand.u32 %v3346, 4294901760
  %3462 = vmatpush1.msra.mxu0 %v3461
  %3463 = vmatprep.subr.mxu0 0.0
  %v3464 = vand.u32 %v3347, 4294901760
  %3465 = vmatpush1.msra.mxu0 %v3464
  %3466 = vmatprep.subr.mxu0 0.0
  %v3467 = vand.u32 %v3348, 4294901760
  %3468 = vmatpush1.msra.mxu0 %v3467
  %3469 = vmatprep.subr.mxu0 0.0
  %3470 = vmatpush1.msra.mxu0 0.0
  %3471 = vmatprep.subr.mxu0 0.0
  %3472 = vmatpush1.msra.mxu0 0.0
  %3473 = vmatprep.subr.mxu0 0.0
  %3474 = vmatpush1.msra.mxu0 0.0
  %3475 = vmatprep.subr.mxu0 0.0
  %3476 = vmatpush1.msra.mxu0 0.0
  %3477 = vmatprep.subr.mxu0 0.0
  %3478 = vmatpush1.msra.mxu0 0.0
  %3479 = vmatprep.subr.mxu0 0.0
  %3480 = vmatpush1.msra.mxu0 0.0
  %3481 = vmatprep.subr.mxu0 0.0
  %3482 = vmatpush1.msra.mxu0 0.0
  %3483 = vmatprep.subr.mxu0 0.0
  %3484 = vmatpush1.msra.mxu0 0.0
  %3485 = vmatprep.subr.mxu0 0.0
  %3486 = vmatpush1.msra.mxu0 0.0
  %3487 = vmatprep.subr.mxu0 0.0
  %3488 = vmatpush1.msra.mxu0 0.0
  %3489 = vmatprep.subr.mxu0 0.0
  %3490 = vmatpush1.msra.mxu0 0.0
  %3491 = vmatprep.subr.mxu0 0.0
  %3492 = vmatpush1.msra.mxu0 0.0
  %3493 = vmatprep.subr.mxu0 0.0
  %3494 = vmatpush1.msra.mxu0 0.0
  %3495 = vmatprep.subr.mxu0 0.0
  %3496 = vmatpush1.msra.mxu0 0.0
  %3497 = vmatprep.subr.mxu0 0.0
  %3498 = vmatpush1.msra.mxu0 0.0
  %3499 = vmatprep.subr.mxu0 0.0
  %3500 = vmatpush1.msra.mxu0 0.0
  %3501 = vmatprep.subr.mxu0 0.0
  %3502 = vmatpush1.msra.mxu0 0.0
  %3503 = vmatprep.subr.mxu0 0.0
  %3504 = vmatpush1.msra.mxu0 0.0
  %3505 = vmatprep.subr.mxu0 0.0
  %3506 = vmatpush1.msra.mxu0 0.0
  %3507 = vmatprep.subr.mxu0 0.0
  %3508 = vmatpush1.msra.mxu0 0.0
  %3509 = vmatprep.mubr.f32.mxu0 0.0
  %v3510 = vand.u32 %v3422, 4294901760
  %v3511 = vsub.f32 %v3422, %v3510
  %v3512 = vand.u32 %v3511, 4294901760
  %v3513 = vsub.f32 %v3511, %v3512
  %v3514 = vand.u32 %v3513, 4294901760
  %3515 = vmatmul.mubr.f32.gmra.mrb[0].mxu0 %v3514
  %v3516 = vpop.f32.mrb[0].mxu0
  %v3517 = vadd.f32 %v3419, %v3516
  %v3518 = vpop.f32.mrb[0].mxu0
  %3519 = vmatprep.mubr.f32.mxu0 0.0
  %v3520 = vand.u32 %v3425, 4294901760
  %v3521 = vsub.f32 %v3425, %v3520
  %v3522 = vand.u32 %v3521, 4294901760
  %v3523 = vsub.f32 %v3521, %v3522
  %v3524 = vand.u32 %v3523, 4294901760
  %3525 = vmatmul.mubr.f32.gmra.mrb[0].mxu0 %v3524
  %v3526 = vpop.f32.mrb[0].mxu0
  %v3527 = vadd.f32 %v3419, %v3526
  %v3528 = vpop.f32.mrb[0].mxu0
  %3529 = vmatprep.mubr.f32.mxu0 0.0
  %v3530 = vand.u32 %v3428, 4294901760
  %v3531 = vsub.f32 %v3428, %v3530
  %v3532 = vand.u32 %v3531, 4294901760
  %v3533 = vsub.f32 %v3531, %v3532
  %v3534 = vand.u32 %v3533, 4294901760
  %3535 = vmatmul.mubr.f32.gmra.mrb[0].mxu0 %v3534
  %v3536 = vpop.f32.mrb[0].mxu0
  %v3537 = vadd.f32 %v3419, %v3536
  %v3538 = vpop.f32.mrb[0].mxu0
  %3539 = vmatprep.mubr.f32.mxu0 0.0
  %v3540 = vand.u32 %v3431, 4294901760
  %v3541 = vsub.f32 %v3431, %v3540
  %v3542 = vand.u32 %v3541, 4294901760
  %v3543 = vsub.f32 %v3541, %v3542
  %v3544 = vand.u32 %v3543, 4294901760
  %3545 = vmatmul.mubr.f32.gmra.mrb[0].mxu0 %v3544
  %v3546 = vpop.f32.mrb[0].mxu0
  %v3547 = vadd.f32 %v3419, %v3546
  %v3548 = vpop.f32.mrb[0].mxu0
  %3549 = vdwg.mxu0
  %3550 = vmatprep.subr.mxu0 0.0
  %v3551 = vand.u32 %v3337, 4294901760
  %v3552 = vsub.f32 %v3337, %v3551
  %v3553 = vand.u32 %v3552, 4294901760
  %v3554 = vsub.f32 %v3552, %v3553
  %v3555 = vand.u32 %v3554, 4294901760
  %3556 = vmatpush1.msra.mxu0 %v3555
  %3557 = vmatprep.subr.mxu0 0.0
  %v3558 = vand.u32 %v3338, 4294901760
  %v3559 = vsub.f32 %v3338, %v3558
  %v3560 = vand.u32 %v3559, 4294901760
  %v3561 = vsub.f32 %v3559, %v3560
  %v3562 = vand.u32 %v3561, 4294901760
  %3563 = vmatpush1.msra.mxu0 %v3562
  %3564 = vmatprep.subr.mxu0 0.0
  %v3565 = vand.u32 %v3339, 4294901760
  %v3566 = vsub.f32 %v3339, %v3565
  %v3567 = vand.u32 %v3566, 4294901760
  %v3568 = vsub.f32 %v3566, %v3567
  %v3569 = vand.u32 %v3568, 4294901760
  %3570 = vmatpush1.msra.mxu0 %v3569
  %3571 = vmatprep.subr.mxu0 0.0
  %v3572 = vand.u32 %v3340, 4294901760
  %v3573 = vsub.f32 %v3340, %v3572
  %v3574 = vand.u32 %v3573, 4294901760
  %v3575 = vsub.f32 %v3573, %v3574
  %v3576 = vand.u32 %v3575, 4294901760
  %3577 = vmatpush1.msra.mxu0 %v3576
  %3578 = vmatprep.subr.mxu0 0.0
  %v3579 = vand.u32 %v3341, 4294901760
  %v3580 = vsub.f32 %v3341, %v3579
  %v3581 = vand.u32 %v3580, 4294901760
  %v3582 = vsub.f32 %v3580, %v3581
  %v3583 = vand.u32 %v3582, 4294901760
  %3584 = vmatpush1.msra.mxu0 %v3583
  %3585 = vmatprep.subr.mxu0 0.0
  %v3586 = vand.u32 %v3342, 4294901760
  %v3587 = vsub.f32 %v3342, %v3586
  %v3588 = vand.u32 %v3587, 4294901760
  %v3589 = vsub.f32 %v3587, %v3588
  %v3590 = vand.u32 %v3589, 4294901760
  %3591 = vmatpush1.msra.mxu0 %v3590
  %3592 = vmatprep.subr.mxu0 0.0
  %v3593 = vand.u32 %v3343, 4294901760
  %v3594 = vsub.f32 %v3343, %v3593
  %v3595 = vand.u32 %v3594, 4294901760
  %v3596 = vsub.f32 %v3594, %v3595
  %v3597 = vand.u32 %v3596, 4294901760
  %3598 = vmatpush1.msra.mxu0 %v3597
  %3599 = vmatprep.subr.mxu0 0.0
  %v3600 = vand.u32 %v3344, 4294901760
  %v3601 = vsub.f32 %v3344, %v3600
  %v3602 = vand.u32 %v3601, 4294901760
  %v3603 = vsub.f32 %v3601, %v3602
  %v3604 = vand.u32 %v3603, 4294901760
  %3605 = vmatpush1.msra.mxu0 %v3604
  %3606 = vmatprep.subr.mxu0 0.0
  %v3607 = vand.u32 %v3345, 4294901760
  %v3608 = vsub.f32 %v3345, %v3607
  %v3609 = vand.u32 %v3608, 4294901760
  %v3610 = vsub.f32 %v3608, %v3609
  %v3611 = vand.u32 %v3610, 4294901760
  %3612 = vmatpush1.msra.mxu0 %v3611
  %3613 = vmatprep.subr.mxu0 0.0
  %v3614 = vand.u32 %v3346, 4294901760
  %v3615 = vsub.f32 %v3346, %v3614
  %v3616 = vand.u32 %v3615, 4294901760
  %v3617 = vsub.f32 %v3615, %v3616
  %v3618 = vand.u32 %v3617, 4294901760
  %3619 = vmatpush1.msra.mxu0 %v3618
  %3620 = vmatprep.subr.mxu0 0.0
  %v3621 = vand.u32 %v3347, 4294901760
  %v3622 = vsub.f32 %v3347, %v3621
  %v3623 = vand.u32 %v3622, 4294901760
  %v3624 = vsub.f32 %v3622, %v3623
  %v3625 = vand.u32 %v3624, 4294901760
  %3626 = vmatpush1.msra.mxu0 %v3625
  %3627 = vmatprep.subr.mxu0 0.0
  %v3628 = vand.u32 %v3348, 4294901760
  %v3629 = vsub.f32 %v3348, %v3628
  %v3630 = vand.u32 %v3629, 4294901760
  %v3631 = vsub.f32 %v3629, %v3630
  %v3632 = vand.u32 %v3631, 4294901760
  %3633 = vmatpush1.msra.mxu0 %v3632
  %3634 = vmatprep.subr.mxu0 0.0
  %3635 = vmatpush1.msra.mxu0 0.0
  %3636 = vmatprep.subr.mxu0 0.0
  %3637 = vmatpush1.msra.mxu0 0.0
  %3638 = vmatprep.subr.mxu0 0.0
  %3639 = vmatpush1.msra.mxu0 0.0
  %3640 = vmatprep.subr.mxu0 0.0
  %3641 = vmatpush1.msra.mxu0 0.0
  %3642 = vmatprep.subr.mxu0 0.0
  %3643 = vmatpush1.msra.mxu0 0.0
  %3644 = vmatprep.subr.mxu0 0.0
  %3645 = vmatpush1.msra.mxu0 0.0
  %3646 = vmatprep.subr.mxu0 0.0
  %3647 = vmatpush1.msra.mxu0 0.0
  %3648 = vmatprep.subr.mxu0 0.0
  %3649 = vmatpush1.msra.mxu0 0.0
  %3650 = vmatprep.subr.mxu0 0.0
  %3651 = vmatpush1.msra.mxu0 0.0
  %3652 = vmatprep.subr.mxu0 0.0
  %3653 = vmatpush1.msra.mxu0 0.0
  %3654 = vmatprep.subr.mxu0 0.0
  %3655 = vmatpush1.msra.mxu0 0.0
  %3656 = vmatprep.subr.mxu0 0.0
  %3657 = vmatpush1.msra.mxu0 0.0
  %3658 = vmatprep.subr.mxu0 0.0
  %3659 = vmatpush1.msra.mxu0 0.0
  %3660 = vmatprep.subr.mxu0 0.0
  %3661 = vmatpush1.msra.mxu0 0.0
  %3662 = vmatprep.subr.mxu0 0.0
  %3663 = vmatpush1.msra.mxu0 0.0
  %3664 = vmatprep.subr.mxu0 0.0
  %3665 = vmatpush1.msra.mxu0 0.0
  %3666 = vmatprep.subr.mxu0 0.0
  %3667 = vmatpush1.msra.mxu0 0.0
  %3668 = vmatprep.subr.mxu0 0.0
  %3669 = vmatpush1.msra.mxu0 0.0
  %3670 = vmatprep.subr.mxu0 0.0
  %3671 = vmatpush1.msra.mxu0 0.0
  %3672 = vmatprep.subr.mxu0 0.0
  %3673 = vmatpush1.msra.mxu0 0.0
  %3674 = vmatprep.mubr.f32.mxu0 0.0
  %v3675 = vand.u32 %v3422, 4294901760
  %3676 = vmatmul.mubr.f32.gmra.mrb[0].mxu0 %v3675
  %v3677 = vpop.f32.mrb[0].mxu0
  %v3678 = vadd.f32 %v3517, %v3677
  %v3679 = vpop.f32.mrb[0].mxu0
  %3680 = vmatprep.mubr.f32.mxu0 0.0
  %v3681 = vand.u32 %v3425, 4294901760
  %3682 = vmatmul.mubr.f32.gmra.mrb[0].mxu0 %v3681
  %v3683 = vpop.f32.mrb[0].mxu0
  %v3684 = vadd.f32 %v3527, %v3683
  %v3685 = vpop.f32.mrb[0].mxu0
  %3686 = vmatprep.mubr.f32.mxu0 0.0
  %v3687 = vand.u32 %v3428, 4294901760
  %3688 = vmatmul.mubr.f32.gmra.mrb[0].mxu0 %v3687
  %v3689 = vpop.f32.mrb[0].mxu0
  %v3690 = vadd.f32 %v3537, %v3689
  %v3691 = vpop.f32.mrb[0].mxu0
  %3692 = vmatprep.mubr.f32.mxu0 0.0
  %v3693 = vand.u32 %v3431, 4294901760
  %3694 = vmatmul.mubr.f32.gmra.mrb[0].mxu0 %v3693
  %v3695 = vpop.f32.mrb[0].mxu0
  %v3696 = vadd.f32 %v3547, %v3695
  %v3697 = vpop.f32.mrb[0].mxu0
  %3698 = vdwg.mxu0
  %3699 = vmatprep.subr.mxu0 0.0
  %v3700 = vand.u32 %v3337, 4294901760
  %v3701 = vsub.f32 %v3337, %v3700
  %3702 = vmatpush1.msra.mxu0 %v3701
  %3703 = vmatprep.subr.mxu0 0.0
  %v3704 = vand.u32 %v3338, 4294901760
  %v3705 = vsub.f32 %v3338, %v3704
  %3706 = vmatpush1.msra.mxu0 %v3705
  %3707 = vmatprep.subr.mxu0 0.0
  %v3708 = vand.u32 %v3339, 4294901760
  %v3709 = vsub.f32 %v3339, %v3708
  %3710 = vmatpush1.msra.mxu0 %v3709
  %3711 = vmatprep.subr.mxu0 0.0
  %v3712 = vand.u32 %v3340, 4294901760
  %v3713 = vsub.f32 %v3340, %v3712
  %3714 = vmatpush1.msra.mxu0 %v3713
  %3715 = vmatprep.subr.mxu0 0.0
  %v3716 = vand.u32 %v3341, 4294901760
  %v3717 = vsub.f32 %v3341, %v3716
  %3718 = vmatpush1.msra.mxu0 %v3717
  %3719 = vmatprep.subr.mxu0 0.0
  %v3720 = vand.u32 %v3342, 4294901760
  %v3721 = vsub.f32 %v3342, %v3720
  %3722 = vmatpush1.msra.mxu0 %v3721
  %3723 = vmatprep.subr.mxu0 0.0
  %v3724 = vand.u32 %v3343, 4294901760
  %v3725 = vsub.f32 %v3343, %v3724
  %3726 = vmatpush1.msra.mxu0 %v3725
  %3727 = vmatprep.subr.mxu0 0.0
  %v3728 = vand.u32 %v3344, 4294901760
  %v3729 = vsub.f32 %v3344, %v3728
  %3730 = vmatpush1.msra.mxu0 %v3729
  %3731 = vmatprep.subr.mxu0 0.0
  %v3732 = vand.u32 %v3345, 4294901760
  %v3733 = vsub.f32 %v3345, %v3732
  %3734 = vmatpush1.msra.mxu0 %v3733
  %3735 = vmatprep.subr.mxu0 0.0
  %v3736 = vand.u32 %v3346, 4294901760
  %v3737 = vsub.f32 %v3346, %v3736
  %3738 = vmatpush1.msra.mxu0 %v3737
  %3739 = vmatprep.subr.mxu0 0.0
  %v3740 = vand.u32 %v3347, 4294901760
  %v3741 = vsub.f32 %v3347, %v3740
  %3742 = vmatpush1.msra.mxu0 %v3741
  %3743 = vmatprep.subr.mxu0 0.0
  %v3744 = vand.u32 %v3348, 4294901760
  %v3745 = vsub.f32 %v3348, %v3744
  %3746 = vmatpush1.msra.mxu0 %v3745
  %3747 = vmatprep.subr.mxu0 0.0
  %3748 = vmatpush1.msra.mxu0 0.0
  %3749 = vmatprep.subr.mxu0 0.0
  %3750 = vmatpush1.msra.mxu0 0.0
  %3751 = vmatprep.subr.mxu0 0.0
  %3752 = vmatpush1.msra.mxu0 0.0
  %3753 = vmatprep.subr.mxu0 0.0
  %3754 = vmatpush1.msra.mxu0 0.0
  %3755 = vmatprep.subr.mxu0 0.0
  %3756 = vmatpush1.msra.mxu0 0.0
  %3757 = vmatprep.subr.mxu0 0.0
  %3758 = vmatpush1.msra.mxu0 0.0
  %3759 = vmatprep.subr.mxu0 0.0
  %3760 = vmatpush1.msra.mxu0 0.0
  %3761 = vmatprep.subr.mxu0 0.0
  %3762 = vmatpush1.msra.mxu0 0.0
  %3763 = vmatprep.subr.mxu0 0.0
  %3764 = vmatpush1.msra.mxu0 0.0
  %3765 = vmatprep.subr.mxu0 0.0
  %3766 = vmatpush1.msra.mxu0 0.0
  %3767 = vmatprep.subr.mxu0 0.0
  %3768 = vmatpush1.msra.mxu0 0.0
  %3769 = vmatprep.subr.mxu0 0.0
  %3770 = vmatpush1.msra.mxu0 0.0
  %3771 = vmatprep.subr.mxu0 0.0
  %3772 = vmatpush1.msra.mxu0 0.0
  %3773 = vmatprep.subr.mxu0 0.0
  %3774 = vmatpush1.msra.mxu0 0.0
  %3775 = vmatprep.subr.mxu0 0.0
  %3776 = vmatpush1.msra.mxu0 0.0
  %3777 = vmatprep.subr.mxu0 0.0
  %3778 = vmatpush1.msra.mxu0 0.0
  %3779 = vmatprep.subr.mxu0 0.0
  %3780 = vmatpush1.msra.mxu0 0.0
  %3781 = vmatprep.subr.mxu0 0.0
  %3782 = vmatpush1.msra.mxu0 0.0
  %3783 = vmatprep.subr.mxu0 0.0
  %3784 = vmatpush1.msra.mxu0 0.0
  %3785 = vmatprep.subr.mxu0 0.0
  %3786 = vmatpush1.msra.mxu0 0.0
  %3787 = vmatprep.mubr.f32.mxu0 0.0
  %v3788 = vand.u32 %v3422, 4294901760
  %v3789 = vsub.f32 %v3422, %v3788
  %3790 = vmatmul.mubr.f32.gmra.mrb[0].mxu0 %v3789
  %v3791 = vpop.f32.mrb[0].mxu0
  %v3792 = vadd.f32 %v3678, %v3791
  %v3793 = vpop.f32.mrb[0].mxu0
  %3794 = vmatprep.mubr.f32.mxu0 0.0
  %v3795 = vand.u32 %v3425, 4294901760
  %v3796 = vsub.f32 %v3425, %v3795
  %3797 = vmatmul.mubr.f32.gmra.mrb[0].mxu0 %v3796
  %v3798 = vpop.f32.mrb[0].mxu0
  %v3799 = vadd.f32 %v3684, %v3798
  %v3800 = vpop.f32.mrb[0].mxu0
  %3801 = vmatprep.mubr.f32.mxu0 0.0
  %v3802 = vand.u32 %v3428, 4294901760
  %v3803 = vsub.f32 %v3428, %v3802
  %3804 = vmatmul.mubr.f32.gmra.mrb[0].mxu0 %v3803
  %v3805 = vpop.f32.mrb[0].mxu0
  %v3806 = vadd.f32 %v3690, %v3805
  %v3807 = vpop.f32.mrb[0].mxu0
  %3808 = vmatprep.mubr.f32.mxu0 0.0
  %v3809 = vand.u32 %v3431, 4294901760
  %v3810 = vsub.f32 %v3431, %v3809
  %3811 = vmatmul.mubr.f32.gmra.mrb[0].mxu0 %v3810
  %v3812 = vpop.f32.mrb[0].mxu0
  %v3813 = vadd.f32 %v3696, %v3812
  %v3814 = vpop.f32.mrb[0].mxu0
  %3815 = vdwg.mxu0
  %3816 = vmatprep.subr.mxu0 0.0
  %v3817 = vand.u32 %v3337, 4294901760
  %3818 = vmatpush1.msra.mxu0 %v3817
  %3819 = vmatprep.subr.mxu0 0.0
  %v3820 = vand.u32 %v3338, 4294901760
  %3821 = vmatpush1.msra.mxu0 %v3820
  %3822 = vmatprep.subr.mxu0 0.0
  %v3823 = vand.u32 %v3339, 4294901760
  %3824 = vmatpush1.msra.mxu0 %v3823
  %3825 = vmatprep.subr.mxu0 0.0
  %v3826 = vand.u32 %v3340, 4294901760
  %3827 = vmatpush1.msra.mxu0 %v3826
  %3828 = vmatprep.subr.mxu0 0.0
  %v3829 = vand.u32 %v3341, 4294901760
  %3830 = vmatpush1.msra.mxu0 %v3829
  %3831 = vmatprep.subr.mxu0 0.0
  %v3832 = vand.u32 %v3342, 4294901760
  %3833 = vmatpush1.msra.mxu0 %v3832
  %3834 = vmatprep.subr.mxu0 0.0
  %v3835 = vand.u32 %v3343, 4294901760
  %3836 = vmatpush1.msra.mxu0 %v3835
  %3837 = vmatprep.subr.mxu0 0.0
  %v3838 = vand.u32 %v3344, 4294901760
  %3839 = vmatpush1.msra.mxu0 %v3838
  %3840 = vmatprep.subr.mxu0 0.0
  %v3841 = vand.u32 %v3345, 4294901760
  %3842 = vmatpush1.msra.mxu0 %v3841
  %3843 = vmatprep.subr.mxu0 0.0
  %v3844 = vand.u32 %v3346, 4294901760
  %3845 = vmatpush1.msra.mxu0 %v3844
  %3846 = vmatprep.subr.mxu0 0.0
  %v3847 = vand.u32 %v3347, 4294901760
  %3848 = vmatpush1.msra.mxu0 %v3847
  %3849 = vmatprep.subr.mxu0 0.0
  %v3850 = vand.u32 %v3348, 4294901760
  %3851 = vmatpush1.msra.mxu0 %v3850
  %3852 = vmatprep.subr.mxu0 0.0
  %3853 = vmatpush1.msra.mxu0 0.0
  %3854 = vmatprep.subr.mxu0 0.0
  %3855 = vmatpush1.msra.mxu0 0.0
  %3856 = vmatprep.subr.mxu0 0.0
  %3857 = vmatpush1.msra.mxu0 0.0
  %3858 = vmatprep.subr.mxu0 0.0
  %3859 = vmatpush1.msra.mxu0 0.0
  %3860 = vmatprep.subr.mxu0 0.0
  %3861 = vmatpush1.msra.mxu0 0.0
  %3862 = vmatprep.subr.mxu0 0.0
  %3863 = vmatpush1.msra.mxu0 0.0
  %3864 = vmatprep.subr.mxu0 0.0
  %3865 = vmatpush1.msra.mxu0 0.0
  %3866 = vmatprep.subr.mxu0 0.0
  %3867 = vmatpush1.msra.mxu0 0.0
  %3868 = vmatprep.subr.mxu0 0.0
  %3869 = vmatpush1.msra.mxu0 0.0
  %3870 = vmatprep.subr.mxu0 0.0
  %3871 = vmatpush1.msra.mxu0 0.0
  %3872 = vmatprep.subr.mxu0 0.0
  %3873 = vmatpush1.msra.mxu0 0.0
  %3874 = vmatprep.subr.mxu0 0.0
  %3875 = vmatpush1.msra.mxu0 0.0
  %3876 = vmatprep.subr.mxu0 0.0
  %3877 = vmatpush1.msra.mxu0 0.0
  %3878 = vmatprep.subr.mxu0 0.0
  %3879 = vmatpush1.msra.mxu0 0.0
  %3880 = vmatprep.subr.mxu0 0.0
  %3881 = vmatpush1.msra.mxu0 0.0
  %3882 = vmatprep.subr.mxu0 0.0
  %3883 = vmatpush1.msra.mxu0 0.0
  %3884 = vmatprep.subr.mxu0 0.0
  %3885 = vmatpush1.msra.mxu0 0.0
  %3886 = vmatprep.subr.mxu0 0.0
  %3887 = vmatpush1.msra.mxu0 0.0
  %3888 = vmatprep.subr.mxu0 0.0
  %3889 = vmatpush1.msra.mxu0 0.0
  %3890 = vmatprep.subr.mxu0 0.0
  %3891 = vmatpush1.msra.mxu0 0.0
  %3892 = vmatprep.mubr.f32.mxu0 0.0
  %v3893 = vand.u32 %v3422, 4294901760
  %v3894 = vsub.f32 %v3422, %v3893
  %v3895 = vand.u32 %v3894, 4294901760
  %3896 = vmatmul.mubr.f32.gmra.mrb[0].mxu0 %v3895
  %v3897 = vpop.f32.mrb[0].mxu0
  %v3898 = vadd.f32 %v3792, %v3897
  %v3899 = vpop.f32.mrb[0].mxu0
  %3900 = vmatprep.mubr.f32.mxu0 0.0
  %v3901 = vand.u32 %v3425, 4294901760
  %v3902 = vsub.f32 %v3425, %v3901
  %v3903 = vand.u32 %v3902, 4294901760
  %3904 = vmatmul.mubr.f32.gmra.mrb[0].mxu0 %v3903
  %v3905 = vpop.f32.mrb[0].mxu0
  %v3906 = vadd.f32 %v3799, %v3905
  %v3907 = vpop.f32.mrb[0].mxu0
  %3908 = vmatprep.mubr.f32.mxu0 0.0
  %v3909 = vand.u32 %v3428, 4294901760
  %v3910 = vsub.f32 %v3428, %v3909
  %v3911 = vand.u32 %v3910, 4294901760
  %3912 = vmatmul.mubr.f32.gmra.mrb[0].mxu0 %v3911
  %v3913 = vpop.f32.mrb[0].mxu0
  %v3914 = vadd.f32 %v3806, %v3913
  %v3915 = vpop.f32.mrb[0].mxu0
  %3916 = vmatprep.mubr.f32.mxu0 0.0
  %v3917 = vand.u32 %v3431, 4294901760
  %v3918 = vsub.f32 %v3431, %v3917
  %v3919 = vand.u32 %v3918, 4294901760
  %3920 = vmatmul.mubr.f32.gmra.mrb[0].mxu0 %v3919
  %v3921 = vpop.f32.mrb[0].mxu0
  %v3922 = vadd.f32 %v3813, %v3921
  %v3923 = vpop.f32.mrb[0].mxu0
  %3924 = vdwg.mxu0
  %3925 = vmatprep.subr.mxu0 0.0
  %v3926 = vand.u32 %v3337, 4294901760
  %v3927 = vsub.f32 %v3337, %v3926
  %v3928 = vand.u32 %v3927, 4294901760
  %3929 = vmatpush1.msra.mxu0 %v3928
  %3930 = vmatprep.subr.mxu0 0.0
  %v3931 = vand.u32 %v3338, 4294901760
  %v3932 = vsub.f32 %v3338, %v3931
  %v3933 = vand.u32 %v3932, 4294901760
  %3934 = vmatpush1.msra.mxu0 %v3933
  %3935 = vmatprep.subr.mxu0 0.0
  %v3936 = vand.u32 %v3339, 4294901760
  %v3937 = vsub.f32 %v3339, %v3936
  %v3938 = vand.u32 %v3937, 4294901760
  %3939 = vmatpush1.msra.mxu0 %v3938
  %3940 = vmatprep.subr.mxu0 0.0
  %v3941 = vand.u32 %v3340, 4294901760
  %v3942 = vsub.f32 %v3340, %v3941
  %v3943 = vand.u32 %v3942, 4294901760
  %3944 = vmatpush1.msra.mxu0 %v3943
  %3945 = vmatprep.subr.mxu0 0.0
  %v3946 = vand.u32 %v3341, 4294901760
  %v3947 = vsub.f32 %v3341, %v3946
  %v3948 = vand.u32 %v3947, 4294901760
  %3949 = vmatpush1.msra.mxu0 %v3948
  %3950 = vmatprep.subr.mxu0 0.0
  %v3951 = vand.u32 %v3342, 4294901760
  %v3952 = vsub.f32 %v3342, %v3951
  %v3953 = vand.u32 %v3952, 4294901760
  %3954 = vmatpush1.msra.mxu0 %v3953
  %3955 = vmatprep.subr.mxu0 0.0
  %v3956 = vand.u32 %v3343, 4294901760
  %v3957 = vsub.f32 %v3343, %v3956
  %v3958 = vand.u32 %v3957, 4294901760
  %3959 = vmatpush1.msra.mxu0 %v3958
  %3960 = vmatprep.subr.mxu0 0.0
  %v3961 = vand.u32 %v3344, 4294901760
  %v3962 = vsub.f32 %v3344, %v3961
  %v3963 = vand.u32 %v3962, 4294901760
  %3964 = vmatpush1.msra.mxu0 %v3963
  %3965 = vmatprep.subr.mxu0 0.0
  %v3966 = vand.u32 %v3345, 4294901760
  %v3967 = vsub.f32 %v3345, %v3966
  %v3968 = vand.u32 %v3967, 4294901760
  %3969 = vmatpush1.msra.mxu0 %v3968
  %3970 = vmatprep.subr.mxu0 0.0
  %v3971 = vand.u32 %v3346, 4294901760
  %v3972 = vsub.f32 %v3346, %v3971
  %v3973 = vand.u32 %v3972, 4294901760
  %3974 = vmatpush1.msra.mxu0 %v3973
  %3975 = vmatprep.subr.mxu0 0.0
  %v3976 = vand.u32 %v3347, 4294901760
  %v3977 = vsub.f32 %v3347, %v3976
  %v3978 = vand.u32 %v3977, 4294901760
  %3979 = vmatpush1.msra.mxu0 %v3978
  %3980 = vmatprep.subr.mxu0 0.0
  %v3981 = vand.u32 %v3348, 4294901760
  %v3982 = vsub.f32 %v3348, %v3981
  %v3983 = vand.u32 %v3982, 4294901760
  %3984 = vmatpush1.msra.mxu0 %v3983
  %3985 = vmatprep.subr.mxu0 0.0
  %3986 = vmatpush1.msra.mxu0 0.0
  %3987 = vmatprep.subr.mxu0 0.0
  %3988 = vmatpush1.msra.mxu0 0.0
  %3989 = vmatprep.subr.mxu0 0.0
  %3990 = vmatpush1.msra.mxu0 0.0
  %3991 = vmatprep.subr.mxu0 0.0
  %3992 = vmatpush1.msra.mxu0 0.0
  %3993 = vmatprep.subr.mxu0 0.0
  %3994 = vmatpush1.msra.mxu0 0.0
  %3995 = vmatprep.subr.mxu0 0.0
  %3996 = vmatpush1.msra.mxu0 0.0
  %3997 = vmatprep.subr.mxu0 0.0
  %3998 = vmatpush1.msra.mxu0 0.0
  %3999 = vmatprep.subr.mxu0 0.0
  %4000 = vmatpush1.msra.mxu0 0.0
  %4001 = vmatprep.subr.mxu0 0.0
  %4002 = vmatpush1.msra.mxu0 0.0
  %4003 = vmatprep.subr.mxu0 0.0
  %4004 = vmatpush1.msra.mxu0 0.0
  %4005 = vmatprep.subr.mxu0 0.0
  %4006 = vmatpush1.msra.mxu0 0.0
  %4007 = vmatprep.subr.mxu0 0.0
  %4008 = vmatpush1.msra.mxu0 0.0
  %4009 = vmatprep.subr.mxu0 0.0
  %4010 = vmatpush1.msra.mxu0 0.0
  %4011 = vmatprep.subr.mxu0 0.0
  %4012 = vmatpush1.msra.mxu0 0.0
  %4013 = vmatprep.subr.mxu0 0.0
  %4014 = vmatpush1.msra.mxu0 0.0
  %4015 = vmatprep.subr.mxu0 0.0
  %4016 = vmatpush1.msra.mxu0 0.0
  %4017 = vmatprep.subr.mxu0 0.0
  %4018 = vmatpush1.msra.mxu0 0.0
  %4019 = vmatprep.subr.mxu0 0.0
  %4020 = vmatpush1.msra.mxu0 0.0
  %4021 = vmatprep.subr.mxu0 0.0
  %4022 = vmatpush1.msra.mxu0 0.0
  %4023 = vmatprep.subr.mxu0 0.0
  %4024 = vmatpush1.msra.mxu0 0.0
  %4025 = vmatprep.mubr.f32.mxu0 0.0
  %v4026 = vand.u32 %v3422, 4294901760
  %4027 = vmatmul.mubr.f32.gmra.mrb[0].mxu0 %v4026
  %v4028 = vpop.f32.mrb[0].mxu0
  %v4029 = vadd.f32 %v3898, %v4028
  %v4030 = vpop.f32.mrb[0].mxu0
  %4031 = vmatprep.mubr.f32.mxu0 0.0
  %v4032 = vand.u32 %v3425, 4294901760
  %4033 = vmatmul.mubr.f32.gmra.mrb[0].mxu0 %v4032
  %v4034 = vpop.f32.mrb[0].mxu0
  %v4035 = vadd.f32 %v3906, %v4034
  %v4036 = vpop.f32.mrb[0].mxu0
  %4037 = vmatprep.mubr.f32.mxu0 0.0
  %v4038 = vand.u32 %v3428, 4294901760
  %4039 = vmatmul.mubr.f32.gmra.mrb[0].mxu0 %v4038
  %v4040 = vpop.f32.mrb[0].mxu0
  %v4041 = vadd.f32 %v3914, %v4040
  %v4042 = vpop.f32.mrb[0].mxu0
  %4043 = vmatprep.mubr.f32.mxu0 0.0
  %v4044 = vand.u32 %v3431, 4294901760
  %4045 = vmatmul.mubr.f32.gmra.mrb[0].mxu0 %v4044
  %v4046 = vpop.f32.mrb[0].mxu0
  %v4047 = vadd.f32 %v3922, %v4046
  %v4048 = vpop.f32.mrb[0].mxu0
  %4049 = vdwg.mxu0
  %4050 = vmatprep.subr.mxu0 0.0
  %v4051 = vand.u32 %v3337, 4294901760
  %4052 = vmatpush1.msra.mxu0 %v4051
  %4053 = vmatprep.subr.mxu0 0.0
  %v4054 = vand.u32 %v3338, 4294901760
  %4055 = vmatpush1.msra.mxu0 %v4054
  %4056 = vmatprep.subr.mxu0 0.0
  %v4057 = vand.u32 %v3339, 4294901760
  %4058 = vmatpush1.msra.mxu0 %v4057
  %4059 = vmatprep.subr.mxu0 0.0
  %v4060 = vand.u32 %v3340, 4294901760
  %4061 = vmatpush1.msra.mxu0 %v4060
  %4062 = vmatprep.subr.mxu0 0.0
  %v4063 = vand.u32 %v3341, 4294901760
  %4064 = vmatpush1.msra.mxu0 %v4063
  %4065 = vmatprep.subr.mxu0 0.0
  %v4066 = vand.u32 %v3342, 4294901760
  %4067 = vmatpush1.msra.mxu0 %v4066
  %4068 = vmatprep.subr.mxu0 0.0
  %v4069 = vand.u32 %v3343, 4294901760
  %4070 = vmatpush1.msra.mxu0 %v4069
  %4071 = vmatprep.subr.mxu0 0.0
  %v4072 = vand.u32 %v3344, 4294901760
  %4073 = vmatpush1.msra.mxu0 %v4072
  %4074 = vmatprep.subr.mxu0 0.0
  %v4075 = vand.u32 %v3345, 4294901760
  %4076 = vmatpush1.msra.mxu0 %v4075
  %4077 = vmatprep.subr.mxu0 0.0
  %v4078 = vand.u32 %v3346, 4294901760
  %4079 = vmatpush1.msra.mxu0 %v4078
  %4080 = vmatprep.subr.mxu0 0.0
  %v4081 = vand.u32 %v3347, 4294901760
  %4082 = vmatpush1.msra.mxu0 %v4081
  %4083 = vmatprep.subr.mxu0 0.0
  %v4084 = vand.u32 %v3348, 4294901760
  %4085 = vmatpush1.msra.mxu0 %v4084
  %4086 = vmatprep.subr.mxu0 0.0
  %4087 = vmatpush1.msra.mxu0 0.0
  %4088 = vmatprep.subr.mxu0 0.0
  %4089 = vmatpush1.msra.mxu0 0.0
  %4090 = vmatprep.subr.mxu0 0.0
  %4091 = vmatpush1.msra.mxu0 0.0
  %4092 = vmatprep.subr.mxu0 0.0
  %4093 = vmatpush1.msra.mxu0 0.0
  %4094 = vmatprep.subr.mxu0 0.0
  %4095 = vmatpush1.msra.mxu0 0.0
  %4096 = vmatprep.subr.mxu0 0.0
  %4097 = vmatpush1.msra.mxu0 0.0
  %4098 = vmatprep.subr.mxu0 0.0
  %4099 = vmatpush1.msra.mxu0 0.0
  %4100 = vmatprep.subr.mxu0 0.0
  %4101 = vmatpush1.msra.mxu0 0.0
  %4102 = vmatprep.subr.mxu0 0.0
  %4103 = vmatpush1.msra.mxu0 0.0
  %4104 = vmatprep.subr.mxu0 0.0
  %4105 = vmatpush1.msra.mxu0 0.0
  %4106 = vmatprep.subr.mxu0 0.0
  %4107 = vmatpush1.msra.mxu0 0.0
  %4108 = vmatprep.subr.mxu0 0.0
  %4109 = vmatpush1.msra.mxu0 0.0
  %4110 = vmatprep.subr.mxu0 0.0
  %4111 = vmatpush1.msra.mxu0 0.0
  %4112 = vmatprep.subr.mxu0 0.0
  %4113 = vmatpush1.msra.mxu0 0.0
  %4114 = vmatprep.subr.mxu0 0.0
  %4115 = vmatpush1.msra.mxu0 0.0
  %4116 = vmatprep.subr.mxu0 0.0
  %4117 = vmatpush1.msra.mxu0 0.0
  %4118 = vmatprep.subr.mxu0 0.0
  %4119 = vmatpush1.msra.mxu0 0.0
  %4120 = vmatprep.subr.mxu0 0.0
  %4121 = vmatpush1.msra.mxu0 0.0
  %4122 = vmatprep.subr.mxu0 0.0
  %4123 = vmatpush1.msra.mxu0 0.0
  %4124 = vmatprep.subr.mxu0 0.0
  %4125 = vmatpush1.msra.mxu0 0.0
  %4126 = vmatprep.mubr.f32.mxu0 0.0
  %v4127 = vand.u32 %v3422, 4294901760
  %4128 = vmatmul.mubr.f32.gmra.mrb[0].mxu0 %v4127
  %v4129 = vpop.f32.mrb[0].mxu0
  %v4130 = vadd.f32 %v4029, %v4129
  %v4131 = vpop.f32.mrb[0].mxu0
  %4132 = vmatprep.mubr.f32.mxu0 0.0
  %v4133 = vand.u32 %v3425, 4294901760
  %4134 = vmatmul.mubr.f32.gmra.mrb[0].mxu0 %v4133
  %v4135 = vpop.f32.mrb[0].mxu0
  %v4136 = vadd.f32 %v4035, %v4135
  %v4137 = vpop.f32.mrb[0].mxu0
  %4138 = vmatprep.mubr.f32.mxu0 0.0
  %v4139 = vand.u32 %v3428, 4294901760
  %4140 = vmatmul.mubr.f32.gmra.mrb[0].mxu0 %v4139
  %v4141 = vpop.f32.mrb[0].mxu0
  %v4142 = vadd.f32 %v4041, %v4141
  %v4143 = vpop.f32.mrb[0].mxu0
  %4144 = vmatprep.mubr.f32.mxu0 0.0
  %v4145 = vand.u32 %v3431, 4294901760
  %4146 = vmatmul.mubr.f32.gmra.mrb[0].mxu0 %v4145
  %v4147 = vpop.f32.mrb[0].mxu0
  %v4148 = vadd.f32 %v4047, %v4147
  %v4149 = vpop.f32.mrb[0].mxu0
  %4150 = vdwg.mxu0
  %v4151 = vadd.f32 %v4130, %v2513
  %v4152 = vadd.f32 %v4136, %v2514
  %v4153 = vadd.f32 %v4142, %v2515
  %v4154 = vadd.f32 %v4148, %v2516
  %v4155 = vmax.f32 %v4151, 0.0
  %v4156 = vmax.f32 %v4152, 0.0
  %v4157 = vmax.f32 %v4153, 0.0
  %v4158 = vmax.f32 %v4154, 0.0
  %s4159 = scalar_lea.vmem %s4, 192
  %v4160 = vld [vmem:[%s4159] sm:$0xff]
  %v4161 = vld [vmem:[%s4159 + $0x8] sm:$0xff]
  %v4162 = vld [vmem:[%s4159 + $0x10] sm:$0xff]
  %v4163 = vld [vmem:[%s4159 + $0x18] sm:$0xff]
  %v4164 = vld [vmem:[%s4159 + $0x20] sm:$0xff]
  %v4165 = vld [vmem:[%s4159 + $0x28] sm:$0xff]
  %v4166 = vld [vmem:[%s4159 + $0x30] sm:$0xff]
  %v4167 = vld [vmem:[%s4159 + $0x38] sm:$0xff]
  %v4168 = vld [vmem:[%s4159 + $0x40] sm:$0xff]
  %v4169 = vld [vmem:[%s4159 + $0x48] sm:$0xff]
  %v4170 = vld [vmem:[%s4159 + $0x50] sm:$0xff]
  %v4171 = vld [vmem:[%s4159 + $0x58] sm:$0xff]
  %s4172 = scalar_lea.vmem %s5, 2
  %v4173 = vld [vmem:[%s4172] sm:$0x1]
  %4174 = vst.msk [vmem:[#allocation4 + $0x1] sm:$0xff] %vm82, %v4155
  %4175 = vst.msk [vmem:[#allocation4 + $0x9] sm:$0xff] %vm82, %v4156
  %v4176 = vld [vmem:[#allocation4] sm:$0xff]
  %v4177 = vld [vmem:[#allocation4 + $0x8] sm:$0xff]
  %4178 = vst.msk [vmem:[#allocation5] sm:$0xff] %vm82, %v4176
  %4179 = vst.msk [vmem:[#allocation5 + $0x8] sm:$0xff] %vm82, %v4177
  %v4180 = vld [vmem:[#allocation4 + $0x1] sm:$0xff]
  %v4181 = vld [vmem:[#allocation4 + $0x9] sm:$0xff]
  %4184 = vrot.lane.b32.xlu0 %v4180, 32
  %v4185 = vpop.permute.xlu0 %4184
  %4186 = vrot.lane.b32.xlu0 %v4181, 32
  %v4187 = vpop.permute.xlu0 %4186
  %4190 = vst.msk [vmem:[#allocation5] sm:$0xff] %vm905, %v4185
  %4191 = vst.msk [vmem:[#allocation5 + $0x8] sm:$0xff] %vm905, %v4187
  %v4192 = vld [vmem:[#allocation4 + $0x2] sm:$0xff]
  %v4193 = vld [vmem:[#allocation4 + $0xa] sm:$0xff]
  %4196 = vrot.lane.b32.xlu0 %v4192, 64
  %v4197 = vpop.permute.xlu0 %4196
  %4198 = vrot.lane.b32.xlu0 %v4193, 64
  %v4199 = vpop.permute.xlu0 %4198
  %4202 = vst.msk [vmem:[#allocation5] sm:$0xff] %vm918, %v4197
  %4203 = vst.msk [vmem:[#allocation5 + $0x8] sm:$0xff] %vm918, %v4199
  %4204 = vst.msk [vmem:[#allocation4 + $0x1] sm:$0xff] %vm82, %v4157
  %4205 = vst.msk [vmem:[#allocation4 + $0x9] sm:$0xff] %vm82, %v4158
  %v4206 = vld [vmem:[#allocation4] sm:$0xff]
  %v4207 = vld [vmem:[#allocation4 + $0x8] sm:$0xff]
  %4208 = vst.msk [vmem:[#allocation5 + $0x10] sm:$0xff] %vm82, %v4206
  %4209 = vst.msk [vmem:[#allocation5 + $0x18] sm:$0xff] %vm82, %v4207
  %v4210 = vld [vmem:[#allocation4 + $0x1] sm:$0xff]
  %v4211 = vld [vmem:[#allocation4 + $0x9] sm:$0xff]
  %4214 = vrot.lane.b32.xlu0 %v4210, 32
  %v4215 = vpop.permute.xlu0 %4214
  %4216 = vrot.lane.b32.xlu0 %v4211, 32
  %v4217 = vpop.permute.xlu0 %4216
  %4220 = vst.msk [vmem:[#allocation5 + $0x10] sm:$0xff] %vm905, %v4215
  %4221 = vst.msk [vmem:[#allocation5 + $0x18] sm:$0xff] %vm905, %v4217
  %v4222 = vld [vmem:[#allocation4 + $0x2] sm:$0xff]
  %v4223 = vld [vmem:[#allocation4 + $0xa] sm:$0xff]
  %4226 = vrot.lane.b32.xlu0 %v4222, 64
  %v4227 = vpop.permute.xlu0 %4226
  %4228 = vrot.lane.b32.xlu0 %v4223, 64
  %v4229 = vpop.permute.xlu0 %4228
  %4232 = vst.msk [vmem:[#allocation5 + $0x10] sm:$0xff] %vm918, %v4227
  %4233 = vst.msk [vmem:[#allocation5 + $0x18] sm:$0xff] %vm918, %v4229
  %v4234 = vld [vmem:[#allocation5] sm:$0xff]
  %v4235 = vld [vmem:[#allocation5 + $0x8] sm:$0xff]
  %v4236 = vld [vmem:[#allocation5 + $0x10] sm:$0xff]
  %v4237 = vld [vmem:[#allocation5 + $0x18] sm:$0xff]
  %v4239 = vlaneseq
  %v4240 = vshrl.u32 %v4239, 7
  %v4241 = vsub.s32 0, %v4240
  %v4242 = vrot.slane %v4173, %v4241
  %v4245 = vsel %vm961, %v4234, 0
  %v4248 = vsel %vm961, %v4235, 0
  %v4251 = vsel %vm961, %v4236, 0
  %v4254 = vsel %vm961, %v4237, 0
  %4256 = vmatprep.subr.mxu0 0.0
  %v4257 = vand.u32 %v4160, 4294901760
  %4258 = vmatpush1.msra.mxu0 %v4257
  %4259 = vmatprep.subr.mxu0 0.0
  %v4260 = vand.u32 %v4161, 4294901760
  %4261 = vmatpush1.msra.mxu0 %v4260
  %4262 = vmatprep.subr.mxu0 0.0
  %v4263 = vand.u32 %v4162, 4294901760
  %4264 = vmatpush1.msra.mxu0 %v4263
  %4265 = vmatprep.subr.mxu0 0.0
  %v4266 = vand.u32 %v4163, 4294901760
  %4267 = vmatpush1.msra.mxu0 %v4266
  %4268 = vmatprep.subr.mxu0 0.0
  %v4269 = vand.u32 %v4164, 4294901760
  %4270 = vmatpush1.msra.mxu0 %v4269
  %4271 = vmatprep.subr.mxu0 0.0
  %v4272 = vand.u32 %v4165, 4294901760
  %4273 = vmatpush1.msra.mxu0 %v4272
  %4274 = vmatprep.subr.mxu0 0.0
  %v4275 = vand.u32 %v4166, 4294901760
  %4276 = vmatpush1.msra.mxu0 %v4275
  %4277 = vmatprep.subr.mxu0 0.0
  %v4278 = vand.u32 %v4167, 4294901760
  %4279 = vmatpush1.msra.mxu0 %v4278
  %4280 = vmatprep.subr.mxu0 0.0
  %v4281 = vand.u32 %v4168, 4294901760
  %4282 = vmatpush1.msra.mxu0 %v4281
  %4283 = vmatprep.subr.mxu0 0.0
  %v4284 = vand.u32 %v4169, 4294901760
  %4285 = vmatpush1.msra.mxu0 %v4284
  %4286 = vmatprep.subr.mxu0 0.0
  %v4287 = vand.u32 %v4170, 4294901760
  %4288 = vmatpush1.msra.mxu0 %v4287
  %4289 = vmatprep.subr.mxu0 0.0
  %v4290 = vand.u32 %v4171, 4294901760
  %4291 = vmatpush1.msra.mxu0 %v4290
  %4292 = vmatprep.subr.mxu0 0.0
  %4293 = vmatpush1.msra.mxu0 0.0
  %4294 = vmatprep.subr.mxu0 0.0
  %4295 = vmatpush1.msra.mxu0 0.0
  %4296 = vmatprep.subr.mxu0 0.0
  %4297 = vmatpush1.msra.mxu0 0.0
  %4298 = vmatprep.subr.mxu0 0.0
  %4299 = vmatpush1.msra.mxu0 0.0
  %4300 = vmatprep.subr.mxu0 0.0
  %4301 = vmatpush1.msra.mxu0 0.0
  %4302 = vmatprep.subr.mxu0 0.0
  %4303 = vmatpush1.msra.mxu0 0.0
  %4304 = vmatprep.subr.mxu0 0.0
  %4305 = vmatpush1.msra.mxu0 0.0
  %4306 = vmatprep.subr.mxu0 0.0
  %4307 = vmatpush1.msra.mxu0 0.0
  %4308 = vmatprep.subr.mxu0 0.0
  %4309 = vmatpush1.msra.mxu0 0.0
  %4310 = vmatprep.subr.mxu0 0.0
  %4311 = vmatpush1.msra.mxu0 0.0
  %4312 = vmatprep.subr.mxu0 0.0
  %4313 = vmatpush1.msra.mxu0 0.0
  %4314 = vmatprep.subr.mxu0 0.0
  %4315 = vmatpush1.msra.mxu0 0.0
  %4316 = vmatprep.subr.mxu0 0.0
  %4317 = vmatpush1.msra.mxu0 0.0
  %4318 = vmatprep.subr.mxu0 0.0
  %4319 = vmatpush1.msra.mxu0 0.0
  %4320 = vmatprep.subr.mxu0 0.0
  %4321 = vmatpush1.msra.mxu0 0.0
  %4322 = vmatprep.subr.mxu0 0.0
  %4323 = vmatpush1.msra.mxu0 0.0
  %4324 = vmatprep.subr.mxu0 0.0
  %4325 = vmatpush1.msra.mxu0 0.0
  %4326 = vmatprep.subr.mxu0 0.0
  %4327 = vmatpush1.msra.mxu0 0.0
  %4328 = vmatprep.subr.mxu0 0.0
  %4329 = vmatpush1.msra.mxu0 0.0
  %4330 = vmatprep.subr.mxu0 0.0
  %4331 = vmatpush1.msra.mxu0 0.0
  %4332 = vmatprep.mubr.f32.mxu0 0.0
  %v4333 = vand.u32 %v4245, 4294901760
  %v4334 = vsub.f32 %v4245, %v4333
  %v4335 = vand.u32 %v4334, 4294901760
  %v4336 = vsub.f32 %v4334, %v4335
  %v4337 = vand.u32 %v4336, 4294901760
  %4338 = vmatmul.mubr.f32.gmra.mrb[0].mxu0 %v4337
  %v4339 = vpop.f32.mrb[0].mxu0
  %v4340 = vadd.f32 %v4242, %v4339
  %v4341 = vpop.f32.mrb[0].mxu0
  %4342 = vmatprep.mubr.f32.mxu0 0.0
  %v4343 = vand.u32 %v4248, 4294901760
  %v4344 = vsub.f32 %v4248, %v4343
  %v4345 = vand.u32 %v4344, 4294901760
  %v4346 = vsub.f32 %v4344, %v4345
  %v4347 = vand.u32 %v4346, 4294901760
  %4348 = vmatmul.mubr.f32.gmra.mrb[0].mxu0 %v4347
  %v4349 = vpop.f32.mrb[0].mxu0
  %v4350 = vadd.f32 %v4242, %v4349
  %v4351 = vpop.f32.mrb[0].mxu0
  %4352 = vmatprep.mubr.f32.mxu0 0.0
  %v4353 = vand.u32 %v4251, 4294901760
  %v4354 = vsub.f32 %v4251, %v4353
  %v4355 = vand.u32 %v4354, 4294901760
  %v4356 = vsub.f32 %v4354, %v4355
  %v4357 = vand.u32 %v4356, 4294901760
  %4358 = vmatmul.mubr.f32.gmra.mrb[0].mxu0 %v4357
  %v4359 = vpop.f32.mrb[0].mxu0
  %v4360 = vadd.f32 %v4242, %v4359
  %v4361 = vpop.f32.mrb[0].mxu0
  %4362 = vmatprep.mubr.f32.mxu0 0.0
  %v4363 = vand.u32 %v4254, 4294901760
  %v4364 = vsub.f32 %v4254, %v4363
  %v4365 = vand.u32 %v4364, 4294901760
  %v4366 = vsub.f32 %v4364, %v4365
  %v4367 = vand.u32 %v4366, 4294901760
  %4368 = vmatmul.mubr.f32.gmra.mrb[0].mxu0 %v4367
  %v4369 = vpop.f32.mrb[0].mxu0
  %v4370 = vadd.f32 %v4242, %v4369
  %v4371 = vpop.f32.mrb[0].mxu0
  %4372 = vdwg.mxu0
  %4373 = vmatprep.subr.mxu0 0.0
  %v4374 = vand.u32 %v4160, 4294901760
  %v4375 = vsub.f32 %v4160, %v4374
  %v4376 = vand.u32 %v4375, 4294901760
  %v4377 = vsub.f32 %v4375, %v4376
  %v4378 = vand.u32 %v4377, 4294901760
  %4379 = vmatpush1.msra.mxu0 %v4378
  %4380 = vmatprep.subr.mxu0 0.0
  %v4381 = vand.u32 %v4161, 4294901760
  %v4382 = vsub.f32 %v4161, %v4381
  %v4383 = vand.u32 %v4382, 4294901760
  %v4384 = vsub.f32 %v4382, %v4383
  %v4385 = vand.u32 %v4384, 4294901760
  %4386 = vmatpush1.msra.mxu0 %v4385
  %4387 = vmatprep.subr.mxu0 0.0
  %v4388 = vand.u32 %v4162, 4294901760
  %v4389 = vsub.f32 %v4162, %v4388
  %v4390 = vand.u32 %v4389, 4294901760
  %v4391 = vsub.f32 %v4389, %v4390
  %v4392 = vand.u32 %v4391, 4294901760
  %4393 = vmatpush1.msra.mxu0 %v4392
  %4394 = vmatprep.subr.mxu0 0.0
  %v4395 = vand.u32 %v4163, 4294901760
  %v4396 = vsub.f32 %v4163, %v4395
  %v4397 = vand.u32 %v4396, 4294901760
  %v4398 = vsub.f32 %v4396, %v4397
  %v4399 = vand.u32 %v4398, 4294901760
  %4400 = vmatpush1.msra.mxu0 %v4399
  %4401 = vmatprep.subr.mxu0 0.0
  %v4402 = vand.u32 %v4164, 4294901760
  %v4403 = vsub.f32 %v4164, %v4402
  %v4404 = vand.u32 %v4403, 4294901760
  %v4405 = vsub.f32 %v4403, %v4404
  %v4406 = vand.u32 %v4405, 4294901760
  %4407 = vmatpush1.msra.mxu0 %v4406
  %4408 = vmatprep.subr.mxu0 0.0
  %v4409 = vand.u32 %v4165, 4294901760
  %v4410 = vsub.f32 %v4165, %v4409
  %v4411 = vand.u32 %v4410, 4294901760
  %v4412 = vsub.f32 %v4410, %v4411
  %v4413 = vand.u32 %v4412, 4294901760
  %4414 = vmatpush1.msra.mxu0 %v4413
  %4415 = vmatprep.subr.mxu0 0.0
  %v4416 = vand.u32 %v4166, 4294901760
  %v4417 = vsub.f32 %v4166, %v4416
  %v4418 = vand.u32 %v4417, 4294901760
  %v4419 = vsub.f32 %v4417, %v4418
  %v4420 = vand.u32 %v4419, 4294901760
  %4421 = vmatpush1.msra.mxu0 %v4420
  %4422 = vmatprep.subr.mxu0 0.0
  %v4423 = vand.u32 %v4167, 4294901760
  %v4424 = vsub.f32 %v4167, %v4423
  %v4425 = vand.u32 %v4424, 4294901760
  %v4426 = vsub.f32 %v4424, %v4425
  %v4427 = vand.u32 %v4426, 4294901760
  %4428 = vmatpush1.msra.mxu0 %v4427
  %4429 = vmatprep.subr.mxu0 0.0
  %v4430 = vand.u32 %v4168, 4294901760
  %v4431 = vsub.f32 %v4168, %v4430
  %v4432 = vand.u32 %v4431, 4294901760
  %v4433 = vsub.f32 %v4431, %v4432
  %v4434 = vand.u32 %v4433, 4294901760
  %4435 = vmatpush1.msra.mxu0 %v4434
  %4436 = vmatprep.subr.mxu0 0.0
  %v4437 = vand.u32 %v4169, 4294901760
  %v4438 = vsub.f32 %v4169, %v4437
  %v4439 = vand.u32 %v4438, 4294901760
  %v4440 = vsub.f32 %v4438, %v4439
  %v4441 = vand.u32 %v4440, 4294901760
  %4442 = vmatpush1.msra.mxu0 %v4441
  %4443 = vmatprep.subr.mxu0 0.0
  %v4444 = vand.u32 %v4170, 4294901760
  %v4445 = vsub.f32 %v4170, %v4444
  %v4446 = vand.u32 %v4445, 4294901760
  %v4447 = vsub.f32 %v4445, %v4446
  %v4448 = vand.u32 %v4447, 4294901760
  %4449 = vmatpush1.msra.mxu0 %v4448
  %4450 = vmatprep.subr.mxu0 0.0
  %v4451 = vand.u32 %v4171, 4294901760
  %v4452 = vsub.f32 %v4171, %v4451
  %v4453 = vand.u32 %v4452, 4294901760
  %v4454 = vsub.f32 %v4452, %v4453
  %v4455 = vand.u32 %v4454, 4294901760
  %4456 = vmatpush1.msra.mxu0 %v4455
  %4457 = vmatprep.subr.mxu0 0.0
  %4458 = vmatpush1.msra.mxu0 0.0
  %4459 = vmatprep.subr.mxu0 0.0
  %4460 = vmatpush1.msra.mxu0 0.0
  %4461 = vmatprep.subr.mxu0 0.0
  %4462 = vmatpush1.msra.mxu0 0.0
  %4463 = vmatprep.subr.mxu0 0.0
  %4464 = vmatpush1.msra.mxu0 0.0
  %4465 = vmatprep.subr.mxu0 0.0
  %4466 = vmatpush1.msra.mxu0 0.0
  %4467 = vmatprep.subr.mxu0 0.0
  %4468 = vmatpush1.msra.mxu0 0.0
  %4469 = vmatprep.subr.mxu0 0.0
  %4470 = vmatpush1.msra.mxu0 0.0
  %4471 = vmatprep.subr.mxu0 0.0
  %4472 = vmatpush1.msra.mxu0 0.0
  %4473 = vmatprep.subr.mxu0 0.0
  %4474 = vmatpush1.msra.mxu0 0.0
  %4475 = vmatprep.subr.mxu0 0.0
  %4476 = vmatpush1.msra.mxu0 0.0
  %4477 = vmatprep.subr.mxu0 0.0
  %4478 = vmatpush1.msra.mxu0 0.0
  %4479 = vmatprep.subr.mxu0 0.0
  %4480 = vmatpush1.msra.mxu0 0.0
  %4481 = vmatprep.subr.mxu0 0.0
  %4482 = vmatpush1.msra.mxu0 0.0
  %4483 = vmatprep.subr.mxu0 0.0
  %4484 = vmatpush1.msra.mxu0 0.0
  %4485 = vmatprep.subr.mxu0 0.0
  %4486 = vmatpush1.msra.mxu0 0.0
  %4487 = vmatprep.subr.mxu0 0.0
  %4488 = vmatpush1.msra.mxu0 0.0
  %4489 = vmatprep.subr.mxu0 0.0
  %4490 = vmatpush1.msra.mxu0 0.0
  %4491 = vmatprep.subr.mxu0 0.0
  %4492 = vmatpush1.msra.mxu0 0.0
  %4493 = vmatprep.subr.mxu0 0.0
  %4494 = vmatpush1.msra.mxu0 0.0
  %4495 = vmatprep.subr.mxu0 0.0
  %4496 = vmatpush1.msra.mxu0 0.0
  %4497 = vmatprep.mubr.f32.mxu0 0.0
  %v4498 = vand.u32 %v4245, 4294901760
  %4499 = vmatmul.mubr.f32.gmra.mrb[0].mxu0 %v4498
  %v4500 = vpop.f32.mrb[0].mxu0
  %v4501 = vadd.f32 %v4340, %v4500
  %v4502 = vpop.f32.mrb[0].mxu0
  %4503 = vmatprep.mubr.f32.mxu0 0.0
  %v4504 = vand.u32 %v4248, 4294901760
  %4505 = vmatmul.mubr.f32.gmra.mrb[0].mxu0 %v4504
  %v4506 = vpop.f32.mrb[0].mxu0
  %v4507 = vadd.f32 %v4350, %v4506
  %v4508 = vpop.f32.mrb[0].mxu0
  %4509 = vmatprep.mubr.f32.mxu0 0.0
  %v4510 = vand.u32 %v4251, 4294901760
  %4511 = vmatmul.mubr.f32.gmra.mrb[0].mxu0 %v4510
  %v4512 = vpop.f32.mrb[0].mxu0
  %v4513 = vadd.f32 %v4360, %v4512
  %v4514 = vpop.f32.mrb[0].mxu0
  %4515 = vmatprep.mubr.f32.mxu0 0.0
  %v4516 = vand.u32 %v4254, 4294901760
  %4517 = vmatmul.mubr.f32.gmra.mrb[0].mxu0 %v4516
  %v4518 = vpop.f32.mrb[0].mxu0
  %v4519 = vadd.f32 %v4370, %v4518
  %v4520 = vpop.f32.mrb[0].mxu0
  %4521 = vdwg.mxu0
  %4522 = vmatprep.subr.mxu0 0.0
  %v4523 = vand.u32 %v4160, 4294901760
  %v4524 = vsub.f32 %v4160, %v4523
  %4525 = vmatpush1.msra.mxu0 %v4524
  %4526 = vmatprep.subr.mxu0 0.0
  %v4527 = vand.u32 %v4161, 4294901760
  %v4528 = vsub.f32 %v4161, %v4527
  %4529 = vmatpush1.msra.mxu0 %v4528
  %4530 = vmatprep.subr.mxu0 0.0
  %v4531 = vand.u32 %v4162, 4294901760
  %v4532 = vsub.f32 %v4162, %v4531
  %4533 = vmatpush1.msra.mxu0 %v4532
  %4534 = vmatprep.subr.mxu0 0.0
  %v4535 = vand.u32 %v4163, 4294901760
  %v4536 = vsub.f32 %v4163, %v4535
  %4537 = vmatpush1.msra.mxu0 %v4536
  %4538 = vmatprep.subr.mxu0 0.0
  %v4539 = vand.u32 %v4164, 4294901760
  %v4540 = vsub.f32 %v4164, %v4539
  %4541 = vmatpush1.msra.mxu0 %v4540
  %4542 = vmatprep.subr.mxu0 0.0
  %v4543 = vand.u32 %v4165, 4294901760
  %v4544 = vsub.f32 %v4165, %v4543
  %4545 = vmatpush1.msra.mxu0 %v4544
  %4546 = vmatprep.subr.mxu0 0.0
  %v4547 = vand.u32 %v4166, 4294901760
  %v4548 = vsub.f32 %v4166, %v4547
  %4549 = vmatpush1.msra.mxu0 %v4548
  %4550 = vmatprep.subr.mxu0 0.0
  %v4551 = vand.u32 %v4167, 4294901760
  %v4552 = vsub.f32 %v4167, %v4551
  %4553 = vmatpush1.msra.mxu0 %v4552
  %4554 = vmatprep.subr.mxu0 0.0
  %v4555 = vand.u32 %v4168, 4294901760
  %v4556 = vsub.f32 %v4168, %v4555
  %4557 = vmatpush1.msra.mxu0 %v4556
  %4558 = vmatprep.subr.mxu0 0.0
  %v4559 = vand.u32 %v4169, 4294901760
  %v4560 = vsub.f32 %v4169, %v4559
  %4561 = vmatpush1.msra.mxu0 %v4560
  %4562 = vmatprep.subr.mxu0 0.0
  %v4563 = vand.u32 %v4170, 4294901760
  %v4564 = vsub.f32 %v4170, %v4563
  %4565 = vmatpush1.msra.mxu0 %v4564
  %4566 = vmatprep.subr.mxu0 0.0
  %v4567 = vand.u32 %v4171, 4294901760
  %v4568 = vsub.f32 %v4171, %v4567
  %4569 = vmatpush1.msra.mxu0 %v4568
  %4570 = vmatprep.subr.mxu0 0.0
  %4571 = vmatpush1.msra.mxu0 0.0
  %4572 = vmatprep.subr.mxu0 0.0
  %4573 = vmatpush1.msra.mxu0 0.0
  %4574 = vmatprep.subr.mxu0 0.0
  %4575 = vmatpush1.msra.mxu0 0.0
  %4576 = vmatprep.subr.mxu0 0.0
  %4577 = vmatpush1.msra.mxu0 0.0
  %4578 = vmatprep.subr.mxu0 0.0
  %4579 = vmatpush1.msra.mxu0 0.0
  %4580 = vmatprep.subr.mxu0 0.0
  %4581 = vmatpush1.msra.mxu0 0.0
  %4582 = vmatprep.subr.mxu0 0.0
  %4583 = vmatpush1.msra.mxu0 0.0
  %4584 = vmatprep.subr.mxu0 0.0
  %4585 = vmatpush1.msra.mxu0 0.0
  %4586 = vmatprep.subr.mxu0 0.0
  %4587 = vmatpush1.msra.mxu0 0.0
  %4588 = vmatprep.subr.mxu0 0.0
  %4589 = vmatpush1.msra.mxu0 0.0
  %4590 = vmatprep.subr.mxu0 0.0
  %4591 = vmatpush1.msra.mxu0 0.0
  %4592 = vmatprep.subr.mxu0 0.0
  %4593 = vmatpush1.msra.mxu0 0.0
  %4594 = vmatprep.subr.mxu0 0.0
  %4595 = vmatpush1.msra.mxu0 0.0
  %4596 = vmatprep.subr.mxu0 0.0
  %4597 = vmatpush1.msra.mxu0 0.0
  %4598 = vmatprep.subr.mxu0 0.0
  %4599 = vmatpush1.msra.mxu0 0.0
  %4600 = vmatprep.subr.mxu0 0.0
  %4601 = vmatpush1.msra.mxu0 0.0
  %4602 = vmatprep.subr.mxu0 0.0
  %4603 = vmatpush1.msra.mxu0 0.0
  %4604 = vmatprep.subr.mxu0 0.0
  %4605 = vmatpush1.msra.mxu0 0.0
  %4606 = vmatprep.subr.mxu0 0.0
  %4607 = vmatpush1.msra.mxu0 0.0
  %4608 = vmatprep.subr.mxu0 0.0
  %4609 = vmatpush1.msra.mxu0 0.0
  %4610 = vmatprep.mubr.f32.mxu0 0.0
  %v4611 = vand.u32 %v4245, 4294901760
  %v4612 = vsub.f32 %v4245, %v4611
  %4613 = vmatmul.mubr.f32.gmra.mrb[0].mxu0 %v4612
  %v4614 = vpop.f32.mrb[0].mxu0
  %v4615 = vadd.f32 %v4501, %v4614
  %v4616 = vpop.f32.mrb[0].mxu0
  %4617 = vmatprep.mubr.f32.mxu0 0.0
  %v4618 = vand.u32 %v4248, 4294901760
  %v4619 = vsub.f32 %v4248, %v4618
  %4620 = vmatmul.mubr.f32.gmra.mrb[0].mxu0 %v4619
  %v4621 = vpop.f32.mrb[0].mxu0
  %v4622 = vadd.f32 %v4507, %v4621
  %v4623 = vpop.f32.mrb[0].mxu0
  %4624 = vmatprep.mubr.f32.mxu0 0.0
  %v4625 = vand.u32 %v4251, 4294901760
  %v4626 = vsub.f32 %v4251, %v4625
  %4627 = vmatmul.mubr.f32.gmra.mrb[0].mxu0 %v4626
  %v4628 = vpop.f32.mrb[0].mxu0
  %v4629 = vadd.f32 %v4513, %v4628
  %v4630 = vpop.f32.mrb[0].mxu0
  %4631 = vmatprep.mubr.f32.mxu0 0.0
  %v4632 = vand.u32 %v4254, 4294901760
  %v4633 = vsub.f32 %v4254, %v4632
  %4634 = vmatmul.mubr.f32.gmra.mrb[0].mxu0 %v4633
  %v4635 = vpop.f32.mrb[0].mxu0
  %v4636 = vadd.f32 %v4519, %v4635
  %v4637 = vpop.f32.mrb[0].mxu0
  %4638 = vdwg.mxu0
  %4639 = vmatprep.subr.mxu0 0.0
  %v4640 = vand.u32 %v4160, 4294901760
  %4641 = vmatpush1.msra.mxu0 %v4640
  %4642 = vmatprep.subr.mxu0 0.0
  %v4643 = vand.u32 %v4161, 4294901760
  %4644 = vmatpush1.msra.mxu0 %v4643
  %4645 = vmatprep.subr.mxu0 0.0
  %v4646 = vand.u32 %v4162, 4294901760
  %4647 = vmatpush1.msra.mxu0 %v4646
  %4648 = vmatprep.subr.mxu0 0.0
  %v4649 = vand.u32 %v4163, 4294901760
  %4650 = vmatpush1.msra.mxu0 %v4649
  %4651 = vmatprep.subr.mxu0 0.0
  %v4652 = vand.u32 %v4164, 4294901760
  %4653 = vmatpush1.msra.mxu0 %v4652
  %4654 = vmatprep.subr.mxu0 0.0
  %v4655 = vand.u32 %v4165, 4294901760
  %4656 = vmatpush1.msra.mxu0 %v4655
  %4657 = vmatprep.subr.mxu0 0.0
  %v4658 = vand.u32 %v4166, 4294901760
  %4659 = vmatpush1.msra.mxu0 %v4658
  %4660 = vmatprep.subr.mxu0 0.0
  %v4661 = vand.u32 %v4167, 4294901760
  %4662 = vmatpush1.msra.mxu0 %v4661
  %4663 = vmatprep.subr.mxu0 0.0
  %v4664 = vand.u32 %v4168, 4294901760
  %4665 = vmatpush1.msra.mxu0 %v4664
  %4666 = vmatprep.subr.mxu0 0.0
  %v4667 = vand.u32 %v4169, 4294901760
  %4668 = vmatpush1.msra.mxu0 %v4667
  %4669 = vmatprep.subr.mxu0 0.0
  %v4670 = vand.u32 %v4170, 4294901760
  %4671 = vmatpush1.msra.mxu0 %v4670
  %4672 = vmatprep.subr.mxu0 0.0
  %v4673 = vand.u32 %v4171, 4294901760
  %4674 = vmatpush1.msra.mxu0 %v4673
  %4675 = vmatprep.subr.mxu0 0.0
  %4676 = vmatpush1.msra.mxu0 0.0
  %4677 = vmatprep.subr.mxu0 0.0
  %4678 = vmatpush1.msra.mxu0 0.0
  %4679 = vmatprep.subr.mxu0 0.0
  %4680 = vmatpush1.msra.mxu0 0.0
  %4681 = vmatprep.subr.mxu0 0.0
  %4682 = vmatpush1.msra.mxu0 0.0
  %4683 = vmatprep.subr.mxu0 0.0
  %4684 = vmatpush1.msra.mxu0 0.0
  %4685 = vmatprep.subr.mxu0 0.0
  %4686 = vmatpush1.msra.mxu0 0.0
  %4687 = vmatprep.subr.mxu0 0.0
  %4688 = vmatpush1.msra.mxu0 0.0
  %4689 = vmatprep.subr.mxu0 0.0
  %4690 = vmatpush1.msra.mxu0 0.0
  %4691 = vmatprep.subr.mxu0 0.0
  %4692 = vmatpush1.msra.mxu0 0.0
  %4693 = vmatprep.subr.mxu0 0.0
  %4694 = vmatpush1.msra.mxu0 0.0
  %4695 = vmatprep.subr.mxu0 0.0
  %4696 = vmatpush1.msra.mxu0 0.0
  %4697 = vmatprep.subr.mxu0 0.0
  %4698 = vmatpush1.msra.mxu0 0.0
  %4699 = vmatprep.subr.mxu0 0.0
  %4700 = vmatpush1.msra.mxu0 0.0
  %4701 = vmatprep.subr.mxu0 0.0
  %4702 = vmatpush1.msra.mxu0 0.0
  %4703 = vmatprep.subr.mxu0 0.0
  %4704 = vmatpush1.msra.mxu0 0.0
  %4705 = vmatprep.subr.mxu0 0.0
  %4706 = vmatpush1.msra.mxu0 0.0
  %4707 = vmatprep.subr.mxu0 0.0
  %4708 = vmatpush1.msra.mxu0 0.0
  %4709 = vmatprep.subr.mxu0 0.0
  %4710 = vmatpush1.msra.mxu0 0.0
  %4711 = vmatprep.subr.mxu0 0.0
  %4712 = vmatpush1.msra.mxu0 0.0
  %4713 = vmatprep.subr.mxu0 0.0
  %4714 = vmatpush1.msra.mxu0 0.0
  %4715 = vmatprep.mubr.f32.mxu0 0.0
  %v4716 = vand.u32 %v4245, 4294901760
  %v4717 = vsub.f32 %v4245, %v4716
  %v4718 = vand.u32 %v4717, 4294901760
  %4719 = vmatmul.mubr.f32.gmra.mrb[0].mxu0 %v4718
  %v4720 = vpop.f32.mrb[0].mxu0
  %v4721 = vadd.f32 %v4615, %v4720
  %v4722 = vpop.f32.mrb[0].mxu0
  %4723 = vmatprep.mubr.f32.mxu0 0.0
  %v4724 = vand.u32 %v4248, 4294901760
  %v4725 = vsub.f32 %v4248, %v4724
  %v4726 = vand.u32 %v4725, 4294901760
  %4727 = vmatmul.mubr.f32.gmra.mrb[0].mxu0 %v4726
  %v4728 = vpop.f32.mrb[0].mxu0
  %v4729 = vadd.f32 %v4622, %v4728
  %v4730 = vpop.f32.mrb[0].mxu0
  %4731 = vmatprep.mubr.f32.mxu0 0.0
  %v4732 = vand.u32 %v4251, 4294901760
  %v4733 = vsub.f32 %v4251, %v4732
  %v4734 = vand.u32 %v4733, 4294901760
  %4735 = vmatmul.mubr.f32.gmra.mrb[0].mxu0 %v4734
  %v4736 = vpop.f32.mrb[0].mxu0
  %v4737 = vadd.f32 %v4629, %v4736
  %v4738 = vpop.f32.mrb[0].mxu0
  %4739 = vmatprep.mubr.f32.mxu0 0.0
  %v4740 = vand.u32 %v4254, 4294901760
  %v4741 = vsub.f32 %v4254, %v4740
  %v4742 = vand.u32 %v4741, 4294901760
  %4743 = vmatmul.mubr.f32.gmra.mrb[0].mxu0 %v4742
  %v4744 = vpop.f32.mrb[0].mxu0
  %v4745 = vadd.f32 %v4636, %v4744
  %v4746 = vpop.f32.mrb[0].mxu0
  %4747 = vdwg.mxu0
  %4748 = vmatprep.subr.mxu0 0.0
  %v4749 = vand.u32 %v4160, 4294901760
  %v4750 = vsub.f32 %v4160, %v4749
  %v4751 = vand.u32 %v4750, 4294901760
  %4752 = vmatpush1.msra.mxu0 %v4751
  %4753 = vmatprep.subr.mxu0 0.0
  %v4754 = vand.u32 %v4161, 4294901760
  %v4755 = vsub.f32 %v4161, %v4754
  %v4756 = vand.u32 %v4755, 4294901760
  %4757 = vmatpush1.msra.mxu0 %v4756
  %4758 = vmatprep.subr.mxu0 0.0
  %v4759 = vand.u32 %v4162, 4294901760
  %v4760 = vsub.f32 %v4162, %v4759
  %v4761 = vand.u32 %v4760, 4294901760
  %4762 = vmatpush1.msra.mxu0 %v4761
  %4763 = vmatprep.subr.mxu0 0.0
  %v4764 = vand.u32 %v4163, 4294901760
  %v4765 = vsub.f32 %v4163, %v4764
  %v4766 = vand.u32 %v4765, 4294901760
  %4767 = vmatpush1.msra.mxu0 %v4766
  %4768 = vmatprep.subr.mxu0 0.0
  %v4769 = vand.u32 %v4164, 4294901760
  %v4770 = vsub.f32 %v4164, %v4769
  %v4771 = vand.u32 %v4770, 4294901760
  %4772 = vmatpush1.msra.mxu0 %v4771
  %4773 = vmatprep.subr.mxu0 0.0
  %v4774 = vand.u32 %v4165, 4294901760
  %v4775 = vsub.f32 %v4165, %v4774
  %v4776 = vand.u32 %v4775, 4294901760
  %4777 = vmatpush1.msra.mxu0 %v4776
  %4778 = vmatprep.subr.mxu0 0.0
  %v4779 = vand.u32 %v4166, 4294901760
  %v4780 = vsub.f32 %v4166, %v4779
  %v4781 = vand.u32 %v4780, 4294901760
  %4782 = vmatpush1.msra.mxu0 %v4781
  %4783 = vmatprep.subr.mxu0 0.0
  %v4784 = vand.u32 %v4167, 4294901760
  %v4785 = vsub.f32 %v4167, %v4784
  %v4786 = vand.u32 %v4785, 4294901760
  %4787 = vmatpush1.msra.mxu0 %v4786
  %4788 = vmatprep.subr.mxu0 0.0
  %v4789 = vand.u32 %v4168, 4294901760
  %v4790 = vsub.f32 %v4168, %v4789
  %v4791 = vand.u32 %v4790, 4294901760
  %4792 = vmatpush1.msra.mxu0 %v4791
  %4793 = vmatprep.subr.mxu0 0.0
  %v4794 = vand.u32 %v4169, 4294901760
  %v4795 = vsub.f32 %v4169, %v4794
  %v4796 = vand.u32 %v4795, 4294901760
  %4797 = vmatpush1.msra.mxu0 %v4796
  %4798 = vmatprep.subr.mxu0 0.0
  %v4799 = vand.u32 %v4170, 4294901760
  %v4800 = vsub.f32 %v4170, %v4799
  %v4801 = vand.u32 %v4800, 4294901760
  %4802 = vmatpush1.msra.mxu0 %v4801
  %4803 = vmatprep.subr.mxu0 0.0
  %v4804 = vand.u32 %v4171, 4294901760
  %v4805 = vsub.f32 %v4171, %v4804
  %v4806 = vand.u32 %v4805, 4294901760
  %4807 = vmatpush1.msra.mxu0 %v4806
  %4808 = vmatprep.subr.mxu0 0.0
  %4809 = vmatpush1.msra.mxu0 0.0
  %4810 = vmatprep.subr.mxu0 0.0
  %4811 = vmatpush1.msra.mxu0 0.0
  %4812 = vmatprep.subr.mxu0 0.0
  %4813 = vmatpush1.msra.mxu0 0.0
  %4814 = vmatprep.subr.mxu0 0.0
  %4815 = vmatpush1.msra.mxu0 0.0
  %4816 = vmatprep.subr.mxu0 0.0
  %4817 = vmatpush1.msra.mxu0 0.0
  %4818 = vmatprep.subr.mxu0 0.0
  %4819 = vmatpush1.msra.mxu0 0.0
  %4820 = vmatprep.subr.mxu0 0.0
  %4821 = vmatpush1.msra.mxu0 0.0
  %4822 = vmatprep.subr.mxu0 0.0
  %4823 = vmatpush1.msra.mxu0 0.0
  %4824 = vmatprep.subr.mxu0 0.0
  %4825 = vmatpush1.msra.mxu0 0.0
  %4826 = vmatprep.subr.mxu0 0.0
  %4827 = vmatpush1.msra.mxu0 0.0
  %4828 = vmatprep.subr.mxu0 0.0
  %4829 = vmatpush1.msra.mxu0 0.0
  %4830 = vmatprep.subr.mxu0 0.0
  %4831 = vmatpush1.msra.mxu0 0.0
  %4832 = vmatprep.subr.mxu0 0.0
  %4833 = vmatpush1.msra.mxu0 0.0
  %4834 = vmatprep.subr.mxu0 0.0
  %4835 = vmatpush1.msra.mxu0 0.0
  %4836 = vmatprep.subr.mxu0 0.0
  %4837 = vmatpush1.msra.mxu0 0.0
  %4838 = vmatprep.subr.mxu0 0.0
  %4839 = vmatpush1.msra.mxu0 0.0
  %4840 = vmatprep.subr.mxu0 0.0
  %4841 = vmatpush1.msra.mxu0 0.0
  %4842 = vmatprep.subr.mxu0 0.0
  %4843 = vmatpush1.msra.mxu0 0.0
  %4844 = vmatprep.subr.mxu0 0.0
  %4845 = vmatpush1.msra.mxu0 0.0
  %4846 = vmatprep.subr.mxu0 0.0
  %4847 = vmatpush1.msra.mxu0 0.0
  %4848 = vmatprep.mubr.f32.mxu0 0.0
  %v4849 = vand.u32 %v4245, 4294901760
  %4850 = vmatmul.mubr.f32.gmra.mrb[0].mxu0 %v4849
  %v4851 = vpop.f32.mrb[0].mxu0
  %v4852 = vadd.f32 %v4721, %v4851
  %v4853 = vpop.f32.mrb[0].mxu0
  %4854 = vmatprep.mubr.f32.mxu0 0.0
  %v4855 = vand.u32 %v4248, 4294901760
  %4856 = vmatmul.mubr.f32.gmra.mrb[0].mxu0 %v4855
  %v4857 = vpop.f32.mrb[0].mxu0
  %v4858 = vadd.f32 %v4729, %v4857
  %v4859 = vpop.f32.mrb[0].mxu0
  %4860 = vmatprep.mubr.f32.mxu0 0.0
  %v4861 = vand.u32 %v4251, 4294901760
  %4862 = vmatmul.mubr.f32.gmra.mrb[0].mxu0 %v4861
  %v4863 = vpop.f32.mrb[0].mxu0
  %v4864 = vadd.f32 %v4737, %v4863
  %v4865 = vpop.f32.mrb[0].mxu0
  %4866 = vmatprep.mubr.f32.mxu0 0.0
  %v4867 = vand.u32 %v4254, 4294901760
  %4868 = vmatmul.mubr.f32.gmra.mrb[0].mxu0 %v4867
  %v4869 = vpop.f32.mrb[0].mxu0
  %v4870 = vadd.f32 %v4745, %v4869
  %v4871 = vpop.f32.mrb[0].mxu0
  %4872 = vdwg.mxu0
  %4873 = vmatprep.subr.mxu0 0.0
  %v4874 = vand.u32 %v4160, 4294901760
  %4875 = vmatpush1.msra.mxu0 %v4874
  %4876 = vmatprep.subr.mxu0 0.0
  %v4877 = vand.u32 %v4161, 4294901760
  %4878 = vmatpush1.msra.mxu0 %v4877
  %4879 = vmatprep.subr.mxu0 0.0
  %v4880 = vand.u32 %v4162, 4294901760
  %4881 = vmatpush1.msra.mxu0 %v4880
  %4882 = vmatprep.subr.mxu0 0.0
  %v4883 = vand.u32 %v4163, 4294901760
  %4884 = vmatpush1.msra.mxu0 %v4883
  %4885 = vmatprep.subr.mxu0 0.0
  %v4886 = vand.u32 %v4164, 4294901760
  %4887 = vmatpush1.msra.mxu0 %v4886
  %4888 = vmatprep.subr.mxu0 0.0
  %v4889 = vand.u32 %v4165, 4294901760
  %4890 = vmatpush1.msra.mxu0 %v4889
  %4891 = vmatprep.subr.mxu0 0.0
  %v4892 = vand.u32 %v4166, 4294901760
  %4893 = vmatpush1.msra.mxu0 %v4892
  %4894 = vmatprep.subr.mxu0 0.0
  %v4895 = vand.u32 %v4167, 4294901760
  %4896 = vmatpush1.msra.mxu0 %v4895
  %4897 = vmatprep.subr.mxu0 0.0
  %v4898 = vand.u32 %v4168, 4294901760
  %4899 = vmatpush1.msra.mxu0 %v4898
  %4900 = vmatprep.subr.mxu0 0.0
  %v4901 = vand.u32 %v4169, 4294901760
  %4902 = vmatpush1.msra.mxu0 %v4901
  %4903 = vmatprep.subr.mxu0 0.0
  %v4904 = vand.u32 %v4170, 4294901760
  %4905 = vmatpush1.msra.mxu0 %v4904
  %4906 = vmatprep.subr.mxu0 0.0
  %v4907 = vand.u32 %v4171, 4294901760
  %4908 = vmatpush1.msra.mxu0 %v4907
  %4909 = vmatprep.subr.mxu0 0.0
  %4910 = vmatpush1.msra.mxu0 0.0
  %4911 = vmatprep.subr.mxu0 0.0
  %4912 = vmatpush1.msra.mxu0 0.0
  %4913 = vmatprep.subr.mxu0 0.0
  %4914 = vmatpush1.msra.mxu0 0.0
  %4915 = vmatprep.subr.mxu0 0.0
  %4916 = vmatpush1.msra.mxu0 0.0
  %4917 = vmatprep.subr.mxu0 0.0
  %4918 = vmatpush1.msra.mxu0 0.0
  %4919 = vmatprep.subr.mxu0 0.0
  %4920 = vmatpush1.msra.mxu0 0.0
  %4921 = vmatprep.subr.mxu0 0.0
  %4922 = vmatpush1.msra.mxu0 0.0
  %4923 = vmatprep.subr.mxu0 0.0
  %4924 = vmatpush1.msra.mxu0 0.0
  %4925 = vmatprep.subr.mxu0 0.0
  %4926 = vmatpush1.msra.mxu0 0.0
  %4927 = vmatprep.subr.mxu0 0.0
  %4928 = vmatpush1.msra.mxu0 0.0
  %4929 = vmatprep.subr.mxu0 0.0
  %4930 = vmatpush1.msra.mxu0 0.0
  %4931 = vmatprep.subr.mxu0 0.0
  %4932 = vmatpush1.msra.mxu0 0.0
  %4933 = vmatprep.subr.mxu0 0.0
  %4934 = vmatpush1.msra.mxu0 0.0
  %4935 = vmatprep.subr.mxu0 0.0
  %4936 = vmatpush1.msra.mxu0 0.0
  %4937 = vmatprep.subr.mxu0 0.0
  %4938 = vmatpush1.msra.mxu0 0.0
  %4939 = vmatprep.subr.mxu0 0.0
  %4940 = vmatpush1.msra.mxu0 0.0
  %4941 = vmatprep.subr.mxu0 0.0
  %4942 = vmatpush1.msra.mxu0 0.0
  %4943 = vmatprep.subr.mxu0 0.0
  %4944 = vmatpush1.msra.mxu0 0.0
  %4945 = vmatprep.subr.mxu0 0.0
  %4946 = vmatpush1.msra.mxu0 0.0
  %4947 = vmatprep.subr.mxu0 0.0
  %4948 = vmatpush1.msra.mxu0 0.0
  %4949 = vmatprep.mubr.f32.mxu0 0.0
  %v4950 = vand.u32 %v4245, 4294901760
  %4951 = vmatmul.mubr.f32.gmra.mrb[0].mxu0 %v4950
  %v4952 = vpop.f32.mrb[0].mxu0
  %v4953 = vadd.f32 %v4852, %v4952
  %v4954 = vpop.f32.mrb[0].mxu0
  %4955 = vmatprep.mubr.f32.mxu0 0.0
  %v4956 = vand.u32 %v4248, 4294901760
  %4957 = vmatmul.mubr.f32.gmra.mrb[0].mxu0 %v4956
  %v4958 = vpop.f32.mrb[0].mxu0
  %v4959 = vadd.f32 %v4858, %v4958
  %v4960 = vpop.f32.mrb[0].mxu0
  %4961 = vmatprep.mubr.f32.mxu0 0.0
  %v4962 = vand.u32 %v4251, 4294901760
  %4963 = vmatmul.mubr.f32.gmra.mrb[0].mxu0 %v4962
  %v4964 = vpop.f32.mrb[0].mxu0
  %v4965 = vadd.f32 %v4864, %v4964
  %v4966 = vpop.f32.mrb[0].mxu0
  %4967 = vmatprep.mubr.f32.mxu0 0.0
  %v4968 = vand.u32 %v4254, 4294901760
  %4969 = vmatmul.mubr.f32.gmra.mrb[0].mxu0 %v4968
  %v4970 = vpop.f32.mrb[0].mxu0
  %v4971 = vadd.f32 %v4870, %v4970
  %v4972 = vpop.f32.mrb[0].mxu0
  %4973 = vdwg.mxu0
  %v4974 = vmax.f32 %v4953, 0.0
  %v4975 = vmax.f32 %v4959, 0.0
  %v4976 = vmax.f32 %v4965, 0.0
  %v4977 = vmax.f32 %v4971, 0.0
  %s4978 = scalar_lea.vmem %s6, 192
  %v4979 = vld [vmem:[%s4978] sm:$0xff]
  %v4980 = vld [vmem:[%s4978 + $0x8] sm:$0xff]
  %v4981 = vld [vmem:[%s4978 + $0x10] sm:$0xff]
  %v4982 = vld [vmem:[%s4978 + $0x18] sm:$0xff]
  %v4983 = vld [vmem:[%s4978 + $0x20] sm:$0xff]
  %v4984 = vld [vmem:[%s4978 + $0x28] sm:$0xff]
  %v4985 = vld [vmem:[%s4978 + $0x30] sm:$0xff]
  %v4986 = vld [vmem:[%s4978 + $0x38] sm:$0xff]
  %v4987 = vld [vmem:[%s4978 + $0x40] sm:$0xff]
  %v4988 = vld [vmem:[%s4978 + $0x48] sm:$0xff]
  %v4989 = vld [vmem:[%s4978 + $0x50] sm:$0xff]
  %v4990 = vld [vmem:[%s4978 + $0x58] sm:$0xff]
  %s4991 = scalar_lea.vmem %s7, 2
  %v4992 = vld [vmem:[%s4991] sm:$0x1]
  %4993 = vst.msk [vmem:[#allocation4 + $0x1] sm:$0xff] %vm82, %v4974
  %4994 = vst.msk [vmem:[#allocation4 + $0x9] sm:$0xff] %vm82, %v4975
  %v4995 = vld [vmem:[#allocation4] sm:$0xff]
  %v4996 = vld [vmem:[#allocation4 + $0x8] sm:$0xff]
  %4997 = vst.msk [vmem:[#allocation5] sm:$0xff] %vm82, %v4995
  %4998 = vst.msk [vmem:[#allocation5 + $0x8] sm:$0xff] %vm82, %v4996
  %v4999 = vld [vmem:[#allocation4 + $0x1] sm:$0xff]
  %v5000 = vld [vmem:[#allocation4 + $0x9] sm:$0xff]
  %5003 = vrot.lane.b32.xlu0 %v4999, 32
  %v5004 = vpop.permute.xlu0 %5003
  %5005 = vrot.lane.b32.xlu0 %v5000, 32
  %v5006 = vpop.permute.xlu0 %5005
  %5009 = vst.msk [vmem:[#allocation5] sm:$0xff] %vm905, %v5004
  %5010 = vst.msk [vmem:[#allocation5 + $0x8] sm:$0xff] %vm905, %v5006
  %v5011 = vld [vmem:[#allocation4 + $0x2] sm:$0xff]
  %v5012 = vld [vmem:[#allocation4 + $0xa] sm:$0xff]
  %5015 = vrot.lane.b32.xlu0 %v5011, 64
  %v5016 = vpop.permute.xlu0 %5015
  %5017 = vrot.lane.b32.xlu0 %v5012, 64
  %v5018 = vpop.permute.xlu0 %5017
  %5021 = vst.msk [vmem:[#allocation5] sm:$0xff] %vm918, %v5016
  %5022 = vst.msk [vmem:[#allocation5 + $0x8] sm:$0xff] %vm918, %v5018
  %5023 = vst.msk [vmem:[#allocation4 + $0x1] sm:$0xff] %vm82, %v4976
  %5024 = vst.msk [vmem:[#allocation4 + $0x9] sm:$0xff] %vm82, %v4977
  %v5025 = vld [vmem:[#allocation4] sm:$0xff]
  %v5026 = vld [vmem:[#allocation4 + $0x8] sm:$0xff]
  %5027 = vst.msk [vmem:[#allocation5 + $0x10] sm:$0xff] %vm82, %v5025
  %5028 = vst.msk [vmem:[#allocation5 + $0x18] sm:$0xff] %vm82, %v5026
  %v5029 = vld [vmem:[#allocation4 + $0x1] sm:$0xff]
  %v5030 = vld [vmem:[#allocation4 + $0x9] sm:$0xff]
  %5033 = vrot.lane.b32.xlu0 %v5029, 32
  %v5034 = vpop.permute.xlu0 %5033
  %5035 = vrot.lane.b32.xlu0 %v5030, 32
  %v5036 = vpop.permute.xlu0 %5035
  %5039 = vst.msk [vmem:[#allocation5 + $0x10] sm:$0xff] %vm905, %v5034
  %5040 = vst.msk [vmem:[#allocation5 + $0x18] sm:$0xff] %vm905, %v5036
  %v5041 = vld [vmem:[#allocation4 + $0x2] sm:$0xff]
  %v5042 = vld [vmem:[#allocation4 + $0xa] sm:$0xff]
  %5045 = vrot.lane.b32.xlu0 %v5041, 64
  %v5046 = vpop.permute.xlu0 %5045
  %5047 = vrot.lane.b32.xlu0 %v5042, 64
  %v5048 = vpop.permute.xlu0 %5047
  %5051 = vst.msk [vmem:[#allocation5 + $0x10] sm:$0xff] %vm918, %v5046
  %5052 = vst.msk [vmem:[#allocation5 + $0x18] sm:$0xff] %vm918, %v5048
  %v5053 = vld [vmem:[#allocation5] sm:$0xff]
  %v5054 = vld [vmem:[#allocation5 + $0x8] sm:$0xff]
  %v5055 = vld [vmem:[#allocation5 + $0x10] sm:$0xff]
  %v5056 = vld [vmem:[#allocation5 + $0x18] sm:$0xff]
  %v5058 = vlaneseq
  %v5059 = vshrl.u32 %v5058, 7
  %v5060 = vsub.s32 0, %v5059
  %v5061 = vrot.slane %v4992, %v5060
  %v5064 = vsel %vm961, %v5053, 0
  %v5067 = vsel %vm961, %v5054, 0
  %v5070 = vsel %vm961, %v5055, 0
  %v5073 = vsel %vm961, %v5056, 0
  %5075 = vmatprep.subr.mxu0 0.0
  %v5076 = vand.u32 %v4979, 4294901760
  %5077 = vmatpush1.msra.mxu0 %v5076
  %5078 = vmatprep.subr.mxu0 0.0
  %v5079 = vand.u32 %v4980, 4294901760
  %5080 = vmatpush1.msra.mxu0 %v5079
  %5081 = vmatprep.subr.mxu0 0.0
  %v5082 = vand.u32 %v4981, 4294901760
  %5083 = vmatpush1.msra.mxu0 %v5082
  %5084 = vmatprep.subr.mxu0 0.0
  %v5085 = vand.u32 %v4982, 4294901760
  %5086 = vmatpush1.msra.mxu0 %v5085
  %5087 = vmatprep.subr.mxu0 0.0
  %v5088 = vand.u32 %v4983, 4294901760
  %5089 = vmatpush1.msra.mxu0 %v5088
  %5090 = vmatprep.subr.mxu0 0.0
  %v5091 = vand.u32 %v4984, 4294901760
  %5092 = vmatpush1.msra.mxu0 %v5091
  %5093 = vmatprep.subr.mxu0 0.0
  %v5094 = vand.u32 %v4985, 4294901760
  %5095 = vmatpush1.msra.mxu0 %v5094
  %5096 = vmatprep.subr.mxu0 0.0
  %v5097 = vand.u32 %v4986, 4294901760
  %5098 = vmatpush1.msra.mxu0 %v5097
  %5099 = vmatprep.subr.mxu0 0.0
  %v5100 = vand.u32 %v4987, 4294901760
  %5101 = vmatpush1.msra.mxu0 %v5100
  %5102 = vmatprep.subr.mxu0 0.0
  %v5103 = vand.u32 %v4988, 4294901760
  %5104 = vmatpush1.msra.mxu0 %v5103
  %5105 = vmatprep.subr.mxu0 0.0
  %v5106 = vand.u32 %v4989, 4294901760
  %5107 = vmatpush1.msra.mxu0 %v5106
  %5108 = vmatprep.subr.mxu0 0.0
  %v5109 = vand.u32 %v4990, 4294901760
  %5110 = vmatpush1.msra.mxu0 %v5109
  %5111 = vmatprep.subr.mxu0 0.0
  %5112 = vmatpush1.msra.mxu0 0.0
  %5113 = vmatprep.subr.mxu0 0.0
  %5114 = vmatpush1.msra.mxu0 0.0
  %5115 = vmatprep.subr.mxu0 0.0
  %5116 = vmatpush1.msra.mxu0 0.0
  %5117 = vmatprep.subr.mxu0 0.0
  %5118 = vmatpush1.msra.mxu0 0.0
  %5119 = vmatprep.subr.mxu0 0.0
  %5120 = vmatpush1.msra.mxu0 0.0
  %5121 = vmatprep.subr.mxu0 0.0
  %5122 = vmatpush1.msra.mxu0 0.0
  %5123 = vmatprep.subr.mxu0 0.0
  %5124 = vmatpush1.msra.mxu0 0.0
  %5125 = vmatprep.subr.mxu0 0.0
  %5126 = vmatpush1.msra.mxu0 0.0
  %5127 = vmatprep.subr.mxu0 0.0
  %5128 = vmatpush1.msra.mxu0 0.0
  %5129 = vmatprep.subr.mxu0 0.0
  %5130 = vmatpush1.msra.mxu0 0.0
  %5131 = vmatprep.subr.mxu0 0.0
  %5132 = vmatpush1.msra.mxu0 0.0
  %5133 = vmatprep.subr.mxu0 0.0
  %5134 = vmatpush1.msra.mxu0 0.0
  %5135 = vmatprep.subr.mxu0 0.0
  %5136 = vmatpush1.msra.mxu0 0.0
  %5137 = vmatprep.subr.mxu0 0.0
  %5138 = vmatpush1.msra.mxu0 0.0
  %5139 = vmatprep.subr.mxu0 0.0
  %5140 = vmatpush1.msra.mxu0 0.0
  %5141 = vmatprep.subr.mxu0 0.0
  %5142 = vmatpush1.msra.mxu0 0.0
  %5143 = vmatprep.subr.mxu0 0.0
  %5144 = vmatpush1.msra.mxu0 0.0
  %5145 = vmatprep.subr.mxu0 0.0
  %5146 = vmatpush1.msra.mxu0 0.0
  %5147 = vmatprep.subr.mxu0 0.0
  %5148 = vmatpush1.msra.mxu0 0.0
  %5149 = vmatprep.subr.mxu0 0.0
  %5150 = vmatpush1.msra.mxu0 0.0
  %5151 = vmatprep.mubr.f32.mxu0 0.0
  %v5152 = vand.u32 %v5064, 4294901760
  %v5153 = vsub.f32 %v5064, %v5152
  %v5154 = vand.u32 %v5153, 4294901760
  %v5155 = vsub.f32 %v5153, %v5154
  %v5156 = vand.u32 %v5155, 4294901760
  %5157 = vmatmul.mubr.f32.gmra.mrb[0].mxu0 %v5156
  %v5158 = vpop.f32.mrb[0].mxu0
  %v5159 = vadd.f32 %v5061, %v5158
  %v5160 = vpop.f32.mrb[0].mxu0
  %5161 = vmatprep.mubr.f32.mxu0 0.0
  %v5162 = vand.u32 %v5067, 4294901760
  %v5163 = vsub.f32 %v5067, %v5162
  %v5164 = vand.u32 %v5163, 4294901760
  %v5165 = vsub.f32 %v5163, %v5164
  %v5166 = vand.u32 %v5165, 4294901760
  %5167 = vmatmul.mubr.f32.gmra.mrb[0].mxu0 %v5166
  %v5168 = vpop.f32.mrb[0].mxu0
  %v5169 = vadd.f32 %v5061, %v5168
  %v5170 = vpop.f32.mrb[0].mxu0
  %5171 = vmatprep.mubr.f32.mxu0 0.0
  %v5172 = vand.u32 %v5070, 4294901760
  %v5173 = vsub.f32 %v5070, %v5172
  %v5174 = vand.u32 %v5173, 4294901760
  %v5175 = vsub.f32 %v5173, %v5174
  %v5176 = vand.u32 %v5175, 4294901760
  %5177 = vmatmul.mubr.f32.gmra.mrb[0].mxu0 %v5176
  %v5178 = vpop.f32.mrb[0].mxu0
  %v5179 = vadd.f32 %v5061, %v5178
  %v5180 = vpop.f32.mrb[0].mxu0
  %5181 = vmatprep.mubr.f32.mxu0 0.0
  %v5182 = vand.u32 %v5073, 4294901760
  %v5183 = vsub.f32 %v5073, %v5182
  %v5184 = vand.u32 %v5183, 4294901760
  %v5185 = vsub.f32 %v5183, %v5184
  %v5186 = vand.u32 %v5185, 4294901760
  %5187 = vmatmul.mubr.f32.gmra.mrb[0].mxu0 %v5186
  %v5188 = vpop.f32.mrb[0].mxu0
  %v5189 = vadd.f32 %v5061, %v5188
  %v5190 = vpop.f32.mrb[0].mxu0
  %5191 = vdwg.mxu0
  %5192 = vmatprep.subr.mxu0 0.0
  %v5193 = vand.u32 %v4979, 4294901760
  %v5194 = vsub.f32 %v4979, %v5193
  %v5195 = vand.u32 %v5194, 4294901760
  %v5196 = vsub.f32 %v5194, %v5195
  %v5197 = vand.u32 %v5196, 4294901760
  %5198 = vmatpush1.msra.mxu0 %v5197
  %5199 = vmatprep.subr.mxu0 0.0
  %v5200 = vand.u32 %v4980, 4294901760
  %v5201 = vsub.f32 %v4980, %v5200
  %v5202 = vand.u32 %v5201, 4294901760
  %v5203 = vsub.f32 %v5201, %v5202
  %v5204 = vand.u32 %v5203, 4294901760
  %5205 = vmatpush1.msra.mxu0 %v5204
  %5206 = vmatprep.subr.mxu0 0.0
  %v5207 = vand.u32 %v4981, 4294901760
  %v5208 = vsub.f32 %v4981, %v5207
  %v5209 = vand.u32 %v5208, 4294901760
  %v5210 = vsub.f32 %v5208, %v5209
  %v5211 = vand.u32 %v5210, 4294901760
  %5212 = vmatpush1.msra.mxu0 %v5211
  %5213 = vmatprep.subr.mxu0 0.0
  %v5214 = vand.u32 %v4982, 4294901760
  %v5215 = vsub.f32 %v4982, %v5214
  %v5216 = vand.u32 %v5215, 4294901760
  %v5217 = vsub.f32 %v5215, %v5216
  %v5218 = vand.u32 %v5217, 4294901760
  %5219 = vmatpush1.msra.mxu0 %v5218
  %5220 = vmatprep.subr.mxu0 0.0
  %v5221 = vand.u32 %v4983, 4294901760
  %v5222 = vsub.f32 %v4983, %v5221
  %v5223 = vand.u32 %v5222, 4294901760
  %v5224 = vsub.f32 %v5222, %v5223
  %v5225 = vand.u32 %v5224, 4294901760
  %5226 = vmatpush1.msra.mxu0 %v5225
  %5227 = vmatprep.subr.mxu0 0.0
  %v5228 = vand.u32 %v4984, 4294901760
  %v5229 = vsub.f32 %v4984, %v5228
  %v5230 = vand.u32 %v5229, 4294901760
  %v5231 = vsub.f32 %v5229, %v5230
  %v5232 = vand.u32 %v5231, 4294901760
  %5233 = vmatpush1.msra.mxu0 %v5232
  %5234 = vmatprep.subr.mxu0 0.0
  %v5235 = vand.u32 %v4985, 4294901760
  %v5236 = vsub.f32 %v4985, %v5235
  %v5237 = vand.u32 %v5236, 4294901760
  %v5238 = vsub.f32 %v5236, %v5237
  %v5239 = vand.u32 %v5238, 4294901760
  %5240 = vmatpush1.msra.mxu0 %v5239
  %5241 = vmatprep.subr.mxu0 0.0
  %v5242 = vand.u32 %v4986, 4294901760
  %v5243 = vsub.f32 %v4986, %v5242
  %v5244 = vand.u32 %v5243, 4294901760
  %v5245 = vsub.f32 %v5243, %v5244
  %v5246 = vand.u32 %v5245, 4294901760
  %5247 = vmatpush1.msra.mxu0 %v5246
  %5248 = vmatprep.subr.mxu0 0.0
  %v5249 = vand.u32 %v4987, 4294901760
  %v5250 = vsub.f32 %v4987, %v5249
  %v5251 = vand.u32 %v5250, 4294901760
  %v5252 = vsub.f32 %v5250, %v5251
  %v5253 = vand.u32 %v5252, 4294901760
  %5254 = vmatpush1.msra.mxu0 %v5253
  %5255 = vmatprep.subr.mxu0 0.0
  %v5256 = vand.u32 %v4988, 4294901760
  %v5257 = vsub.f32 %v4988, %v5256
  %v5258 = vand.u32 %v5257, 4294901760
  %v5259 = vsub.f32 %v5257, %v5258
  %v5260 = vand.u32 %v5259, 4294901760
  %5261 = vmatpush1.msra.mxu0 %v5260
  %5262 = vmatprep.subr.mxu0 0.0
  %v5263 = vand.u32 %v4989, 4294901760
  %v5264 = vsub.f32 %v4989, %v5263
  %v5265 = vand.u32 %v5264, 4294901760
  %v5266 = vsub.f32 %v5264, %v5265
  %v5267 = vand.u32 %v5266, 4294901760
  %5268 = vmatpush1.msra.mxu0 %v5267
  %5269 = vmatprep.subr.mxu0 0.0
  %v5270 = vand.u32 %v4990, 4294901760
  %v5271 = vsub.f32 %v4990, %v5270
  %v5272 = vand.u32 %v5271, 4294901760
  %v5273 = vsub.f32 %v5271, %v5272
  %v5274 = vand.u32 %v5273, 4294901760
  %5275 = vmatpush1.msra.mxu0 %v5274
  %5276 = vmatprep.subr.mxu0 0.0
  %5277 = vmatpush1.msra.mxu0 0.0
  %5278 = vmatprep.subr.mxu0 0.0
  %5279 = vmatpush1.msra.mxu0 0.0
  %5280 = vmatprep.subr.mxu0 0.0
  %5281 = vmatpush1.msra.mxu0 0.0
  %5282 = vmatprep.subr.mxu0 0.0
  %5283 = vmatpush1.msra.mxu0 0.0
  %5284 = vmatprep.subr.mxu0 0.0
  %5285 = vmatpush1.msra.mxu0 0.0
  %5286 = vmatprep.subr.mxu0 0.0
  %5287 = vmatpush1.msra.mxu0 0.0
  %5288 = vmatprep.subr.mxu0 0.0
  %5289 = vmatpush1.msra.mxu0 0.0
  %5290 = vmatprep.subr.mxu0 0.0
  %5291 = vmatpush1.msra.mxu0 0.0
  %5292 = vmatprep.subr.mxu0 0.0
  %5293 = vmatpush1.msra.mxu0 0.0
  %5294 = vmatprep.subr.mxu0 0.0
  %5295 = vmatpush1.msra.mxu0 0.0
  %5296 = vmatprep.subr.mxu0 0.0
  %5297 = vmatpush1.msra.mxu0 0.0
  %5298 = vmatprep.subr.mxu0 0.0
  %5299 = vmatpush1.msra.mxu0 0.0
  %5300 = vmatprep.subr.mxu0 0.0
  %5301 = vmatpush1.msra.mxu0 0.0
  %5302 = vmatprep.subr.mxu0 0.0
  %5303 = vmatpush1.msra.mxu0 0.0
  %5304 = vmatprep.subr.mxu0 0.0
  %5305 = vmatpush1.msra.mxu0 0.0
  %5306 = vmatprep.subr.mxu0 0.0
  %5307 = vmatpush1.msra.mxu0 0.0
  %5308 = vmatprep.subr.mxu0 0.0
  %5309 = vmatpush1.msra.mxu0 0.0
  %5310 = vmatprep.subr.mxu0 0.0
  %5311 = vmatpush1.msra.mxu0 0.0
  %5312 = vmatprep.subr.mxu0 0.0
  %5313 = vmatpush1.msra.mxu0 0.0
  %5314 = vmatprep.subr.mxu0 0.0
  %5315 = vmatpush1.msra.mxu0 0.0
  %5316 = vmatprep.mubr.f32.mxu0 0.0
  %v5317 = vand.u32 %v5064, 4294901760
  %5318 = vmatmul.mubr.f32.gmra.mrb[0].mxu0 %v5317
  %v5319 = vpop.f32.mrb[0].mxu0
  %v5320 = vadd.f32 %v5159, %v5319
  %v5321 = vpop.f32.mrb[0].mxu0
  %5322 = vmatprep.mubr.f32.mxu0 0.0
  %v5323 = vand.u32 %v5067, 4294901760
  %5324 = vmatmul.mubr.f32.gmra.mrb[0].mxu0 %v5323
  %v5325 = vpop.f32.mrb[0].mxu0
  %v5326 = vadd.f32 %v5169, %v5325
  %v5327 = vpop.f32.mrb[0].mxu0
  %5328 = vmatprep.mubr.f32.mxu0 0.0
  %v5329 = vand.u32 %v5070, 4294901760
  %5330 = vmatmul.mubr.f32.gmra.mrb[0].mxu0 %v5329
  %v5331 = vpop.f32.mrb[0].mxu0
  %v5332 = vadd.f32 %v5179, %v5331
  %v5333 = vpop.f32.mrb[0].mxu0
  %5334 = vmatprep.mubr.f32.mxu0 0.0
  %v5335 = vand.u32 %v5073, 4294901760
  %5336 = vmatmul.mubr.f32.gmra.mrb[0].mxu0 %v5335
  %v5337 = vpop.f32.mrb[0].mxu0
  %v5338 = vadd.f32 %v5189, %v5337
  %v5339 = vpop.f32.mrb[0].mxu0
  %5340 = vdwg.mxu0
  %5341 = vmatprep.subr.mxu0 0.0
  %v5342 = vand.u32 %v4979, 4294901760
  %v5343 = vsub.f32 %v4979, %v5342
  %5344 = vmatpush1.msra.mxu0 %v5343
  %5345 = vmatprep.subr.mxu0 0.0
  %v5346 = vand.u32 %v4980, 4294901760
  %v5347 = vsub.f32 %v4980, %v5346
  %5348 = vmatpush1.msra.mxu0 %v5347
  %5349 = vmatprep.subr.mxu0 0.0
  %v5350 = vand.u32 %v4981, 4294901760
  %v5351 = vsub.f32 %v4981, %v5350
  %5352 = vmatpush1.msra.mxu0 %v5351
  %5353 = vmatprep.subr.mxu0 0.0
  %v5354 = vand.u32 %v4982, 4294901760
  %v5355 = vsub.f32 %v4982, %v5354
  %5356 = vmatpush1.msra.mxu0 %v5355
  %5357 = vmatprep.subr.mxu0 0.0
  %v5358 = vand.u32 %v4983, 4294901760
  %v5359 = vsub.f32 %v4983, %v5358
  %5360 = vmatpush1.msra.mxu0 %v5359
  %5361 = vmatprep.subr.mxu0 0.0
  %v5362 = vand.u32 %v4984, 4294901760
  %v5363 = vsub.f32 %v4984, %v5362
  %5364 = vmatpush1.msra.mxu0 %v5363
  %5365 = vmatprep.subr.mxu0 0.0
  %v5366 = vand.u32 %v4985, 4294901760
  %v5367 = vsub.f32 %v4985, %v5366
  %5368 = vmatpush1.msra.mxu0 %v5367
  %5369 = vmatprep.subr.mxu0 0.0
  %v5370 = vand.u32 %v4986, 4294901760
  %v5371 = vsub.f32 %v4986, %v5370
  %5372 = vmatpush1.msra.mxu0 %v5371
  %5373 = vmatprep.subr.mxu0 0.0
  %v5374 = vand.u32 %v4987, 4294901760
  %v5375 = vsub.f32 %v4987, %v5374
  %5376 = vmatpush1.msra.mxu0 %v5375
  %5377 = vmatprep.subr.mxu0 0.0
  %v5378 = vand.u32 %v4988, 4294901760
  %v5379 = vsub.f32 %v4988, %v5378
  %5380 = vmatpush1.msra.mxu0 %v5379
  %5381 = vmatprep.subr.mxu0 0.0
  %v5382 = vand.u32 %v4989, 4294901760
  %v5383 = vsub.f32 %v4989, %v5382
  %5384 = vmatpush1.msra.mxu0 %v5383
  %5385 = vmatprep.subr.mxu0 0.0
  %v5386 = vand.u32 %v4990, 4294901760
  %v5387 = vsub.f32 %v4990, %v5386
  %5388 = vmatpush1.msra.mxu0 %v5387
  %5389 = vmatprep.subr.mxu0 0.0
  %5390 = vmatpush1.msra.mxu0 0.0
  %5391 = vmatprep.subr.mxu0 0.0
  %5392 = vmatpush1.msra.mxu0 0.0
  %5393 = vmatprep.subr.mxu0 0.0
  %5394 = vmatpush1.msra.mxu0 0.0
  %5395 = vmatprep.subr.mxu0 0.0
  %5396 = vmatpush1.msra.mxu0 0.0
  %5397 = vmatprep.subr.mxu0 0.0
  %5398 = vmatpush1.msra.mxu0 0.0
  %5399 = vmatprep.subr.mxu0 0.0
  %5400 = vmatpush1.msra.mxu0 0.0
  %5401 = vmatprep.subr.mxu0 0.0
  %5402 = vmatpush1.msra.mxu0 0.0
  %5403 = vmatprep.subr.mxu0 0.0
  %5404 = vmatpush1.msra.mxu0 0.0
  %5405 = vmatprep.subr.mxu0 0.0
  %5406 = vmatpush1.msra.mxu0 0.0
  %5407 = vmatprep.subr.mxu0 0.0
  %5408 = vmatpush1.msra.mxu0 0.0
  %5409 = vmatprep.subr.mxu0 0.0
  %5410 = vmatpush1.msra.mxu0 0.0
  %5411 = vmatprep.subr.mxu0 0.0
  %5412 = vmatpush1.msra.mxu0 0.0
  %5413 = vmatprep.subr.mxu0 0.0
  %5414 = vmatpush1.msra.mxu0 0.0
  %5415 = vmatprep.subr.mxu0 0.0
  %5416 = vmatpush1.msra.mxu0 0.0
  %5417 = vmatprep.subr.mxu0 0.0
  %5418 = vmatpush1.msra.mxu0 0.0
  %5419 = vmatprep.subr.mxu0 0.0
  %5420 = vmatpush1.msra.mxu0 0.0
  %5421 = vmatprep.subr.mxu0 0.0
  %5422 = vmatpush1.msra.mxu0 0.0
  %5423 = vmatprep.subr.mxu0 0.0
  %5424 = vmatpush1.msra.mxu0 0.0
  %5425 = vmatprep.subr.mxu0 0.0
  %5426 = vmatpush1.msra.mxu0 0.0
  %5427 = vmatprep.subr.mxu0 0.0
  %5428 = vmatpush1.msra.mxu0 0.0
  %5429 = vmatprep.mubr.f32.mxu0 0.0
  %v5430 = vand.u32 %v5064, 4294901760
  %v5431 = vsub.f32 %v5064, %v5430
  %5432 = vmatmul.mubr.f32.gmra.mrb[0].mxu0 %v5431
  %v5433 = vpop.f32.mrb[0].mxu0
  %v5434 = vadd.f32 %v5320, %v5433
  %v5435 = vpop.f32.mrb[0].mxu0
  %5436 = vmatprep.mubr.f32.mxu0 0.0
  %v5437 = vand.u32 %v5067, 4294901760
  %v5438 = vsub.f32 %v5067, %v5437
  %5439 = vmatmul.mubr.f32.gmra.mrb[0].mxu0 %v5438
  %v5440 = vpop.f32.mrb[0].mxu0
  %v5441 = vadd.f32 %v5326, %v5440
  %v5442 = vpop.f32.mrb[0].mxu0
  %5443 = vmatprep.mubr.f32.mxu0 0.0
  %v5444 = vand.u32 %v5070, 4294901760
  %v5445 = vsub.f32 %v5070, %v5444
  %5446 = vmatmul.mubr.f32.gmra.mrb[0].mxu0 %v5445
  %v5447 = vpop.f32.mrb[0].mxu0
  %v5448 = vadd.f32 %v5332, %v5447
  %v5449 = vpop.f32.mrb[0].mxu0
  %5450 = vmatprep.mubr.f32.mxu0 0.0
  %v5451 = vand.u32 %v5073, 4294901760
  %v5452 = vsub.f32 %v5073, %v5451
  %5453 = vmatmul.mubr.f32.gmra.mrb[0].mxu0 %v5452
  %v5454 = vpop.f32.mrb[0].mxu0
  %v5455 = vadd.f32 %v5338, %v5454
  %v5456 = vpop.f32.mrb[0].mxu0
  %5457 = vdwg.mxu0
  %5458 = vmatprep.subr.mxu0 0.0
  %v5459 = vand.u32 %v4979, 4294901760
  %5460 = vmatpush1.msra.mxu0 %v5459
  %5461 = vmatprep.subr.mxu0 0.0
  %v5462 = vand.u32 %v4980, 4294901760
  %5463 = vmatpush1.msra.mxu0 %v5462
  %5464 = vmatprep.subr.mxu0 0.0
  %v5465 = vand.u32 %v4981, 4294901760
  %5466 = vmatpush1.msra.mxu0 %v5465
  %5467 = vmatprep.subr.mxu0 0.0
  %v5468 = vand.u32 %v4982, 4294901760
  %5469 = vmatpush1.msra.mxu0 %v5468
  %5470 = vmatprep.subr.mxu0 0.0
  %v5471 = vand.u32 %v4983, 4294901760
  %5472 = vmatpush1.msra.mxu0 %v5471
  %5473 = vmatprep.subr.mxu0 0.0
  %v5474 = vand.u32 %v4984, 4294901760
  %5475 = vmatpush1.msra.mxu0 %v5474
  %5476 = vmatprep.subr.mxu0 0.0
  %v5477 = vand.u32 %v4985, 4294901760
  %5478 = vmatpush1.msra.mxu0 %v5477
  %5479 = vmatprep.subr.mxu0 0.0
  %v5480 = vand.u32 %v4986, 4294901760
  %5481 = vmatpush1.msra.mxu0 %v5480
  %5482 = vmatprep.subr.mxu0 0.0
  %v5483 = vand.u32 %v4987, 4294901760
  %5484 = vmatpush1.msra.mxu0 %v5483
  %5485 = vmatprep.subr.mxu0 0.0
  %v5486 = vand.u32 %v4988, 4294901760
  %5487 = vmatpush1.msra.mxu0 %v5486
  %5488 = vmatprep.subr.mxu0 0.0
  %v5489 = vand.u32 %v4989, 4294901760
  %5490 = vmatpush1.msra.mxu0 %v5489
  %5491 = vmatprep.subr.mxu0 0.0
  %v5492 = vand.u32 %v4990, 4294901760
  %5493 = vmatpush1.msra.mxu0 %v5492
  %5494 = vmatprep.subr.mxu0 0.0
  %5495 = vmatpush1.msra.mxu0 0.0
  %5496 = vmatprep.subr.mxu0 0.0
  %5497 = vmatpush1.msra.mxu0 0.0
  %5498 = vmatprep.subr.mxu0 0.0
  %5499 = vmatpush1.msra.mxu0 0.0
  %5500 = vmatprep.subr.mxu0 0.0
  %5501 = vmatpush1.msra.mxu0 0.0
  %5502 = vmatprep.subr.mxu0 0.0
  %5503 = vmatpush1.msra.mxu0 0.0
  %5504 = vmatprep.subr.mxu0 0.0
  %5505 = vmatpush1.msra.mxu0 0.0
  %5506 = vmatprep.subr.mxu0 0.0
  %5507 = vmatpush1.msra.mxu0 0.0
  %5508 = vmatprep.subr.mxu0 0.0
  %5509 = vmatpush1.msra.mxu0 0.0
  %5510 = vmatprep.subr.mxu0 0.0
  %5511 = vmatpush1.msra.mxu0 0.0
  %5512 = vmatprep.subr.mxu0 0.0
  %5513 = vmatpush1.msra.mxu0 0.0
  %5514 = vmatprep.subr.mxu0 0.0
  %5515 = vmatpush1.msra.mxu0 0.0
  %5516 = vmatprep.subr.mxu0 0.0
  %5517 = vmatpush1.msra.mxu0 0.0
  %5518 = vmatprep.subr.mxu0 0.0
  %5519 = vmatpush1.msra.mxu0 0.0
  %5520 = vmatprep.subr.mxu0 0.0
  %5521 = vmatpush1.msra.mxu0 0.0
  %5522 = vmatprep.subr.mxu0 0.0
  %5523 = vmatpush1.msra.mxu0 0.0
  %5524 = vmatprep.subr.mxu0 0.0
  %5525 = vmatpush1.msra.mxu0 0.0
  %5526 = vmatprep.subr.mxu0 0.0
  %5527 = vmatpush1.msra.mxu0 0.0
  %5528 = vmatprep.subr.mxu0 0.0
  %5529 = vmatpush1.msra.mxu0 0.0
  %5530 = vmatprep.subr.mxu0 0.0
  %5531 = vmatpush1.msra.mxu0 0.0
  %5532 = vmatprep.subr.mxu0 0.0
  %5533 = vmatpush1.msra.mxu0 0.0
  %5534 = vmatprep.mubr.f32.mxu0 0.0
  %v5535 = vand.u32 %v5064, 4294901760
  %v5536 = vsub.f32 %v5064, %v5535
  %v5537 = vand.u32 %v5536, 4294901760
  %5538 = vmatmul.mubr.f32.gmra.mrb[0].mxu0 %v5537
  %v5539 = vpop.f32.mrb[0].mxu0
  %v5540 = vadd.f32 %v5434, %v5539
  %v5541 = vpop.f32.mrb[0].mxu0
  %5542 = vmatprep.mubr.f32.mxu0 0.0
  %v5543 = vand.u32 %v5067, 4294901760
  %v5544 = vsub.f32 %v5067, %v5543
  %v5545 = vand.u32 %v5544, 4294901760
  %5546 = vmatmul.mubr.f32.gmra.mrb[0].mxu0 %v5545
  %v5547 = vpop.f32.mrb[0].mxu0
  %v5548 = vadd.f32 %v5441, %v5547
  %v5549 = vpop.f32.mrb[0].mxu0
  %5550 = vmatprep.mubr.f32.mxu0 0.0
  %v5551 = vand.u32 %v5070, 4294901760
  %v5552 = vsub.f32 %v5070, %v5551
  %v5553 = vand.u32 %v5552, 4294901760
  %5554 = vmatmul.mubr.f32.gmra.mrb[0].mxu0 %v5553
  %v5555 = vpop.f32.mrb[0].mxu0
  %v5556 = vadd.f32 %v5448, %v5555
  %v5557 = vpop.f32.mrb[0].mxu0
  %5558 = vmatprep.mubr.f32.mxu0 0.0
  %v5559 = vand.u32 %v5073, 4294901760
  %v5560 = vsub.f32 %v5073, %v5559
  %v5561 = vand.u32 %v5560, 4294901760
  %5562 = vmatmul.mubr.f32.gmra.mrb[0].mxu0 %v5561
  %v5563 = vpop.f32.mrb[0].mxu0
  %v5564 = vadd.f32 %v5455, %v5563
  %v5565 = vpop.f32.mrb[0].mxu0
  %5566 = vdwg.mxu0
  %5567 = vmatprep.subr.mxu0 0.0
  %v5568 = vand.u32 %v4979, 4294901760
  %v5569 = vsub.f32 %v4979, %v5568
  %v5570 = vand.u32 %v5569, 4294901760
  %5571 = vmatpush1.msra.mxu0 %v5570
  %5572 = vmatprep.subr.mxu0 0.0
  %v5573 = vand.u32 %v4980, 4294901760
  %v5574 = vsub.f32 %v4980, %v5573
  %v5575 = vand.u32 %v5574, 4294901760
  %5576 = vmatpush1.msra.mxu0 %v5575
  %5577 = vmatprep.subr.mxu0 0.0
  %v5578 = vand.u32 %v4981, 4294901760
  %v5579 = vsub.f32 %v4981, %v5578
  %v5580 = vand.u32 %v5579, 4294901760
  %5581 = vmatpush1.msra.mxu0 %v5580
  %5582 = vmatprep.subr.mxu0 0.0
  %v5583 = vand.u32 %v4982, 4294901760
  %v5584 = vsub.f32 %v4982, %v5583
  %v5585 = vand.u32 %v5584, 4294901760
  %5586 = vmatpush1.msra.mxu0 %v5585
  %5587 = vmatprep.subr.mxu0 0.0
  %v5588 = vand.u32 %v4983, 4294901760
  %v5589 = vsub.f32 %v4983, %v5588
  %v5590 = vand.u32 %v5589, 4294901760
  %5591 = vmatpush1.msra.mxu0 %v5590
  %5592 = vmatprep.subr.mxu0 0.0
  %v5593 = vand.u32 %v4984, 4294901760
  %v5594 = vsub.f32 %v4984, %v5593
  %v5595 = vand.u32 %v5594, 4294901760
  %5596 = vmatpush1.msra.mxu0 %v5595
  %5597 = vmatprep.subr.mxu0 0.0
  %v5598 = vand.u32 %v4985, 4294901760
  %v5599 = vsub.f32 %v4985, %v5598
  %v5600 = vand.u32 %v5599, 4294901760
  %5601 = vmatpush1.msra.mxu0 %v5600
  %5602 = vmatprep.subr.mxu0 0.0
  %v5603 = vand.u32 %v4986, 4294901760
  %v5604 = vsub.f32 %v4986, %v5603
  %v5605 = vand.u32 %v5604, 4294901760
  %5606 = vmatpush1.msra.mxu0 %v5605
  %5607 = vmatprep.subr.mxu0 0.0
  %v5608 = vand.u32 %v4987, 4294901760
  %v5609 = vsub.f32 %v4987, %v5608
  %v5610 = vand.u32 %v5609, 4294901760
  %5611 = vmatpush1.msra.mxu0 %v5610
  %5612 = vmatprep.subr.mxu0 0.0
  %v5613 = vand.u32 %v4988, 4294901760
  %v5614 = vsub.f32 %v4988, %v5613
  %v5615 = vand.u32 %v5614, 4294901760
  %5616 = vmatpush1.msra.mxu0 %v5615
  %5617 = vmatprep.subr.mxu0 0.0
  %v5618 = vand.u32 %v4989, 4294901760
  %v5619 = vsub.f32 %v4989, %v5618
  %v5620 = vand.u32 %v5619, 4294901760
  %5621 = vmatpush1.msra.mxu0 %v5620
  %5622 = vmatprep.subr.mxu0 0.0
  %v5623 = vand.u32 %v4990, 4294901760
  %v5624 = vsub.f32 %v4990, %v5623
  %v5625 = vand.u32 %v5624, 4294901760
  %5626 = vmatpush1.msra.mxu0 %v5625
  %5627 = vmatprep.subr.mxu0 0.0
  %5628 = vmatpush1.msra.mxu0 0.0
  %5629 = vmatprep.subr.mxu0 0.0
  %5630 = vmatpush1.msra.mxu0 0.0
  %5631 = vmatprep.subr.mxu0 0.0
  %5632 = vmatpush1.msra.mxu0 0.0
  %5633 = vmatprep.subr.mxu0 0.0
  %5634 = vmatpush1.msra.mxu0 0.0
  %5635 = vmatprep.subr.mxu0 0.0
  %5636 = vmatpush1.msra.mxu0 0.0
  %5637 = vmatprep.subr.mxu0 0.0
  %5638 = vmatpush1.msra.mxu0 0.0
  %5639 = vmatprep.subr.mxu0 0.0
  %5640 = vmatpush1.msra.mxu0 0.0
  %5641 = vmatprep.subr.mxu0 0.0
  %5642 = vmatpush1.msra.mxu0 0.0
  %5643 = vmatprep.subr.mxu0 0.0
  %5644 = vmatpush1.msra.mxu0 0.0
  %5645 = vmatprep.subr.mxu0 0.0
  %5646 = vmatpush1.msra.mxu0 0.0
  %5647 = vmatprep.subr.mxu0 0.0
  %5648 = vmatpush1.msra.mxu0 0.0
  %5649 = vmatprep.subr.mxu0 0.0
  %5650 = vmatpush1.msra.mxu0 0.0
  %5651 = vmatprep.subr.mxu0 0.0
  %5652 = vmatpush1.msra.mxu0 0.0
  %5653 = vmatprep.subr.mxu0 0.0
  %5654 = vmatpush1.msra.mxu0 0.0
  %5655 = vmatprep.subr.mxu0 0.0
  %5656 = vmatpush1.msra.mxu0 0.0
  %5657 = vmatprep.subr.mxu0 0.0
  %5658 = vmatpush1.msra.mxu0 0.0
  %5659 = vmatprep.subr.mxu0 0.0
  %5660 = vmatpush1.msra.mxu0 0.0
  %5661 = vmatprep.subr.mxu0 0.0
  %5662 = vmatpush1.msra.mxu0 0.0
  %5663 = vmatprep.subr.mxu0 0.0
  %5664 = vmatpush1.msra.mxu0 0.0
  %5665 = vmatprep.subr.mxu0 0.0
  %5666 = vmatpush1.msra.mxu0 0.0
  %5667 = vmatprep.mubr.f32.mxu0 0.0
  %v5668 = vand.u32 %v5064, 4294901760
  %5669 = vmatmul.mubr.f32.gmra.mrb[0].mxu0 %v5668
  %v5670 = vpop.f32.mrb[0].mxu0
  %v5671 = vadd.f32 %v5540, %v5670
  %v5672 = vpop.f32.mrb[0].mxu0
  %5673 = vmatprep.mubr.f32.mxu0 0.0
  %v5674 = vand.u32 %v5067, 4294901760
  %5675 = vmatmul.mubr.f32.gmra.mrb[0].mxu0 %v5674
  %v5676 = vpop.f32.mrb[0].mxu0
  %v5677 = vadd.f32 %v5548, %v5676
  %v5678 = vpop.f32.mrb[0].mxu0
  %5679 = vmatprep.mubr.f32.mxu0 0.0
  %v5680 = vand.u32 %v5070, 4294901760
  %5681 = vmatmul.mubr.f32.gmra.mrb[0].mxu0 %v5680
  %v5682 = vpop.f32.mrb[0].mxu0
  %v5683 = vadd.f32 %v5556, %v5682
  %v5684 = vpop.f32.mrb[0].mxu0
  %5685 = vmatprep.mubr.f32.mxu0 0.0
  %v5686 = vand.u32 %v5073, 4294901760
  %5687 = vmatmul.mubr.f32.gmra.mrb[0].mxu0 %v5686
  %v5688 = vpop.f32.mrb[0].mxu0
  %v5689 = vadd.f32 %v5564, %v5688
  %v5690 = vpop.f32.mrb[0].mxu0
  %5691 = vdwg.mxu0
  %5692 = vmatprep.subr.mxu0 0.0
  %v5693 = vand.u32 %v4979, 4294901760
  %5694 = vmatpush1.msra.mxu0 %v5693
  %5695 = vmatprep.subr.mxu0 0.0
  %v5696 = vand.u32 %v4980, 4294901760
  %5697 = vmatpush1.msra.mxu0 %v5696
  %5698 = vmatprep.subr.mxu0 0.0
  %v5699 = vand.u32 %v4981, 4294901760
  %5700 = vmatpush1.msra.mxu0 %v5699
  %5701 = vmatprep.subr.mxu0 0.0
  %v5702 = vand.u32 %v4982, 4294901760
  %5703 = vmatpush1.msra.mxu0 %v5702
  %5704 = vmatprep.subr.mxu0 0.0
  %v5705 = vand.u32 %v4983, 4294901760
  %5706 = vmatpush1.msra.mxu0 %v5705
  %5707 = vmatprep.subr.mxu0 0.0
  %v5708 = vand.u32 %v4984, 4294901760
  %5709 = vmatpush1.msra.mxu0 %v5708
  %5710 = vmatprep.subr.mxu0 0.0
  %v5711 = vand.u32 %v4985, 4294901760
  %5712 = vmatpush1.msra.mxu0 %v5711
  %5713 = vmatprep.subr.mxu0 0.0
  %v5714 = vand.u32 %v4986, 4294901760
  %5715 = vmatpush1.msra.mxu0 %v5714
  %5716 = vmatprep.subr.mxu0 0.0
  %v5717 = vand.u32 %v4987, 4294901760
  %5718 = vmatpush1.msra.mxu0 %v5717
  %5719 = vmatprep.subr.mxu0 0.0
  %v5720 = vand.u32 %v4988, 4294901760
  %5721 = vmatpush1.msra.mxu0 %v5720
  %5722 = vmatprep.subr.mxu0 0.0
  %v5723 = vand.u32 %v4989, 4294901760
  %5724 = vmatpush1.msra.mxu0 %v5723
  %5725 = vmatprep.subr.mxu0 0.0
  %v5726 = vand.u32 %v4990, 4294901760
  %5727 = vmatpush1.msra.mxu0 %v5726
  %5728 = vmatprep.subr.mxu0 0.0
  %5729 = vmatpush1.msra.mxu0 0.0
  %5730 = vmatprep.subr.mxu0 0.0
  %5731 = vmatpush1.msra.mxu0 0.0
  %5732 = vmatprep.subr.mxu0 0.0
  %5733 = vmatpush1.msra.mxu0 0.0
  %5734 = vmatprep.subr.mxu0 0.0
  %5735 = vmatpush1.msra.mxu0 0.0
  %5736 = vmatprep.subr.mxu0 0.0
  %5737 = vmatpush1.msra.mxu0 0.0
  %5738 = vmatprep.subr.mxu0 0.0
  %5739 = vmatpush1.msra.mxu0 0.0
  %5740 = vmatprep.subr.mxu0 0.0
  %5741 = vmatpush1.msra.mxu0 0.0
  %5742 = vmatprep.subr.mxu0 0.0
  %5743 = vmatpush1.msra.mxu0 0.0
  %5744 = vmatprep.subr.mxu0 0.0
  %5745 = vmatpush1.msra.mxu0 0.0
  %5746 = vmatprep.subr.mxu0 0.0
  %5747 = vmatpush1.msra.mxu0 0.0
  %5748 = vmatprep.subr.mxu0 0.0
  %5749 = vmatpush1.msra.mxu0 0.0
  %5750 = vmatprep.subr.mxu0 0.0
  %5751 = vmatpush1.msra.mxu0 0.0
  %5752 = vmatprep.subr.mxu0 0.0
  %5753 = vmatpush1.msra.mxu0 0.0
  %5754 = vmatprep.subr.mxu0 0.0
  %5755 = vmatpush1.msra.mxu0 0.0
  %5756 = vmatprep.subr.mxu0 0.0
  %5757 = vmatpush1.msra.mxu0 0.0
  %5758 = vmatprep.subr.mxu0 0.0
  %5759 = vmatpush1.msra.mxu0 0.0
  %5760 = vmatprep.subr.mxu0 0.0
  %5761 = vmatpush1.msra.mxu0 0.0
  %5762 = vmatprep.subr.mxu0 0.0
  %5763 = vmatpush1.msra.mxu0 0.0
  %5764 = vmatprep.subr.mxu0 0.0
  %5765 = vmatpush1.msra.mxu0 0.0
  %5766 = vmatprep.subr.mxu0 0.0
  %5767 = vmatpush1.msra.mxu0 0.0
  %5768 = vmatprep.mubr.f32.mxu0 0.0
  %v5769 = vand.u32 %v5064, 4294901760
  %5770 = vmatmul.mubr.f32.gmra.mrb[0].mxu0 %v5769
  %v5771 = vpop.f32.mrb[0].mxu0
  %v5772 = vadd.f32 %v5671, %v5771
  %v5773 = vpop.f32.mrb[0].mxu0
  %5774 = vmatprep.mubr.f32.mxu0 0.0
  %v5775 = vand.u32 %v5067, 4294901760
  %5776 = vmatmul.mubr.f32.gmra.mrb[0].mxu0 %v5775
  %v5777 = vpop.f32.mrb[0].mxu0
  %v5778 = vadd.f32 %v5677, %v5777
  %v5779 = vpop.f32.mrb[0].mxu0
  %5780 = vmatprep.mubr.f32.mxu0 0.0
  %v5781 = vand.u32 %v5070, 4294901760
  %5782 = vmatmul.mubr.f32.gmra.mrb[0].mxu0 %v5781
  %v5783 = vpop.f32.mrb[0].mxu0
  %v5784 = vadd.f32 %v5683, %v5783
  %v5785 = vpop.f32.mrb[0].mxu0
  %5786 = vmatprep.mubr.f32.mxu0 0.0
  %v5787 = vand.u32 %v5073, 4294901760
  %5788 = vmatmul.mubr.f32.gmra.mrb[0].mxu0 %v5787
  %v5789 = vpop.f32.mrb[0].mxu0
  %v5790 = vadd.f32 %v5689, %v5789
  %v5791 = vpop.f32.mrb[0].mxu0
  %5792 = vdwg.mxu0
  %v5793 = vadd.f32 %v5772, %v4155
  %v5794 = vadd.f32 %v5778, %v4156
  %v5795 = vadd.f32 %v5784, %v4157
  %v5796 = vadd.f32 %v5790, %v4158
  %v5797 = vmax.f32 %v5793, 0.0
  %v5798 = vmax.f32 %v5794, 0.0
  %v5799 = vmax.f32 %v5795, 0.0
  %v5800 = vmax.f32 %v5796, 0.0
  %v5801 = vsel %vm82, %v5797, 0.0
  %v5802 = vsel %vm82, %v5798, 0.0
  %v5803 = vadd.f32 %v5801, %v5802
  %v5804 = vrot.slane %v5803, 4
  %v5805 = vadd.f32 %v5803, %v5804
  %v5806 = vrot.slane %v5805, 2
  %v5807 = vadd.f32 %v5805, %v5806
  %v5808 = vrot.slane %v5807, 1
  %v5809 = vadd.f32 %v5807, %v5808
  %v5810 = vrcp.pop 16.0
  %v5811 = vmul.f32 %v5809, %v5810
  %vm5812 = vcmask 253952
  %5813 = vst.msk [vmem:[#allocation6] sm:$0x1] %vm5812, %v5811
  %v5814 = vsel %vm82, %v5799, 0.0
  %v5815 = vsel %vm82, %v5800, 0.0
  %v5816 = vadd.f32 %v5814, %v5815
  %v5817 = vrot.slane %v5816, 4
  %v5818 = vadd.f32 %v5816, %v5817
  %v5819 = vrot.slane %v5818, 2
  %v5820 = vadd.f32 %v5818, %v5819
  %v5821 = vrot.slane %v5820, 1
  %v5822 = vadd.f32 %v5820, %v5821
  %v5823 = vmul.f32 %v5822, %v5810
  %5824 = vst.msk [vmem:[#allocation6 + $0x1] sm:$0x1] %vm5812, %v5823
  %v5825 = vld [vmem:[#allocation6] sm:$0x3]
  %v5826 = vld [vmem:[%s8] sm:$0xff]
  %v5827 = vld [vmem:[%s8 + $0x8] sm:$0xff]
  %v5828 = vld [vmem:[%s8 + $0x10] sm:$0xff]
  %v5829 = vld [vmem:[%s8 + $0x18] sm:$0xff]
  %v5830 = vld [vmem:[%s9] sm:$0x1]
  %v5832 = vlaneseq
  %v5833 = vshrl.u32 %v5832, 7
  %v5834 = vsub.s32 0, %v5833
  %v5835 = vrot.slane %v5830, %v5834
  %v5838 = vsel %vm82, %v5825, 0
  %5840 = vmatprep.subr.mxu0 0.0
  %v5841 = vand.u32 %v5826, 4294901760
  %5842 = vmatpush1.msra.mxu0 %v5841
  %5843 = vmatprep.subr.mxu0 0.0
  %v5844 = vand.u32 %v5827, 4294901760
  %5845 = vmatpush1.msra.mxu0 %v5844
  %5846 = vmatprep.subr.mxu0 0.0
  %v5847 = vand.u32 %v5828, 4294901760
  %5848 = vmatpush1.msra.mxu0 %v5847
  %5849 = vmatprep.subr.mxu0 0.0
  %v5850 = vand.u32 %v5829, 4294901760
  %5851 = vmatpush1.msra.mxu0 %v5850
  %5852 = vmatprep.subr.mxu0 0.0
  %5853 = vmatpush1.msra.mxu0 0.0
  %5854 = vmatprep.subr.mxu0 0.0
  %5855 = vmatpush1.msra.mxu0 0.0
  %5856 = vmatprep.subr.mxu0 0.0
  %5857 = vmatpush1.msra.mxu0 0.0
  %5858 = vmatprep.subr.mxu0 0.0
  %5859 = vmatpush1.msra.mxu0 0.0
  %5860 = vmatprep.subr.mxu0 0.0
  %5861 = vmatpush1.msra.mxu0 0.0
  %5862 = vmatprep.subr.mxu0 0.0
  %5863 = vmatpush1.msra.mxu0 0.0
  %5864 = vmatprep.subr.mxu0 0.0
  %5865 = vmatpush1.msra.mxu0 0.0
  %5866 = vmatprep.subr.mxu0 0.0
  %5867 = vmatpush1.msra.mxu0 0.0
  %5868 = vmatprep.subr.mxu0 0.0
  %5869 = vmatpush1.msra.mxu0 0.0
  %5870 = vmatprep.subr.mxu0 0.0
  %5871 = vmatpush1.msra.mxu0 0.0
  %5872 = vmatprep.subr.mxu0 0.0
  %5873 = vmatpush1.msra.mxu0 0.0
  %5874 = vmatprep.subr.mxu0 0.0
  %5875 = vmatpush1.msra.mxu0 0.0
  %5876 = vmatprep.subr.mxu0 0.0
  %5877 = vmatpush1.msra.mxu0 0.0
  %5878 = vmatprep.subr.mxu0 0.0
  %5879 = vmatpush1.msra.mxu0 0.0
  %5880 = vmatprep.subr.mxu0 0.0
  %5881 = vmatpush1.msra.mxu0 0.0
  %5882 = vmatprep.subr.mxu0 0.0
  %5883 = vmatpush1.msra.mxu0 0.0
  %5884 = vmatprep.subr.mxu0 0.0
  %5885 = vmatpush1.msra.mxu0 0.0
  %5886 = vmatprep.subr.mxu0 0.0
  %5887 = vmatpush1.msra.mxu0 0.0
  %5888 = vmatprep.subr.mxu0 0.0
  %5889 = vmatpush1.msra.mxu0 0.0
  %5890 = vmatprep.subr.mxu0 0.0
  %5891 = vmatpush1.msra.mxu0 0.0
  %5892 = vmatprep.subr.mxu0 0.0
  %5893 = vmatpush1.msra.mxu0 0.0
  %5894 = vmatprep.subr.mxu0 0.0
  %5895 = vmatpush1.msra.mxu0 0.0
  %5896 = vmatprep.subr.mxu0 0.0
  %5897 = vmatpush1.msra.mxu0 0.0
  %5898 = vmatprep.subr.mxu0 0.0
  %5899 = vmatpush1.msra.mxu0 0.0
  %5900 = vmatprep.subr.mxu0 0.0
  %5901 = vmatpush1.msra.mxu0 0.0
  %5902 = vmatprep.subr.mxu0 0.0
  %5903 = vmatpush1.msra.mxu0 0.0
  %5904 = vmatprep.subr.mxu0 0.0
  %5905 = vmatpush1.msra.mxu0 0.0
  %5906 = vmatprep.subr.mxu0 0.0
  %5907 = vmatpush1.msra.mxu0 0.0
  %5908 = vmatprep.mubr.f32.mxu0 0.0
  %v5909 = vand.u32 %v5838, 4294901760
  %v5910 = vsub.f32 %v5838, %v5909
  %v5911 = vand.u32 %v5910, 4294901760
  %v5912 = vsub.f32 %v5910, %v5911
  %v5913 = vand.u32 %v5912, 4294901760
  %5914 = vmatmul.mubr.f32.gmra.mrb[0].mxu0 %v5913
  %v5915 = vpop.f32.mrb[0].mxu0
  %v5916 = vadd.f32 %v5835, %v5915
  %v5917 = vpop.f32.mrb[0].mxu0
  %5918 = vdwg.mxu0
  %5919 = vmatprep.subr.mxu0 0.0
  %v5920 = vand.u32 %v5826, 4294901760
  %v5921 = vsub.f32 %v5826, %v5920
  %v5922 = vand.u32 %v5921, 4294901760
  %v5923 = vsub.f32 %v5921, %v5922
  %v5924 = vand.u32 %v5923, 4294901760
  %5925 = vmatpush1.msra.mxu0 %v5924
  %5926 = vmatprep.subr.mxu0 0.0
  %v5927 = vand.u32 %v5827, 4294901760
  %v5928 = vsub.f32 %v5827, %v5927
  %v5929 = vand.u32 %v5928, 4294901760
  %v5930 = vsub.f32 %v5928, %v5929
  %v5931 = vand.u32 %v5930, 4294901760
  %5932 = vmatpush1.msra.mxu0 %v5931
  %5933 = vmatprep.subr.mxu0 0.0
  %v5934 = vand.u32 %v5828, 4294901760
  %v5935 = vsub.f32 %v5828, %v5934
  %v5936 = vand.u32 %v5935, 4294901760
  %v5937 = vsub.f32 %v5935, %v5936
  %v5938 = vand.u32 %v5937, 4294901760
  %5939 = vmatpush1.msra.mxu0 %v5938
  %5940 = vmatprep.subr.mxu0 0.0
  %v5941 = vand.u32 %v5829, 4294901760
  %v5942 = vsub.f32 %v5829, %v5941
  %v5943 = vand.u32 %v5942, 4294901760
  %v5944 = vsub.f32 %v5942, %v5943
  %v5945 = vand.u32 %v5944, 4294901760
  %5946 = vmatpush1.msra.mxu0 %v5945
  %5947 = vmatprep.subr.mxu0 0.0
  %5948 = vmatpush1.msra.mxu0 0.0
  %5949 = vmatprep.subr.mxu0 0.0
  %5950 = vmatpush1.msra.mxu0 0.0
  %5951 = vmatprep.subr.mxu0 0.0
  %5952 = vmatpush1.msra.mxu0 0.0
  %5953 = vmatprep.subr.mxu0 0.0
  %5954 = vmatpush1.msra.mxu0 0.0
  %5955 = vmatprep.subr.mxu0 0.0
  %5956 = vmatpush1.msra.mxu0 0.0
  %5957 = vmatprep.subr.mxu0 0.0
  %5958 = vmatpush1.msra.mxu0 0.0
  %5959 = vmatprep.subr.mxu0 0.0
  %5960 = vmatpush1.msra.mxu0 0.0
  %5961 = vmatprep.subr.mxu0 0.0
  %5962 = vmatpush1.msra.mxu0 0.0
  %5963 = vmatprep.subr.mxu0 0.0
  %5964 = vmatpush1.msra.mxu0 0.0
  %5965 = vmatprep.subr.mxu0 0.0
  %5966 = vmatpush1.msra.mxu0 0.0
  %5967 = vmatprep.subr.mxu0 0.0
  %5968 = vmatpush1.msra.mxu0 0.0
  %5969 = vmatprep.subr.mxu0 0.0
  %5970 = vmatpush1.msra.mxu0 0.0
  %5971 = vmatprep.subr.mxu0 0.0
  %5972 = vmatpush1.msra.mxu0 0.0
  %5973 = vmatprep.subr.mxu0 0.0
  %5974 = vmatpush1.msra.mxu0 0.0
  %5975 = vmatprep.subr.mxu0 0.0
  %5976 = vmatpush1.msra.mxu0 0.0
  %5977 = vmatprep.subr.mxu0 0.0
  %5978 = vmatpush1.msra.mxu0 0.0
  %5979 = vmatprep.subr.mxu0 0.0
  %5980 = vmatpush1.msra.mxu0 0.0
  %5981 = vmatprep.subr.mxu0 0.0
  %5982 = vmatpush1.msra.mxu0 0.0
  %5983 = vmatprep.subr.mxu0 0.0
  %5984 = vmatpush1.msra.mxu0 0.0
  %5985 = vmatprep.subr.mxu0 0.0
  %5986 = vmatpush1.msra.mxu0 0.0
  %5987 = vmatprep.subr.mxu0 0.0
  %5988 = vmatpush1.msra.mxu0 0.0
  %5989 = vmatprep.subr.mxu0 0.0
  %5990 = vmatpush1.msra.mxu0 0.0
  %5991 = vmatprep.subr.mxu0 0.0
  %5992 = vmatpush1.msra.mxu0 0.0
  %5993 = vmatprep.subr.mxu0 0.0
  %5994 = vmatpush1.msra.mxu0 0.0
  %5995 = vmatprep.subr.mxu0 0.0
  %5996 = vmatpush1.msra.mxu0 0.0
  %5997 = vmatprep.subr.mxu0 0.0
  %5998 = vmatpush1.msra.mxu0 0.0
  %5999 = vmatprep.subr.mxu0 0.0
  %6000 = vmatpush1.msra.mxu0 0.0
  %6001 = vmatprep.subr.mxu0 0.0
  %6002 = vmatpush1.msra.mxu0 0.0
  %6003 = vmatprep.mubr.f32.mxu0 0.0
  %v6004 = vand.u32 %v5838, 4294901760
  %6005 = vmatmul.mubr.f32.gmra.mrb[0].mxu0 %v6004
  %v6006 = vpop.f32.mrb[0].mxu0
  %v6007 = vadd.f32 %v5916, %v6006
  %v6008 = vpop.f32.mrb[0].mxu0
  %6009 = vdwg.mxu0
  %6010 = vmatprep.subr.mxu0 0.0
  %v6011 = vand.u32 %v5826, 4294901760
  %v6012 = vsub.f32 %v5826, %v6011
  %6013 = vmatpush1.msra.mxu0 %v6012
  %6014 = vmatprep.subr.mxu0 0.0
  %v6015 = vand.u32 %v5827, 4294901760
  %v6016 = vsub.f32 %v5827, %v6015
  %6017 = vmatpush1.msra.mxu0 %v6016
  %6018 = vmatprep.subr.mxu0 0.0
  %v6019 = vand.u32 %v5828, 4294901760
  %v6020 = vsub.f32 %v5828, %v6019
  %6021 = vmatpush1.msra.mxu0 %v6020
  %6022 = vmatprep.subr.mxu0 0.0
  %v6023 = vand.u32 %v5829, 4294901760
  %v6024 = vsub.f32 %v5829, %v6023
  %6025 = vmatpush1.msra.mxu0 %v6024
  %6026 = vmatprep.subr.mxu0 0.0
  %6027 = vmatpush1.msra.mxu0 0.0
  %6028 = vmatprep.subr.mxu0 0.0
  %6029 = vmatpush1.msra.mxu0 0.0
  %6030 = vmatprep.subr.mxu0 0.0
  %6031 = vmatpush1.msra.mxu0 0.0
  %6032 = vmatprep.subr.mxu0 0.0
  %6033 = vmatpush1.msra.mxu0 0.0
  %6034 = vmatprep.subr.mxu0 0.0
  %6035 = vmatpush1.msra.mxu0 0.0
  %6036 = vmatprep.subr.mxu0 0.0
  %6037 = vmatpush1.msra.mxu0 0.0
  %6038 = vmatprep.subr.mxu0 0.0
  %6039 = vmatpush1.msra.mxu0 0.0
  %6040 = vmatprep.subr.mxu0 0.0
  %6041 = vmatpush1.msra.mxu0 0.0
  %6042 = vmatprep.subr.mxu0 0.0
  %6043 = vmatpush1.msra.mxu0 0.0
  %6044 = vmatprep.subr.mxu0 0.0
  %6045 = vmatpush1.msra.mxu0 0.0
  %6046 = vmatprep.subr.mxu0 0.0
  %6047 = vmatpush1.msra.mxu0 0.0
  %6048 = vmatprep.subr.mxu0 0.0
  %6049 = vmatpush1.msra.mxu0 0.0
  %6050 = vmatprep.subr.mxu0 0.0
  %6051 = vmatpush1.msra.mxu0 0.0
  %6052 = vmatprep.subr.mxu0 0.0
  %6053 = vmatpush1.msra.mxu0 0.0
  %6054 = vmatprep.subr.mxu0 0.0
  %6055 = vmatpush1.msra.mxu0 0.0
  %6056 = vmatprep.subr.mxu0 0.0
  %6057 = vmatpush1.msra.mxu0 0.0
  %6058 = vmatprep.subr.mxu0 0.0
  %6059 = vmatpush1.msra.mxu0 0.0
  %6060 = vmatprep.subr.mxu0 0.0
  %6061 = vmatpush1.msra.mxu0 0.0
  %6062 = vmatprep.subr.mxu0 0.0
  %6063 = vmatpush1.msra.mxu0 0.0
  %6064 = vmatprep.subr.mxu0 0.0
  %6065 = vmatpush1.msra.mxu0 0.0
  %6066 = vmatprep.subr.mxu0 0.0
  %6067 = vmatpush1.msra.mxu0 0.0
  %6068 = vmatprep.subr.mxu0 0.0
  %6069 = vmatpush1.msra.mxu0 0.0
  %6070 = vmatprep.subr.mxu0 0.0
  %6071 = vmatpush1.msra.mxu0 0.0
  %6072 = vmatprep.subr.mxu0 0.0
  %6073 = vmatpush1.msra.mxu0 0.0
  %6074 = vmatprep.subr.mxu0 0.0
  %6075 = vmatpush1.msra.mxu0 0.0
  %6076 = vmatprep.subr.mxu0 0.0
  %6077 = vmatpush1.msra.mxu0 0.0
  %6078 = vmatprep.subr.mxu0 0.0
  %6079 = vmatpush1.msra.mxu0 0.0
  %6080 = vmatprep.subr.mxu0 0.0
  %6081 = vmatpush1.msra.mxu0 0.0
  %6082 = vmatprep.mubr.f32.mxu0 0.0
  %v6083 = vand.u32 %v5838, 4294901760
  %v6084 = vsub.f32 %v5838, %v6083
  %6085 = vmatmul.mubr.f32.gmra.mrb[0].mxu0 %v6084
  %v6086 = vpop.f32.mrb[0].mxu0
  %v6087 = vadd.f32 %v6007, %v6086
  %v6088 = vpop.f32.mrb[0].mxu0
  %6089 = vdwg.mxu0
  %6090 = vmatprep.subr.mxu0 0.0
  %v6091 = vand.u32 %v5826, 4294901760
  %6092 = vmatpush1.msra.mxu0 %v6091
  %6093 = vmatprep.subr.mxu0 0.0
  %v6094 = vand.u32 %v5827, 4294901760
  %6095 = vmatpush1.msra.mxu0 %v6094
  %6096 = vmatprep.subr.mxu0 0.0
  %v6097 = vand.u32 %v5828, 4294901760
  %6098 = vmatpush1.msra.mxu0 %v6097
  %6099 = vmatprep.subr.mxu0 0.0
  %v6100 = vand.u32 %v5829, 4294901760
  %6101 = vmatpush1.msra.mxu0 %v6100
  %6102 = vmatprep.subr.mxu0 0.0
  %6103 = vmatpush1.msra.mxu0 0.0
  %6104 = vmatprep.subr.mxu0 0.0
  %6105 = vmatpush1.msra.mxu0 0.0
  %6106 = vmatprep.subr.mxu0 0.0
  %6107 = vmatpush1.msra.mxu0 0.0
  %6108 = vmatprep.subr.mxu0 0.0
  %6109 = vmatpush1.msra.mxu0 0.0
  %6110 = vmatprep.subr.mxu0 0.0
  %6111 = vmatpush1.msra.mxu0 0.0
  %6112 = vmatprep.subr.mxu0 0.0
  %6113 = vmatpush1.msra.mxu0 0.0
  %6114 = vmatprep.subr.mxu0 0.0
  %6115 = vmatpush1.msra.mxu0 0.0
  %6116 = vmatprep.subr.mxu0 0.0
  %6117 = vmatpush1.msra.mxu0 0.0
  %6118 = vmatprep.subr.mxu0 0.0
  %6119 = vmatpush1.msra.mxu0 0.0
  %6120 = vmatprep.subr.mxu0 0.0
  %6121 = vmatpush1.msra.mxu0 0.0
  %6122 = vmatprep.subr.mxu0 0.0
  %6123 = vmatpush1.msra.mxu0 0.0
  %6124 = vmatprep.subr.mxu0 0.0
  %6125 = vmatpush1.msra.mxu0 0.0
  %6126 = vmatprep.subr.mxu0 0.0
  %6127 = vmatpush1.msra.mxu0 0.0
  %6128 = vmatprep.subr.mxu0 0.0
  %6129 = vmatpush1.msra.mxu0 0.0
  %6130 = vmatprep.subr.mxu0 0.0
  %6131 = vmatpush1.msra.mxu0 0.0
  %6132 = vmatprep.subr.mxu0 0.0
  %6133 = vmatpush1.msra.mxu0 0.0
  %6134 = vmatprep.subr.mxu0 0.0
  %6135 = vmatpush1.msra.mxu0 0.0
  %6136 = vmatprep.subr.mxu0 0.0
  %6137 = vmatpush1.msra.mxu0 0.0
  %6138 = vmatprep.subr.mxu0 0.0
  %6139 = vmatpush1.msra.mxu0 0.0
  %6140 = vmatprep.subr.mxu0 0.0
  %6141 = vmatpush1.msra.mxu0 0.0
  %6142 = vmatprep.subr.mxu0 0.0
  %6143 = vmatpush1.msra.mxu0 0.0
  %6144 = vmatprep.subr.mxu0 0.0
  %6145 = vmatpush1.msra.mxu0 0.0
  %6146 = vmatprep.subr.mxu0 0.0
  %6147 = vmatpush1.msra.mxu0 0.0
  %6148 = vmatprep.subr.mxu0 0.0
  %6149 = vmatpush1.msra.mxu0 0.0
  %6150 = vmatprep.subr.mxu0 0.0
  %6151 = vmatpush1.msra.mxu0 0.0
  %6152 = vmatprep.subr.mxu0 0.0
  %6153 = vmatpush1.msra.mxu0 0.0
  %6154 = vmatprep.subr.mxu0 0.0
  %6155 = vmatpush1.msra.mxu0 0.0
  %6156 = vmatprep.subr.mxu0 0.0
  %6157 = vmatpush1.msra.mxu0 0.0
  %6158 = vmatprep.mubr.f32.mxu0 0.0
  %v6159 = vand.u32 %v5838, 4294901760
  %v6160 = vsub.f32 %v5838, %v6159
  %v6161 = vand.u32 %v6160, 4294901760
  %6162 = vmatmul.mubr.f32.gmra.mrb[0].mxu0 %v6161
  %v6163 = vpop.f32.mrb[0].mxu0
  %v6164 = vadd.f32 %v6087, %v6163
  %v6165 = vpop.f32.mrb[0].mxu0
  %6166 = vdwg.mxu0
  %6167 = vmatprep.subr.mxu0 0.0
  %v6168 = vand.u32 %v5826, 4294901760
  %v6169 = vsub.f32 %v5826, %v6168
  %v6170 = vand.u32 %v6169, 4294901760
  %6171 = vmatpush1.msra.mxu0 %v6170
  %6172 = vmatprep.subr.mxu0 0.0
  %v6173 = vand.u32 %v5827, 4294901760
  %v6174 = vsub.f32 %v5827, %v6173
  %v6175 = vand.u32 %v6174, 4294901760
  %6176 = vmatpush1.msra.mxu0 %v6175
  %6177 = vmatprep.subr.mxu0 0.0
  %v6178 = vand.u32 %v5828, 4294901760
  %v6179 = vsub.f32 %v5828, %v6178
  %v6180 = vand.u32 %v6179, 4294901760
  %6181 = vmatpush1.msra.mxu0 %v6180
  %6182 = vmatprep.subr.mxu0 0.0
  %v6183 = vand.u32 %v5829, 4294901760
  %v6184 = vsub.f32 %v5829, %v6183
  %v6185 = vand.u32 %v6184, 4294901760
  %6186 = vmatpush1.msra.mxu0 %v6185
  %6187 = vmatprep.subr.mxu0 0.0
  %6188 = vmatpush1.msra.mxu0 0.0
  %6189 = vmatprep.subr.mxu0 0.0
  %6190 = vmatpush1.msra.mxu0 0.0
  %6191 = vmatprep.subr.mxu0 0.0
  %6192 = vmatpush1.msra.mxu0 0.0
  %6193 = vmatprep.subr.mxu0 0.0
  %6194 = vmatpush1.msra.mxu0 0.0
  %6195 = vmatprep.subr.mxu0 0.0
  %6196 = vmatpush1.msra.mxu0 0.0
  %6197 = vmatprep.subr.mxu0 0.0
  %6198 = vmatpush1.msra.mxu0 0.0
  %6199 = vmatprep.subr.mxu0 0.0
  %6200 = vmatpush1.msra.mxu0 0.0
  %6201 = vmatprep.subr.mxu0 0.0
  %6202 = vmatpush1.msra.mxu0 0.0
  %6203 = vmatprep.subr.mxu0 0.0
  %6204 = vmatpush1.msra.mxu0 0.0
  %6205 = vmatprep.subr.mxu0 0.0
  %6206 = vmatpush1.msra.mxu0 0.0
  %6207 = vmatprep.subr.mxu0 0.0
  %6208 = vmatpush1.msra.mxu0 0.0
  %6209 = vmatprep.subr.mxu0 0.0
  %6210 = vmatpush1.msra.mxu0 0.0
  %6211 = vmatprep.subr.mxu0 0.0
  %6212 = vmatpush1.msra.mxu0 0.0
  %6213 = vmatprep.subr.mxu0 0.0
  %6214 = vmatpush1.msra.mxu0 0.0
  %6215 = vmatprep.subr.mxu0 0.0
  %6216 = vmatpush1.msra.mxu0 0.0
  %6217 = vmatprep.subr.mxu0 0.0
  %6218 = vmatpush1.msra.mxu0 0.0
  %6219 = vmatprep.subr.mxu0 0.0
  %6220 = vmatpush1.msra.mxu0 0.0
  %6221 = vmatprep.subr.mxu0 0.0
  %6222 = vmatpush1.msra.mxu0 0.0
  %6223 = vmatprep.subr.mxu0 0.0
  %6224 = vmatpush1.msra.mxu0 0.0
  %6225 = vmatprep.subr.mxu0 0.0
  %6226 = vmatpush1.msra.mxu0 0.0
  %6227 = vmatprep.subr.mxu0 0.0
  %6228 = vmatpush1.msra.mxu0 0.0
  %6229 = vmatprep.subr.mxu0 0.0
  %6230 = vmatpush1.msra.mxu0 0.0
  %6231 = vmatprep.subr.mxu0 0.0
  %6232 = vmatpush1.msra.mxu0 0.0
  %6233 = vmatprep.subr.mxu0 0.0
  %6234 = vmatpush1.msra.mxu0 0.0
  %6235 = vmatprep.subr.mxu0 0.0
  %6236 = vmatpush1.msra.mxu0 0.0
  %6237 = vmatprep.subr.mxu0 0.0
  %6238 = vmatpush1.msra.mxu0 0.0
  %6239 = vmatprep.subr.mxu0 0.0
  %6240 = vmatpush1.msra.mxu0 0.0
  %6241 = vmatprep.subr.mxu0 0.0
  %6242 = vmatpush1.msra.mxu0 0.0
  %6243 = vmatprep.mubr.f32.mxu0 0.0
  %v6244 = vand.u32 %v5838, 4294901760
  %6245 = vmatmul.mubr.f32.gmra.mrb[0].mxu0 %v6244
  %v6246 = vpop.f32.mrb[0].mxu0
  %v6247 = vadd.f32 %v6164, %v6246
  %v6248 = vpop.f32.mrb[0].mxu0
  %6249 = vdwg.mxu0
  %6250 = vmatprep.subr.mxu0 0.0
  %v6251 = vand.u32 %v5826, 4294901760
  %6252 = vmatpush1.msra.mxu0 %v6251
  %6253 = vmatprep.subr.mxu0 0.0
  %v6254 = vand.u32 %v5827, 4294901760
  %6255 = vmatpush1.msra.mxu0 %v6254
  %6256 = vmatprep.subr.mxu0 0.0
  %v6257 = vand.u32 %v5828, 4294901760
  %6258 = vmatpush1.msra.mxu0 %v6257
  %6259 = vmatprep.subr.mxu0 0.0
  %v6260 = vand.u32 %v5829, 4294901760
  %6261 = vmatpush1.msra.mxu0 %v6260
  %6262 = vmatprep.subr.mxu0 0.0
  %6263 = vmatpush1.msra.mxu0 0.0
  %6264 = vmatprep.subr.mxu0 0.0
  %6265 = vmatpush1.msra.mxu0 0.0
  %6266 = vmatprep.subr.mxu0 0.0
  %6267 = vmatpush1.msra.mxu0 0.0
  %6268 = vmatprep.subr.mxu0 0.0
  %6269 = vmatpush1.msra.mxu0 0.0
  %6270 = vmatprep.subr.mxu0 0.0
  %6271 = vmatpush1.msra.mxu0 0.0
  %6272 = vmatprep.subr.mxu0 0.0
  %6273 = vmatpush1.msra.mxu0 0.0
  %6274 = vmatprep.subr.mxu0 0.0
  %6275 = vmatpush1.msra.mxu0 0.0
  %6276 = vmatprep.subr.mxu0 0.0
  %6277 = vmatpush1.msra.mxu0 0.0
  %6278 = vmatprep.subr.mxu0 0.0
  %6279 = vmatpush1.msra.mxu0 0.0
  %6280 = vmatprep.subr.mxu0 0.0
  %6281 = vmatpush1.msra.mxu0 0.0
  %6282 = vmatprep.subr.mxu0 0.0
  %6283 = vmatpush1.msra.mxu0 0.0
  %6284 = vmatprep.subr.mxu0 0.0
  %6285 = vmatpush1.msra.mxu0 0.0
  %6286 = vmatprep.subr.mxu0 0.0
  %6287 = vmatpush1.msra.mxu0 0.0
  %6288 = vmatprep.subr.mxu0 0.0
  %6289 = vmatpush1.msra.mxu0 0.0
  %6290 = vmatprep.subr.mxu0 0.0
  %6291 = vmatpush1.msra.mxu0 0.0
  %6292 = vmatprep.subr.mxu0 0.0
  %6293 = vmatpush1.msra.mxu0 0.0
  %6294 = vmatprep.subr.mxu0 0.0
  %6295 = vmatpush1.msra.mxu0 0.0
  %6296 = vmatprep.subr.mxu0 0.0
  %6297 = vmatpush1.msra.mxu0 0.0
  %6298 = vmatprep.subr.mxu0 0.0
  %6299 = vmatpush1.msra.mxu0 0.0
  %6300 = vmatprep.subr.mxu0 0.0
  %6301 = vmatpush1.msra.mxu0 0.0
  %6302 = vmatprep.subr.mxu0 0.0
  %6303 = vmatpush1.msra.mxu0 0.0
  %6304 = vmatprep.subr.mxu0 0.0
  %6305 = vmatpush1.msra.mxu0 0.0
  %6306 = vmatprep.subr.mxu0 0.0
  %6307 = vmatpush1.msra.mxu0 0.0
  %6308 = vmatprep.subr.mxu0 0.0
  %6309 = vmatpush1.msra.mxu0 0.0
  %6310 = vmatprep.subr.mxu0 0.0
  %6311 = vmatpush1.msra.mxu0 0.0
  %6312 = vmatprep.subr.mxu0 0.0
  %6313 = vmatpush1.msra.mxu0 0.0
  %6314 = vmatprep.subr.mxu0 0.0
  %6315 = vmatpush1.msra.mxu0 0.0
  %6316 = vmatprep.subr.mxu0 0.0
  %6317 = vmatpush1.msra.mxu0 0.0
  %6318 = vmatprep.mubr.f32.mxu0 0.0
  %v6319 = vand.u32 %v5838, 4294901760
  %6320 = vmatmul.mubr.f32.gmra.mrb[0].mxu0 %v6319
  %v6321 = vpop.f32.mrb[0].mxu0
  %v6322 = vadd.f32 %v6247, %v6321
  %v6323 = vpop.f32.mrb[0].mxu0
  %6324 = vdwg.mxu0
  %v6325 = vld [vmem:[%s1] sm:$0x3]
  %v6326 = vld [vmem:[%s10] sm:$0xff]
  %v6327 = vld [vmem:[%s10 + $0x8] sm:$0xff]
  %v6328 = vld [vmem:[%s10 + $0x10] sm:$0xff]
  %v6329 = vld [vmem:[%s10 + $0x18] sm:$0xff]
  %v6330 = vld [vmem:[%s11] sm:$0x1]
  %v6332 = vlaneseq
  %v6333 = vshrl.u32 %v6332, 7
  %v6334 = vsub.s32 0, %v6333
  %v6335 = vrot.slane %v6330, %v6334
  %v6338 = vsel %vm82, %v6325, 0
  %6340 = vmatprep.subr.mxu0 0.0
  %v6341 = vand.u32 %v6326, 4294901760
  %6342 = vmatpush1.msra.mxu0 %v6341
  %6343 = vmatprep.subr.mxu0 0.0
  %v6344 = vand.u32 %v6327, 4294901760
  %6345 = vmatpush1.msra.mxu0 %v6344
  %6346 = vmatprep.subr.mxu0 0.0
  %v6347 = vand.u32 %v6328, 4294901760
  %6348 = vmatpush1.msra.mxu0 %v6347
  %6349 = vmatprep.subr.mxu0 0.0
  %v6350 = vand.u32 %v6329, 4294901760
  %6351 = vmatpush1.msra.mxu0 %v6350
  %6352 = vmatprep.subr.mxu0 0.0
  %6353 = vmatpush1.msra.mxu0 0.0
  %6354 = vmatprep.subr.mxu0 0.0
  %6355 = vmatpush1.msra.mxu0 0.0
  %6356 = vmatprep.subr.mxu0 0.0
  %6357 = vmatpush1.msra.mxu0 0.0
  %6358 = vmatprep.subr.mxu0 0.0
  %6359 = vmatpush1.msra.mxu0 0.0
  %6360 = vmatprep.subr.mxu0 0.0
  %6361 = vmatpush1.msra.mxu0 0.0
  %6362 = vmatprep.subr.mxu0 0.0
  %6363 = vmatpush1.msra.mxu0 0.0
  %6364 = vmatprep.subr.mxu0 0.0
  %6365 = vmatpush1.msra.mxu0 0.0
  %6366 = vmatprep.subr.mxu0 0.0
  %6367 = vmatpush1.msra.mxu0 0.0
  %6368 = vmatprep.subr.mxu0 0.0
  %6369 = vmatpush1.msra.mxu0 0.0
  %6370 = vmatprep.subr.mxu0 0.0
  %6371 = vmatpush1.msra.mxu0 0.0
  %6372 = vmatprep.subr.mxu0 0.0
  %6373 = vmatpush1.msra.mxu0 0.0
  %6374 = vmatprep.subr.mxu0 0.0
  %6375 = vmatpush1.msra.mxu0 0.0
  %6376 = vmatprep.subr.mxu0 0.0
  %6377 = vmatpush1.msra.mxu0 0.0
  %6378 = vmatprep.subr.mxu0 0.0
  %6379 = vmatpush1.msra.mxu0 0.0
  %6380 = vmatprep.subr.mxu0 0.0
  %6381 = vmatpush1.msra.mxu0 0.0
  %6382 = vmatprep.subr.mxu0 0.0
  %6383 = vmatpush1.msra.mxu0 0.0
  %6384 = vmatprep.subr.mxu0 0.0
  %6385 = vmatpush1.msra.mxu0 0.0
  %6386 = vmatprep.subr.mxu0 0.0
  %6387 = vmatpush1.msra.mxu0 0.0
  %6388 = vmatprep.subr.mxu0 0.0
  %6389 = vmatpush1.msra.mxu0 0.0
  %6390 = vmatprep.subr.mxu0 0.0
  %6391 = vmatpush1.msra.mxu0 0.0
  %6392 = vmatprep.subr.mxu0 0.0
  %6393 = vmatpush1.msra.mxu0 0.0
  %6394 = vmatprep.subr.mxu0 0.0
  %6395 = vmatpush1.msra.mxu0 0.0
  %6396 = vmatprep.subr.mxu0 0.0
  %6397 = vmatpush1.msra.mxu0 0.0
  %6398 = vmatprep.subr.mxu0 0.0
  %6399 = vmatpush1.msra.mxu0 0.0
  %6400 = vmatprep.subr.mxu0 0.0
  %6401 = vmatpush1.msra.mxu0 0.0
  %6402 = vmatprep.subr.mxu0 0.0
  %6403 = vmatpush1.msra.mxu0 0.0
  %6404 = vmatprep.subr.mxu0 0.0
  %6405 = vmatpush1.msra.mxu0 0.0
  %6406 = vmatprep.subr.mxu0 0.0
  %6407 = vmatpush1.msra.mxu0 0.0
  %6408 = vmatprep.mubr.f32.mxu0 0.0
  %v6409 = vand.u32 %v6338, 4294901760
  %v6410 = vsub.f32 %v6338, %v6409
  %v6411 = vand.u32 %v6410, 4294901760
  %v6412 = vsub.f32 %v6410, %v6411
  %v6413 = vand.u32 %v6412, 4294901760
  %6414 = vmatmul.mubr.f32.gmra.mrb[0].mxu0 %v6413
  %v6415 = vpop.f32.mrb[0].mxu0
  %v6416 = vadd.f32 %v6335, %v6415
  %v6417 = vpop.f32.mrb[0].mxu0
  %6418 = vdwg.mxu0
  %6419 = vmatprep.subr.mxu0 0.0
  %v6420 = vand.u32 %v6326, 4294901760
  %v6421 = vsub.f32 %v6326, %v6420
  %v6422 = vand.u32 %v6421, 4294901760
  %v6423 = vsub.f32 %v6421, %v6422
  %v6424 = vand.u32 %v6423, 4294901760
  %6425 = vmatpush1.msra.mxu0 %v6424
  %6426 = vmatprep.subr.mxu0 0.0
  %v6427 = vand.u32 %v6327, 4294901760
  %v6428 = vsub.f32 %v6327, %v6427
  %v6429 = vand.u32 %v6428, 4294901760
  %v6430 = vsub.f32 %v6428, %v6429
  %v6431 = vand.u32 %v6430, 4294901760
  %6432 = vmatpush1.msra.mxu0 %v6431
  %6433 = vmatprep.subr.mxu0 0.0
  %v6434 = vand.u32 %v6328, 4294901760
  %v6435 = vsub.f32 %v6328, %v6434
  %v6436 = vand.u32 %v6435, 4294901760
  %v6437 = vsub.f32 %v6435, %v6436
  %v6438 = vand.u32 %v6437, 4294901760
  %6439 = vmatpush1.msra.mxu0 %v6438
  %6440 = vmatprep.subr.mxu0 0.0
  %v6441 = vand.u32 %v6329, 4294901760
  %v6442 = vsub.f32 %v6329, %v6441
  %v6443 = vand.u32 %v6442, 4294901760
  %v6444 = vsub.f32 %v6442, %v6443
  %v6445 = vand.u32 %v6444, 4294901760
  %6446 = vmatpush1.msra.mxu0 %v6445
  %6447 = vmatprep.subr.mxu0 0.0
  %6448 = vmatpush1.msra.mxu0 0.0
  %6449 = vmatprep.subr.mxu0 0.0
  %6450 = vmatpush1.msra.mxu0 0.0
  %6451 = vmatprep.subr.mxu0 0.0
  %6452 = vmatpush1.msra.mxu0 0.0
  %6453 = vmatprep.subr.mxu0 0.0
  %6454 = vmatpush1.msra.mxu0 0.0
  %6455 = vmatprep.subr.mxu0 0.0
  %6456 = vmatpush1.msra.mxu0 0.0
  %6457 = vmatprep.subr.mxu0 0.0
  %6458 = vmatpush1.msra.mxu0 0.0
  %6459 = vmatprep.subr.mxu0 0.0
  %6460 = vmatpush1.msra.mxu0 0.0
  %6461 = vmatprep.subr.mxu0 0.0
  %6462 = vmatpush1.msra.mxu0 0.0
  %6463 = vmatprep.subr.mxu0 0.0
  %6464 = vmatpush1.msra.mxu0 0.0
  %6465 = vmatprep.subr.mxu0 0.0
  %6466 = vmatpush1.msra.mxu0 0.0
  %6467 = vmatprep.subr.mxu0 0.0
  %6468 = vmatpush1.msra.mxu0 0.0
  %6469 = vmatprep.subr.mxu0 0.0
  %6470 = vmatpush1.msra.mxu0 0.0
  %6471 = vmatprep.subr.mxu0 0.0
  %6472 = vmatpush1.msra.mxu0 0.0
  %6473 = vmatprep.subr.mxu0 0.0
  %6474 = vmatpush1.msra.mxu0 0.0
  %6475 = vmatprep.subr.mxu0 0.0
  %6476 = vmatpush1.msra.mxu0 0.0
  %6477 = vmatprep.subr.mxu0 0.0
  %6478 = vmatpush1.msra.mxu0 0.0
  %6479 = vmatprep.subr.mxu0 0.0
  %6480 = vmatpush1.msra.mxu0 0.0
  %6481 = vmatprep.subr.mxu0 0.0
  %6482 = vmatpush1.msra.mxu0 0.0
  %6483 = vmatprep.subr.mxu0 0.0
  %6484 = vmatpush1.msra.mxu0 0.0
  %6485 = vmatprep.subr.mxu0 0.0
  %6486 = vmatpush1.msra.mxu0 0.0
  %6487 = vmatprep.subr.mxu0 0.0
  %6488 = vmatpush1.msra.mxu0 0.0
  %6489 = vmatprep.subr.mxu0 0.0
  %6490 = vmatpush1.msra.mxu0 0.0
  %6491 = vmatprep.subr.mxu0 0.0
  %6492 = vmatpush1.msra.mxu0 0.0
  %6493 = vmatprep.subr.mxu0 0.0
  %6494 = vmatpush1.msra.mxu0 0.0
  %6495 = vmatprep.subr.mxu0 0.0
  %6496 = vmatpush1.msra.mxu0 0.0
  %6497 = vmatprep.subr.mxu0 0.0
  %6498 = vmatpush1.msra.mxu0 0.0
  %6499 = vmatprep.subr.mxu0 0.0
  %6500 = vmatpush1.msra.mxu0 0.0
  %6501 = vmatprep.subr.mxu0 0.0
  %6502 = vmatpush1.msra.mxu0 0.0
  %6503 = vmatprep.mubr.f32.mxu0 0.0
  %v6504 = vand.u32 %v6338, 4294901760
  %6505 = vmatmul.mubr.f32.gmra.mrb[0].mxu0 %v6504
  %v6506 = vpop.f32.mrb[0].mxu0
  %v6507 = vadd.f32 %v6416, %v6506
  %v6508 = vpop.f32.mrb[0].mxu0
  %6509 = vdwg.mxu0
  %6510 = vmatprep.subr.mxu0 0.0
  %v6511 = vand.u32 %v6326, 4294901760
  %v6512 = vsub.f32 %v6326, %v6511
  %6513 = vmatpush1.msra.mxu0 %v6512
  %6514 = vmatprep.subr.mxu0 0.0
  %v6515 = vand.u32 %v6327, 4294901760
  %v6516 = vsub.f32 %v6327, %v6515
  %6517 = vmatpush1.msra.mxu0 %v6516
  %6518 = vmatprep.subr.mxu0 0.0
  %v6519 = vand.u32 %v6328, 4294901760
  %v6520 = vsub.f32 %v6328, %v6519
  %6521 = vmatpush1.msra.mxu0 %v6520
  %6522 = vmatprep.subr.mxu0 0.0
  %v6523 = vand.u32 %v6329, 4294901760
  %v6524 = vsub.f32 %v6329, %v6523
  %6525 = vmatpush1.msra.mxu0 %v6524
  %6526 = vmatprep.subr.mxu0 0.0
  %6527 = vmatpush1.msra.mxu0 0.0
  %6528 = vmatprep.subr.mxu0 0.0
  %6529 = vmatpush1.msra.mxu0 0.0
  %6530 = vmatprep.subr.mxu0 0.0
  %6531 = vmatpush1.msra.mxu0 0.0
  %6532 = vmatprep.subr.mxu0 0.0
  %6533 = vmatpush1.msra.mxu0 0.0
  %6534 = vmatprep.subr.mxu0 0.0
  %6535 = vmatpush1.msra.mxu0 0.0
  %6536 = vmatprep.subr.mxu0 0.0
  %6537 = vmatpush1.msra.mxu0 0.0
  %6538 = vmatprep.subr.mxu0 0.0
  %6539 = vmatpush1.msra.mxu0 0.0
  %6540 = vmatprep.subr.mxu0 0.0
  %6541 = vmatpush1.msra.mxu0 0.0
  %6542 = vmatprep.subr.mxu0 0.0
  %6543 = vmatpush1.msra.mxu0 0.0
  %6544 = vmatprep.subr.mxu0 0.0
  %6545 = vmatpush1.msra.mxu0 0.0
  %6546 = vmatprep.subr.mxu0 0.0
  %6547 = vmatpush1.msra.mxu0 0.0
  %6548 = vmatprep.subr.mxu0 0.0
  %6549 = vmatpush1.msra.mxu0 0.0
  %6550 = vmatprep.subr.mxu0 0.0
  %6551 = vmatpush1.msra.mxu0 0.0
  %6552 = vmatprep.subr.mxu0 0.0
  %6553 = vmatpush1.msra.mxu0 0.0
  %6554 = vmatprep.subr.mxu0 0.0
  %6555 = vmatpush1.msra.mxu0 0.0
  %6556 = vmatprep.subr.mxu0 0.0
  %6557 = vmatpush1.msra.mxu0 0.0
  %6558 = vmatprep.subr.mxu0 0.0
  %6559 = vmatpush1.msra.mxu0 0.0
  %6560 = vmatprep.subr.mxu0 0.0
  %6561 = vmatpush1.msra.mxu0 0.0
  %6562 = vmatprep.subr.mxu0 0.0
  %6563 = vmatpush1.msra.mxu0 0.0
  %6564 = vmatprep.subr.mxu0 0.0
  %6565 = vmatpush1.msra.mxu0 0.0
  %6566 = vmatprep.subr.mxu0 0.0
  %6567 = vmatpush1.msra.mxu0 0.0
  %6568 = vmatprep.subr.mxu0 0.0
  %6569 = vmatpush1.msra.mxu0 0.0
  %6570 = vmatprep.subr.mxu0 0.0
  %6571 = vmatpush1.msra.mxu0 0.0
  %6572 = vmatprep.subr.mxu0 0.0
  %6573 = vmatpush1.msra.mxu0 0.0
  %6574 = vmatprep.subr.mxu0 0.0
  %6575 = vmatpush1.msra.mxu0 0.0
  %6576 = vmatprep.subr.mxu0 0.0
  %6577 = vmatpush1.msra.mxu0 0.0
  %6578 = vmatprep.subr.mxu0 0.0
  %6579 = vmatpush1.msra.mxu0 0.0
  %6580 = vmatprep.subr.mxu0 0.0
  %6581 = vmatpush1.msra.mxu0 0.0
  %6582 = vmatprep.mubr.f32.mxu0 0.0
  %v6583 = vand.u32 %v6338, 4294901760
  %v6584 = vsub.f32 %v6338, %v6583
  %6585 = vmatmul.mubr.f32.gmra.mrb[0].mxu0 %v6584
  %v6586 = vpop.f32.mrb[0].mxu0
  %v6587 = vadd.f32 %v6507, %v6586
  %v6588 = vpop.f32.mrb[0].mxu0
  %6589 = vdwg.mxu0
  %6590 = vmatprep.subr.mxu0 0.0
  %v6591 = vand.u32 %v6326, 4294901760
  %6592 = vmatpush1.msra.mxu0 %v6591
  %6593 = vmatprep.subr.mxu0 0.0
  %v6594 = vand.u32 %v6327, 4294901760
  %6595 = vmatpush1.msra.mxu0 %v6594
  %6596 = vmatprep.subr.mxu0 0.0
  %v6597 = vand.u32 %v6328, 4294901760
  %6598 = vmatpush1.msra.mxu0 %v6597
  %6599 = vmatprep.subr.mxu0 0.0
  %v6600 = vand.u32 %v6329, 4294901760
  %6601 = vmatpush1.msra.mxu0 %v6600
  %6602 = vmatprep.subr.mxu0 0.0
  %6603 = vmatpush1.msra.mxu0 0.0
  %6604 = vmatprep.subr.mxu0 0.0
  %6605 = vmatpush1.msra.mxu0 0.0
  %6606 = vmatprep.subr.mxu0 0.0
  %6607 = vmatpush1.msra.mxu0 0.0
  %6608 = vmatprep.subr.mxu0 0.0
  %6609 = vmatpush1.msra.mxu0 0.0
  %6610 = vmatprep.subr.mxu0 0.0
  %6611 = vmatpush1.msra.mxu0 0.0
  %6612 = vmatprep.subr.mxu0 0.0
  %6613 = vmatpush1.msra.mxu0 0.0
  %6614 = vmatprep.subr.mxu0 0.0
  %6615 = vmatpush1.msra.mxu0 0.0
  %6616 = vmatprep.subr.mxu0 0.0
  %6617 = vmatpush1.msra.mxu0 0.0
  %6618 = vmatprep.subr.mxu0 0.0
  %6619 = vmatpush1.msra.mxu0 0.0
  %6620 = vmatprep.subr.mxu0 0.0
  %6621 = vmatpush1.msra.mxu0 0.0
  %6622 = vmatprep.subr.mxu0 0.0
  %6623 = vmatpush1.msra.mxu0 0.0
  %6624 = vmatprep.subr.mxu0 0.0
  %6625 = vmatpush1.msra.mxu0 0.0
  %6626 = vmatprep.subr.mxu0 0.0
  %6627 = vmatpush1.msra.mxu0 0.0
  %6628 = vmatprep.subr.mxu0 0.0
  %6629 = vmatpush1.msra.mxu0 0.0
  %6630 = vmatprep.subr.mxu0 0.0
  %6631 = vmatpush1.msra.mxu0 0.0
  %6632 = vmatprep.subr.mxu0 0.0
  %6633 = vmatpush1.msra.mxu0 0.0
  %6634 = vmatprep.subr.mxu0 0.0
  %6635 = vmatpush1.msra.mxu0 0.0
  %6636 = vmatprep.subr.mxu0 0.0
  %6637 = vmatpush1.msra.mxu0 0.0
  %6638 = vmatprep.subr.mxu0 0.0
  %6639 = vmatpush1.msra.mxu0 0.0
  %6640 = vmatprep.subr.mxu0 0.0
  %6641 = vmatpush1.msra.mxu0 0.0
  %6642 = vmatprep.subr.mxu0 0.0
  %6643 = vmatpush1.msra.mxu0 0.0
  %6644 = vmatprep.subr.mxu0 0.0
  %6645 = vmatpush1.msra.mxu0 0.0
  %6646 = vmatprep.subr.mxu0 0.0
  %6647 = vmatpush1.msra.mxu0 0.0
  %6648 = vmatprep.subr.mxu0 0.0
  %6649 = vmatpush1.msra.mxu0 0.0
  %6650 = vmatprep.subr.mxu0 0.0
  %6651 = vmatpush1.msra.mxu0 0.0
  %6652 = vmatprep.subr.mxu0 0.0
  %6653 = vmatpush1.msra.mxu0 0.0
  %6654 = vmatprep.subr.mxu0 0.0
  %6655 = vmatpush1.msra.mxu0 0.0
  %6656 = vmatprep.subr.mxu0 0.0
  %6657 = vmatpush1.msra.mxu0 0.0
  %6658 = vmatprep.mubr.f32.mxu0 0.0
  %v6659 = vand.u32 %v6338, 4294901760
  %v6660 = vsub.f32 %v6338, %v6659
  %v6661 = vand.u32 %v6660, 4294901760
  %6662 = vmatmul.mubr.f32.gmra.mrb[0].mxu0 %v6661
  %v6663 = vpop.f32.mrb[0].mxu0
  %v6664 = vadd.f32 %v6587, %v6663
  %v6665 = vpop.f32.mrb[0].mxu0
  %6666 = vdwg.mxu0
  %6667 = vmatprep.subr.mxu0 0.0
  %v6668 = vand.u32 %v6326, 4294901760
  %v6669 = vsub.f32 %v6326, %v6668
  %v6670 = vand.u32 %v6669, 4294901760
  %6671 = vmatpush1.msra.mxu0 %v6670
  %6672 = vmatprep.subr.mxu0 0.0
  %v6673 = vand.u32 %v6327, 4294901760
  %v6674 = vsub.f32 %v6327, %v6673
  %v6675 = vand.u32 %v6674, 4294901760
  %6676 = vmatpush1.msra.mxu0 %v6675
  %6677 = vmatprep.subr.mxu0 0.0
  %v6678 = vand.u32 %v6328, 4294901760
  %v6679 = vsub.f32 %v6328, %v6678
  %v6680 = vand.u32 %v6679, 4294901760
  %6681 = vmatpush1.msra.mxu0 %v6680
  %6682 = vmatprep.subr.mxu0 0.0
  %v6683 = vand.u32 %v6329, 4294901760
  %v6684 = vsub.f32 %v6329, %v6683
  %v6685 = vand.u32 %v6684, 4294901760
  %6686 = vmatpush1.msra.mxu0 %v6685
  %6687 = vmatprep.subr.mxu0 0.0
  %6688 = vmatpush1.msra.mxu0 0.0
  %6689 = vmatprep.subr.mxu0 0.0
  %6690 = vmatpush1.msra.mxu0 0.0
  %6691 = vmatprep.subr.mxu0 0.0
  %6692 = vmatpush1.msra.mxu0 0.0
  %6693 = vmatprep.subr.mxu0 0.0
  %6694 = vmatpush1.msra.mxu0 0.0
  %6695 = vmatprep.subr.mxu0 0.0
  %6696 = vmatpush1.msra.mxu0 0.0
  %6697 = vmatprep.subr.mxu0 0.0
  %6698 = vmatpush1.msra.mxu0 0.0
  %6699 = vmatprep.subr.mxu0 0.0
  %6700 = vmatpush1.msra.mxu0 0.0
  %6701 = vmatprep.subr.mxu0 0.0
  %6702 = vmatpush1.msra.mxu0 0.0
  %6703 = vmatprep.subr.mxu0 0.0
  %6704 = vmatpush1.msra.mxu0 0.0
  %6705 = vmatprep.subr.mxu0 0.0
  %6706 = vmatpush1.msra.mxu0 0.0
  %6707 = vmatprep.subr.mxu0 0.0
  %6708 = vmatpush1.msra.mxu0 0.0
  %6709 = vmatprep.subr.mxu0 0.0
  %6710 = vmatpush1.msra.mxu0 0.0
  %6711 = vmatprep.subr.mxu0 0.0
  %6712 = vmatpush1.msra.mxu0 0.0
  %6713 = vmatprep.subr.mxu0 0.0
  %6714 = vmatpush1.msra.mxu0 0.0
  %6715 = vmatprep.subr.mxu0 0.0
  %6716 = vmatpush1.msra.mxu0 0.0
  %6717 = vmatprep.subr.mxu0 0.0
  %6718 = vmatpush1.msra.mxu0 0.0
  %6719 = vmatprep.subr.mxu0 0.0
  %6720 = vmatpush1.msra.mxu0 0.0
  %6721 = vmatprep.subr.mxu0 0.0
  %6722 = vmatpush1.msra.mxu0 0.0
  %6723 = vmatprep.subr.mxu0 0.0
  %6724 = vmatpush1.msra.mxu0 0.0
  %6725 = vmatprep.subr.mxu0 0.0
  %6726 = vmatpush1.msra.mxu0 0.0
  %6727 = vmatprep.subr.mxu0 0.0
  %6728 = vmatpush1.msra.mxu0 0.0
  %6729 = vmatprep.subr.mxu0 0.0
  %6730 = vmatpush1.msra.mxu0 0.0
  %6731 = vmatprep.subr.mxu0 0.0
  %6732 = vmatpush1.msra.mxu0 0.0
  %6733 = vmatprep.subr.mxu0 0.0
  %6734 = vmatpush1.msra.mxu0 0.0
  %6735 = vmatprep.subr.mxu0 0.0
  %6736 = vmatpush1.msra.mxu0 0.0
  %6737 = vmatprep.subr.mxu0 0.0
  %6738 = vmatpush1.msra.mxu0 0.0
  %6739 = vmatprep.subr.mxu0 0.0
  %6740 = vmatpush1.msra.mxu0 0.0
  %6741 = vmatprep.subr.mxu0 0.0
  %6742 = vmatpush1.msra.mxu0 0.0
  %6743 = vmatprep.mubr.f32.mxu0 0.0
  %v6744 = vand.u32 %v6338, 4294901760
  %6745 = vmatmul.mubr.f32.gmra.mrb[0].mxu0 %v6744
  %v6746 = vpop.f32.mrb[0].mxu0
  %v6747 = vadd.f32 %v6664, %v6746
  %v6748 = vpop.f32.mrb[0].mxu0
  %6749 = vdwg.mxu0
  %6750 = vmatprep.subr.mxu0 0.0
  %v6751 = vand.u32 %v6326, 4294901760
  %6752 = vmatpush1.msra.mxu0 %v6751
  %6753 = vmatprep.subr.mxu0 0.0
  %v6754 = vand.u32 %v6327, 4294901760
  %6755 = vmatpush1.msra.mxu0 %v6754
  %6756 = vmatprep.subr.mxu0 0.0
  %v6757 = vand.u32 %v6328, 4294901760
  %6758 = vmatpush1.msra.mxu0 %v6757
  %6759 = vmatprep.subr.mxu0 0.0
  %v6760 = vand.u32 %v6329, 4294901760
  %6761 = vmatpush1.msra.mxu0 %v6760
  %6762 = vmatprep.subr.mxu0 0.0
  %6763 = vmatpush1.msra.mxu0 0.0
  %6764 = vmatprep.subr.mxu0 0.0
  %6765 = vmatpush1.msra.mxu0 0.0
  %6766 = vmatprep.subr.mxu0 0.0
  %6767 = vmatpush1.msra.mxu0 0.0
  %6768 = vmatprep.subr.mxu0 0.0
  %6769 = vmatpush1.msra.mxu0 0.0
  %6770 = vmatprep.subr.mxu0 0.0
  %6771 = vmatpush1.msra.mxu0 0.0
  %6772 = vmatprep.subr.mxu0 0.0
  %6773 = vmatpush1.msra.mxu0 0.0
  %6774 = vmatprep.subr.mxu0 0.0
  %6775 = vmatpush1.msra.mxu0 0.0
  %6776 = vmatprep.subr.mxu0 0.0
  %6777 = vmatpush1.msra.mxu0 0.0
  %6778 = vmatprep.subr.mxu0 0.0
  %6779 = vmatpush1.msra.mxu0 0.0
  %6780 = vmatprep.subr.mxu0 0.0
  %6781 = vmatpush1.msra.mxu0 0.0
  %6782 = vmatprep.subr.mxu0 0.0
  %6783 = vmatpush1.msra.mxu0 0.0
  %6784 = vmatprep.subr.mxu0 0.0
  %6785 = vmatpush1.msra.mxu0 0.0
  %6786 = vmatprep.subr.mxu0 0.0
  %6787 = vmatpush1.msra.mxu0 0.0
  %6788 = vmatprep.subr.mxu0 0.0
  %6789 = vmatpush1.msra.mxu0 0.0
  %6790 = vmatprep.subr.mxu0 0.0
  %6791 = vmatpush1.msra.mxu0 0.0
  %6792 = vmatprep.subr.mxu0 0.0
  %6793 = vmatpush1.msra.mxu0 0.0
  %6794 = vmatprep.subr.mxu0 0.0
  %6795 = vmatpush1.msra.mxu0 0.0
  %6796 = vmatprep.subr.mxu0 0.0
  %6797 = vmatpush1.msra.mxu0 0.0
  %6798 = vmatprep.subr.mxu0 0.0
  %6799 = vmatpush1.msra.mxu0 0.0
  %6800 = vmatprep.subr.mxu0 0.0
  %6801 = vmatpush1.msra.mxu0 0.0
  %6802 = vmatprep.subr.mxu0 0.0
  %6803 = vmatpush1.msra.mxu0 0.0
  %6804 = vmatprep.subr.mxu0 0.0
  %6805 = vmatpush1.msra.mxu0 0.0
  %6806 = vmatprep.subr.mxu0 0.0
  %6807 = vmatpush1.msra.mxu0 0.0
  %6808 = vmatprep.subr.mxu0 0.0
  %6809 = vmatpush1.msra.mxu0 0.0
  %6810 = vmatprep.subr.mxu0 0.0
  %6811 = vmatpush1.msra.mxu0 0.0
  %6812 = vmatprep.subr.mxu0 0.0
  %6813 = vmatpush1.msra.mxu0 0.0
  %6814 = vmatprep.subr.mxu0 0.0
  %6815 = vmatpush1.msra.mxu0 0.0
  %6816 = vmatprep.subr.mxu0 0.0
  %6817 = vmatpush1.msra.mxu0 0.0
  %6818 = vmatprep.mubr.f32.mxu0 0.0
  %v6819 = vand.u32 %v6338, 4294901760
  %6820 = vmatmul.mubr.f32.gmra.mrb[0].mxu0 %v6819
  %v6821 = vpop.f32.mrb[0].mxu0
  %v6822 = vadd.f32 %v6747, %v6821
  %v6823 = vpop.f32.mrb[0].mxu0
  %6824 = vdwg.mxu0
  %v6825 = vld [vmem:[%s12] sm:$0xff]
  %v6826 = vld [vmem:[%s12 + $0x8] sm:$0xff]
  %v6827 = vld [vmem:[%s12 + $0x10] sm:$0xff]
  %v6828 = vld [vmem:[%s12 + $0x18] sm:$0xff]
  %v6829 = vld [vmem:[%s13] sm:$0x1]
  %v6831 = vlaneseq
  %v6832 = vshrl.u32 %v6831, 7
  %v6833 = vsub.s32 0, %v6832
  %v6834 = vrot.slane %v6829, %v6833
  %v6837 = vsel %vm82, %v6822, 0
  %6839 = vmatprep.subr.mxu0 0.0
  %v6840 = vand.u32 %v6825, 4294901760
  %6841 = vmatpush1.msra.mxu0 %v6840
  %6842 = vmatprep.subr.mxu0 0.0
  %v6843 = vand.u32 %v6826, 4294901760
  %6844 = vmatpush1.msra.mxu0 %v6843
  %6845 = vmatprep.subr.mxu0 0.0
  %v6846 = vand.u32 %v6827, 4294901760
  %6847 = vmatpush1.msra.mxu0 %v6846
  %6848 = vmatprep.subr.mxu0 0.0
  %v6849 = vand.u32 %v6828, 4294901760
  %6850 = vmatpush1.msra.mxu0 %v6849
  %6851 = vmatprep.subr.mxu0 0.0
  %6852 = vmatpush1.msra.mxu0 0.0
  %6853 = vmatprep.subr.mxu0 0.0
  %6854 = vmatpush1.msra.mxu0 0.0
  %6855 = vmatprep.subr.mxu0 0.0
  %6856 = vmatpush1.msra.mxu0 0.0
  %6857 = vmatprep.subr.mxu0 0.0
  %6858 = vmatpush1.msra.mxu0 0.0
  %6859 = vmatprep.subr.mxu0 0.0
  %6860 = vmatpush1.msra.mxu0 0.0
  %6861 = vmatprep.subr.mxu0 0.0
  %6862 = vmatpush1.msra.mxu0 0.0
  %6863 = vmatprep.subr.mxu0 0.0
  %6864 = vmatpush1.msra.mxu0 0.0
  %6865 = vmatprep.subr.mxu0 0.0
  %6866 = vmatpush1.msra.mxu0 0.0
  %6867 = vmatprep.subr.mxu0 0.0
  %6868 = vmatpush1.msra.mxu0 0.0
  %6869 = vmatprep.subr.mxu0 0.0
  %6870 = vmatpush1.msra.mxu0 0.0
  %6871 = vmatprep.subr.mxu0 0.0
  %6872 = vmatpush1.msra.mxu0 0.0
  %6873 = vmatprep.subr.mxu0 0.0
  %6874 = vmatpush1.msra.mxu0 0.0
  %6875 = vmatprep.subr.mxu0 0.0
  %6876 = vmatpush1.msra.mxu0 0.0
  %6877 = vmatprep.subr.mxu0 0.0
  %6878 = vmatpush1.msra.mxu0 0.0
  %6879 = vmatprep.subr.mxu0 0.0
  %6880 = vmatpush1.msra.mxu0 0.0
  %6881 = vmatprep.subr.mxu0 0.0
  %6882 = vmatpush1.msra.mxu0 0.0
  %6883 = vmatprep.subr.mxu0 0.0
  %6884 = vmatpush1.msra.mxu0 0.0
  %6885 = vmatprep.subr.mxu0 0.0
  %6886 = vmatpush1.msra.mxu0 0.0
  %6887 = vmatprep.subr.mxu0 0.0
  %6888 = vmatpush1.msra.mxu0 0.0
  %6889 = vmatprep.subr.mxu0 0.0
  %6890 = vmatpush1.msra.mxu0 0.0
  %6891 = vmatprep.subr.mxu0 0.0
  %6892 = vmatpush1.msra.mxu0 0.0
  %6893 = vmatprep.subr.mxu0 0.0
  %6894 = vmatpush1.msra.mxu0 0.0
  %6895 = vmatprep.subr.mxu0 0.0
  %6896 = vmatpush1.msra.mxu0 0.0
  %6897 = vmatprep.subr.mxu0 0.0
  %6898 = vmatpush1.msra.mxu0 0.0
  %6899 = vmatprep.subr.mxu0 0.0
  %6900 = vmatpush1.msra.mxu0 0.0
  %6901 = vmatprep.subr.mxu0 0.0
  %6902 = vmatpush1.msra.mxu0 0.0
  %6903 = vmatprep.subr.mxu0 0.0
  %6904 = vmatpush1.msra.mxu0 0.0
  %6905 = vmatprep.subr.mxu0 0.0
  %6906 = vmatpush1.msra.mxu0 0.0
  %6907 = vmatprep.mubr.f32.mxu0 0.0
  %v6908 = vand.u32 %v6837, 4294901760
  %v6909 = vsub.f32 %v6837, %v6908
  %v6910 = vand.u32 %v6909, 4294901760
  %v6911 = vsub.f32 %v6909, %v6910
  %v6912 = vand.u32 %v6911, 4294901760
  %6913 = vmatmul.mubr.f32.gmra.mrb[0].mxu0 %v6912
  %v6914 = vpop.f32.mrb[0].mxu0
  %v6915 = vadd.f32 %v6834, %v6914
  %v6916 = vpop.f32.mrb[0].mxu0
  %6917 = vdwg.mxu0
  %6918 = vmatprep.subr.mxu0 0.0
  %v6919 = vand.u32 %v6825, 4294901760
  %v6920 = vsub.f32 %v6825, %v6919
  %v6921 = vand.u32 %v6920, 4294901760
  %v6922 = vsub.f32 %v6920, %v6921
  %v6923 = vand.u32 %v6922, 4294901760
  %6924 = vmatpush1.msra.mxu0 %v6923
  %6925 = vmatprep.subr.mxu0 0.0
  %v6926 = vand.u32 %v6826, 4294901760
  %v6927 = vsub.f32 %v6826, %v6926
  %v6928 = vand.u32 %v6927, 4294901760
  %v6929 = vsub.f32 %v6927, %v6928
  %v6930 = vand.u32 %v6929, 4294901760
  %6931 = vmatpush1.msra.mxu0 %v6930
  %6932 = vmatprep.subr.mxu0 0.0
  %v6933 = vand.u32 %v6827, 4294901760
  %v6934 = vsub.f32 %v6827, %v6933
  %v6935 = vand.u32 %v6934, 4294901760
  %v6936 = vsub.f32 %v6934, %v6935
  %v6937 = vand.u32 %v6936, 4294901760
  %6938 = vmatpush1.msra.mxu0 %v6937
  %6939 = vmatprep.subr.mxu0 0.0
  %v6940 = vand.u32 %v6828, 4294901760
  %v6941 = vsub.f32 %v6828, %v6940
  %v6942 = vand.u32 %v6941, 4294901760
  %v6943 = vsub.f32 %v6941, %v6942
  %v6944 = vand.u32 %v6943, 4294901760
  %6945 = vmatpush1.msra.mxu0 %v6944
  %6946 = vmatprep.subr.mxu0 0.0
  %6947 = vmatpush1.msra.mxu0 0.0
  %6948 = vmatprep.subr.mxu0 0.0
  %6949 = vmatpush1.msra.mxu0 0.0
  %6950 = vmatprep.subr.mxu0 0.0
  %6951 = vmatpush1.msra.mxu0 0.0
  %6952 = vmatprep.subr.mxu0 0.0
  %6953 = vmatpush1.msra.mxu0 0.0
  %6954 = vmatprep.subr.mxu0 0.0
  %6955 = vmatpush1.msra.mxu0 0.0
  %6956 = vmatprep.subr.mxu0 0.0
  %6957 = vmatpush1.msra.mxu0 0.0
  %6958 = vmatprep.subr.mxu0 0.0
  %6959 = vmatpush1.msra.mxu0 0.0
  %6960 = vmatprep.subr.mxu0 0.0
  %6961 = vmatpush1.msra.mxu0 0.0
  %6962 = vmatprep.subr.mxu0 0.0
  %6963 = vmatpush1.msra.mxu0 0.0
  %6964 = vmatprep.subr.mxu0 0.0
  %6965 = vmatpush1.msra.mxu0 0.0
  %6966 = vmatprep.subr.mxu0 0.0
  %6967 = vmatpush1.msra.mxu0 0.0
  %6968 = vmatprep.subr.mxu0 0.0
  %6969 = vmatpush1.msra.mxu0 0.0
  %6970 = vmatprep.subr.mxu0 0.0
  %6971 = vmatpush1.msra.mxu0 0.0
  %6972 = vmatprep.subr.mxu0 0.0
  %6973 = vmatpush1.msra.mxu0 0.0
  %6974 = vmatprep.subr.mxu0 0.0
  %6975 = vmatpush1.msra.mxu0 0.0
  %6976 = vmatprep.subr.mxu0 0.0
  %6977 = vmatpush1.msra.mxu0 0.0
  %6978 = vmatprep.subr.mxu0 0.0
  %6979 = vmatpush1.msra.mxu0 0.0
  %6980 = vmatprep.subr.mxu0 0.0
  %6981 = vmatpush1.msra.mxu0 0.0
  %6982 = vmatprep.subr.mxu0 0.0
  %6983 = vmatpush1.msra.mxu0 0.0
  %6984 = vmatprep.subr.mxu0 0.0
  %6985 = vmatpush1.msra.mxu0 0.0
  %6986 = vmatprep.subr.mxu0 0.0
  %6987 = vmatpush1.msra.mxu0 0.0
  %6988 = vmatprep.subr.mxu0 0.0
  %6989 = vmatpush1.msra.mxu0 0.0
  %6990 = vmatprep.subr.mxu0 0.0
  %6991 = vmatpush1.msra.mxu0 0.0
  %6992 = vmatprep.subr.mxu0 0.0
  %6993 = vmatpush1.msra.mxu0 0.0
  %6994 = vmatprep.subr.mxu0 0.0
  %6995 = vmatpush1.msra.mxu0 0.0
  %6996 = vmatprep.subr.mxu0 0.0
  %6997 = vmatpush1.msra.mxu0 0.0
  %6998 = vmatprep.subr.mxu0 0.0
  %6999 = vmatpush1.msra.mxu0 0.0
  %7000 = vmatprep.subr.mxu0 0.0
  %7001 = vmatpush1.msra.mxu0 0.0
  %7002 = vmatprep.mubr.f32.mxu0 0.0
  %v7003 = vand.u32 %v6837, 4294901760
  %7004 = vmatmul.mubr.f32.gmra.mrb[0].mxu0 %v7003
  %v7005 = vpop.f32.mrb[0].mxu0
  %v7006 = vadd.f32 %v6915, %v7005
  %v7007 = vpop.f32.mrb[0].mxu0
  %7008 = vdwg.mxu0
  %7009 = vmatprep.subr.mxu0 0.0
  %v7010 = vand.u32 %v6825, 4294901760
  %v7011 = vsub.f32 %v6825, %v7010
  %7012 = vmatpush1.msra.mxu0 %v7011
  %7013 = vmatprep.subr.mxu0 0.0
  %v7014 = vand.u32 %v6826, 4294901760
  %v7015 = vsub.f32 %v6826, %v7014
  %7016 = vmatpush1.msra.mxu0 %v7015
  %7017 = vmatprep.subr.mxu0 0.0
  %v7018 = vand.u32 %v6827, 4294901760
  %v7019 = vsub.f32 %v6827, %v7018
  %7020 = vmatpush1.msra.mxu0 %v7019
  %7021 = vmatprep.subr.mxu0 0.0
  %v7022 = vand.u32 %v6828, 4294901760
  %v7023 = vsub.f32 %v6828, %v7022
  %7024 = vmatpush1.msra.mxu0 %v7023
  %7025 = vmatprep.subr.mxu0 0.0
  %7026 = vmatpush1.msra.mxu0 0.0
  %7027 = vmatprep.subr.mxu0 0.0
  %7028 = vmatpush1.msra.mxu0 0.0
  %7029 = vmatprep.subr.mxu0 0.0
  %7030 = vmatpush1.msra.mxu0 0.0
  %7031 = vmatprep.subr.mxu0 0.0
  %7032 = vmatpush1.msra.mxu0 0.0
  %7033 = vmatprep.subr.mxu0 0.0
  %7034 = vmatpush1.msra.mxu0 0.0
  %7035 = vmatprep.subr.mxu0 0.0
  %7036 = vmatpush1.msra.mxu0 0.0
  %7037 = vmatprep.subr.mxu0 0.0
  %7038 = vmatpush1.msra.mxu0 0.0
  %7039 = vmatprep.subr.mxu0 0.0
  %7040 = vmatpush1.msra.mxu0 0.0
  %7041 = vmatprep.subr.mxu0 0.0
  %7042 = vmatpush1.msra.mxu0 0.0
  %7043 = vmatprep.subr.mxu0 0.0
  %7044 = vmatpush1.msra.mxu0 0.0
  %7045 = vmatprep.subr.mxu0 0.0
  %7046 = vmatpush1.msra.mxu0 0.0
  %7047 = vmatprep.subr.mxu0 0.0
  %7048 = vmatpush1.msra.mxu0 0.0
  %7049 = vmatprep.subr.mxu0 0.0
  %7050 = vmatpush1.msra.mxu0 0.0
  %7051 = vmatprep.subr.mxu0 0.0
  %7052 = vmatpush1.msra.mxu0 0.0
  %7053 = vmatprep.subr.mxu0 0.0
  %7054 = vmatpush1.msra.mxu0 0.0
  %7055 = vmatprep.subr.mxu0 0.0
  %7056 = vmatpush1.msra.mxu0 0.0
  %7057 = vmatprep.subr.mxu0 0.0
  %7058 = vmatpush1.msra.mxu0 0.0
  %7059 = vmatprep.subr.mxu0 0.0
  %7060 = vmatpush1.msra.mxu0 0.0
  %7061 = vmatprep.subr.mxu0 0.0
  %7062 = vmatpush1.msra.mxu0 0.0
  %7063 = vmatprep.subr.mxu0 0.0
  %7064 = vmatpush1.msra.mxu0 0.0
  %7065 = vmatprep.subr.mxu0 0.0
  %7066 = vmatpush1.msra.mxu0 0.0
  %7067 = vmatprep.subr.mxu0 0.0
  %7068 = vmatpush1.msra.mxu0 0.0
  %7069 = vmatprep.subr.mxu0 0.0
  %7070 = vmatpush1.msra.mxu0 0.0
  %7071 = vmatprep.subr.mxu0 0.0
  %7072 = vmatpush1.msra.mxu0 0.0
  %7073 = vmatprep.subr.mxu0 0.0
  %7074 = vmatpush1.msra.mxu0 0.0
  %7075 = vmatprep.subr.mxu0 0.0
  %7076 = vmatpush1.msra.mxu0 0.0
  %7077 = vmatprep.subr.mxu0 0.0
  %7078 = vmatpush1.msra.mxu0 0.0
  %7079 = vmatprep.subr.mxu0 0.0
  %7080 = vmatpush1.msra.mxu0 0.0
  %7081 = vmatprep.mubr.f32.mxu0 0.0
  %v7082 = vand.u32 %v6837, 4294901760
  %v7083 = vsub.f32 %v6837, %v7082
  %7084 = vmatmul.mubr.f32.gmra.mrb[0].mxu0 %v7083
  %v7085 = vpop.f32.mrb[0].mxu0
  %v7086 = vadd.f32 %v7006, %v7085
  %v7087 = vpop.f32.mrb[0].mxu0
  %7088 = vdwg.mxu0
  %7089 = vmatprep.subr.mxu0 0.0
  %v7090 = vand.u32 %v6825, 4294901760
  %7091 = vmatpush1.msra.mxu0 %v7090
  %7092 = vmatprep.subr.mxu0 0.0
  %v7093 = vand.u32 %v6826, 4294901760
  %7094 = vmatpush1.msra.mxu0 %v7093
  %7095 = vmatprep.subr.mxu0 0.0
  %v7096 = vand.u32 %v6827, 4294901760
  %7097 = vmatpush1.msra.mxu0 %v7096
  %7098 = vmatprep.subr.mxu0 0.0
  %v7099 = vand.u32 %v6828, 4294901760
  %7100 = vmatpush1.msra.mxu0 %v7099
  %7101 = vmatprep.subr.mxu0 0.0
  %7102 = vmatpush1.msra.mxu0 0.0
  %7103 = vmatprep.subr.mxu0 0.0
  %7104 = vmatpush1.msra.mxu0 0.0
  %7105 = vmatprep.subr.mxu0 0.0
  %7106 = vmatpush1.msra.mxu0 0.0
  %7107 = vmatprep.subr.mxu0 0.0
  %7108 = vmatpush1.msra.mxu0 0.0
  %7109 = vmatprep.subr.mxu0 0.0
  %7110 = vmatpush1.msra.mxu0 0.0
  %7111 = vmatprep.subr.mxu0 0.0
  %7112 = vmatpush1.msra.mxu0 0.0
  %7113 = vmatprep.subr.mxu0 0.0
  %7114 = vmatpush1.msra.mxu0 0.0
  %7115 = vmatprep.subr.mxu0 0.0
  %7116 = vmatpush1.msra.mxu0 0.0
  %7117 = vmatprep.subr.mxu0 0.0
  %7118 = vmatpush1.msra.mxu0 0.0
  %7119 = vmatprep.subr.mxu0 0.0
  %7120 = vmatpush1.msra.mxu0 0.0
  %7121 = vmatprep.subr.mxu0 0.0
  %7122 = vmatpush1.msra.mxu0 0.0
  %7123 = vmatprep.subr.mxu0 0.0
  %7124 = vmatpush1.msra.mxu0 0.0
  %7125 = vmatprep.subr.mxu0 0.0
  %7126 = vmatpush1.msra.mxu0 0.0
  %7127 = vmatprep.subr.mxu0 0.0
  %7128 = vmatpush1.msra.mxu0 0.0
  %7129 = vmatprep.subr.mxu0 0.0
  %7130 = vmatpush1.msra.mxu0 0.0
  %7131 = vmatprep.subr.mxu0 0.0
  %7132 = vmatpush1.msra.mxu0 0.0
  %7133 = vmatprep.subr.mxu0 0.0
  %7134 = vmatpush1.msra.mxu0 0.0
  %7135 = vmatprep.subr.mxu0 0.0
  %7136 = vmatpush1.msra.mxu0 0.0
  %7137 = vmatprep.subr.mxu0 0.0
  %7138 = vmatpush1.msra.mxu0 0.0
  %7139 = vmatprep.subr.mxu0 0.0
  %7140 = vmatpush1.msra.mxu0 0.0
  %7141 = vmatprep.subr.mxu0 0.0
  %7142 = vmatpush1.msra.mxu0 0.0
  %7143 = vmatprep.subr.mxu0 0.0
  %7144 = vmatpush1.msra.mxu0 0.0
  %7145 = vmatprep.subr.mxu0 0.0
  %7146 = vmatpush1.msra.mxu0 0.0
  %7147 = vmatprep.subr.mxu0 0.0
  %7148 = vmatpush1.msra.mxu0 0.0
  %7149 = vmatprep.subr.mxu0 0.0
  %7150 = vmatpush1.msra.mxu0 0.0
  %7151 = vmatprep.subr.mxu0 0.0
  %7152 = vmatpush1.msra.mxu0 0.0
  %7153 = vmatprep.subr.mxu0 0.0
  %7154 = vmatpush1.msra.mxu0 0.0
  %7155 = vmatprep.subr.mxu0 0.0
  %7156 = vmatpush1.msra.mxu0 0.0
  %7157 = vmatprep.mubr.f32.mxu0 0.0
  %v7158 = vand.u32 %v6837, 4294901760
  %v7159 = vsub.f32 %v6837, %v7158
  %v7160 = vand.u32 %v7159, 4294901760
  %7161 = vmatmul.mubr.f32.gmra.mrb[0].mxu0 %v7160
  %v7162 = vpop.f32.mrb[0].mxu0
  %v7163 = vadd.f32 %v7086, %v7162
  %v7164 = vpop.f32.mrb[0].mxu0
  %7165 = vdwg.mxu0
  %7166 = vmatprep.subr.mxu0 0.0
  %v7167 = vand.u32 %v6825, 4294901760
  %v7168 = vsub.f32 %v6825, %v7167
  %v7169 = vand.u32 %v7168, 4294901760
  %7170 = vmatpush1.msra.mxu0 %v7169
  %7171 = vmatprep.subr.mxu0 0.0
  %v7172 = vand.u32 %v6826, 4294901760
  %v7173 = vsub.f32 %v6826, %v7172
  %v7174 = vand.u32 %v7173, 4294901760
  %7175 = vmatpush1.msra.mxu0 %v7174
  %7176 = vmatprep.subr.mxu0 0.0
  %v7177 = vand.u32 %v6827, 4294901760
  %v7178 = vsub.f32 %v6827, %v7177
  %v7179 = vand.u32 %v7178, 4294901760
  %7180 = vmatpush1.msra.mxu0 %v7179
  %7181 = vmatprep.subr.mxu0 0.0
  %v7182 = vand.u32 %v6828, 4294901760
  %v7183 = vsub.f32 %v6828, %v7182
  %v7184 = vand.u32 %v7183, 4294901760
  %7185 = vmatpush1.msra.mxu0 %v7184
  %7186 = vmatprep.subr.mxu0 0.0
  %7187 = vmatpush1.msra.mxu0 0.0
  %7188 = vmatprep.subr.mxu0 0.0
  %7189 = vmatpush1.msra.mxu0 0.0
  %7190 = vmatprep.subr.mxu0 0.0
  %7191 = vmatpush1.msra.mxu0 0.0
  %7192 = vmatprep.subr.mxu0 0.0
  %7193 = vmatpush1.msra.mxu0 0.0
  %7194 = vmatprep.subr.mxu0 0.0
  %7195 = vmatpush1.msra.mxu0 0.0
  %7196 = vmatprep.subr.mxu0 0.0
  %7197 = vmatpush1.msra.mxu0 0.0
  %7198 = vmatprep.subr.mxu0 0.0
  %7199 = vmatpush1.msra.mxu0 0.0
  %7200 = vmatprep.subr.mxu0 0.0
  %7201 = vmatpush1.msra.mxu0 0.0
  %7202 = vmatprep.subr.mxu0 0.0
  %7203 = vmatpush1.msra.mxu0 0.0
  %7204 = vmatprep.subr.mxu0 0.0
  %7205 = vmatpush1.msra.mxu0 0.0
  %7206 = vmatprep.subr.mxu0 0.0
  %7207 = vmatpush1.msra.mxu0 0.0
  %7208 = vmatprep.subr.mxu0 0.0
  %7209 = vmatpush1.msra.mxu0 0.0
  %7210 = vmatprep.subr.mxu0 0.0
  %7211 = vmatpush1.msra.mxu0 0.0
  %7212 = vmatprep.subr.mxu0 0.0
  %7213 = vmatpush1.msra.mxu0 0.0
  %7214 = vmatprep.subr.mxu0 0.0
  %7215 = vmatpush1.msra.mxu0 0.0
  %7216 = vmatprep.subr.mxu0 0.0
  %7217 = vmatpush1.msra.mxu0 0.0
  %7218 = vmatprep.subr.mxu0 0.0
  %7219 = vmatpush1.msra.mxu0 0.0
  %7220 = vmatprep.subr.mxu0 0.0
  %7221 = vmatpush1.msra.mxu0 0.0
  %7222 = vmatprep.subr.mxu0 0.0
  %7223 = vmatpush1.msra.mxu0 0.0
  %7224 = vmatprep.subr.mxu0 0.0
  %7225 = vmatpush1.msra.mxu0 0.0
  %7226 = vmatprep.subr.mxu0 0.0
  %7227 = vmatpush1.msra.mxu0 0.0
  %7228 = vmatprep.subr.mxu0 0.0
  %7229 = vmatpush1.msra.mxu0 0.0
  %7230 = vmatprep.subr.mxu0 0.0
  %7231 = vmatpush1.msra.mxu0 0.0
  %7232 = vmatprep.subr.mxu0 0.0
  %7233 = vmatpush1.msra.mxu0 0.0
  %7234 = vmatprep.subr.mxu0 0.0
  %7235 = vmatpush1.msra.mxu0 0.0
  %7236 = vmatprep.subr.mxu0 0.0
  %7237 = vmatpush1.msra.mxu0 0.0
  %7238 = vmatprep.subr.mxu0 0.0
  %7239 = vmatpush1.msra.mxu0 0.0
  %7240 = vmatprep.subr.mxu0 0.0
  %7241 = vmatpush1.msra.mxu0 0.0
  %7242 = vmatprep.mubr.f32.mxu0 0.0
  %v7243 = vand.u32 %v6837, 4294901760
  %7244 = vmatmul.mubr.f32.gmra.mrb[0].mxu0 %v7243
  %v7245 = vpop.f32.mrb[0].mxu0
  %v7246 = vadd.f32 %v7163, %v7245
  %v7247 = vpop.f32.mrb[0].mxu0
  %7248 = vdwg.mxu0
  %7249 = vmatprep.subr.mxu0 0.0
  %v7250 = vand.u32 %v6825, 4294901760
  %7251 = vmatpush1.msra.mxu0 %v7250
  %7252 = vmatprep.subr.mxu0 0.0
  %v7253 = vand.u32 %v6826, 4294901760
  %7254 = vmatpush1.msra.mxu0 %v7253
  %7255 = vmatprep.subr.mxu0 0.0
  %v7256 = vand.u32 %v6827, 4294901760
  %7257 = vmatpush1.msra.mxu0 %v7256
  %7258 = vmatprep.subr.mxu0 0.0
  %v7259 = vand.u32 %v6828, 4294901760
  %7260 = vmatpush1.msra.mxu0 %v7259
  %7261 = vmatprep.subr.mxu0 0.0
  %7262 = vmatpush1.msra.mxu0 0.0
  %7263 = vmatprep.subr.mxu0 0.0
  %7264 = vmatpush1.msra.mxu0 0.0
  %7265 = vmatprep.subr.mxu0 0.0
  %7266 = vmatpush1.msra.mxu0 0.0
  %7267 = vmatprep.subr.mxu0 0.0
  %7268 = vmatpush1.msra.mxu0 0.0
  %7269 = vmatprep.subr.mxu0 0.0
  %7270 = vmatpush1.msra.mxu0 0.0
  %7271 = vmatprep.subr.mxu0 0.0
  %7272 = vmatpush1.msra.mxu0 0.0
  %7273 = vmatprep.subr.mxu0 0.0
  %7274 = vmatpush1.msra.mxu0 0.0
  %7275 = vmatprep.subr.mxu0 0.0
  %7276 = vmatpush1.msra.mxu0 0.0
  %7277 = vmatprep.subr.mxu0 0.0
  %7278 = vmatpush1.msra.mxu0 0.0
  %7279 = vmatprep.subr.mxu0 0.0
  %7280 = vmatpush1.msra.mxu0 0.0
  %7281 = vmatprep.subr.mxu0 0.0
  %7282 = vmatpush1.msra.mxu0 0.0
  %7283 = vmatprep.subr.mxu0 0.0
  %7284 = vmatpush1.msra.mxu0 0.0
  %7285 = vmatprep.subr.mxu0 0.0
  %7286 = vmatpush1.msra.mxu0 0.0
  %7287 = vmatprep.subr.mxu0 0.0
  %7288 = vmatpush1.msra.mxu0 0.0
  %7289 = vmatprep.subr.mxu0 0.0
  %7290 = vmatpush1.msra.mxu0 0.0
  %7291 = vmatprep.subr.mxu0 0.0
  %7292 = vmatpush1.msra.mxu0 0.0
  %7293 = vmatprep.subr.mxu0 0.0
  %7294 = vmatpush1.msra.mxu0 0.0
  %7295 = vmatprep.subr.mxu0 0.0
  %7296 = vmatpush1.msra.mxu0 0.0
  %7297 = vmatprep.subr.mxu0 0.0
  %7298 = vmatpush1.msra.mxu0 0.0
  %7299 = vmatprep.subr.mxu0 0.0
  %7300 = vmatpush1.msra.mxu0 0.0
  %7301 = vmatprep.subr.mxu0 0.0
  %7302 = vmatpush1.msra.mxu0 0.0
  %7303 = vmatprep.subr.mxu0 0.0
  %7304 = vmatpush1.msra.mxu0 0.0
  %7305 = vmatprep.subr.mxu0 0.0
  %7306 = vmatpush1.msra.mxu0 0.0
  %7307 = vmatprep.subr.mxu0 0.0
  %7308 = vmatpush1.msra.mxu0 0.0
  %7309 = vmatprep.subr.mxu0 0.0
  %7310 = vmatpush1.msra.mxu0 0.0
  %7311 = vmatprep.subr.mxu0 0.0
  %7312 = vmatpush1.msra.mxu0 0.0
  %7313 = vmatprep.subr.mxu0 0.0
  %7314 = vmatpush1.msra.mxu0 0.0
  %7315 = vmatprep.subr.mxu0 0.0
  %7316 = vmatpush1.msra.mxu0 0.0
  %7317 = vmatprep.mubr.f32.mxu0 0.0
  %v7318 = vand.u32 %v6837, 4294901760
  %7319 = vmatmul.mubr.f32.gmra.mrb[0].mxu0 %v7318
  %v7320 = vpop.f32.mrb[0].mxu0
  %v7321 = vadd.f32 %v7246, %v7320
  %v7322 = vpop.f32.mrb[0].mxu0
  %7323 = vdwg.mxu0
  %v7324 = vmax.f32 %v7321, 0.0
  %v7325 = vld [vmem:[%s14] sm:$0xff]
  %v7326 = vld [vmem:[%s14 + $0x8] sm:$0xff]
  %v7327 = vld [vmem:[%s14 + $0x10] sm:$0xff]
  %v7328 = vld [vmem:[%s14 + $0x18] sm:$0xff]
  %v7329 = vld [vmem:[%s15] sm:$0x1]
  %v7331 = vlaneseq
  %v7332 = vshrl.u32 %v7331, 7
  %v7333 = vsub.s32 0, %v7332
  %v7334 = vrot.slane %v7329, %v7333
  %v7337 = vsel %vm82, %v7324, 0
  %7339 = vmatprep.subr.mxu0 0.0
  %v7340 = vand.u32 %v7325, 4294901760
  %7341 = vmatpush1.msra.mxu0 %v7340
  %7342 = vmatprep.subr.mxu0 0.0
  %v7343 = vand.u32 %v7326, 4294901760
  %7344 = vmatpush1.msra.mxu0 %v7343
  %7345 = vmatprep.subr.mxu0 0.0
  %v7346 = vand.u32 %v7327, 4294901760
  %7347 = vmatpush1.msra.mxu0 %v7346
  %7348 = vmatprep.subr.mxu0 0.0
  %v7349 = vand.u32 %v7328, 4294901760
  %7350 = vmatpush1.msra.mxu0 %v7349
  %7351 = vmatprep.subr.mxu0 0.0
  %7352 = vmatpush1.msra.mxu0 0.0
  %7353 = vmatprep.subr.mxu0 0.0
  %7354 = vmatpush1.msra.mxu0 0.0
  %7355 = vmatprep.subr.mxu0 0.0
  %7356 = vmatpush1.msra.mxu0 0.0
  %7357 = vmatprep.subr.mxu0 0.0
  %7358 = vmatpush1.msra.mxu0 0.0
  %7359 = vmatprep.subr.mxu0 0.0
  %7360 = vmatpush1.msra.mxu0 0.0
  %7361 = vmatprep.subr.mxu0 0.0
  %7362 = vmatpush1.msra.mxu0 0.0
  %7363 = vmatprep.subr.mxu0 0.0
  %7364 = vmatpush1.msra.mxu0 0.0
  %7365 = vmatprep.subr.mxu0 0.0
  %7366 = vmatpush1.msra.mxu0 0.0
  %7367 = vmatprep.subr.mxu0 0.0
  %7368 = vmatpush1.msra.mxu0 0.0
  %7369 = vmatprep.subr.mxu0 0.0
  %7370 = vmatpush1.msra.mxu0 0.0
  %7371 = vmatprep.subr.mxu0 0.0
  %7372 = vmatpush1.msra.mxu0 0.0
  %7373 = vmatprep.subr.mxu0 0.0
  %7374 = vmatpush1.msra.mxu0 0.0
  %7375 = vmatprep.subr.mxu0 0.0
  %7376 = vmatpush1.msra.mxu0 0.0
  %7377 = vmatprep.subr.mxu0 0.0
  %7378 = vmatpush1.msra.mxu0 0.0
  %7379 = vmatprep.subr.mxu0 0.0
  %7380 = vmatpush1.msra.mxu0 0.0
  %7381 = vmatprep.subr.mxu0 0.0
  %7382 = vmatpush1.msra.mxu0 0.0
  %7383 = vmatprep.subr.mxu0 0.0
  %7384 = vmatpush1.msra.mxu0 0.0
  %7385 = vmatprep.subr.mxu0 0.0
  %7386 = vmatpush1.msra.mxu0 0.0
  %7387 = vmatprep.subr.mxu0 0.0
  %7388 = vmatpush1.msra.mxu0 0.0
  %7389 = vmatprep.subr.mxu0 0.0
  %7390 = vmatpush1.msra.mxu0 0.0
  %7391 = vmatprep.subr.mxu0 0.0
  %7392 = vmatpush1.msra.mxu0 0.0
  %7393 = vmatprep.subr.mxu0 0.0
  %7394 = vmatpush1.msra.mxu0 0.0
  %7395 = vmatprep.subr.mxu0 0.0
  %7396 = vmatpush1.msra.mxu0 0.0
  %7397 = vmatprep.subr.mxu0 0.0
  %7398 = vmatpush1.msra.mxu0 0.0
  %7399 = vmatprep.subr.mxu0 0.0
  %7400 = vmatpush1.msra.mxu0 0.0
  %7401 = vmatprep.subr.mxu0 0.0
  %7402 = vmatpush1.msra.mxu0 0.0
  %7403 = vmatprep.subr.mxu0 0.0
  %7404 = vmatpush1.msra.mxu0 0.0
  %7405 = vmatprep.subr.mxu0 0.0
  %7406 = vmatpush1.msra.mxu0 0.0
  %7407 = vmatprep.mubr.f32.mxu0 0.0
  %v7408 = vand.u32 %v7337, 4294901760
  %v7409 = vsub.f32 %v7337, %v7408
  %v7410 = vand.u32 %v7409, 4294901760
  %v7411 = vsub.f32 %v7409, %v7410
  %v7412 = vand.u32 %v7411, 4294901760
  %7413 = vmatmul.mubr.f32.gmra.mrb[0].mxu0 %v7412
  %v7414 = vpop.f32.mrb[0].mxu0
  %v7415 = vadd.f32 %v7334, %v7414
  %v7416 = vpop.f32.mrb[0].mxu0
  %7417 = vdwg.mxu0
  %7418 = vmatprep.subr.mxu0 0.0
  %v7419 = vand.u32 %v7325, 4294901760
  %v7420 = vsub.f32 %v7325, %v7419
  %v7421 = vand.u32 %v7420, 4294901760
  %v7422 = vsub.f32 %v7420, %v7421
  %v7423 = vand.u32 %v7422, 4294901760
  %7424 = vmatpush1.msra.mxu0 %v7423
  %7425 = vmatprep.subr.mxu0 0.0
  %v7426 = vand.u32 %v7326, 4294901760
  %v7427 = vsub.f32 %v7326, %v7426
  %v7428 = vand.u32 %v7427, 4294901760
  %v7429 = vsub.f32 %v7427, %v7428
  %v7430 = vand.u32 %v7429, 4294901760
  %7431 = vmatpush1.msra.mxu0 %v7430
  %7432 = vmatprep.subr.mxu0 0.0
  %v7433 = vand.u32 %v7327, 4294901760
  %v7434 = vsub.f32 %v7327, %v7433
  %v7435 = vand.u32 %v7434, 4294901760
  %v7436 = vsub.f32 %v7434, %v7435
  %v7437 = vand.u32 %v7436, 4294901760
  %7438 = vmatpush1.msra.mxu0 %v7437
  %7439 = vmatprep.subr.mxu0 0.0
  %v7440 = vand.u32 %v7328, 4294901760
  %v7441 = vsub.f32 %v7328, %v7440
  %v7442 = vand.u32 %v7441, 4294901760
  %v7443 = vsub.f32 %v7441, %v7442
  %v7444 = vand.u32 %v7443, 4294901760
  %7445 = vmatpush1.msra.mxu0 %v7444
  %7446 = vmatprep.subr.mxu0 0.0
  %7447 = vmatpush1.msra.mxu0 0.0
  %7448 = vmatprep.subr.mxu0 0.0
  %7449 = vmatpush1.msra.mxu0 0.0
  %7450 = vmatprep.subr.mxu0 0.0
  %7451 = vmatpush1.msra.mxu0 0.0
  %7452 = vmatprep.subr.mxu0 0.0
  %7453 = vmatpush1.msra.mxu0 0.0
  %7454 = vmatprep.subr.mxu0 0.0
  %7455 = vmatpush1.msra.mxu0 0.0
  %7456 = vmatprep.subr.mxu0 0.0
  %7457 = vmatpush1.msra.mxu0 0.0
  %7458 = vmatprep.subr.mxu0 0.0
  %7459 = vmatpush1.msra.mxu0 0.0
  %7460 = vmatprep.subr.mxu0 0.0
  %7461 = vmatpush1.msra.mxu0 0.0
  %7462 = vmatprep.subr.mxu0 0.0
  %7463 = vmatpush1.msra.mxu0 0.0
  %7464 = vmatprep.subr.mxu0 0.0
  %7465 = vmatpush1.msra.mxu0 0.0
  %7466 = vmatprep.subr.mxu0 0.0
  %7467 = vmatpush1.msra.mxu0 0.0
  %7468 = vmatprep.subr.mxu0 0.0
  %7469 = vmatpush1.msra.mxu0 0.0
  %7470 = vmatprep.subr.mxu0 0.0
  %7471 = vmatpush1.msra.mxu0 0.0
  %7472 = vmatprep.subr.mxu0 0.0
  %7473 = vmatpush1.msra.mxu0 0.0
  %7474 = vmatprep.subr.mxu0 0.0
  %7475 = vmatpush1.msra.mxu0 0.0
  %7476 = vmatprep.subr.mxu0 0.0
  %7477 = vmatpush1.msra.mxu0 0.0
  %7478 = vmatprep.subr.mxu0 0.0
  %7479 = vmatpush1.msra.mxu0 0.0
  %7480 = vmatprep.subr.mxu0 0.0
  %7481 = vmatpush1.msra.mxu0 0.0
  %7482 = vmatprep.subr.mxu0 0.0
  %7483 = vmatpush1.msra.mxu0 0.0
  %7484 = vmatprep.subr.mxu0 0.0
  %7485 = vmatpush1.msra.mxu0 0.0
  %7486 = vmatprep.subr.mxu0 0.0
  %7487 = vmatpush1.msra.mxu0 0.0
  %7488 = vmatprep.subr.mxu0 0.0
  %7489 = vmatpush1.msra.mxu0 0.0
  %7490 = vmatprep.subr.mxu0 0.0
  %7491 = vmatpush1.msra.mxu0 0.0
  %7492 = vmatprep.subr.mxu0 0.0
  %7493 = vmatpush1.msra.mxu0 0.0
  %7494 = vmatprep.subr.mxu0 0.0
  %7495 = vmatpush1.msra.mxu0 0.0
  %7496 = vmatprep.subr.mxu0 0.0
  %7497 = vmatpush1.msra.mxu0 0.0
  %7498 = vmatprep.subr.mxu0 0.0
  %7499 = vmatpush1.msra.mxu0 0.0
  %7500 = vmatprep.subr.mxu0 0.0
  %7501 = vmatpush1.msra.mxu0 0.0
  %7502 = vmatprep.mubr.f32.mxu0 0.0
  %v7503 = vand.u32 %v7337, 4294901760
  %7504 = vmatmul.mubr.f32.gmra.mrb[0].mxu0 %v7503
  %v7505 = vpop.f32.mrb[0].mxu0
  %v7506 = vadd.f32 %v7415, %v7505
  %v7507 = vpop.f32.mrb[0].mxu0
  %7508 = vdwg.mxu0
  %7509 = vmatprep.subr.mxu0 0.0
  %v7510 = vand.u32 %v7325, 4294901760
  %v7511 = vsub.f32 %v7325, %v7510
  %7512 = vmatpush1.msra.mxu0 %v7511
  %7513 = vmatprep.subr.mxu0 0.0
  %v7514 = vand.u32 %v7326, 4294901760
  %v7515 = vsub.f32 %v7326, %v7514
  %7516 = vmatpush1.msra.mxu0 %v7515
  %7517 = vmatprep.subr.mxu0 0.0
  %v7518 = vand.u32 %v7327, 4294901760
  %v7519 = vsub.f32 %v7327, %v7518
  %7520 = vmatpush1.msra.mxu0 %v7519
  %7521 = vmatprep.subr.mxu0 0.0
  %v7522 = vand.u32 %v7328, 4294901760
  %v7523 = vsub.f32 %v7328, %v7522
  %7524 = vmatpush1.msra.mxu0 %v7523
  %7525 = vmatprep.subr.mxu0 0.0
  %7526 = vmatpush1.msra.mxu0 0.0
  %7527 = vmatprep.subr.mxu0 0.0
  %7528 = vmatpush1.msra.mxu0 0.0
  %7529 = vmatprep.subr.mxu0 0.0
  %7530 = vmatpush1.msra.mxu0 0.0
  %7531 = vmatprep.subr.mxu0 0.0
  %7532 = vmatpush1.msra.mxu0 0.0
  %7533 = vmatprep.subr.mxu0 0.0
  %7534 = vmatpush1.msra.mxu0 0.0
  %7535 = vmatprep.subr.mxu0 0.0
  %7536 = vmatpush1.msra.mxu0 0.0
  %7537 = vmatprep.subr.mxu0 0.0
  %7538 = vmatpush1.msra.mxu0 0.0
  %7539 = vmatprep.subr.mxu0 0.0
  %7540 = vmatpush1.msra.mxu0 0.0
  %7541 = vmatprep.subr.mxu0 0.0
  %7542 = vmatpush1.msra.mxu0 0.0
  %7543 = vmatprep.subr.mxu0 0.0
  %7544 = vmatpush1.msra.mxu0 0.0
  %7545 = vmatprep.subr.mxu0 0.0
  %7546 = vmatpush1.msra.mxu0 0.0
  %7547 = vmatprep.subr.mxu0 0.0
  %7548 = vmatpush1.msra.mxu0 0.0
  %7549 = vmatprep.subr.mxu0 0.0
  %7550 = vmatpush1.msra.mxu0 0.0
  %7551 = vmatprep.subr.mxu0 0.0
  %7552 = vmatpush1.msra.mxu0 0.0
  %7553 = vmatprep.subr.mxu0 0.0
  %7554 = vmatpush1.msra.mxu0 0.0
  %7555 = vmatprep.subr.mxu0 0.0
  %7556 = vmatpush1.msra.mxu0 0.0
  %7557 = vmatprep.subr.mxu0 0.0
  %7558 = vmatpush1.msra.mxu0 0.0
  %7559 = vmatprep.subr.mxu0 0.0
  %7560 = vmatpush1.msra.mxu0 0.0
  %7561 = vmatprep.subr.mxu0 0.0
  %7562 = vmatpush1.msra.mxu0 0.0
  %7563 = vmatprep.subr.mxu0 0.0
  %7564 = vmatpush1.msra.mxu0 0.0
  %7565 = vmatprep.subr.mxu0 0.0
  %7566 = vmatpush1.msra.mxu0 0.0
  %7567 = vmatprep.subr.mxu0 0.0
  %7568 = vmatpush1.msra.mxu0 0.0
  %7569 = vmatprep.subr.mxu0 0.0
  %7570 = vmatpush1.msra.mxu0 0.0
  %7571 = vmatprep.subr.mxu0 0.0
  %7572 = vmatpush1.msra.mxu0 0.0
  %7573 = vmatprep.subr.mxu0 0.0
  %7574 = vmatpush1.msra.mxu0 0.0
  %7575 = vmatprep.subr.mxu0 0.0
  %7576 = vmatpush1.msra.mxu0 0.0
  %7577 = vmatprep.subr.mxu0 0.0
  %7578 = vmatpush1.msra.mxu0 0.0
  %7579 = vmatprep.subr.mxu0 0.0
  %7580 = vmatpush1.msra.mxu0 0.0
  %7581 = vmatprep.mubr.f32.mxu0 0.0
  %v7582 = vand.u32 %v7337, 4294901760
  %v7583 = vsub.f32 %v7337, %v7582
  %7584 = vmatmul.mubr.f32.gmra.mrb[0].mxu0 %v7583
  %v7585 = vpop.f32.mrb[0].mxu0
  %v7586 = vadd.f32 %v7506, %v7585
  %v7587 = vpop.f32.mrb[0].mxu0
  %7588 = vdwg.mxu0
  %7589 = vmatprep.subr.mxu0 0.0
  %v7590 = vand.u32 %v7325, 4294901760
  %7591 = vmatpush1.msra.mxu0 %v7590
  %7592 = vmatprep.subr.mxu0 0.0
  %v7593 = vand.u32 %v7326, 4294901760
  %7594 = vmatpush1.msra.mxu0 %v7593
  %7595 = vmatprep.subr.mxu0 0.0
  %v7596 = vand.u32 %v7327, 4294901760
  %7597 = vmatpush1.msra.mxu0 %v7596
  %7598 = vmatprep.subr.mxu0 0.0
  %v7599 = vand.u32 %v7328, 4294901760
  %7600 = vmatpush1.msra.mxu0 %v7599
  %7601 = vmatprep.subr.mxu0 0.0
  %7602 = vmatpush1.msra.mxu0 0.0
  %7603 = vmatprep.subr.mxu0 0.0
  %7604 = vmatpush1.msra.mxu0 0.0
  %7605 = vmatprep.subr.mxu0 0.0
  %7606 = vmatpush1.msra.mxu0 0.0
  %7607 = vmatprep.subr.mxu0 0.0
  %7608 = vmatpush1.msra.mxu0 0.0
  %7609 = vmatprep.subr.mxu0 0.0
  %7610 = vmatpush1.msra.mxu0 0.0
  %7611 = vmatprep.subr.mxu0 0.0
  %7612 = vmatpush1.msra.mxu0 0.0
  %7613 = vmatprep.subr.mxu0 0.0
  %7614 = vmatpush1.msra.mxu0 0.0
  %7615 = vmatprep.subr.mxu0 0.0
  %7616 = vmatpush1.msra.mxu0 0.0
  %7617 = vmatprep.subr.mxu0 0.0
  %7618 = vmatpush1.msra.mxu0 0.0
  %7619 = vmatprep.subr.mxu0 0.0
  %7620 = vmatpush1.msra.mxu0 0.0
  %7621 = vmatprep.subr.mxu0 0.0
  %7622 = vmatpush1.msra.mxu0 0.0
  %7623 = vmatprep.subr.mxu0 0.0
  %7624 = vmatpush1.msra.mxu0 0.0
  %7625 = vmatprep.subr.mxu0 0.0
  %7626 = vmatpush1.msra.mxu0 0.0
  %7627 = vmatprep.subr.mxu0 0.0
  %7628 = vmatpush1.msra.mxu0 0.0
  %7629 = vmatprep.subr.mxu0 0.0
  %7630 = vmatpush1.msra.mxu0 0.0
  %7631 = vmatprep.subr.mxu0 0.0
  %7632 = vmatpush1.msra.mxu0 0.0
  %7633 = vmatprep.subr.mxu0 0.0
  %7634 = vmatpush1.msra.mxu0 0.0
  %7635 = vmatprep.subr.mxu0 0.0
  %7636 = vmatpush1.msra.mxu0 0.0
  %7637 = vmatprep.subr.mxu0 0.0
  %7638 = vmatpush1.msra.mxu0 0.0
  %7639 = vmatprep.subr.mxu0 0.0
  %7640 = vmatpush1.msra.mxu0 0.0
  %7641 = vmatprep.subr.mxu0 0.0
  %7642 = vmatpush1.msra.mxu0 0.0
  %7643 = vmatprep.subr.mxu0 0.0
  %7644 = vmatpush1.msra.mxu0 0.0
  %7645 = vmatprep.subr.mxu0 0.0
  %7646 = vmatpush1.msra.mxu0 0.0
  %7647 = vmatprep.subr.mxu0 0.0
  %7648 = vmatpush1.msra.mxu0 0.0
  %7649 = vmatprep.subr.mxu0 0.0
  %7650 = vmatpush1.msra.mxu0 0.0
  %7651 = vmatprep.subr.mxu0 0.0
  %7652 = vmatpush1.msra.mxu0 0.0
  %7653 = vmatprep.subr.mxu0 0.0
  %7654 = vmatpush1.msra.mxu0 0.0
  %7655 = vmatprep.subr.mxu0 0.0
  %7656 = vmatpush1.msra.mxu0 0.0
  %7657 = vmatprep.mubr.f32.mxu0 0.0
  %v7658 = vand.u32 %v7337, 4294901760
  %v7659 = vsub.f32 %v7337, %v7658
  %v7660 = vand.u32 %v7659, 4294901760
  %7661 = vmatmul.mubr.f32.gmra.mrb[0].mxu0 %v7660
  %v7662 = vpop.f32.mrb[0].mxu0
  %v7663 = vadd.f32 %v7586, %v7662
  %v7664 = vpop.f32.mrb[0].mxu0
  %7665 = vdwg.mxu0
  %7666 = vmatprep.subr.mxu0 0.0
  %v7667 = vand.u32 %v7325, 4294901760
  %v7668 = vsub.f32 %v7325, %v7667
  %v7669 = vand.u32 %v7668, 4294901760
  %7670 = vmatpush1.msra.mxu0 %v7669
  %7671 = vmatprep.subr.mxu0 0.0
  %v7672 = vand.u32 %v7326, 4294901760
  %v7673 = vsub.f32 %v7326, %v7672
  %v7674 = vand.u32 %v7673, 4294901760
  %7675 = vmatpush1.msra.mxu0 %v7674
  %7676 = vmatprep.subr.mxu0 0.0
  %v7677 = vand.u32 %v7327, 4294901760
  %v7678 = vsub.f32 %v7327, %v7677
  %v7679 = vand.u32 %v7678, 4294901760
  %7680 = vmatpush1.msra.mxu0 %v7679
  %7681 = vmatprep.subr.mxu0 0.0
  %v7682 = vand.u32 %v7328, 4294901760
  %v7683 = vsub.f32 %v7328, %v7682
  %v7684 = vand.u32 %v7683, 4294901760
  %7685 = vmatpush1.msra.mxu0 %v7684
  %7686 = vmatprep.subr.mxu0 0.0
  %7687 = vmatpush1.msra.mxu0 0.0
  %7688 = vmatprep.subr.mxu0 0.0
  %7689 = vmatpush1.msra.mxu0 0.0
  %7690 = vmatprep.subr.mxu0 0.0
  %7691 = vmatpush1.msra.mxu0 0.0
  %7692 = vmatprep.subr.mxu0 0.0
  %7693 = vmatpush1.msra.mxu0 0.0
  %7694 = vmatprep.subr.mxu0 0.0
  %7695 = vmatpush1.msra.mxu0 0.0
  %7696 = vmatprep.subr.mxu0 0.0
  %7697 = vmatpush1.msra.mxu0 0.0
  %7698 = vmatprep.subr.mxu0 0.0
  %7699 = vmatpush1.msra.mxu0 0.0
  %7700 = vmatprep.subr.mxu0 0.0
  %7701 = vmatpush1.msra.mxu0 0.0
  %7702 = vmatprep.subr.mxu0 0.0
  %7703 = vmatpush1.msra.mxu0 0.0
  %7704 = vmatprep.subr.mxu0 0.0
  %7705 = vmatpush1.msra.mxu0 0.0
  %7706 = vmatprep.subr.mxu0 0.0
  %7707 = vmatpush1.msra.mxu0 0.0
  %7708 = vmatprep.subr.mxu0 0.0
  %7709 = vmatpush1.msra.mxu0 0.0
  %7710 = vmatprep.subr.mxu0 0.0
  %7711 = vmatpush1.msra.mxu0 0.0
  %7712 = vmatprep.subr.mxu0 0.0
  %7713 = vmatpush1.msra.mxu0 0.0
  %7714 = vmatprep.subr.mxu0 0.0
  %7715 = vmatpush1.msra.mxu0 0.0
  %7716 = vmatprep.subr.mxu0 0.0
  %7717 = vmatpush1.msra.mxu0 0.0
  %7718 = vmatprep.subr.mxu0 0.0
  %7719 = vmatpush1.msra.mxu0 0.0
  %7720 = vmatprep.subr.mxu0 0.0
  %7721 = vmatpush1.msra.mxu0 0.0
  %7722 = vmatprep.subr.mxu0 0.0
  %7723 = vmatpush1.msra.mxu0 0.0
  %7724 = vmatprep.subr.mxu0 0.0
  %7725 = vmatpush1.msra.mxu0 0.0
  %7726 = vmatprep.subr.mxu0 0.0
  %7727 = vmatpush1.msra.mxu0 0.0
  %7728 = vmatprep.subr.mxu0 0.0
  %7729 = vmatpush1.msra.mxu0 0.0
  %7730 = vmatprep.subr.mxu0 0.0
  %7731 = vmatpush1.msra.mxu0 0.0
  %7732 = vmatprep.subr.mxu0 0.0
  %7733 = vmatpush1.msra.mxu0 0.0
  %7734 = vmatprep.subr.mxu0 0.0
  %7735 = vmatpush1.msra.mxu0 0.0
  %7736 = vmatprep.subr.mxu0 0.0
  %7737 = vmatpush1.msra.mxu0 0.0
  %7738 = vmatprep.subr.mxu0 0.0
  %7739 = vmatpush1.msra.mxu0 0.0
  %7740 = vmatprep.subr.mxu0 0.0
  %7741 = vmatpush1.msra.mxu0 0.0
  %7742 = vmatprep.mubr.f32.mxu0 0.0
  %v7743 = vand.u32 %v7337, 4294901760
  %7744 = vmatmul.mubr.f32.gmra.mrb[0].mxu0 %v7743
  %v7745 = vpop.f32.mrb[0].mxu0
  %v7746 = vadd.f32 %v7663, %v7745
  %v7747 = vpop.f32.mrb[0].mxu0
  %7748 = vdwg.mxu0
  %7749 = vmatprep.subr.mxu0 0.0
  %v7750 = vand.u32 %v7325, 4294901760
  %7751 = vmatpush1.msra.mxu0 %v7750
  %7752 = vmatprep.subr.mxu0 0.0
  %v7753 = vand.u32 %v7326, 4294901760
  %7754 = vmatpush1.msra.mxu0 %v7753
  %7755 = vmatprep.subr.mxu0 0.0
  %v7756 = vand.u32 %v7327, 4294901760
  %7757 = vmatpush1.msra.mxu0 %v7756
  %7758 = vmatprep.subr.mxu0 0.0
  %v7759 = vand.u32 %v7328, 4294901760
  %7760 = vmatpush1.msra.mxu0 %v7759
  %7761 = vmatprep.subr.mxu0 0.0
  %7762 = vmatpush1.msra.mxu0 0.0
  %7763 = vmatprep.subr.mxu0 0.0
  %7764 = vmatpush1.msra.mxu0 0.0
  %7765 = vmatprep.subr.mxu0 0.0
  %7766 = vmatpush1.msra.mxu0 0.0
  %7767 = vmatprep.subr.mxu0 0.0
  %7768 = vmatpush1.msra.mxu0 0.0
  %7769 = vmatprep.subr.mxu0 0.0
  %7770 = vmatpush1.msra.mxu0 0.0
  %7771 = vmatprep.subr.mxu0 0.0
  %7772 = vmatpush1.msra.mxu0 0.0
  %7773 = vmatprep.subr.mxu0 0.0
  %7774 = vmatpush1.msra.mxu0 0.0
  %7775 = vmatprep.subr.mxu0 0.0
  %7776 = vmatpush1.msra.mxu0 0.0
  %7777 = vmatprep.subr.mxu0 0.0
  %7778 = vmatpush1.msra.mxu0 0.0
  %7779 = vmatprep.subr.mxu0 0.0
  %7780 = vmatpush1.msra.mxu0 0.0
  %7781 = vmatprep.subr.mxu0 0.0
  %7782 = vmatpush1.msra.mxu0 0.0
  %7783 = vmatprep.subr.mxu0 0.0
  %7784 = vmatpush1.msra.mxu0 0.0
  %7785 = vmatprep.subr.mxu0 0.0
  %7786 = vmatpush1.msra.mxu0 0.0
  %7787 = vmatprep.subr.mxu0 0.0
  %7788 = vmatpush1.msra.mxu0 0.0
  %7789 = vmatprep.subr.mxu0 0.0
  %7790 = vmatpush1.msra.mxu0 0.0
  %7791 = vmatprep.subr.mxu0 0.0
  %7792 = vmatpush1.msra.mxu0 0.0
  %7793 = vmatprep.subr.mxu0 0.0
  %7794 = vmatpush1.msra.mxu0 0.0
  %7795 = vmatprep.subr.mxu0 0.0
  %7796 = vmatpush1.msra.mxu0 0.0
  %7797 = vmatprep.subr.mxu0 0.0
  %7798 = vmatpush1.msra.mxu0 0.0
  %7799 = vmatprep.subr.mxu0 0.0
  %7800 = vmatpush1.msra.mxu0 0.0
  %7801 = vmatprep.subr.mxu0 0.0
  %7802 = vmatpush1.msra.mxu0 0.0
  %7803 = vmatprep.subr.mxu0 0.0
  %7804 = vmatpush1.msra.mxu0 0.0
  %7805 = vmatprep.subr.mxu0 0.0
  %7806 = vmatpush1.msra.mxu0 0.0
  %7807 = vmatprep.subr.mxu0 0.0
  %7808 = vmatpush1.msra.mxu0 0.0
  %7809 = vmatprep.subr.mxu0 0.0
  %7810 = vmatpush1.msra.mxu0 0.0
  %7811 = vmatprep.subr.mxu0 0.0
  %7812 = vmatpush1.msra.mxu0 0.0
  %7813 = vmatprep.subr.mxu0 0.0
  %7814 = vmatpush1.msra.mxu0 0.0
  %7815 = vmatprep.subr.mxu0 0.0
  %7816 = vmatpush1.msra.mxu0 0.0
  %7817 = vmatprep.mubr.f32.mxu0 0.0
  %v7818 = vand.u32 %v7337, 4294901760
  %7819 = vmatmul.mubr.f32.gmra.mrb[0].mxu0 %v7818
  %v7820 = vpop.f32.mrb[0].mxu0
  %v7821 = vadd.f32 %v7746, %v7820
  %v7822 = vpop.f32.mrb[0].mxu0
  %7823 = vdwg.mxu0
  %v7824 = vmax.f32 %v7821, 0.0
  %v7825 = vld [vmem:[%s16] sm:$0xff]
  %v7826 = vld [vmem:[%s16 + $0x8] sm:$0xff]
  %v7827 = vld [vmem:[%s16 + $0x10] sm:$0xff]
  %v7828 = vld [vmem:[%s16 + $0x18] sm:$0xff]
  %v7829 = vld [vmem:[%s17] sm:$0x1]
  %v7831 = vlaneseq
  %v7832 = vshrl.u32 %v7831, 7
  %v7833 = vsub.s32 0, %v7832
  %v7834 = vrot.slane %v7829, %v7833
  %v7837 = vsel %vm82, %v7824, 0
  %7839 = vmatprep.subr.mxu0 0.0
  %v7840 = vand.u32 %v7825, 4294901760
  %7841 = vmatpush1.msra.mxu0 %v7840
  %7842 = vmatprep.subr.mxu0 0.0
  %v7843 = vand.u32 %v7826, 4294901760
  %7844 = vmatpush1.msra.mxu0 %v7843
  %7845 = vmatprep.subr.mxu0 0.0
  %v7846 = vand.u32 %v7827, 4294901760
  %7847 = vmatpush1.msra.mxu0 %v7846
  %7848 = vmatprep.subr.mxu0 0.0
  %v7849 = vand.u32 %v7828, 4294901760
  %7850 = vmatpush1.msra.mxu0 %v7849
  %7851 = vmatprep.subr.mxu0 0.0
  %7852 = vmatpush1.msra.mxu0 0.0
  %7853 = vmatprep.subr.mxu0 0.0
  %7854 = vmatpush1.msra.mxu0 0.0
  %7855 = vmatprep.subr.mxu0 0.0
  %7856 = vmatpush1.msra.mxu0 0.0
  %7857 = vmatprep.subr.mxu0 0.0
  %7858 = vmatpush1.msra.mxu0 0.0
  %7859 = vmatprep.subr.mxu0 0.0
  %7860 = vmatpush1.msra.mxu0 0.0
  %7861 = vmatprep.subr.mxu0 0.0
  %7862 = vmatpush1.msra.mxu0 0.0
  %7863 = vmatprep.subr.mxu0 0.0
  %7864 = vmatpush1.msra.mxu0 0.0
  %7865 = vmatprep.subr.mxu0 0.0
  %7866 = vmatpush1.msra.mxu0 0.0
  %7867 = vmatprep.subr.mxu0 0.0
  %7868 = vmatpush1.msra.mxu0 0.0
  %7869 = vmatprep.subr.mxu0 0.0
  %7870 = vmatpush1.msra.mxu0 0.0
  %7871 = vmatprep.subr.mxu0 0.0
  %7872 = vmatpush1.msra.mxu0 0.0
  %7873 = vmatprep.subr.mxu0 0.0
  %7874 = vmatpush1.msra.mxu0 0.0
  %7875 = vmatprep.subr.mxu0 0.0
  %7876 = vmatpush1.msra.mxu0 0.0
  %7877 = vmatprep.subr.mxu0 0.0
  %7878 = vmatpush1.msra.mxu0 0.0
  %7879 = vmatprep.subr.mxu0 0.0
  %7880 = vmatpush1.msra.mxu0 0.0
  %7881 = vmatprep.subr.mxu0 0.0
  %7882 = vmatpush1.msra.mxu0 0.0
  %7883 = vmatprep.subr.mxu0 0.0
  %7884 = vmatpush1.msra.mxu0 0.0
  %7885 = vmatprep.subr.mxu0 0.0
  %7886 = vmatpush1.msra.mxu0 0.0
  %7887 = vmatprep.subr.mxu0 0.0
  %7888 = vmatpush1.msra.mxu0 0.0
  %7889 = vmatprep.subr.mxu0 0.0
  %7890 = vmatpush1.msra.mxu0 0.0
  %7891 = vmatprep.subr.mxu0 0.0
  %7892 = vmatpush1.msra.mxu0 0.0
  %7893 = vmatprep.subr.mxu0 0.0
  %7894 = vmatpush1.msra.mxu0 0.0
  %7895 = vmatprep.subr.mxu0 0.0
  %7896 = vmatpush1.msra.mxu0 0.0
  %7897 = vmatprep.subr.mxu0 0.0
  %7898 = vmatpush1.msra.mxu0 0.0
  %7899 = vmatprep.subr.mxu0 0.0
  %7900 = vmatpush1.msra.mxu0 0.0
  %7901 = vmatprep.subr.mxu0 0.0
  %7902 = vmatpush1.msra.mxu0 0.0
  %7903 = vmatprep.subr.mxu0 0.0
  %7904 = vmatpush1.msra.mxu0 0.0
  %7905 = vmatprep.subr.mxu0 0.0
  %7906 = vmatpush1.msra.mxu0 0.0
  %7907 = vmatprep.mubr.f32.mxu0 0.0
  %v7908 = vand.u32 %v7837, 4294901760
  %v7909 = vsub.f32 %v7837, %v7908
  %v7910 = vand.u32 %v7909, 4294901760
  %v7911 = vsub.f32 %v7909, %v7910
  %v7912 = vand.u32 %v7911, 4294901760
  %7913 = vmatmul.mubr.f32.gmra.mrb[0].mxu0 %v7912
  %v7914 = vpop.f32.mrb[0].mxu0
  %v7915 = vadd.f32 %v7834, %v7914
  %v7916 = vpop.f32.mrb[0].mxu0
  %7917 = vdwg.mxu0
  %7918 = vmatprep.subr.mxu0 0.0
  %v7919 = vand.u32 %v7825, 4294901760
  %v7920 = vsub.f32 %v7825, %v7919
  %v7921 = vand.u32 %v7920, 4294901760
  %v7922 = vsub.f32 %v7920, %v7921
  %v7923 = vand.u32 %v7922, 4294901760
  %7924 = vmatpush1.msra.mxu0 %v7923
  %7925 = vmatprep.subr.mxu0 0.0
  %v7926 = vand.u32 %v7826, 4294901760
  %v7927 = vsub.f32 %v7826, %v7926
  %v7928 = vand.u32 %v7927, 4294901760
  %v7929 = vsub.f32 %v7927, %v7928
  %v7930 = vand.u32 %v7929, 4294901760
  %7931 = vmatpush1.msra.mxu0 %v7930
  %7932 = vmatprep.subr.mxu0 0.0
  %v7933 = vand.u32 %v7827, 4294901760
  %v7934 = vsub.f32 %v7827, %v7933
  %v7935 = vand.u32 %v7934, 4294901760
  %v7936 = vsub.f32 %v7934, %v7935
  %v7937 = vand.u32 %v7936, 4294901760
  %7938 = vmatpush1.msra.mxu0 %v7937
  %7939 = vmatprep.subr.mxu0 0.0
  %v7940 = vand.u32 %v7828, 4294901760
  %v7941 = vsub.f32 %v7828, %v7940
  %v7942 = vand.u32 %v7941, 4294901760
  %v7943 = vsub.f32 %v7941, %v7942
  %v7944 = vand.u32 %v7943, 4294901760
  %7945 = vmatpush1.msra.mxu0 %v7944
  %7946 = vmatprep.subr.mxu0 0.0
  %7947 = vmatpush1.msra.mxu0 0.0
  %7948 = vmatprep.subr.mxu0 0.0
  %7949 = vmatpush1.msra.mxu0 0.0
  %7950 = vmatprep.subr.mxu0 0.0
  %7951 = vmatpush1.msra.mxu0 0.0
  %7952 = vmatprep.subr.mxu0 0.0
  %7953 = vmatpush1.msra.mxu0 0.0
  %7954 = vmatprep.subr.mxu0 0.0
  %7955 = vmatpush1.msra.mxu0 0.0
  %7956 = vmatprep.subr.mxu0 0.0
  %7957 = vmatpush1.msra.mxu0 0.0
  %7958 = vmatprep.subr.mxu0 0.0
  %7959 = vmatpush1.msra.mxu0 0.0
  %7960 = vmatprep.subr.mxu0 0.0
  %7961 = vmatpush1.msra.mxu0 0.0
  %7962 = vmatprep.subr.mxu0 0.0
  %7963 = vmatpush1.msra.mxu0 0.0
  %7964 = vmatprep.subr.mxu0 0.0
  %7965 = vmatpush1.msra.mxu0 0.0
  %7966 = vmatprep.subr.mxu0 0.0
  %7967 = vmatpush1.msra.mxu0 0.0
  %7968 = vmatprep.subr.mxu0 0.0
  %7969 = vmatpush1.msra.mxu0 0.0
  %7970 = vmatprep.subr.mxu0 0.0
  %7971 = vmatpush1.msra.mxu0 0.0
  %7972 = vmatprep.subr.mxu0 0.0
  %7973 = vmatpush1.msra.mxu0 0.0
  %7974 = vmatprep.subr.mxu0 0.0
  %7975 = vmatpush1.msra.mxu0 0.0
  %7976 = vmatprep.subr.mxu0 0.0
  %7977 = vmatpush1.msra.mxu0 0.0
  %7978 = vmatprep.subr.mxu0 0.0
  %7979 = vmatpush1.msra.mxu0 0.0
  %7980 = vmatprep.subr.mxu0 0.0
  %7981 = vmatpush1.msra.mxu0 0.0
  %7982 = vmatprep.subr.mxu0 0.0
  %7983 = vmatpush1.msra.mxu0 0.0
  %7984 = vmatprep.subr.mxu0 0.0
  %7985 = vmatpush1.msra.mxu0 0.0
  %7986 = vmatprep.subr.mxu0 0.0
  %7987 = vmatpush1.msra.mxu0 0.0
  %7988 = vmatprep.subr.mxu0 0.0
  %7989 = vmatpush1.msra.mxu0 0.0
  %7990 = vmatprep.subr.mxu0 0.0
  %7991 = vmatpush1.msra.mxu0 0.0
  %7992 = vmatprep.subr.mxu0 0.0
  %7993 = vmatpush1.msra.mxu0 0.0
  %7994 = vmatprep.subr.mxu0 0.0
  %7995 = vmatpush1.msra.mxu0 0.0
  %7996 = vmatprep.subr.mxu0 0.0
  %7997 = vmatpush1.msra.mxu0 0.0
  %7998 = vmatprep.subr.mxu0 0.0
  %7999 = vmatpush1.msra.mxu0 0.0
  %8000 = vmatprep.subr.mxu0 0.0
  %8001 = vmatpush1.msra.mxu0 0.0
  %8002 = vmatprep.mubr.f32.mxu0 0.0
  %v8003 = vand.u32 %v7837, 4294901760
  %8004 = vmatmul.mubr.f32.gmra.mrb[0].mxu0 %v8003
  %v8005 = vpop.f32.mrb[0].mxu0
  %v8006 = vadd.f32 %v7915, %v8005
  %v8007 = vpop.f32.mrb[0].mxu0
  %8008 = vdwg.mxu0
  %8009 = vmatprep.subr.mxu0 0.0
  %v8010 = vand.u32 %v7825, 4294901760
  %v8011 = vsub.f32 %v7825, %v8010
  %8012 = vmatpush1.msra.mxu0 %v8011
  %8013 = vmatprep.subr.mxu0 0.0
  %v8014 = vand.u32 %v7826, 4294901760
  %v8015 = vsub.f32 %v7826, %v8014
  %8016 = vmatpush1.msra.mxu0 %v8015
  %8017 = vmatprep.subr.mxu0 0.0
  %v8018 = vand.u32 %v7827, 4294901760
  %v8019 = vsub.f32 %v7827, %v8018
  %8020 = vmatpush1.msra.mxu0 %v8019
  %8021 = vmatprep.subr.mxu0 0.0
  %v8022 = vand.u32 %v7828, 4294901760
  %v8023 = vsub.f32 %v7828, %v8022
  %8024 = vmatpush1.msra.mxu0 %v8023
  %8025 = vmatprep.subr.mxu0 0.0
  %8026 = vmatpush1.msra.mxu0 0.0
  %8027 = vmatprep.subr.mxu0 0.0
  %8028 = vmatpush1.msra.mxu0 0.0
  %8029 = vmatprep.subr.mxu0 0.0
  %8030 = vmatpush1.msra.mxu0 0.0
  %8031 = vmatprep.subr.mxu0 0.0
  %8032 = vmatpush1.msra.mxu0 0.0
  %8033 = vmatprep.subr.mxu0 0.0
  %8034 = vmatpush1.msra.mxu0 0.0
  %8035 = vmatprep.subr.mxu0 0.0
  %8036 = vmatpush1.msra.mxu0 0.0
  %8037 = vmatprep.subr.mxu0 0.0
  %8038 = vmatpush1.msra.mxu0 0.0
  %8039 = vmatprep.subr.mxu0 0.0
  %8040 = vmatpush1.msra.mxu0 0.0
  %8041 = vmatprep.subr.mxu0 0.0
  %8042 = vmatpush1.msra.mxu0 0.0
  %8043 = vmatprep.subr.mxu0 0.0
  %8044 = vmatpush1.msra.mxu0 0.0
  %8045 = vmatprep.subr.mxu0 0.0
  %8046 = vmatpush1.msra.mxu0 0.0
  %8047 = vmatprep.subr.mxu0 0.0
  %8048 = vmatpush1.msra.mxu0 0.0
  %8049 = vmatprep.subr.mxu0 0.0
  %8050 = vmatpush1.msra.mxu0 0.0
  %8051 = vmatprep.subr.mxu0 0.0
  %8052 = vmatpush1.msra.mxu0 0.0
  %8053 = vmatprep.subr.mxu0 0.0
  %8054 = vmatpush1.msra.mxu0 0.0
  %8055 = vmatprep.subr.mxu0 0.0
  %8056 = vmatpush1.msra.mxu0 0.0
  %8057 = vmatprep.subr.mxu0 0.0
  %8058 = vmatpush1.msra.mxu0 0.0
  %8059 = vmatprep.subr.mxu0 0.0
  %8060 = vmatpush1.msra.mxu0 0.0
  %8061 = vmatprep.subr.mxu0 0.0
  %8062 = vmatpush1.msra.mxu0 0.0
  %8063 = vmatprep.subr.mxu0 0.0
  %8064 = vmatpush1.msra.mxu0 0.0
  %8065 = vmatprep.subr.mxu0 0.0
  %8066 = vmatpush1.msra.mxu0 0.0
  %8067 = vmatprep.subr.mxu0 0.0
  %8068 = vmatpush1.msra.mxu0 0.0
  %8069 = vmatprep.subr.mxu0 0.0
  %8070 = vmatpush1.msra.mxu0 0.0
  %8071 = vmatprep.subr.mxu0 0.0
  %8072 = vmatpush1.msra.mxu0 0.0
  %8073 = vmatprep.subr.mxu0 0.0
  %8074 = vmatpush1.msra.mxu0 0.0
  %8075 = vmatprep.subr.mxu0 0.0
  %8076 = vmatpush1.msra.mxu0 0.0
  %8077 = vmatprep.subr.mxu0 0.0
  %8078 = vmatpush1.msra.mxu0 0.0
  %8079 = vmatprep.subr.mxu0 0.0
  %8080 = vmatpush1.msra.mxu0 0.0
  %8081 = vmatprep.mubr.f32.mxu0 0.0
  %v8082 = vand.u32 %v7837, 4294901760
  %v8083 = vsub.f32 %v7837, %v8082
  %8084 = vmatmul.mubr.f32.gmra.mrb[0].mxu0 %v8083
  %v8085 = vpop.f32.mrb[0].mxu0
  %v8086 = vadd.f32 %v8006, %v8085
  %v8087 = vpop.f32.mrb[0].mxu0
  %8088 = vdwg.mxu0
  %8089 = vmatprep.subr.mxu0 0.0
  %v8090 = vand.u32 %v7825, 4294901760
  %8091 = vmatpush1.msra.mxu0 %v8090
  %8092 = vmatprep.subr.mxu0 0.0
  %v8093 = vand.u32 %v7826, 4294901760
  %8094 = vmatpush1.msra.mxu0 %v8093
  %8095 = vmatprep.subr.mxu0 0.0
  %v8096 = vand.u32 %v7827, 4294901760
  %8097 = vmatpush1.msra.mxu0 %v8096
  %8098 = vmatprep.subr.mxu0 0.0
  %v8099 = vand.u32 %v7828, 4294901760
  %8100 = vmatpush1.msra.mxu0 %v8099
  %8101 = vmatprep.subr.mxu0 0.0
  %8102 = vmatpush1.msra.mxu0 0.0
  %8103 = vmatprep.subr.mxu0 0.0
  %8104 = vmatpush1.msra.mxu0 0.0
  %8105 = vmatprep.subr.mxu0 0.0
  %8106 = vmatpush1.msra.mxu0 0.0
  %8107 = vmatprep.subr.mxu0 0.0
  %8108 = vmatpush1.msra.mxu0 0.0
  %8109 = vmatprep.subr.mxu0 0.0
  %8110 = vmatpush1.msra.mxu0 0.0
  %8111 = vmatprep.subr.mxu0 0.0
  %8112 = vmatpush1.msra.mxu0 0.0
  %8113 = vmatprep.subr.mxu0 0.0
  %8114 = vmatpush1.msra.mxu0 0.0
  %8115 = vmatprep.subr.mxu0 0.0
  %8116 = vmatpush1.msra.mxu0 0.0
  %8117 = vmatprep.subr.mxu0 0.0
  %8118 = vmatpush1.msra.mxu0 0.0
  %8119 = vmatprep.subr.mxu0 0.0
  %8120 = vmatpush1.msra.mxu0 0.0
  %8121 = vmatprep.subr.mxu0 0.0
  %8122 = vmatpush1.msra.mxu0 0.0
  %8123 = vmatprep.subr.mxu0 0.0
  %8124 = vmatpush1.msra.mxu0 0.0
  %8125 = vmatprep.subr.mxu0 0.0
  %8126 = vmatpush1.msra.mxu0 0.0
  %8127 = vmatprep.subr.mxu0 0.0
  %8128 = vmatpush1.msra.mxu0 0.0
  %8129 = vmatprep.subr.mxu0 0.0
  %8130 = vmatpush1.msra.mxu0 0.0
  %8131 = vmatprep.subr.mxu0 0.0
  %8132 = vmatpush1.msra.mxu0 0.0
  %8133 = vmatprep.subr.mxu0 0.0
  %8134 = vmatpush1.msra.mxu0 0.0
  %8135 = vmatprep.subr.mxu0 0.0
  %8136 = vmatpush1.msra.mxu0 0.0
  %8137 = vmatprep.subr.mxu0 0.0
  %8138 = vmatpush1.msra.mxu0 0.0
  %8139 = vmatprep.subr.mxu0 0.0
  %8140 = vmatpush1.msra.mxu0 0.0
  %8141 = vmatprep.subr.mxu0 0.0
  %8142 = vmatpush1.msra.mxu0 0.0
  %8143 = vmatprep.subr.mxu0 0.0
  %8144 = vmatpush1.msra.mxu0 0.0
  %8145 = vmatprep.subr.mxu0 0.0
  %8146 = vmatpush1.msra.mxu0 0.0
  %8147 = vmatprep.subr.mxu0 0.0
  %8148 = vmatpush1.msra.mxu0 0.0
  %8149 = vmatprep.subr.mxu0 0.0
  %8150 = vmatpush1.msra.mxu0 0.0
  %8151 = vmatprep.subr.mxu0 0.0
  %8152 = vmatpush1.msra.mxu0 0.0
  %8153 = vmatprep.subr.mxu0 0.0
  %8154 = vmatpush1.msra.mxu0 0.0
  %8155 = vmatprep.subr.mxu0 0.0
  %8156 = vmatpush1.msra.mxu0 0.0
  %8157 = vmatprep.mubr.f32.mxu0 0.0
  %v8158 = vand.u32 %v7837, 4294901760
  %v8159 = vsub.f32 %v7837, %v8158
  %v8160 = vand.u32 %v8159, 4294901760
  %8161 = vmatmul.mubr.f32.gmra.mrb[0].mxu0 %v8160
  %v8162 = vpop.f32.mrb[0].mxu0
  %v8163 = vadd.f32 %v8086, %v8162
  %v8164 = vpop.f32.mrb[0].mxu0
  %8165 = vdwg.mxu0
  %8166 = vmatprep.subr.mxu0 0.0
  %v8167 = vand.u32 %v7825, 4294901760
  %v8168 = vsub.f32 %v7825, %v8167
  %v8169 = vand.u32 %v8168, 4294901760
  %8170 = vmatpush1.msra.mxu0 %v8169
  %8171 = vmatprep.subr.mxu0 0.0
  %v8172 = vand.u32 %v7826, 4294901760
  %v8173 = vsub.f32 %v7826, %v8172
  %v8174 = vand.u32 %v8173, 4294901760
  %8175 = vmatpush1.msra.mxu0 %v8174
  %8176 = vmatprep.subr.mxu0 0.0
  %v8177 = vand.u32 %v7827, 4294901760
  %v8178 = vsub.f32 %v7827, %v8177
  %v8179 = vand.u32 %v8178, 4294901760
  %8180 = vmatpush1.msra.mxu0 %v8179
  %8181 = vmatprep.subr.mxu0 0.0
  %v8182 = vand.u32 %v7828, 4294901760
  %v8183 = vsub.f32 %v7828, %v8182
  %v8184 = vand.u32 %v8183, 4294901760
  %8185 = vmatpush1.msra.mxu0 %v8184
  %8186 = vmatprep.subr.mxu0 0.0
  %8187 = vmatpush1.msra.mxu0 0.0
  %8188 = vmatprep.subr.mxu0 0.0
  %8189 = vmatpush1.msra.mxu0 0.0
  %8190 = vmatprep.subr.mxu0 0.0
  %8191 = vmatpush1.msra.mxu0 0.0
  %8192 = vmatprep.subr.mxu0 0.0
  %8193 = vmatpush1.msra.mxu0 0.0
  %8194 = vmatprep.subr.mxu0 0.0
  %8195 = vmatpush1.msra.mxu0 0.0
  %8196 = vmatprep.subr.mxu0 0.0
  %8197 = vmatpush1.msra.mxu0 0.0
  %8198 = vmatprep.subr.mxu0 0.0
  %8199 = vmatpush1.msra.mxu0 0.0
  %8200 = vmatprep.subr.mxu0 0.0
  %8201 = vmatpush1.msra.mxu0 0.0
  %8202 = vmatprep.subr.mxu0 0.0
  %8203 = vmatpush1.msra.mxu0 0.0
  %8204 = vmatprep.subr.mxu0 0.0
  %8205 = vmatpush1.msra.mxu0 0.0
  %8206 = vmatprep.subr.mxu0 0.0
  %8207 = vmatpush1.msra.mxu0 0.0
  %8208 = vmatprep.subr.mxu0 0.0
  %8209 = vmatpush1.msra.mxu0 0.0
  %8210 = vmatprep.subr.mxu0 0.0
  %8211 = vmatpush1.msra.mxu0 0.0
  %8212 = vmatprep.subr.mxu0 0.0
  %8213 = vmatpush1.msra.mxu0 0.0
  %8214 = vmatprep.subr.mxu0 0.0
  %8215 = vmatpush1.msra.mxu0 0.0
  %8216 = vmatprep.subr.mxu0 0.0
  %8217 = vmatpush1.msra.mxu0 0.0
  %8218 = vmatprep.subr.mxu0 0.0
  %8219 = vmatpush1.msra.mxu0 0.0
  %8220 = vmatprep.subr.mxu0 0.0
  %8221 = vmatpush1.msra.mxu0 0.0
  %8222 = vmatprep.subr.mxu0 0.0
  %8223 = vmatpush1.msra.mxu0 0.0
  %8224 = vmatprep.subr.mxu0 0.0
  %8225 = vmatpush1.msra.mxu0 0.0
  %8226 = vmatprep.subr.mxu0 0.0
  %8227 = vmatpush1.msra.mxu0 0.0
  %8228 = vmatprep.subr.mxu0 0.0
  %8229 = vmatpush1.msra.mxu0 0.0
  %8230 = vmatprep.subr.mxu0 0.0
  %8231 = vmatpush1.msra.mxu0 0.0
  %8232 = vmatprep.subr.mxu0 0.0
  %8233 = vmatpush1.msra.mxu0 0.0
  %8234 = vmatprep.subr.mxu0 0.0
  %8235 = vmatpush1.msra.mxu0 0.0
  %8236 = vmatprep.subr.mxu0 0.0
  %8237 = vmatpush1.msra.mxu0 0.0
  %8238 = vmatprep.subr.mxu0 0.0
  %8239 = vmatpush1.msra.mxu0 0.0
  %8240 = vmatprep.subr.mxu0 0.0
  %8241 = vmatpush1.msra.mxu0 0.0
  %8242 = vmatprep.mubr.f32.mxu0 0.0
  %v8243 = vand.u32 %v7837, 4294901760
  %8244 = vmatmul.mubr.f32.gmra.mrb[0].mxu0 %v8243
  %v8245 = vpop.f32.mrb[0].mxu0
  %v8246 = vadd.f32 %v8163, %v8245
  %v8247 = vpop.f32.mrb[0].mxu0
  %8248 = vdwg.mxu0
  %8249 = vmatprep.subr.mxu0 0.0
  %v8250 = vand.u32 %v7825, 4294901760
  %8251 = vmatpush1.msra.mxu0 %v8250
  %8252 = vmatprep.subr.mxu0 0.0
  %v8253 = vand.u32 %v7826, 4294901760
  %8254 = vmatpush1.msra.mxu0 %v8253
  %8255 = vmatprep.subr.mxu0 0.0
  %v8256 = vand.u32 %v7827, 4294901760
  %8257 = vmatpush1.msra.mxu0 %v8256
  %8258 = vmatprep.subr.mxu0 0.0
  %v8259 = vand.u32 %v7828, 4294901760
  %8260 = vmatpush1.msra.mxu0 %v8259
  %8261 = vmatprep.subr.mxu0 0.0
  %8262 = vmatpush1.msra.mxu0 0.0
  %8263 = vmatprep.subr.mxu0 0.0
  %8264 = vmatpush1.msra.mxu0 0.0
  %8265 = vmatprep.subr.mxu0 0.0
  %8266 = vmatpush1.msra.mxu0 0.0
  %8267 = vmatprep.subr.mxu0 0.0
  %8268 = vmatpush1.msra.mxu0 0.0
  %8269 = vmatprep.subr.mxu0 0.0
  %8270 = vmatpush1.msra.mxu0 0.0
  %8271 = vmatprep.subr.mxu0 0.0
  %8272 = vmatpush1.msra.mxu0 0.0
  %8273 = vmatprep.subr.mxu0 0.0
  %8274 = vmatpush1.msra.mxu0 0.0
  %8275 = vmatprep.subr.mxu0 0.0
  %8276 = vmatpush1.msra.mxu0 0.0
  %8277 = vmatprep.subr.mxu0 0.0
  %8278 = vmatpush1.msra.mxu0 0.0
  %8279 = vmatprep.subr.mxu0 0.0
  %8280 = vmatpush1.msra.mxu0 0.0
  %8281 = vmatprep.subr.mxu0 0.0
  %8282 = vmatpush1.msra.mxu0 0.0
  %8283 = vmatprep.subr.mxu0 0.0
  %8284 = vmatpush1.msra.mxu0 0.0
  %8285 = vmatprep.subr.mxu0 0.0
  %8286 = vmatpush1.msra.mxu0 0.0
  %8287 = vmatprep.subr.mxu0 0.0
  %8288 = vmatpush1.msra.mxu0 0.0
  %8289 = vmatprep.subr.mxu0 0.0
  %8290 = vmatpush1.msra.mxu0 0.0
  %8291 = vmatprep.subr.mxu0 0.0
  %8292 = vmatpush1.msra.mxu0 0.0
  %8293 = vmatprep.subr.mxu0 0.0
  %8294 = vmatpush1.msra.mxu0 0.0
  %8295 = vmatprep.subr.mxu0 0.0
  %8296 = vmatpush1.msra.mxu0 0.0
  %8297 = vmatprep.subr.mxu0 0.0
  %8298 = vmatpush1.msra.mxu0 0.0
  %8299 = vmatprep.subr.mxu0 0.0
  %8300 = vmatpush1.msra.mxu0 0.0
  %8301 = vmatprep.subr.mxu0 0.0
  %8302 = vmatpush1.msra.mxu0 0.0
  %8303 = vmatprep.subr.mxu0 0.0
  %8304 = vmatpush1.msra.mxu0 0.0
  %8305 = vmatprep.subr.mxu0 0.0
  %8306 = vmatpush1.msra.mxu0 0.0
  %8307 = vmatprep.subr.mxu0 0.0
  %8308 = vmatpush1.msra.mxu0 0.0
  %8309 = vmatprep.subr.mxu0 0.0
  %8310 = vmatpush1.msra.mxu0 0.0
  %8311 = vmatprep.subr.mxu0 0.0
  %8312 = vmatpush1.msra.mxu0 0.0
  %8313 = vmatprep.subr.mxu0 0.0
  %8314 = vmatpush1.msra.mxu0 0.0
  %8315 = vmatprep.subr.mxu0 0.0
  %8316 = vmatpush1.msra.mxu0 0.0
  %8317 = vmatprep.mubr.f32.mxu0 0.0
  %v8318 = vand.u32 %v7837, 4294901760
  %8319 = vmatmul.mubr.f32.gmra.mrb[0].mxu0 %v8318
  %v8320 = vpop.f32.mrb[0].mxu0
  %v8321 = vadd.f32 %v8246, %v8320
  %v8322 = vpop.f32.mrb[0].mxu0
  %8323 = vdwg.mxu0
  %v8324 = vmul.f32 %v6322, %v8321
  %v8325 = vld [vmem:[%s18] sm:$0xff]
  %v8326 = vld [vmem:[%s18 + $0x8] sm:$0xff]
  %v8327 = vld [vmem:[%s18 + $0x10] sm:$0xff]
  %v8328 = vld [vmem:[%s18 + $0x18] sm:$0xff]
  %v8329 = vld [vmem:[%s19] sm:$0x1]
  %v8331 = vlaneseq
  %v8332 = vshrl.u32 %v8331, 7
  %v8333 = vsub.s32 0, %v8332
  %v8334 = vrot.slane %v8329, %v8333
  %v8337 = vsel %vm82, %v8324, 0
  %8339 = vmatprep.subr.mxu0 0.0
  %v8340 = vand.u32 %v8325, 4294901760
  %8341 = vmatpush1.msra.mxu0 %v8340
  %8342 = vmatprep.subr.mxu0 0.0
  %v8343 = vand.u32 %v8326, 4294901760
  %8344 = vmatpush1.msra.mxu0 %v8343
  %8345 = vmatprep.subr.mxu0 0.0
  %v8346 = vand.u32 %v8327, 4294901760
  %8347 = vmatpush1.msra.mxu0 %v8346
  %8348 = vmatprep.subr.mxu0 0.0
  %v8349 = vand.u32 %v8328, 4294901760
  %8350 = vmatpush1.msra.mxu0 %v8349
  %8351 = vmatprep.subr.mxu0 0.0
  %8352 = vmatpush1.msra.mxu0 0.0
  %8353 = vmatprep.subr.mxu0 0.0
  %8354 = vmatpush1.msra.mxu0 0.0
  %8355 = vmatprep.subr.mxu0 0.0
  %8356 = vmatpush1.msra.mxu0 0.0
  %8357 = vmatprep.subr.mxu0 0.0
  %8358 = vmatpush1.msra.mxu0 0.0
  %8359 = vmatprep.subr.mxu0 0.0
  %8360 = vmatpush1.msra.mxu0 0.0
  %8361 = vmatprep.subr.mxu0 0.0
  %8362 = vmatpush1.msra.mxu0 0.0
  %8363 = vmatprep.subr.mxu0 0.0
  %8364 = vmatpush1.msra.mxu0 0.0
  %8365 = vmatprep.subr.mxu0 0.0
  %8366 = vmatpush1.msra.mxu0 0.0
  %8367 = vmatprep.subr.mxu0 0.0
  %8368 = vmatpush1.msra.mxu0 0.0
  %8369 = vmatprep.subr.mxu0 0.0
  %8370 = vmatpush1.msra.mxu0 0.0
  %8371 = vmatprep.subr.mxu0 0.0
  %8372 = vmatpush1.msra.mxu0 0.0
  %8373 = vmatprep.subr.mxu0 0.0
  %8374 = vmatpush1.msra.mxu0 0.0
  %8375 = vmatprep.subr.mxu0 0.0
  %8376 = vmatpush1.msra.mxu0 0.0
  %8377 = vmatprep.subr.mxu0 0.0
  %8378 = vmatpush1.msra.mxu0 0.0
  %8379 = vmatprep.subr.mxu0 0.0
  %8380 = vmatpush1.msra.mxu0 0.0
  %8381 = vmatprep.subr.mxu0 0.0
  %8382 = vmatpush1.msra.mxu0 0.0
  %8383 = vmatprep.subr.mxu0 0.0
  %8384 = vmatpush1.msra.mxu0 0.0
  %8385 = vmatprep.subr.mxu0 0.0
  %8386 = vmatpush1.msra.mxu0 0.0
  %8387 = vmatprep.subr.mxu0 0.0
  %8388 = vmatpush1.msra.mxu0 0.0
  %8389 = vmatprep.subr.mxu0 0.0
  %8390 = vmatpush1.msra.mxu0 0.0
  %8391 = vmatprep.subr.mxu0 0.0
  %8392 = vmatpush1.msra.mxu0 0.0
  %8393 = vmatprep.subr.mxu0 0.0
  %8394 = vmatpush1.msra.mxu0 0.0
  %8395 = vmatprep.subr.mxu0 0.0
  %8396 = vmatpush1.msra.mxu0 0.0
  %8397 = vmatprep.subr.mxu0 0.0
  %8398 = vmatpush1.msra.mxu0 0.0
  %8399 = vmatprep.subr.mxu0 0.0
  %8400 = vmatpush1.msra.mxu0 0.0
  %8401 = vmatprep.subr.mxu0 0.0
  %8402 = vmatpush1.msra.mxu0 0.0
  %8403 = vmatprep.subr.mxu0 0.0
  %8404 = vmatpush1.msra.mxu0 0.0
  %8405 = vmatprep.subr.mxu0 0.0
  %8406 = vmatpush1.msra.mxu0 0.0
  %8407 = vmatprep.mubr.f32.mxu0 0.0
  %v8408 = vand.u32 %v8337, 4294901760
  %v8409 = vsub.f32 %v8337, %v8408
  %v8410 = vand.u32 %v8409, 4294901760
  %v8411 = vsub.f32 %v8409, %v8410
  %v8412 = vand.u32 %v8411, 4294901760
  %8413 = vmatmul.mubr.f32.gmra.mrb[0].mxu0 %v8412
  %v8414 = vpop.f32.mrb[0].mxu0
  %v8415 = vadd.f32 %v8334, %v8414
  %v8416 = vpop.f32.mrb[0].mxu0
  %8417 = vdwg.mxu0
  %8418 = vmatprep.subr.mxu0 0.0
  %v8419 = vand.u32 %v8325, 4294901760
  %v8420 = vsub.f32 %v8325, %v8419
  %v8421 = vand.u32 %v8420, 4294901760
  %v8422 = vsub.f32 %v8420, %v8421
  %v8423 = vand.u32 %v8422, 4294901760
  %8424 = vmatpush1.msra.mxu0 %v8423
  %8425 = vmatprep.subr.mxu0 0.0
  %v8426 = vand.u32 %v8326, 4294901760
  %v8427 = vsub.f32 %v8326, %v8426
  %v8428 = vand.u32 %v8427, 4294901760
  %v8429 = vsub.f32 %v8427, %v8428
  %v8430 = vand.u32 %v8429, 4294901760
  %8431 = vmatpush1.msra.mxu0 %v8430
  %8432 = vmatprep.subr.mxu0 0.0
  %v8433 = vand.u32 %v8327, 4294901760
  %v8434 = vsub.f32 %v8327, %v8433
  %v8435 = vand.u32 %v8434, 4294901760
  %v8436 = vsub.f32 %v8434, %v8435
  %v8437 = vand.u32 %v8436, 4294901760
  %8438 = vmatpush1.msra.mxu0 %v8437
  %8439 = vmatprep.subr.mxu0 0.0
  %v8440 = vand.u32 %v8328, 4294901760
  %v8441 = vsub.f32 %v8328, %v8440
  %v8442 = vand.u32 %v8441, 4294901760
  %v8443 = vsub.f32 %v8441, %v8442
  %v8444 = vand.u32 %v8443, 4294901760
  %8445 = vmatpush1.msra.mxu0 %v8444
  %8446 = vmatprep.subr.mxu0 0.0
  %8447 = vmatpush1.msra.mxu0 0.0
  %8448 = vmatprep.subr.mxu0 0.0
  %8449 = vmatpush1.msra.mxu0 0.0
  %8450 = vmatprep.subr.mxu0 0.0
  %8451 = vmatpush1.msra.mxu0 0.0
  %8452 = vmatprep.subr.mxu0 0.0
  %8453 = vmatpush1.msra.mxu0 0.0
  %8454 = vmatprep.subr.mxu0 0.0
  %8455 = vmatpush1.msra.mxu0 0.0
  %8456 = vmatprep.subr.mxu0 0.0
  %8457 = vmatpush1.msra.mxu0 0.0
  %8458 = vmatprep.subr.mxu0 0.0
  %8459 = vmatpush1.msra.mxu0 0.0
  %8460 = vmatprep.subr.mxu0 0.0
  %8461 = vmatpush1.msra.mxu0 0.0
  %8462 = vmatprep.subr.mxu0 0.0
  %8463 = vmatpush1.msra.mxu0 0.0
  %8464 = vmatprep.subr.mxu0 0.0
  %8465 = vmatpush1.msra.mxu0 0.0
  %8466 = vmatprep.subr.mxu0 0.0
  %8467 = vmatpush1.msra.mxu0 0.0
  %8468 = vmatprep.subr.mxu0 0.0
  %8469 = vmatpush1.msra.mxu0 0.0
  %8470 = vmatprep.subr.mxu0 0.0
  %8471 = vmatpush1.msra.mxu0 0.0
  %8472 = vmatprep.subr.mxu0 0.0
  %8473 = vmatpush1.msra.mxu0 0.0
  %8474 = vmatprep.subr.mxu0 0.0
  %8475 = vmatpush1.msra.mxu0 0.0
  %8476 = vmatprep.subr.mxu0 0.0
  %8477 = vmatpush1.msra.mxu0 0.0
  %8478 = vmatprep.subr.mxu0 0.0
  %8479 = vmatpush1.msra.mxu0 0.0
  %8480 = vmatprep.subr.mxu0 0.0
  %8481 = vmatpush1.msra.mxu0 0.0
  %8482 = vmatprep.subr.mxu0 0.0
  %8483 = vmatpush1.msra.mxu0 0.0
  %8484 = vmatprep.subr.mxu0 0.0
  %8485 = vmatpush1.msra.mxu0 0.0
  %8486 = vmatprep.subr.mxu0 0.0
  %8487 = vmatpush1.msra.mxu0 0.0
  %8488 = vmatprep.subr.mxu0 0.0
  %8489 = vmatpush1.msra.mxu0 0.0
  %8490 = vmatprep.subr.mxu0 0.0
  %8491 = vmatpush1.msra.mxu0 0.0
  %8492 = vmatprep.subr.mxu0 0.0
  %8493 = vmatpush1.msra.mxu0 0.0
  %8494 = vmatprep.subr.mxu0 0.0
  %8495 = vmatpush1.msra.mxu0 0.0
  %8496 = vmatprep.subr.mxu0 0.0
  %8497 = vmatpush1.msra.mxu0 0.0
  %8498 = vmatprep.subr.mxu0 0.0
  %8499 = vmatpush1.msra.mxu0 0.0
  %8500 = vmatprep.subr.mxu0 0.0
  %8501 = vmatpush1.msra.mxu0 0.0
  %8502 = vmatprep.mubr.f32.mxu0 0.0
  %v8503 = vand.u32 %v8337, 4294901760
  %8504 = vmatmul.mubr.f32.gmra.mrb[0].mxu0 %v8503
  %v8505 = vpop.f32.mrb[0].mxu0
  %v8506 = vadd.f32 %v8415, %v8505
  %v8507 = vpop.f32.mrb[0].mxu0
  %8508 = vdwg.mxu0
  %8509 = vmatprep.subr.mxu0 0.0
  %v8510 = vand.u32 %v8325, 4294901760
  %v8511 = vsub.f32 %v8325, %v8510
  %8512 = vmatpush1.msra.mxu0 %v8511
  %8513 = vmatprep.subr.mxu0 0.0
  %v8514 = vand.u32 %v8326, 4294901760
  %v8515 = vsub.f32 %v8326, %v8514
  %8516 = vmatpush1.msra.mxu0 %v8515
  %8517 = vmatprep.subr.mxu0 0.0
  %v8518 = vand.u32 %v8327, 4294901760
  %v8519 = vsub.f32 %v8327, %v8518
  %8520 = vmatpush1.msra.mxu0 %v8519
  %8521 = vmatprep.subr.mxu0 0.0
  %v8522 = vand.u32 %v8328, 4294901760
  %v8523 = vsub.f32 %v8328, %v8522
  %8524 = vmatpush1.msra.mxu0 %v8523
  %8525 = vmatprep.subr.mxu0 0.0
  %8526 = vmatpush1.msra.mxu0 0.0
  %8527 = vmatprep.subr.mxu0 0.0
  %8528 = vmatpush1.msra.mxu0 0.0
  %8529 = vmatprep.subr.mxu0 0.0
  %8530 = vmatpush1.msra.mxu0 0.0
  %8531 = vmatprep.subr.mxu0 0.0
  %8532 = vmatpush1.msra.mxu0 0.0
  %8533 = vmatprep.subr.mxu0 0.0
  %8534 = vmatpush1.msra.mxu0 0.0
  %8535 = vmatprep.subr.mxu0 0.0
  %8536 = vmatpush1.msra.mxu0 0.0
  %8537 = vmatprep.subr.mxu0 0.0
  %8538 = vmatpush1.msra.mxu0 0.0
  %8539 = vmatprep.subr.mxu0 0.0
  %8540 = vmatpush1.msra.mxu0 0.0
  %8541 = vmatprep.subr.mxu0 0.0
  %8542 = vmatpush1.msra.mxu0 0.0
  %8543 = vmatprep.subr.mxu0 0.0
  %8544 = vmatpush1.msra.mxu0 0.0
  %8545 = vmatprep.subr.mxu0 0.0
  %8546 = vmatpush1.msra.mxu0 0.0
  %8547 = vmatprep.subr.mxu0 0.0
  %8548 = vmatpush1.msra.mxu0 0.0
  %8549 = vmatprep.subr.mxu0 0.0
  %8550 = vmatpush1.msra.mxu0 0.0
  %8551 = vmatprep.subr.mxu0 0.0
  %8552 = vmatpush1.msra.mxu0 0.0
  %8553 = vmatprep.subr.mxu0 0.0
  %8554 = vmatpush1.msra.mxu0 0.0
  %8555 = vmatprep.subr.mxu0 0.0
  %8556 = vmatpush1.msra.mxu0 0.0
  %8557 = vmatprep.subr.mxu0 0.0
  %8558 = vmatpush1.msra.mxu0 0.0
  %8559 = vmatprep.subr.mxu0 0.0
  %8560 = vmatpush1.msra.mxu0 0.0
  %8561 = vmatprep.subr.mxu0 0.0
  %8562 = vmatpush1.msra.mxu0 0.0
  %8563 = vmatprep.subr.mxu0 0.0
  %8564 = vmatpush1.msra.mxu0 0.0
  %8565 = vmatprep.subr.mxu0 0.0
  %8566 = vmatpush1.msra.mxu0 0.0
  %8567 = vmatprep.subr.mxu0 0.0
  %8568 = vmatpush1.msra.mxu0 0.0
  %8569 = vmatprep.subr.mxu0 0.0
  %8570 = vmatpush1.msra.mxu0 0.0
  %8571 = vmatprep.subr.mxu0 0.0
  %8572 = vmatpush1.msra.mxu0 0.0
  %8573 = vmatprep.subr.mxu0 0.0
  %8574 = vmatpush1.msra.mxu0 0.0
  %8575 = vmatprep.subr.mxu0 0.0
  %8576 = vmatpush1.msra.mxu0 0.0
  %8577 = vmatprep.subr.mxu0 0.0
  %8578 = vmatpush1.msra.mxu0 0.0
  %8579 = vmatprep.subr.mxu0 0.0
  %8580 = vmatpush1.msra.mxu0 0.0
  %8581 = vmatprep.mubr.f32.mxu0 0.0
  %v8582 = vand.u32 %v8337, 4294901760
  %v8583 = vsub.f32 %v8337, %v8582
  %8584 = vmatmul.mubr.f32.gmra.mrb[0].mxu0 %v8583
  %v8585 = vpop.f32.mrb[0].mxu0
  %v8586 = vadd.f32 %v8506, %v8585
  %v8587 = vpop.f32.mrb[0].mxu0
  %8588 = vdwg.mxu0
  %8589 = vmatprep.subr.mxu0 0.0
  %v8590 = vand.u32 %v8325, 4294901760
  %8591 = vmatpush1.msra.mxu0 %v8590
  %8592 = vmatprep.subr.mxu0 0.0
  %v8593 = vand.u32 %v8326, 4294901760
  %8594 = vmatpush1.msra.mxu0 %v8593
  %8595 = vmatprep.subr.mxu0 0.0
  %v8596 = vand.u32 %v8327, 4294901760
  %8597 = vmatpush1.msra.mxu0 %v8596
  %8598 = vmatprep.subr.mxu0 0.0
  %v8599 = vand.u32 %v8328, 4294901760
  %8600 = vmatpush1.msra.mxu0 %v8599
  %8601 = vmatprep.subr.mxu0 0.0
  %8602 = vmatpush1.msra.mxu0 0.0
  %8603 = vmatprep.subr.mxu0 0.0
  %8604 = vmatpush1.msra.mxu0 0.0
  %8605 = vmatprep.subr.mxu0 0.0
  %8606 = vmatpush1.msra.mxu0 0.0
  %8607 = vmatprep.subr.mxu0 0.0
  %8608 = vmatpush1.msra.mxu0 0.0
  %8609 = vmatprep.subr.mxu0 0.0
  %8610 = vmatpush1.msra.mxu0 0.0
  %8611 = vmatprep.subr.mxu0 0.0
  %8612 = vmatpush1.msra.mxu0 0.0
  %8613 = vmatprep.subr.mxu0 0.0
  %8614 = vmatpush1.msra.mxu0 0.0
  %8615 = vmatprep.subr.mxu0 0.0
  %8616 = vmatpush1.msra.mxu0 0.0
  %8617 = vmatprep.subr.mxu0 0.0
  %8618 = vmatpush1.msra.mxu0 0.0
  %8619 = vmatprep.subr.mxu0 0.0
  %8620 = vmatpush1.msra.mxu0 0.0
  %8621 = vmatprep.subr.mxu0 0.0
  %8622 = vmatpush1.msra.mxu0 0.0
  %8623 = vmatprep.subr.mxu0 0.0
  %8624 = vmatpush1.msra.mxu0 0.0
  %8625 = vmatprep.subr.mxu0 0.0
  %8626 = vmatpush1.msra.mxu0 0.0
  %8627 = vmatprep.subr.mxu0 0.0
  %8628 = vmatpush1.msra.mxu0 0.0
  %8629 = vmatprep.subr.mxu0 0.0
  %8630 = vmatpush1.msra.mxu0 0.0
  %8631 = vmatprep.subr.mxu0 0.0
  %8632 = vmatpush1.msra.mxu0 0.0
  %8633 = vmatprep.subr.mxu0 0.0
  %8634 = vmatpush1.msra.mxu0 0.0
  %8635 = vmatprep.subr.mxu0 0.0
  %8636 = vmatpush1.msra.mxu0 0.0
  %8637 = vmatprep.subr.mxu0 0.0
  %8638 = vmatpush1.msra.mxu0 0.0
  %8639 = vmatprep.subr.mxu0 0.0
  %8640 = vmatpush1.msra.mxu0 0.0
  %8641 = vmatprep.subr.mxu0 0.0
  %8642 = vmatpush1.msra.mxu0 0.0
  %8643 = vmatprep.subr.mxu0 0.0
  %8644 = vmatpush1.msra.mxu0 0.0
  %8645 = vmatprep.subr.mxu0 0.0
  %8646 = vmatpush1.msra.mxu0 0.0
  %8647 = vmatprep.subr.mxu0 0.0
  %8648 = vmatpush1.msra.mxu0 0.0
  %8649 = vmatprep.subr.mxu0 0.0
  %8650 = vmatpush1.msra.mxu0 0.0
  %8651 = vmatprep.subr.mxu0 0.0
  %8652 = vmatpush1.msra.mxu0 0.0
  %8653 = vmatprep.subr.mxu0 0.0
  %8654 = vmatpush1.msra.mxu0 0.0
  %8655 = vmatprep.subr.mxu0 0.0
  %8656 = vmatpush1.msra.mxu0 0.0
  %8657 = vmatprep.mubr.f32.mxu0 0.0
  %v8658 = vand.u32 %v8337, 4294901760
  %v8659 = vsub.f32 %v8337, %v8658
  %v8660 = vand.u32 %v8659, 4294901760
  %8661 = vmatmul.mubr.f32.gmra.mrb[0].mxu0 %v8660
  %v8662 = vpop.f32.mrb[0].mxu0
  %v8663 = vadd.f32 %v8586, %v8662
  %v8664 = vpop.f32.mrb[0].mxu0
  %8665 = vdwg.mxu0
  %8666 = vmatprep.subr.mxu0 0.0
  %v8667 = vand.u32 %v8325, 4294901760
  %v8668 = vsub.f32 %v8325, %v8667
  %v8669 = vand.u32 %v8668, 4294901760
  %8670 = vmatpush1.msra.mxu0 %v8669
  %8671 = vmatprep.subr.mxu0 0.0
  %v8672 = vand.u32 %v8326, 4294901760
  %v8673 = vsub.f32 %v8326, %v8672
  %v8674 = vand.u32 %v8673, 4294901760
  %8675 = vmatpush1.msra.mxu0 %v8674
  %8676 = vmatprep.subr.mxu0 0.0
  %v8677 = vand.u32 %v8327, 4294901760
  %v8678 = vsub.f32 %v8327, %v8677
  %v8679 = vand.u32 %v8678, 4294901760
  %8680 = vmatpush1.msra.mxu0 %v8679
  %8681 = vmatprep.subr.mxu0 0.0
  %v8682 = vand.u32 %v8328, 4294901760
  %v8683 = vsub.f32 %v8328, %v8682
  %v8684 = vand.u32 %v8683, 4294901760
  %8685 = vmatpush1.msra.mxu0 %v8684
  %8686 = vmatprep.subr.mxu0 0.0
  %8687 = vmatpush1.msra.mxu0 0.0
  %8688 = vmatprep.subr.mxu0 0.0
  %8689 = vmatpush1.msra.mxu0 0.0
  %8690 = vmatprep.subr.mxu0 0.0
  %8691 = vmatpush1.msra.mxu0 0.0
  %8692 = vmatprep.subr.mxu0 0.0
  %8693 = vmatpush1.msra.mxu0 0.0
  %8694 = vmatprep.subr.mxu0 0.0
  %8695 = vmatpush1.msra.mxu0 0.0
  %8696 = vmatprep.subr.mxu0 0.0
  %8697 = vmatpush1.msra.mxu0 0.0
  %8698 = vmatprep.subr.mxu0 0.0
  %8699 = vmatpush1.msra.mxu0 0.0
  %8700 = vmatprep.subr.mxu0 0.0
  %8701 = vmatpush1.msra.mxu0 0.0
  %8702 = vmatprep.subr.mxu0 0.0
  %8703 = vmatpush1.msra.mxu0 0.0
  %8704 = vmatprep.subr.mxu0 0.0
  %8705 = vmatpush1.msra.mxu0 0.0
  %8706 = vmatprep.subr.mxu0 0.0
  %8707 = vmatpush1.msra.mxu0 0.0
  %8708 = vmatprep.subr.mxu0 0.0
  %8709 = vmatpush1.msra.mxu0 0.0
  %8710 = vmatprep.subr.mxu0 0.0
  %8711 = vmatpush1.msra.mxu0 0.0
  %8712 = vmatprep.subr.mxu0 0.0
  %8713 = vmatpush1.msra.mxu0 0.0
  %8714 = vmatprep.subr.mxu0 0.0
  %8715 = vmatpush1.msra.mxu0 0.0
  %8716 = vmatprep.subr.mxu0 0.0
  %8717 = vmatpush1.msra.mxu0 0.0
  %8718 = vmatprep.subr.mxu0 0.0
  %8719 = vmatpush1.msra.mxu0 0.0
  %8720 = vmatprep.subr.mxu0 0.0
  %8721 = vmatpush1.msra.mxu0 0.0
  %8722 = vmatprep.subr.mxu0 0.0
  %8723 = vmatpush1.msra.mxu0 0.0
  %8724 = vmatprep.subr.mxu0 0.0
  %8725 = vmatpush1.msra.mxu0 0.0
  %8726 = vmatprep.subr.mxu0 0.0
  %8727 = vmatpush1.msra.mxu0 0.0
  %8728 = vmatprep.subr.mxu0 0.0
  %8729 = vmatpush1.msra.mxu0 0.0
  %8730 = vmatprep.subr.mxu0 0.0
  %8731 = vmatpush1.msra.mxu0 0.0
  %8732 = vmatprep.subr.mxu0 0.0
  %8733 = vmatpush1.msra.mxu0 0.0
  %8734 = vmatprep.subr.mxu0 0.0
  %8735 = vmatpush1.msra.mxu0 0.0
  %8736 = vmatprep.subr.mxu0 0.0
  %8737 = vmatpush1.msra.mxu0 0.0
  %8738 = vmatprep.subr.mxu0 0.0
  %8739 = vmatpush1.msra.mxu0 0.0
  %8740 = vmatprep.subr.mxu0 0.0
  %8741 = vmatpush1.msra.mxu0 0.0
  %8742 = vmatprep.mubr.f32.mxu0 0.0
  %v8743 = vand.u32 %v8337, 4294901760
  %8744 = vmatmul.mubr.f32.gmra.mrb[0].mxu0 %v8743
  %v8745 = vpop.f32.mrb[0].mxu0
  %v8746 = vadd.f32 %v8663, %v8745
  %v8747 = vpop.f32.mrb[0].mxu0
  %8748 = vdwg.mxu0
  %8749 = vmatprep.subr.mxu0 0.0
  %v8750 = vand.u32 %v8325, 4294901760
  %8751 = vmatpush1.msra.mxu0 %v8750
  %8752 = vmatprep.subr.mxu0 0.0
  %v8753 = vand.u32 %v8326, 4294901760
  %8754 = vmatpush1.msra.mxu0 %v8753
  %8755 = vmatprep.subr.mxu0 0.0
  %v8756 = vand.u32 %v8327, 4294901760
  %8757 = vmatpush1.msra.mxu0 %v8756
  %8758 = vmatprep.subr.mxu0 0.0
  %v8759 = vand.u32 %v8328, 4294901760
  %8760 = vmatpush1.msra.mxu0 %v8759
  %8761 = vmatprep.subr.mxu0 0.0
  %8762 = vmatpush1.msra.mxu0 0.0
  %8763 = vmatprep.subr.mxu0 0.0
  %8764 = vmatpush1.msra.mxu0 0.0
  %8765 = vmatprep.subr.mxu0 0.0
  %8766 = vmatpush1.msra.mxu0 0.0
  %8767 = vmatprep.subr.mxu0 0.0
  %8768 = vmatpush1.msra.mxu0 0.0
  %8769 = vmatprep.subr.mxu0 0.0
  %8770 = vmatpush1.msra.mxu0 0.0
  %8771 = vmatprep.subr.mxu0 0.0
  %8772 = vmatpush1.msra.mxu0 0.0
  %8773 = vmatprep.subr.mxu0 0.0
  %8774 = vmatpush1.msra.mxu0 0.0
  %8775 = vmatprep.subr.mxu0 0.0
  %8776 = vmatpush1.msra.mxu0 0.0
  %8777 = vmatprep.subr.mxu0 0.0
  %8778 = vmatpush1.msra.mxu0 0.0
  %8779 = vmatprep.subr.mxu0 0.0
  %8780 = vmatpush1.msra.mxu0 0.0
  %8781 = vmatprep.subr.mxu0 0.0
  %8782 = vmatpush1.msra.mxu0 0.0
  %8783 = vmatprep.subr.mxu0 0.0
  %8784 = vmatpush1.msra.mxu0 0.0
  %8785 = vmatprep.subr.mxu0 0.0
  %8786 = vmatpush1.msra.mxu0 0.0
  %8787 = vmatprep.subr.mxu0 0.0
  %8788 = vmatpush1.msra.mxu0 0.0
  %8789 = vmatprep.subr.mxu0 0.0
  %8790 = vmatpush1.msra.mxu0 0.0
  %8791 = vmatprep.subr.mxu0 0.0
  %8792 = vmatpush1.msra.mxu0 0.0
  %8793 = vmatprep.subr.mxu0 0.0
  %8794 = vmatpush1.msra.mxu0 0.0
  %8795 = vmatprep.subr.mxu0 0.0
  %8796 = vmatpush1.msra.mxu0 0.0
  %8797 = vmatprep.subr.mxu0 0.0
  %8798 = vmatpush1.msra.mxu0 0.0
  %8799 = vmatprep.subr.mxu0 0.0
  %8800 = vmatpush1.msra.mxu0 0.0
  %8801 = vmatprep.subr.mxu0 0.0
  %8802 = vmatpush1.msra.mxu0 0.0
  %8803 = vmatprep.subr.mxu0 0.0
  %8804 = vmatpush1.msra.mxu0 0.0
  %8805 = vmatprep.subr.mxu0 0.0
  %8806 = vmatpush1.msra.mxu0 0.0
  %8807 = vmatprep.subr.mxu0 0.0
  %8808 = vmatpush1.msra.mxu0 0.0
  %8809 = vmatprep.subr.mxu0 0.0
  %8810 = vmatpush1.msra.mxu0 0.0
  %8811 = vmatprep.subr.mxu0 0.0
  %8812 = vmatpush1.msra.mxu0 0.0
  %8813 = vmatprep.subr.mxu0 0.0
  %8814 = vmatpush1.msra.mxu0 0.0
  %8815 = vmatprep.subr.mxu0 0.0
  %8816 = vmatpush1.msra.mxu0 0.0
  %8817 = vmatprep.mubr.f32.mxu0 0.0
  %v8818 = vand.u32 %v8337, 4294901760
  %8819 = vmatmul.mubr.f32.gmra.mrb[0].mxu0 %v8818
  %v8820 = vpop.f32.mrb[0].mxu0
  %v8821 = vadd.f32 %v8746, %v8820
  %v8822 = vpop.f32.mrb[0].mxu0
  %8823 = vdwg.mxu0
  %v8824 = vmax.f32 %v8821, 0.0
  %v8825 = vld [vmem:[%s20] sm:$0xff]
  %v8826 = vld [vmem:[%s20 + $0x8] sm:$0xff]
  %v8827 = vld [vmem:[%s20 + $0x10] sm:$0xff]
  %v8828 = vld [vmem:[%s20 + $0x18] sm:$0xff]
  %v8829 = vld [vmem:[%s20 + $0x20] sm:$0xff]
  %v8830 = vld [vmem:[%s20 + $0x28] sm:$0xff]
  %v8831 = vld [vmem:[%s20 + $0x30] sm:$0xff]
  %v8832 = vld [vmem:[%s20 + $0x38] sm:$0xff]
  %v8833 = vld [vmem:[%s21] sm:$0x1]
  %v8835 = vlaneseq
  %v8836 = vshrl.u32 %v8835, 7
  %v8837 = vsub.s32 0, %v8836
  %v8838 = vrot.slane %v8833, %v8837
  %vm8840 = vcmask 523264
  %v8842 = vsel %vm8840, %v8824, 0
  %8844 = vmatprep.subr.mxu0 0.0
  %v8845 = vand.u32 %v8825, 4294901760
  %8846 = vmatpush1.msra.mxu0 %v8845
  %8847 = vmatprep.subr.mxu0 0.0
  %v8848 = vand.u32 %v8826, 4294901760
  %8849 = vmatpush1.msra.mxu0 %v8848
  %8850 = vmatprep.subr.mxu0 0.0
  %v8851 = vand.u32 %v8827, 4294901760
  %8852 = vmatpush1.msra.mxu0 %v8851
  %8853 = vmatprep.subr.mxu0 0.0
  %v8854 = vand.u32 %v8828, 4294901760
  %8855 = vmatpush1.msra.mxu0 %v8854
  %8856 = vmatprep.subr.mxu0 0.0
  %v8857 = vand.u32 %v8829, 4294901760
  %8858 = vmatpush1.msra.mxu0 %v8857
  %8859 = vmatprep.subr.mxu0 0.0
  %v8860 = vand.u32 %v8830, 4294901760
  %8861 = vmatpush1.msra.mxu0 %v8860
  %8862 = vmatprep.subr.mxu0 0.0
  %v8863 = vand.u32 %v8831, 4294901760
  %8864 = vmatpush1.msra.mxu0 %v8863
  %8865 = vmatprep.subr.mxu0 0.0
  %v8866 = vand.u32 %v8832, 4294901760
  %8867 = vmatpush1.msra.mxu0 %v8866
  %8868 = vmatprep.subr.mxu0 0.0
  %8869 = vmatpush1.msra.mxu0 0.0
  %8870 = vmatprep.subr.mxu0 0.0
  %8871 = vmatpush1.msra.mxu0 0.0
  %8872 = vmatprep.subr.mxu0 0.0
  %8873 = vmatpush1.msra.mxu0 0.0
  %8874 = vmatprep.subr.mxu0 0.0
  %8875 = vmatpush1.msra.mxu0 0.0
  %8876 = vmatprep.subr.mxu0 0.0
  %8877 = vmatpush1.msra.mxu0 0.0
  %8878 = vmatprep.subr.mxu0 0.0
  %8879 = vmatpush1.msra.mxu0 0.0
  %8880 = vmatprep.subr.mxu0 0.0
  %8881 = vmatpush1.msra.mxu0 0.0
  %8882 = vmatprep.subr.mxu0 0.0
  %8883 = vmatpush1.msra.mxu0 0.0
  %8884 = vmatprep.subr.mxu0 0.0
  %8885 = vmatpush1.msra.mxu0 0.0
  %8886 = vmatprep.subr.mxu0 0.0
  %8887 = vmatpush1.msra.mxu0 0.0
  %8888 = vmatprep.subr.mxu0 0.0
  %8889 = vmatpush1.msra.mxu0 0.0
  %8890 = vmatprep.subr.mxu0 0.0
  %8891 = vmatpush1.msra.mxu0 0.0
  %8892 = vmatprep.subr.mxu0 0.0
  %8893 = vmatpush1.msra.mxu0 0.0
  %8894 = vmatprep.subr.mxu0 0.0
  %8895 = vmatpush1.msra.mxu0 0.0
  %8896 = vmatprep.subr.mxu0 0.0
  %8897 = vmatpush1.msra.mxu0 0.0
  %8898 = vmatprep.subr.mxu0 0.0
  %8899 = vmatpush1.msra.mxu0 0.0
  %8900 = vmatprep.subr.mxu0 0.0
  %8901 = vmatpush1.msra.mxu0 0.0
  %8902 = vmatprep.subr.mxu0 0.0
  %8903 = vmatpush1.msra.mxu0 0.0
  %8904 = vmatprep.subr.mxu0 0.0
  %8905 = vmatpush1.msra.mxu0 0.0
  %8906 = vmatprep.subr.mxu0 0.0
  %8907 = vmatpush1.msra.mxu0 0.0
  %8908 = vmatprep.subr.mxu0 0.0
  %8909 = vmatpush1.msra.mxu0 0.0
  %8910 = vmatprep.subr.mxu0 0.0
  %8911 = vmatpush1.msra.mxu0 0.0
  %8912 = vmatprep.subr.mxu0 0.0
  %8913 = vmatpush1.msra.mxu0 0.0
  %8914 = vmatprep.subr.mxu0 0.0
  %8915 = vmatpush1.msra.mxu0 0.0
  %8916 = vmatprep.mubr.f32.mxu0 0.0
  %v8917 = vand.u32 %v8842, 4294901760
  %v8918 = vsub.f32 %v8842, %v8917
  %v8919 = vand.u32 %v8918, 4294901760
  %v8920 = vsub.f32 %v8918, %v8919
  %v8921 = vand.u32 %v8920, 4294901760
  %8922 = vmatmul.mubr.f32.gmra.mrb[0].mxu0 %v8921
  %v8923 = vpop.f32.mrb[0].mxu0
  %v8924 = vadd.f32 %v8838, %v8923
  %v8925 = vpop.f32.mrb[0].mxu0
  %8926 = vdwg.mxu0
  %8927 = vmatprep.subr.mxu0 0.0
  %v8928 = vand.u32 %v8825, 4294901760
  %v8929 = vsub.f32 %v8825, %v8928
  %v8930 = vand.u32 %v8929, 4294901760
  %v8931 = vsub.f32 %v8929, %v8930
  %v8932 = vand.u32 %v8931, 4294901760
  %8933 = vmatpush1.msra.mxu0 %v8932
  %8934 = vmatprep.subr.mxu0 0.0
  %v8935 = vand.u32 %v8826, 4294901760
  %v8936 = vsub.f32 %v8826, %v8935
  %v8937 = vand.u32 %v8936, 4294901760
  %v8938 = vsub.f32 %v8936, %v8937
  %v8939 = vand.u32 %v8938, 4294901760
  %8940 = vmatpush1.msra.mxu0 %v8939
  %8941 = vmatprep.subr.mxu0 0.0
  %v8942 = vand.u32 %v8827, 4294901760
  %v8943 = vsub.f32 %v8827, %v8942
  %v8944 = vand.u32 %v8943, 4294901760
  %v8945 = vsub.f32 %v8943, %v8944
  %v8946 = vand.u32 %v8945, 4294901760
  %8947 = vmatpush1.msra.mxu0 %v8946
  %8948 = vmatprep.subr.mxu0 0.0
  %v8949 = vand.u32 %v8828, 4294901760
  %v8950 = vsub.f32 %v8828, %v8949
  %v8951 = vand.u32 %v8950, 4294901760
  %v8952 = vsub.f32 %v8950, %v8951
  %v8953 = vand.u32 %v8952, 4294901760
  %8954 = vmatpush1.msra.mxu0 %v8953
  %8955 = vmatprep.subr.mxu0 0.0
  %v8956 = vand.u32 %v8829, 4294901760
  %v8957 = vsub.f32 %v8829, %v8956
  %v8958 = vand.u32 %v8957, 4294901760
  %v8959 = vsub.f32 %v8957, %v8958
  %v8960 = vand.u32 %v8959, 4294901760
  %8961 = vmatpush1.msra.mxu0 %v8960
  %8962 = vmatprep.subr.mxu0 0.0
  %v8963 = vand.u32 %v8830, 4294901760
  %v8964 = vsub.f32 %v8830, %v8963
  %v8965 = vand.u32 %v8964, 4294901760
  %v8966 = vsub.f32 %v8964, %v8965
  %v8967 = vand.u32 %v8966, 4294901760
  %8968 = vmatpush1.msra.mxu0 %v8967
  %8969 = vmatprep.subr.mxu0 0.0
  %v8970 = vand.u32 %v8831, 4294901760
  %v8971 = vsub.f32 %v8831, %v8970
  %v8972 = vand.u32 %v8971, 4294901760
  %v8973 = vsub.f32 %v8971, %v8972
  %v8974 = vand.u32 %v8973, 4294901760
  %8975 = vmatpush1.msra.mxu0 %v8974
  %8976 = vmatprep.subr.mxu0 0.0
  %v8977 = vand.u32 %v8832, 4294901760
  %v8978 = vsub.f32 %v8832, %v8977
  %v8979 = vand.u32 %v8978, 4294901760
  %v8980 = vsub.f32 %v8978, %v8979
  %v8981 = vand.u32 %v8980, 4294901760
  %8982 = vmatpush1.msra.mxu0 %v8981
  %8983 = vmatprep.subr.mxu0 0.0
  %8984 = vmatpush1.msra.mxu0 0.0
  %8985 = vmatprep.subr.mxu0 0.0
  %8986 = vmatpush1.msra.mxu0 0.0
  %8987 = vmatprep.subr.mxu0 0.0
  %8988 = vmatpush1.msra.mxu0 0.0
  %8989 = vmatprep.subr.mxu0 0.0
  %8990 = vmatpush1.msra.mxu0 0.0
  %8991 = vmatprep.subr.mxu0 0.0
  %8992 = vmatpush1.msra.mxu0 0.0
  %8993 = vmatprep.subr.mxu0 0.0
  %8994 = vmatpush1.msra.mxu0 0.0
  %8995 = vmatprep.subr.mxu0 0.0
  %8996 = vmatpush1.msra.mxu0 0.0
  %8997 = vmatprep.subr.mxu0 0.0
  %8998 = vmatpush1.msra.mxu0 0.0
  %8999 = vmatprep.subr.mxu0 0.0
  %9000 = vmatpush1.msra.mxu0 0.0
  %9001 = vmatprep.subr.mxu0 0.0
  %9002 = vmatpush1.msra.mxu0 0.0
  %9003 = vmatprep.subr.mxu0 0.0
  %9004 = vmatpush1.msra.mxu0 0.0
  %9005 = vmatprep.subr.mxu0 0.0
  %9006 = vmatpush1.msra.mxu0 0.0
  %9007 = vmatprep.subr.mxu0 0.0
  %9008 = vmatpush1.msra.mxu0 0.0
  %9009 = vmatprep.subr.mxu0 0.0
  %9010 = vmatpush1.msra.mxu0 0.0
  %9011 = vmatprep.subr.mxu0 0.0
  %9012 = vmatpush1.msra.mxu0 0.0
  %9013 = vmatprep.subr.mxu0 0.0
  %9014 = vmatpush1.msra.mxu0 0.0
  %9015 = vmatprep.subr.mxu0 0.0
  %9016 = vmatpush1.msra.mxu0 0.0
  %9017 = vmatprep.subr.mxu0 0.0
  %9018 = vmatpush1.msra.mxu0 0.0
  %9019 = vmatprep.subr.mxu0 0.0
  %9020 = vmatpush1.msra.mxu0 0.0
  %9021 = vmatprep.subr.mxu0 0.0
  %9022 = vmatpush1.msra.mxu0 0.0
  %9023 = vmatprep.subr.mxu0 0.0
  %9024 = vmatpush1.msra.mxu0 0.0
  %9025 = vmatprep.subr.mxu0 0.0
  %9026 = vmatpush1.msra.mxu0 0.0
  %9027 = vmatprep.subr.mxu0 0.0
  %9028 = vmatpush1.msra.mxu0 0.0
  %9029 = vmatprep.subr.mxu0 0.0
  %9030 = vmatpush1.msra.mxu0 0.0
  %9031 = vmatprep.mubr.f32.mxu0 0.0
  %v9032 = vand.u32 %v8842, 4294901760
  %9033 = vmatmul.mubr.f32.gmra.mrb[0].mxu0 %v9032
  %v9034 = vpop.f32.mrb[0].mxu0
  %v9035 = vadd.f32 %v8924, %v9034
  %v9036 = vpop.f32.mrb[0].mxu0
  %9037 = vdwg.mxu0
  %9038 = vmatprep.subr.mxu0 0.0
  %v9039 = vand.u32 %v8825, 4294901760
  %v9040 = vsub.f32 %v8825, %v9039
  %9041 = vmatpush1.msra.mxu0 %v9040
  %9042 = vmatprep.subr.mxu0 0.0
  %v9043 = vand.u32 %v8826, 4294901760
  %v9044 = vsub.f32 %v8826, %v9043
  %9045 = vmatpush1.msra.mxu0 %v9044
  %9046 = vmatprep.subr.mxu0 0.0
  %v9047 = vand.u32 %v8827, 4294901760
  %v9048 = vsub.f32 %v8827, %v9047
  %9049 = vmatpush1.msra.mxu0 %v9048
  %9050 = vmatprep.subr.mxu0 0.0
  %v9051 = vand.u32 %v8828, 4294901760
  %v9052 = vsub.f32 %v8828, %v9051
  %9053 = vmatpush1.msra.mxu0 %v9052
  %9054 = vmatprep.subr.mxu0 0.0
  %v9055 = vand.u32 %v8829, 4294901760
  %v9056 = vsub.f32 %v8829, %v9055
  %9057 = vmatpush1.msra.mxu0 %v9056
  %9058 = vmatprep.subr.mxu0 0.0
  %v9059 = vand.u32 %v8830, 4294901760
  %v9060 = vsub.f32 %v8830, %v9059
  %9061 = vmatpush1.msra.mxu0 %v9060
  %9062 = vmatprep.subr.mxu0 0.0
  %v9063 = vand.u32 %v8831, 4294901760
  %v9064 = vsub.f32 %v8831, %v9063
  %9065 = vmatpush1.msra.mxu0 %v9064
  %9066 = vmatprep.subr.mxu0 0.0
  %v9067 = vand.u32 %v8832, 4294901760
  %v9068 = vsub.f32 %v8832, %v9067
  %9069 = vmatpush1.msra.mxu0 %v9068
  %9070 = vmatprep.subr.mxu0 0.0
  %9071 = vmatpush1.msra.mxu0 0.0
  %9072 = vmatprep.subr.mxu0 0.0
  %9073 = vmatpush1.msra.mxu0 0.0
  %9074 = vmatprep.subr.mxu0 0.0
  %9075 = vmatpush1.msra.mxu0 0.0
  %9076 = vmatprep.subr.mxu0 0.0
  %9077 = vmatpush1.msra.mxu0 0.0
  %9078 = vmatprep.subr.mxu0 0.0
  %9079 = vmatpush1.msra.mxu0 0.0
  %9080 = vmatprep.subr.mxu0 0.0
  %9081 = vmatpush1.msra.mxu0 0.0
  %9082 = vmatprep.subr.mxu0 0.0
  %9083 = vmatpush1.msra.mxu0 0.0
  %9084 = vmatprep.subr.mxu0 0.0
  %9085 = vmatpush1.msra.mxu0 0.0
  %9086 = vmatprep.subr.mxu0 0.0
  %9087 = vmatpush1.msra.mxu0 0.0
  %9088 = vmatprep.subr.mxu0 0.0
  %9089 = vmatpush1.msra.mxu0 0.0
  %9090 = vmatprep.subr.mxu0 0.0
  %9091 = vmatpush1.msra.mxu0 0.0
  %9092 = vmatprep.subr.mxu0 0.0
  %9093 = vmatpush1.msra.mxu0 0.0
  %9094 = vmatprep.subr.mxu0 0.0
  %9095 = vmatpush1.msra.mxu0 0.0
  %9096 = vmatprep.subr.mxu0 0.0
  %9097 = vmatpush1.msra.mxu0 0.0
  %9098 = vmatprep.subr.mxu0 0.0
  %9099 = vmatpush1.msra.mxu0 0.0
  %9100 = vmatprep.subr.mxu0 0.0
  %9101 = vmatpush1.msra.mxu0 0.0
  %9102 = vmatprep.subr.mxu0 0.0
  %9103 = vmatpush1.msra.mxu0 0.0
  %9104 = vmatprep.subr.mxu0 0.0
  %9105 = vmatpush1.msra.mxu0 0.0
  %9106 = vmatprep.subr.mxu0 0.0
  %9107 = vmatpush1.msra.mxu0 0.0
  %9108 = vmatprep.subr.mxu0 0.0
  %9109 = vmatpush1.msra.mxu0 0.0
  %9110 = vmatprep.subr.mxu0 0.0
  %9111 = vmatpush1.msra.mxu0 0.0
  %9112 = vmatprep.subr.mxu0 0.0
  %9113 = vmatpush1.msra.mxu0 0.0
  %9114 = vmatprep.subr.mxu0 0.0
  %9115 = vmatpush1.msra.mxu0 0.0
  %9116 = vmatprep.subr.mxu0 0.0
  %9117 = vmatpush1.msra.mxu0 0.0
  %9118 = vmatprep.mubr.f32.mxu0 0.0
  %v9119 = vand.u32 %v8842, 4294901760
  %v9120 = vsub.f32 %v8842, %v9119
  %9121 = vmatmul.mubr.f32.gmra.mrb[0].mxu0 %v9120
  %v9122 = vpop.f32.mrb[0].mxu0
  %v9123 = vadd.f32 %v9035, %v9122
  %v9124 = vpop.f32.mrb[0].mxu0
  %9125 = vdwg.mxu0
  %9126 = vmatprep.subr.mxu0 0.0
  %v9127 = vand.u32 %v8825, 4294901760
  %9128 = vmatpush1.msra.mxu0 %v9127
  %9129 = vmatprep.subr.mxu0 0.0
  %v9130 = vand.u32 %v8826, 4294901760
  %9131 = vmatpush1.msra.mxu0 %v9130
  %9132 = vmatprep.subr.mxu0 0.0
  %v9133 = vand.u32 %v8827, 4294901760
  %9134 = vmatpush1.msra.mxu0 %v9133
  %9135 = vmatprep.subr.mxu0 0.0
  %v9136 = vand.u32 %v8828, 4294901760
  %9137 = vmatpush1.msra.mxu0 %v9136
  %9138 = vmatprep.subr.mxu0 0.0
  %v9139 = vand.u32 %v8829, 4294901760
  %9140 = vmatpush1.msra.mxu0 %v9139
  %9141 = vmatprep.subr.mxu0 0.0
  %v9142 = vand.u32 %v8830, 4294901760
  %9143 = vmatpush1.msra.mxu0 %v9142
  %9144 = vmatprep.subr.mxu0 0.0
  %v9145 = vand.u32 %v8831, 4294901760
  %9146 = vmatpush1.msra.mxu0 %v9145
  %9147 = vmatprep.subr.mxu0 0.0
  %v9148 = vand.u32 %v8832, 4294901760
  %9149 = vmatpush1.msra.mxu0 %v9148
  %9150 = vmatprep.subr.mxu0 0.0
  %9151 = vmatpush1.msra.mxu0 0.0
  %9152 = vmatprep.subr.mxu0 0.0
  %9153 = vmatpush1.msra.mxu0 0.0
  %9154 = vmatprep.subr.mxu0 0.0
  %9155 = vmatpush1.msra.mxu0 0.0
  %9156 = vmatprep.subr.mxu0 0.0
  %9157 = vmatpush1.msra.mxu0 0.0
  %9158 = vmatprep.subr.mxu0 0.0
  %9159 = vmatpush1.msra.mxu0 0.0
  %9160 = vmatprep.subr.mxu0 0.0
  %9161 = vmatpush1.msra.mxu0 0.0
  %9162 = vmatprep.subr.mxu0 0.0
  %9163 = vmatpush1.msra.mxu0 0.0
  %9164 = vmatprep.subr.mxu0 0.0
  %9165 = vmatpush1.msra.mxu0 0.0
  %9166 = vmatprep.subr.mxu0 0.0
  %9167 = vmatpush1.msra.mxu0 0.0
  %9168 = vmatprep.subr.mxu0 0.0
  %9169 = vmatpush1.msra.mxu0 0.0
  %9170 = vmatprep.subr.mxu0 0.0
  %9171 = vmatpush1.msra.mxu0 0.0
  %9172 = vmatprep.subr.mxu0 0.0
  %9173 = vmatpush1.msra.mxu0 0.0
  %9174 = vmatprep.subr.mxu0 0.0
  %9175 = vmatpush1.msra.mxu0 0.0
  %9176 = vmatprep.subr.mxu0 0.0
  %9177 = vmatpush1.msra.mxu0 0.0
  %9178 = vmatprep.subr.mxu0 0.0
  %9179 = vmatpush1.msra.mxu0 0.0
  %9180 = vmatprep.subr.mxu0 0.0
  %9181 = vmatpush1.msra.mxu0 0.0
  %9182 = vmatprep.subr.mxu0 0.0
  %9183 = vmatpush1.msra.mxu0 0.0
  %9184 = vmatprep.subr.mxu0 0.0
  %9185 = vmatpush1.msra.mxu0 0.0
  %9186 = vmatprep.subr.mxu0 0.0
  %9187 = vmatpush1.msra.mxu0 0.0
  %9188 = vmatprep.subr.mxu0 0.0
  %9189 = vmatpush1.msra.mxu0 0.0
  %9190 = vmatprep.subr.mxu0 0.0
  %9191 = vmatpush1.msra.mxu0 0.0
  %9192 = vmatprep.subr.mxu0 0.0
  %9193 = vmatpush1.msra.mxu0 0.0
  %9194 = vmatprep.subr.mxu0 0.0
  %9195 = vmatpush1.msra.mxu0 0.0
  %9196 = vmatprep.subr.mxu0 0.0
  %9197 = vmatpush1.msra.mxu0 0.0
  %9198 = vmatprep.mubr.f32.mxu0 0.0
  %v9199 = vand.u32 %v8842, 4294901760
  %v9200 = vsub.f32 %v8842, %v9199
  %v9201 = vand.u32 %v9200, 4294901760
  %9202 = vmatmul.mubr.f32.gmra.mrb[0].mxu0 %v9201
  %v9203 = vpop.f32.mrb[0].mxu0
  %v9204 = vadd.f32 %v9123, %v9203
  %v9205 = vpop.f32.mrb[0].mxu0
  %9206 = vdwg.mxu0
  %9207 = vmatprep.subr.mxu0 0.0
  %v9208 = vand.u32 %v8825, 4294901760
  %v9209 = vsub.f32 %v8825, %v9208
  %v9210 = vand.u32 %v9209, 4294901760
  %9211 = vmatpush1.msra.mxu0 %v9210
  %9212 = vmatprep.subr.mxu0 0.0
  %v9213 = vand.u32 %v8826, 4294901760
  %v9214 = vsub.f32 %v8826, %v9213
  %v9215 = vand.u32 %v9214, 4294901760
  %9216 = vmatpush1.msra.mxu0 %v9215
  %9217 = vmatprep.subr.mxu0 0.0
  %v9218 = vand.u32 %v8827, 4294901760
  %v9219 = vsub.f32 %v8827, %v9218
  %v9220 = vand.u32 %v9219, 4294901760
  %9221 = vmatpush1.msra.mxu0 %v9220
  %9222 = vmatprep.subr.mxu0 0.0
  %v9223 = vand.u32 %v8828, 4294901760
  %v9224 = vsub.f32 %v8828, %v9223
  %v9225 = vand.u32 %v9224, 4294901760
  %9226 = vmatpush1.msra.mxu0 %v9225
  %9227 = vmatprep.subr.mxu0 0.0
  %v9228 = vand.u32 %v8829, 4294901760
  %v9229 = vsub.f32 %v8829, %v9228
  %v9230 = vand.u32 %v9229, 4294901760
  %9231 = vmatpush1.msra.mxu0 %v9230
  %9232 = vmatprep.subr.mxu0 0.0
  %v9233 = vand.u32 %v8830, 4294901760
  %v9234 = vsub.f32 %v8830, %v9233
  %v9235 = vand.u32 %v9234, 4294901760
  %9236 = vmatpush1.msra.mxu0 %v9235
  %9237 = vmatprep.subr.mxu0 0.0
  %v9238 = vand.u32 %v8831, 4294901760
  %v9239 = vsub.f32 %v8831, %v9238
  %v9240 = vand.u32 %v9239, 4294901760
  %9241 = vmatpush1.msra.mxu0 %v9240
  %9242 = vmatprep.subr.mxu0 0.0
  %v9243 = vand.u32 %v8832, 4294901760
  %v9244 = vsub.f32 %v8832, %v9243
  %v9245 = vand.u32 %v9244, 4294901760
  %9246 = vmatpush1.msra.mxu0 %v9245
  %9247 = vmatprep.subr.mxu0 0.0
  %9248 = vmatpush1.msra.mxu0 0.0
  %9249 = vmatprep.subr.mxu0 0.0
  %9250 = vmatpush1.msra.mxu0 0.0
  %9251 = vmatprep.subr.mxu0 0.0
  %9252 = vmatpush1.msra.mxu0 0.0
  %9253 = vmatprep.subr.mxu0 0.0
  %9254 = vmatpush1.msra.mxu0 0.0
  %9255 = vmatprep.subr.mxu0 0.0
  %9256 = vmatpush1.msra.mxu0 0.0
  %9257 = vmatprep.subr.mxu0 0.0
  %9258 = vmatpush1.msra.mxu0 0.0
  %9259 = vmatprep.subr.mxu0 0.0
  %9260 = vmatpush1.msra.mxu0 0.0
  %9261 = vmatprep.subr.mxu0 0.0
  %9262 = vmatpush1.msra.mxu0 0.0
  %9263 = vmatprep.subr.mxu0 0.0
  %9264 = vmatpush1.msra.mxu0 0.0
  %9265 = vmatprep.subr.mxu0 0.0
  %9266 = vmatpush1.msra.mxu0 0.0
  %9267 = vmatprep.subr.mxu0 0.0
  %9268 = vmatpush1.msra.mxu0 0.0
  %9269 = vmatprep.subr.mxu0 0.0
  %9270 = vmatpush1.msra.mxu0 0.0
  %9271 = vmatprep.subr.mxu0 0.0
  %9272 = vmatpush1.msra.mxu0 0.0
  %9273 = vmatprep.subr.mxu0 0.0
  %9274 = vmatpush1.msra.mxu0 0.0
  %9275 = vmatprep.subr.mxu0 0.0
  %9276 = vmatpush1.msra.mxu0 0.0
  %9277 = vmatprep.subr.mxu0 0.0
  %9278 = vmatpush1.msra.mxu0 0.0
  %9279 = vmatprep.subr.mxu0 0.0
  %9280 = vmatpush1.msra.mxu0 0.0
  %9281 = vmatprep.subr.mxu0 0.0
  %9282 = vmatpush1.msra.mxu0 0.0
  %9283 = vmatprep.subr.mxu0 0.0
  %9284 = vmatpush1.msra.mxu0 0.0
  %9285 = vmatprep.subr.mxu0 0.0
  %9286 = vmatpush1.msra.mxu0 0.0
  %9287 = vmatprep.subr.mxu0 0.0
  %9288 = vmatpush1.msra.mxu0 0.0
  %9289 = vmatprep.subr.mxu0 0.0
  %9290 = vmatpush1.msra.mxu0 0.0
  %9291 = vmatprep.subr.mxu0 0.0
  %9292 = vmatpush1.msra.mxu0 0.0
  %9293 = vmatprep.subr.mxu0 0.0
  %9294 = vmatpush1.msra.mxu0 0.0
  %9295 = vmatprep.mubr.f32.mxu0 0.0
  %v9296 = vand.u32 %v8842, 4294901760
  %9297 = vmatmul.mubr.f32.gmra.mrb[0].mxu0 %v9296
  %v9298 = vpop.f32.mrb[0].mxu0
  %v9299 = vadd.f32 %v9204, %v9298
  %v9300 = vpop.f32.mrb[0].mxu0
  %9301 = vdwg.mxu0
  %9302 = vmatprep.subr.mxu0 0.0
  %v9303 = vand.u32 %v8825, 4294901760
  %9304 = vmatpush1.msra.mxu0 %v9303
  %9305 = vmatprep.subr.mxu0 0.0
  %v9306 = vand.u32 %v8826, 4294901760
  %9307 = vmatpush1.msra.mxu0 %v9306
  %9308 = vmatprep.subr.mxu0 0.0
  %v9309 = vand.u32 %v8827, 4294901760
  %9310 = vmatpush1.msra.mxu0 %v9309
  %9311 = vmatprep.subr.mxu0 0.0
  %v9312 = vand.u32 %v8828, 4294901760
  %9313 = vmatpush1.msra.mxu0 %v9312
  %9314 = vmatprep.subr.mxu0 0.0
  %v9315 = vand.u32 %v8829, 4294901760
  %9316 = vmatpush1.msra.mxu0 %v9315
  %9317 = vmatprep.subr.mxu0 0.0
  %v9318 = vand.u32 %v8830, 4294901760
  %9319 = vmatpush1.msra.mxu0 %v9318
  %9320 = vmatprep.subr.mxu0 0.0
  %v9321 = vand.u32 %v8831, 4294901760
  %9322 = vmatpush1.msra.mxu0 %v9321
  %9323 = vmatprep.subr.mxu0 0.0
  %v9324 = vand.u32 %v8832, 4294901760
  %9325 = vmatpush1.msra.mxu0 %v9324
  %9326 = vmatprep.subr.mxu0 0.0
  %9327 = vmatpush1.msra.mxu0 0.0
  %9328 = vmatprep.subr.mxu0 0.0
  %9329 = vmatpush1.msra.mxu0 0.0
  %9330 = vmatprep.subr.mxu0 0.0
  %9331 = vmatpush1.msra.mxu0 0.0
  %9332 = vmatprep.subr.mxu0 0.0
  %9333 = vmatpush1.msra.mxu0 0.0
  %9334 = vmatprep.subr.mxu0 0.0
  %9335 = vmatpush1.msra.mxu0 0.0
  %9336 = vmatprep.subr.mxu0 0.0
  %9337 = vmatpush1.msra.mxu0 0.0
  %9338 = vmatprep.subr.mxu0 0.0
  %9339 = vmatpush1.msra.mxu0 0.0
  %9340 = vmatprep.subr.mxu0 0.0
  %9341 = vmatpush1.msra.mxu0 0.0
  %9342 = vmatprep.subr.mxu0 0.0
  %9343 = vmatpush1.msra.mxu0 0.0
  %9344 = vmatprep.subr.mxu0 0.0
  %9345 = vmatpush1.msra.mxu0 0.0
  %9346 = vmatprep.subr.mxu0 0.0
  %9347 = vmatpush1.msra.mxu0 0.0
  %9348 = vmatprep.subr.mxu0 0.0
  %9349 = vmatpush1.msra.mxu0 0.0
  %9350 = vmatprep.subr.mxu0 0.0
  %9351 = vmatpush1.msra.mxu0 0.0
  %9352 = vmatprep.subr.mxu0 0.0
  %9353 = vmatpush1.msra.mxu0 0.0
  %9354 = vmatprep.subr.mxu0 0.0
  %9355 = vmatpush1.msra.mxu0 0.0
  %9356 = vmatprep.subr.mxu0 0.0
  %9357 = vmatpush1.msra.mxu0 0.0
  %9358 = vmatprep.subr.mxu0 0.0
  %9359 = vmatpush1.msra.mxu0 0.0
  %9360 = vmatprep.subr.mxu0 0.0
  %9361 = vmatpush1.msra.mxu0 0.0
  %9362 = vmatprep.subr.mxu0 0.0
  %9363 = vmatpush1.msra.mxu0 0.0
  %9364 = vmatprep.subr.mxu0 0.0
  %9365 = vmatpush1.msra.mxu0 0.0
  %9366 = vmatprep.subr.mxu0 0.0
  %9367 = vmatpush1.msra.mxu0 0.0
  %9368 = vmatprep.subr.mxu0 0.0
  %9369 = vmatpush1.msra.mxu0 0.0
  %9370 = vmatprep.subr.mxu0 0.0
  %9371 = vmatpush1.msra.mxu0 0.0
  %9372 = vmatprep.subr.mxu0 0.0
  %9373 = vmatpush1.msra.mxu0 0.0
  %9374 = vmatprep.mubr.f32.mxu0 0.0
  %v9375 = vand.u32 %v8842, 4294901760
  %9376 = vmatmul.mubr.f32.gmra.mrb[0].mxu0 %v9375
  %v9377 = vpop.f32.mrb[0].mxu0
  %v9378 = vadd.f32 %v9299, %v9377
  %v9379 = vpop.f32.mrb[0].mxu0
  %9380 = vdwg.mxu0
  %v9381 = vmax.f32 %v9378, 0.0
  %v9382 = vld [vmem:[%s22] sm:$0xff]
  %v9383 = vld [vmem:[%s22 + $0x8] sm:$0xff]
  %v9384 = vld [vmem:[%s22 + $0x10] sm:$0xff]
  %v9385 = vld [vmem:[%s22 + $0x18] sm:$0xff]
  %v9386 = vld [vmem:[%s22 + $0x20] sm:$0xff]
  %v9387 = vld [vmem:[%s22 + $0x28] sm:$0xff]
  %v9388 = vld [vmem:[%s22 + $0x30] sm:$0xff]
  %v9389 = vld [vmem:[%s22 + $0x38] sm:$0xff]
  %v9390 = vld [vmem:[%s23] sm:$0x1]
  %v9392 = vlaneseq
  %v9393 = vshrl.u32 %v9392, 7
  %v9394 = vsub.s32 0, %v9393
  %v9395 = vrot.slane %v9390, %v9394
  %v9398 = vsel %vm8840, %v9381, 0
  %9400 = vmatprep.subr.mxu0 0.0
  %v9401 = vand.u32 %v9382, 4294901760
  %9402 = vmatpush1.msra.mxu0 %v9401
  %9403 = vmatprep.subr.mxu0 0.0
  %v9404 = vand.u32 %v9383, 4294901760
  %9405 = vmatpush1.msra.mxu0 %v9404
  %9406 = vmatprep.subr.mxu0 0.0
  %v9407 = vand.u32 %v9384, 4294901760
  %9408 = vmatpush1.msra.mxu0 %v9407
  %9409 = vmatprep.subr.mxu0 0.0
  %v9410 = vand.u32 %v9385, 4294901760
  %9411 = vmatpush1.msra.mxu0 %v9410
  %9412 = vmatprep.subr.mxu0 0.0
  %v9413 = vand.u32 %v9386, 4294901760
  %9414 = vmatpush1.msra.mxu0 %v9413
  %9415 = vmatprep.subr.mxu0 0.0
  %v9416 = vand.u32 %v9387, 4294901760
  %9417 = vmatpush1.msra.mxu0 %v9416
  %9418 = vmatprep.subr.mxu0 0.0
  %v9419 = vand.u32 %v9388, 4294901760
  %9420 = vmatpush1.msra.mxu0 %v9419
  %9421 = vmatprep.subr.mxu0 0.0
  %v9422 = vand.u32 %v9389, 4294901760
  %9423 = vmatpush1.msra.mxu0 %v9422
  %9424 = vmatprep.subr.mxu0 0.0
  %9425 = vmatpush1.msra.mxu0 0.0
  %9426 = vmatprep.subr.mxu0 0.0
  %9427 = vmatpush1.msra.mxu0 0.0
  %9428 = vmatprep.subr.mxu0 0.0
  %9429 = vmatpush1.msra.mxu0 0.0
  %9430 = vmatprep.subr.mxu0 0.0
  %9431 = vmatpush1.msra.mxu0 0.0
  %9432 = vmatprep.subr.mxu0 0.0
  %9433 = vmatpush1.msra.mxu0 0.0
  %9434 = vmatprep.subr.mxu0 0.0
  %9435 = vmatpush1.msra.mxu0 0.0
  %9436 = vmatprep.subr.mxu0 0.0
  %9437 = vmatpush1.msra.mxu0 0.0
  %9438 = vmatprep.subr.mxu0 0.0
  %9439 = vmatpush1.msra.mxu0 0.0
  %9440 = vmatprep.subr.mxu0 0.0
  %9441 = vmatpush1.msra.mxu0 0.0
  %9442 = vmatprep.subr.mxu0 0.0
  %9443 = vmatpush1.msra.mxu0 0.0
  %9444 = vmatprep.subr.mxu0 0.0
  %9445 = vmatpush1.msra.mxu0 0.0
  %9446 = vmatprep.subr.mxu0 0.0
  %9447 = vmatpush1.msra.mxu0 0.0
  %9448 = vmatprep.subr.mxu0 0.0
  %9449 = vmatpush1.msra.mxu0 0.0
  %9450 = vmatprep.subr.mxu0 0.0
  %9451 = vmatpush1.msra.mxu0 0.0
  %9452 = vmatprep.subr.mxu0 0.0
  %9453 = vmatpush1.msra.mxu0 0.0
  %9454 = vmatprep.subr.mxu0 0.0
  %9455 = vmatpush1.msra.mxu0 0.0
  %9456 = vmatprep.subr.mxu0 0.0
  %9457 = vmatpush1.msra.mxu0 0.0
  %9458 = vmatprep.subr.mxu0 0.0
  %9459 = vmatpush1.msra.mxu0 0.0
  %9460 = vmatprep.subr.mxu0 0.0
  %9461 = vmatpush1.msra.mxu0 0.0
  %9462 = vmatprep.subr.mxu0 0.0
  %9463 = vmatpush1.msra.mxu0 0.0
  %9464 = vmatprep.subr.mxu0 0.0
  %9465 = vmatpush1.msra.mxu0 0.0
  %9466 = vmatprep.subr.mxu0 0.0
  %9467 = vmatpush1.msra.mxu0 0.0
  %9468 = vmatprep.subr.mxu0 0.0
  %9469 = vmatpush1.msra.mxu0 0.0
  %9470 = vmatprep.subr.mxu0 0.0
  %9471 = vmatpush1.msra.mxu0 0.0
  %9472 = vmatprep.mubr.f32.mxu0 0.0
  %v9473 = vand.u32 %v9398, 4294901760
  %v9474 = vsub.f32 %v9398, %v9473
  %v9475 = vand.u32 %v9474, 4294901760
  %v9476 = vsub.f32 %v9474, %v9475
  %v9477 = vand.u32 %v9476, 4294901760
  %9478 = vmatmul.mubr.f32.gmra.mrb[0].mxu0 %v9477
  %v9479 = vpop.f32.mrb[0].mxu0
  %v9480 = vadd.f32 %v9395, %v9479
  %v9481 = vpop.f32.mrb[0].mxu0
  %9482 = vdwg.mxu0
  %9483 = vmatprep.subr.mxu0 0.0
  %v9484 = vand.u32 %v9382, 4294901760
  %v9485 = vsub.f32 %v9382, %v9484
  %v9486 = vand.u32 %v9485, 4294901760
  %v9487 = vsub.f32 %v9485, %v9486
  %v9488 = vand.u32 %v9487, 4294901760
  %9489 = vmatpush1.msra.mxu0 %v9488
  %9490 = vmatprep.subr.mxu0 0.0
  %v9491 = vand.u32 %v9383, 4294901760
  %v9492 = vsub.f32 %v9383, %v9491
  %v9493 = vand.u32 %v9492, 4294901760
  %v9494 = vsub.f32 %v9492, %v9493
  %v9495 = vand.u32 %v9494, 4294901760
  %9496 = vmatpush1.msra.mxu0 %v9495
  %9497 = vmatprep.subr.mxu0 0.0
  %v9498 = vand.u32 %v9384, 4294901760
  %v9499 = vsub.f32 %v9384, %v9498
  %v9500 = vand.u32 %v9499, 4294901760
  %v9501 = vsub.f32 %v9499, %v9500
  %v9502 = vand.u32 %v9501, 4294901760
  %9503 = vmatpush1.msra.mxu0 %v9502
  %9504 = vmatprep.subr.mxu0 0.0
  %v9505 = vand.u32 %v9385, 4294901760
  %v9506 = vsub.f32 %v9385, %v9505
  %v9507 = vand.u32 %v9506, 4294901760
  %v9508 = vsub.f32 %v9506, %v9507
  %v9509 = vand.u32 %v9508, 4294901760
  %9510 = vmatpush1.msra.mxu0 %v9509
  %9511 = vmatprep.subr.mxu0 0.0
  %v9512 = vand.u32 %v9386, 4294901760
  %v9513 = vsub.f32 %v9386, %v9512
  %v9514 = vand.u32 %v9513, 4294901760
  %v9515 = vsub.f32 %v9513, %v9514
  %v9516 = vand.u32 %v9515, 4294901760
  %9517 = vmatpush1.msra.mxu0 %v9516
  %9518 = vmatprep.subr.mxu0 0.0
  %v9519 = vand.u32 %v9387, 4294901760
  %v9520 = vsub.f32 %v9387, %v9519
  %v9521 = vand.u32 %v9520, 4294901760
  %v9522 = vsub.f32 %v9520, %v9521
  %v9523 = vand.u32 %v9522, 4294901760
  %9524 = vmatpush1.msra.mxu0 %v9523
  %9525 = vmatprep.subr.mxu0 0.0
  %v9526 = vand.u32 %v9388, 4294901760
  %v9527 = vsub.f32 %v9388, %v9526
  %v9528 = vand.u32 %v9527, 4294901760
  %v9529 = vsub.f32 %v9527, %v9528
  %v9530 = vand.u32 %v9529, 4294901760
  %9531 = vmatpush1.msra.mxu0 %v9530
  %9532 = vmatprep.subr.mxu0 0.0
  %v9533 = vand.u32 %v9389, 4294901760
  %v9534 = vsub.f32 %v9389, %v9533
  %v9535 = vand.u32 %v9534, 4294901760
  %v9536 = vsub.f32 %v9534, %v9535
  %v9537 = vand.u32 %v9536, 4294901760
  %9538 = vmatpush1.msra.mxu0 %v9537
  %9539 = vmatprep.subr.mxu0 0.0
  %9540 = vmatpush1.msra.mxu0 0.0
  %9541 = vmatprep.subr.mxu0 0.0
  %9542 = vmatpush1.msra.mxu0 0.0
  %9543 = vmatprep.subr.mxu0 0.0
  %9544 = vmatpush1.msra.mxu0 0.0
  %9545 = vmatprep.subr.mxu0 0.0
  %9546 = vmatpush1.msra.mxu0 0.0
  %9547 = vmatprep.subr.mxu0 0.0
  %9548 = vmatpush1.msra.mxu0 0.0
  %9549 = vmatprep.subr.mxu0 0.0
  %9550 = vmatpush1.msra.mxu0 0.0
  %9551 = vmatprep.subr.mxu0 0.0
  %9552 = vmatpush1.msra.mxu0 0.0
  %9553 = vmatprep.subr.mxu0 0.0
  %9554 = vmatpush1.msra.mxu0 0.0
  %9555 = vmatprep.subr.mxu0 0.0
  %9556 = vmatpush1.msra.mxu0 0.0
  %9557 = vmatprep.subr.mxu0 0.0
  %9558 = vmatpush1.msra.mxu0 0.0
  %9559 = vmatprep.subr.mxu0 0.0
  %9560 = vmatpush1.msra.mxu0 0.0
  %9561 = vmatprep.subr.mxu0 0.0
  %9562 = vmatpush1.msra.mxu0 0.0
  %9563 = vmatprep.subr.mxu0 0.0
  %9564 = vmatpush1.msra.mxu0 0.0
  %9565 = vmatprep.subr.mxu0 0.0
  %9566 = vmatpush1.msra.mxu0 0.0
  %9567 = vmatprep.subr.mxu0 0.0
  %9568 = vmatpush1.msra.mxu0 0.0
  %9569 = vmatprep.subr.mxu0 0.0
  %9570 = vmatpush1.msra.mxu0 0.0
  %9571 = vmatprep.subr.mxu0 0.0
  %9572 = vmatpush1.msra.mxu0 0.0
  %9573 = vmatprep.subr.mxu0 0.0
  %9574 = vmatpush1.msra.mxu0 0.0
  %9575 = vmatprep.subr.mxu0 0.0
  %9576 = vmatpush1.msra.mxu0 0.0
  %9577 = vmatprep.subr.mxu0 0.0
  %9578 = vmatpush1.msra.mxu0 0.0
  %9579 = vmatprep.subr.mxu0 0.0
  %9580 = vmatpush1.msra.mxu0 0.0
  %9581 = vmatprep.subr.mxu0 0.0
  %9582 = vmatpush1.msra.mxu0 0.0
  %9583 = vmatprep.subr.mxu0 0.0
  %9584 = vmatpush1.msra.mxu0 0.0
  %9585 = vmatprep.subr.mxu0 0.0
  %9586 = vmatpush1.msra.mxu0 0.0
  %9587 = vmatprep.mubr.f32.mxu0 0.0
  %v9588 = vand.u32 %v9398, 4294901760
  %9589 = vmatmul.mubr.f32.gmra.mrb[0].mxu0 %v9588
  %v9590 = vpop.f32.mrb[0].mxu0
  %v9591 = vadd.f32 %v9480, %v9590
  %v9592 = vpop.f32.mrb[0].mxu0
  %9593 = vdwg.mxu0
  %9594 = vmatprep.subr.mxu0 0.0
  %v9595 = vand.u32 %v9382, 4294901760
  %v9596 = vsub.f32 %v9382, %v9595
  %9597 = vmatpush1.msra.mxu0 %v9596
  %9598 = vmatprep.subr.mxu0 0.0
  %v9599 = vand.u32 %v9383, 4294901760
  %v9600 = vsub.f32 %v9383, %v9599
  %9601 = vmatpush1.msra.mxu0 %v9600
  %9602 = vmatprep.subr.mxu0 0.0
  %v9603 = vand.u32 %v9384, 4294901760
  %v9604 = vsub.f32 %v9384, %v9603
  %9605 = vmatpush1.msra.mxu0 %v9604
  %9606 = vmatprep.subr.mxu0 0.0
  %v9607 = vand.u32 %v9385, 4294901760
  %v9608 = vsub.f32 %v9385, %v9607
  %9609 = vmatpush1.msra.mxu0 %v9608
  %9610 = vmatprep.subr.mxu0 0.0
  %v9611 = vand.u32 %v9386, 4294901760
  %v9612 = vsub.f32 %v9386, %v9611
  %9613 = vmatpush1.msra.mxu0 %v9612
  %9614 = vmatprep.subr.mxu0 0.0
  %v9615 = vand.u32 %v9387, 4294901760
  %v9616 = vsub.f32 %v9387, %v9615
  %9617 = vmatpush1.msra.mxu0 %v9616
  %9618 = vmatprep.subr.mxu0 0.0
  %v9619 = vand.u32 %v9388, 4294901760
  %v9620 = vsub.f32 %v9388, %v9619
  %9621 = vmatpush1.msra.mxu0 %v9620
  %9622 = vmatprep.subr.mxu0 0.0
  %v9623 = vand.u32 %v9389, 4294901760
  %v9624 = vsub.f32 %v9389, %v9623
  %9625 = vmatpush1.msra.mxu0 %v9624
  %9626 = vmatprep.subr.mxu0 0.0
  %9627 = vmatpush1.msra.mxu0 0.0
  %9628 = vmatprep.subr.mxu0 0.0
  %9629 = vmatpush1.msra.mxu0 0.0
  %9630 = vmatprep.subr.mxu0 0.0
  %9631 = vmatpush1.msra.mxu0 0.0
  %9632 = vmatprep.subr.mxu0 0.0
  %9633 = vmatpush1.msra.mxu0 0.0
  %9634 = vmatprep.subr.mxu0 0.0
  %9635 = vmatpush1.msra.mxu0 0.0
  %9636 = vmatprep.subr.mxu0 0.0
  %9637 = vmatpush1.msra.mxu0 0.0
  %9638 = vmatprep.subr.mxu0 0.0
  %9639 = vmatpush1.msra.mxu0 0.0
  %9640 = vmatprep.subr.mxu0 0.0
  %9641 = vmatpush1.msra.mxu0 0.0
  %9642 = vmatprep.subr.mxu0 0.0
  %9643 = vmatpush1.msra.mxu0 0.0
  %9644 = vmatprep.subr.mxu0 0.0
  %9645 = vmatpush1.msra.mxu0 0.0
  %9646 = vmatprep.subr.mxu0 0.0
  %9647 = vmatpush1.msra.mxu0 0.0
  %9648 = vmatprep.subr.mxu0 0.0
  %9649 = vmatpush1.msra.mxu0 0.0
  %9650 = vmatprep.subr.mxu0 0.0
  %9651 = vmatpush1.msra.mxu0 0.0
  %9652 = vmatprep.subr.mxu0 0.0
  %9653 = vmatpush1.msra.mxu0 0.0
  %9654 = vmatprep.subr.mxu0 0.0
  %9655 = vmatpush1.msra.mxu0 0.0
  %9656 = vmatprep.subr.mxu0 0.0
  %9657 = vmatpush1.msra.mxu0 0.0
  %9658 = vmatprep.subr.mxu0 0.0
  %9659 = vmatpush1.msra.mxu0 0.0
  %9660 = vmatprep.subr.mxu0 0.0
  %9661 = vmatpush1.msra.mxu0 0.0
  %9662 = vmatprep.subr.mxu0 0.0
  %9663 = vmatpush1.msra.mxu0 0.0
  %9664 = vmatprep.subr.mxu0 0.0
  %9665 = vmatpush1.msra.mxu0 0.0
  %9666 = vmatprep.subr.mxu0 0.0
  %9667 = vmatpush1.msra.mxu0 0.0
  %9668 = vmatprep.subr.mxu0 0.0
  %9669 = vmatpush1.msra.mxu0 0.0
  %9670 = vmatprep.subr.mxu0 0.0
  %9671 = vmatpush1.msra.mxu0 0.0
  %9672 = vmatprep.subr.mxu0 0.0
  %9673 = vmatpush1.msra.mxu0 0.0
  %9674 = vmatprep.mubr.f32.mxu0 0.0
  %v9675 = vand.u32 %v9398, 4294901760
  %v9676 = vsub.f32 %v9398, %v9675
  %9677 = vmatmul.mubr.f32.gmra.mrb[0].mxu0 %v9676
  %v9678 = vpop.f32.mrb[0].mxu0
  %v9679 = vadd.f32 %v9591, %v9678
  %v9680 = vpop.f32.mrb[0].mxu0
  %9681 = vdwg.mxu0
  %9682 = vmatprep.subr.mxu0 0.0
  %v9683 = vand.u32 %v9382, 4294901760
  %9684 = vmatpush1.msra.mxu0 %v9683
  %9685 = vmatprep.subr.mxu0 0.0
  %v9686 = vand.u32 %v9383, 4294901760
  %9687 = vmatpush1.msra.mxu0 %v9686
  %9688 = vmatprep.subr.mxu0 0.0
  %v9689 = vand.u32 %v9384, 4294901760
  %9690 = vmatpush1.msra.mxu0 %v9689
  %9691 = vmatprep.subr.mxu0 0.0
  %v9692 = vand.u32 %v9385, 4294901760
  %9693 = vmatpush1.msra.mxu0 %v9692
  %9694 = vmatprep.subr.mxu0 0.0
  %v9695 = vand.u32 %v9386, 4294901760
  %9696 = vmatpush1.msra.mxu0 %v9695
  %9697 = vmatprep.subr.mxu0 0.0
  %v9698 = vand.u32 %v9387, 4294901760
  %9699 = vmatpush1.msra.mxu0 %v9698
  %9700 = vmatprep.subr.mxu0 0.0
  %v9701 = vand.u32 %v9388, 4294901760
  %9702 = vmatpush1.msra.mxu0 %v9701
  %9703 = vmatprep.subr.mxu0 0.0
  %v9704 = vand.u32 %v9389, 4294901760
  %9705 = vmatpush1.msra.mxu0 %v9704
  %9706 = vmatprep.subr.mxu0 0.0
  %9707 = vmatpush1.msra.mxu0 0.0
  %9708 = vmatprep.subr.mxu0 0.0
  %9709 = vmatpush1.msra.mxu0 0.0
  %9710 = vmatprep.subr.mxu0 0.0
  %9711 = vmatpush1.msra.mxu0 0.0
  %9712 = vmatprep.subr.mxu0 0.0
  %9713 = vmatpush1.msra.mxu0 0.0
  %9714 = vmatprep.subr.mxu0 0.0
  %9715 = vmatpush1.msra.mxu0 0.0
  %9716 = vmatprep.subr.mxu0 0.0
  %9717 = vmatpush1.msra.mxu0 0.0
  %9718 = vmatprep.subr.mxu0 0.0
  %9719 = vmatpush1.msra.mxu0 0.0
  %9720 = vmatprep.subr.mxu0 0.0
  %9721 = vmatpush1.msra.mxu0 0.0
  %9722 = vmatprep.subr.mxu0 0.0
  %9723 = vmatpush1.msra.mxu0 0.0
  %9724 = vmatprep.subr.mxu0 0.0
  %9725 = vmatpush1.msra.mxu0 0.0
  %9726 = vmatprep.subr.mxu0 0.0
  %9727 = vmatpush1.msra.mxu0 0.0
  %9728 = vmatprep.subr.mxu0 0.0
  %9729 = vmatpush1.msra.mxu0 0.0
  %9730 = vmatprep.subr.mxu0 0.0
  %9731 = vmatpush1.msra.mxu0 0.0
  %9732 = vmatprep.subr.mxu0 0.0
  %9733 = vmatpush1.msra.mxu0 0.0
  %9734 = vmatprep.subr.mxu0 0.0
  %9735 = vmatpush1.msra.mxu0 0.0
  %9736 = vmatprep.subr.mxu0 0.0
  %9737 = vmatpush1.msra.mxu0 0.0
  %9738 = vmatprep.subr.mxu0 0.0
  %9739 = vmatpush1.msra.mxu0 0.0
  %9740 = vmatprep.subr.mxu0 0.0
  %9741 = vmatpush1.msra.mxu0 0.0
  %9742 = vmatprep.subr.mxu0 0.0
  %9743 = vmatpush1.msra.mxu0 0.0
  %9744 = vmatprep.subr.mxu0 0.0
  %9745 = vmatpush1.msra.mxu0 0.0
  %9746 = vmatprep.subr.mxu0 0.0
  %9747 = vmatpush1.msra.mxu0 0.0
  %9748 = vmatprep.subr.mxu0 0.0
  %9749 = vmatpush1.msra.mxu0 0.0
  %9750 = vmatprep.subr.mxu0 0.0
  %9751 = vmatpush1.msra.mxu0 0.0
  %9752 = vmatprep.subr.mxu0 0.0
  %9753 = vmatpush1.msra.mxu0 0.0
  %9754 = vmatprep.mubr.f32.mxu0 0.0
  %v9755 = vand.u32 %v9398, 4294901760
  %v9756 = vsub.f32 %v9398, %v9755
  %v9757 = vand.u32 %v9756, 4294901760
  %9758 = vmatmul.mubr.f32.gmra.mrb[0].mxu0 %v9757
  %v9759 = vpop.f32.mrb[0].mxu0
  %v9760 = vadd.f32 %v9679, %v9759
  %v9761 = vpop.f32.mrb[0].mxu0
  %9762 = vdwg.mxu0
  %9763 = vmatprep.subr.mxu0 0.0
  %v9764 = vand.u32 %v9382, 4294901760
  %v9765 = vsub.f32 %v9382, %v9764
  %v9766 = vand.u32 %v9765, 4294901760
  %9767 = vmatpush1.msra.mxu0 %v9766
  %9768 = vmatprep.subr.mxu0 0.0
  %v9769 = vand.u32 %v9383, 4294901760
  %v9770 = vsub.f32 %v9383, %v9769
  %v9771 = vand.u32 %v9770, 4294901760
  %9772 = vmatpush1.msra.mxu0 %v9771
  %9773 = vmatprep.subr.mxu0 0.0
  %v9774 = vand.u32 %v9384, 4294901760
  %v9775 = vsub.f32 %v9384, %v9774
  %v9776 = vand.u32 %v9775, 4294901760
  %9777 = vmatpush1.msra.mxu0 %v9776
  %9778 = vmatprep.subr.mxu0 0.0
  %v9779 = vand.u32 %v9385, 4294901760
  %v9780 = vsub.f32 %v9385, %v9779
  %v9781 = vand.u32 %v9780, 4294901760
  %9782 = vmatpush1.msra.mxu0 %v9781
  %9783 = vmatprep.subr.mxu0 0.0
  %v9784 = vand.u32 %v9386, 4294901760
  %v9785 = vsub.f32 %v9386, %v9784
  %v9786 = vand.u32 %v9785, 4294901760
  %9787 = vmatpush1.msra.mxu0 %v9786
  %9788 = vmatprep.subr.mxu0 0.0
  %v9789 = vand.u32 %v9387, 4294901760
  %v9790 = vsub.f32 %v9387, %v9789
  %v9791 = vand.u32 %v9790, 4294901760
  %9792 = vmatpush1.msra.mxu0 %v9791
  %9793 = vmatprep.subr.mxu0 0.0
  %v9794 = vand.u32 %v9388, 4294901760
  %v9795 = vsub.f32 %v9388, %v9794
  %v9796 = vand.u32 %v9795, 4294901760
  %9797 = vmatpush1.msra.mxu0 %v9796
  %9798 = vmatprep.subr.mxu0 0.0
  %v9799 = vand.u32 %v9389, 4294901760
  %v9800 = vsub.f32 %v9389, %v9799
  %v9801 = vand.u32 %v9800, 4294901760
  %9802 = vmatpush1.msra.mxu0 %v9801
  %9803 = vmatprep.subr.mxu0 0.0
  %9804 = vmatpush1.msra.mxu0 0.0
  %9805 = vmatprep.subr.mxu0 0.0
  %9806 = vmatpush1.msra.mxu0 0.0
  %9807 = vmatprep.subr.mxu0 0.0
  %9808 = vmatpush1.msra.mxu0 0.0
  %9809 = vmatprep.subr.mxu0 0.0
  %9810 = vmatpush1.msra.mxu0 0.0
  %9811 = vmatprep.subr.mxu0 0.0
  %9812 = vmatpush1.msra.mxu0 0.0
  %9813 = vmatprep.subr.mxu0 0.0
  %9814 = vmatpush1.msra.mxu0 0.0
  %9815 = vmatprep.subr.mxu0 0.0
  %9816 = vmatpush1.msra.mxu0 0.0
  %9817 = vmatprep.subr.mxu0 0.0
  %9818 = vmatpush1.msra.mxu0 0.0
  %9819 = vmatprep.subr.mxu0 0.0
  %9820 = vmatpush1.msra.mxu0 0.0
  %9821 = vmatprep.subr.mxu0 0.0
  %9822 = vmatpush1.msra.mxu0 0.0
  %9823 = vmatprep.subr.mxu0 0.0
  %9824 = vmatpush1.msra.mxu0 0.0
  %9825 = vmatprep.subr.mxu0 0.0
  %9826 = vmatpush1.msra.mxu0 0.0
  %9827 = vmatprep.subr.mxu0 0.0
  %9828 = vmatpush1.msra.mxu0 0.0
  %9829 = vmatprep.subr.mxu0 0.0
  %9830 = vmatpush1.msra.mxu0 0.0
  %9831 = vmatprep.subr.mxu0 0.0
  %9832 = vmatpush1.msra.mxu0 0.0
  %9833 = vmatprep.subr.mxu0 0.0
  %9834 = vmatpush1.msra.mxu0 0.0
  %9835 = vmatprep.subr.mxu0 0.0
  %9836 = vmatpush1.msra.mxu0 0.0
  %9837 = vmatprep.subr.mxu0 0.0
  %9838 = vmatpush1.msra.mxu0 0.0
  %9839 = vmatprep.subr.mxu0 0.0
  %9840 = vmatpush1.msra.mxu0 0.0
  %9841 = vmatprep.subr.mxu0 0.0
  %9842 = vmatpush1.msra.mxu0 0.0
  %9843 = vmatprep.subr.mxu0 0.0
  %9844 = vmatpush1.msra.mxu0 0.0
  %9845 = vmatprep.subr.mxu0 0.0
  %9846 = vmatpush1.msra.mxu0 0.0
  %9847 = vmatprep.subr.mxu0 0.0
  %9848 = vmatpush1.msra.mxu0 0.0
  %9849 = vmatprep.subr.mxu0 0.0
  %9850 = vmatpush1.msra.mxu0 0.0
  %9851 = vmatprep.mubr.f32.mxu0 0.0
  %v9852 = vand.u32 %v9398, 4294901760
  %9853 = vmatmul.mubr.f32.gmra.mrb[0].mxu0 %v9852
  %v9854 = vpop.f32.mrb[0].mxu0
  %v9855 = vadd.f32 %v9760, %v9854
  %v9856 = vpop.f32.mrb[0].mxu0
  %9857 = vdwg.mxu0
  %9858 = vmatprep.subr.mxu0 0.0
  %v9859 = vand.u32 %v9382, 4294901760
  %9860 = vmatpush1.msra.mxu0 %v9859
  %9861 = vmatprep.subr.mxu0 0.0
  %v9862 = vand.u32 %v9383, 4294901760
  %9863 = vmatpush1.msra.mxu0 %v9862
  %9864 = vmatprep.subr.mxu0 0.0
  %v9865 = vand.u32 %v9384, 4294901760
  %9866 = vmatpush1.msra.mxu0 %v9865
  %9867 = vmatprep.subr.mxu0 0.0
  %v9868 = vand.u32 %v9385, 4294901760
  %9869 = vmatpush1.msra.mxu0 %v9868
  %9870 = vmatprep.subr.mxu0 0.0
  %v9871 = vand.u32 %v9386, 4294901760
  %9872 = vmatpush1.msra.mxu0 %v9871
  %9873 = vmatprep.subr.mxu0 0.0
  %v9874 = vand.u32 %v9387, 4294901760
  %9875 = vmatpush1.msra.mxu0 %v9874
  %9876 = vmatprep.subr.mxu0 0.0
  %v9877 = vand.u32 %v9388, 4294901760
  %9878 = vmatpush1.msra.mxu0 %v9877
  %9879 = vmatprep.subr.mxu0 0.0
  %v9880 = vand.u32 %v9389, 4294901760
  %9881 = vmatpush1.msra.mxu0 %v9880
  %9882 = vmatprep.subr.mxu0 0.0
  %9883 = vmatpush1.msra.mxu0 0.0
  %9884 = vmatprep.subr.mxu0 0.0
  %9885 = vmatpush1.msra.mxu0 0.0
  %9886 = vmatprep.subr.mxu0 0.0
  %9887 = vmatpush1.msra.mxu0 0.0
  %9888 = vmatprep.subr.mxu0 0.0
  %9889 = vmatpush1.msra.mxu0 0.0
  %9890 = vmatprep.subr.mxu0 0.0
  %9891 = vmatpush1.msra.mxu0 0.0
  %9892 = vmatprep.subr.mxu0 0.0
  %9893 = vmatpush1.msra.mxu0 0.0
  %9894 = vmatprep.subr.mxu0 0.0
  %9895 = vmatpush1.msra.mxu0 0.0
  %9896 = vmatprep.subr.mxu0 0.0
  %9897 = vmatpush1.msra.mxu0 0.0
  %9898 = vmatprep.subr.mxu0 0.0
  %9899 = vmatpush1.msra.mxu0 0.0
  %9900 = vmatprep.subr.mxu0 0.0
  %9901 = vmatpush1.msra.mxu0 0.0
  %9902 = vmatprep.subr.mxu0 0.0
  %9903 = vmatpush1.msra.mxu0 0.0
  %9904 = vmatprep.subr.mxu0 0.0
  %9905 = vmatpush1.msra.mxu0 0.0
  %9906 = vmatprep.subr.mxu0 0.0
  %9907 = vmatpush1.msra.mxu0 0.0
  %9908 = vmatprep.subr.mxu0 0.0
  %9909 = vmatpush1.msra.mxu0 0.0
  %9910 = vmatprep.subr.mxu0 0.0
  %9911 = vmatpush1.msra.mxu0 0.0
  %9912 = vmatprep.subr.mxu0 0.0
  %9913 = vmatpush1.msra.mxu0 0.0
  %9914 = vmatprep.subr.mxu0 0.0
  %9915 = vmatpush1.msra.mxu0 0.0
  %9916 = vmatprep.subr.mxu0 0.0
  %9917 = vmatpush1.msra.mxu0 0.0
  %9918 = vmatprep.subr.mxu0 0.0
  %9919 = vmatpush1.msra.mxu0 0.0
  %9920 = vmatprep.subr.mxu0 0.0
  %9921 = vmatpush1.msra.mxu0 0.0
  %9922 = vmatprep.subr.mxu0 0.0
  %9923 = vmatpush1.msra.mxu0 0.0
  %9924 = vmatprep.subr.mxu0 0.0
  %9925 = vmatpush1.msra.mxu0 0.0
  %9926 = vmatprep.subr.mxu0 0.0
  %9927 = vmatpush1.msra.mxu0 0.0
  %9928 = vmatprep.subr.mxu0 0.0
  %9929 = vmatpush1.msra.mxu0 0.0
  %9930 = vmatprep.mubr.f32.mxu0 0.0
  %v9931 = vand.u32 %v9398, 4294901760
  %9932 = vmatmul.mubr.f32.gmra.mrb[0].mxu0 %v9931
  %v9933 = vpop.f32.mrb[0].mxu0
  %v9934 = vadd.f32 %v9855, %v9933
  %v9935 = vpop.f32.mrb[0].mxu0
  %9936 = vdwg.mxu0
  %9937 = vst.msk [vmem:[%s24] sm:$0x3] %vm85, %v9934
  // Predicated region
  $region98: #{deeponet_forward.1} parent=0 // pred_check
    _
  $region99: #{deeponet_forward.1} parent=0 // pred_check_branch
    %9939 = sbr.rel (0) target = $region101
  $region100: #{deeponet_forward.1} parent=0 // pred_region
    _
  $region101: #{deeponet_forward.1} parent=0 // pred_fallthru
    _
  // Predicated region
  $region102: #{deeponet_forward.1} parent=0 // pred_check
    _
  $region103: #{deeponet_forward.1} parent=0 // pred_check_branch
    %9941 = sbr.rel (0) target = $region105
  $region104: #{deeponet_forward.1} parent=0 // pred_region
    _
  $region105: #{deeponet_forward.1} parent=0 // pred_fallthru
    _

</llo_original>
